<compile_context>
chip_gen: v7x
topology: tpu7x:2x2x1
jax: 0.10.0
libtpu: 0.0.40
codegen_flags: <defaults>
</compile_context>

<pallas_src>
import functools

import jax
import jax.numpy as jnp
from jax.experimental import pallas as pl
from jax.experimental.pallas import tpu as pltpu

# ----------------------------- model hyperparams ----------------------------
NUM_INPUTS = 2
NUM_HIDDENS = 16
NUM_RES_HIDDENS = 32
NUM_RES_LAYERS = 2
WEIGHT_RECON = 1.0
WEIGHT_KLD = 1.0
WEIGHT_MATCHING = 0.005
CHANNEL_VAR = jnp.array([1.0, 1.0], dtype=jnp.float32)
BN_EPS = 1e-5


# ------------------------------ Pallas kernels ------------------------------
def gemm_bias_kernel(a_ref, w_ref, b_ref, o_ref, *, relu):
    """conv-as-GEMM: (M,K)@(K,C) + bias, optional ReLU."""
    y = jnp.dot(a_ref[...], w_ref[...], preferred_element_type=jnp.float32)
    y = y + b_ref[...]
    if relu:
        y = jnp.maximum(y, 0.0)
    o_ref[...] = y


def gemm_bias_bn_kernel(a_ref, w_ref, b_ref, g_ref, beta_ref, o_ref, *, relu):
    """conv GEMM + bias + training-mode BatchNorm (batch stats) + optional ReLU."""
    y = jnp.dot(a_ref[...], w_ref[...], preferred_element_type=jnp.float32)
    y = y + b_ref[...]
    mean = jnp.mean(y, axis=0, keepdims=True)            # stats over N*H*W rows
    var = jnp.mean(jnp.square(y - mean), axis=0, keepdims=True)
    y = (y - mean) * (g_ref[...] * jax.lax.rsqrt(var + BN_EPS)) + beta_ref[...]
    if relu:
        y = jnp.maximum(y, 0.0)
    o_ref[...] = y


def gemm_bias_bn_add_kernel(a_ref, w_ref, b_ref, g_ref, beta_ref, res_ref, o_ref):
    """conv GEMM + bias + BatchNorm + residual add (tail of a residual layer)."""
    y = jnp.dot(a_ref[...], w_ref[...], preferred_element_type=jnp.float32)
    y = y + b_ref[...]
    mean = jnp.mean(y, axis=0, keepdims=True)
    var = jnp.mean(jnp.square(y - mean), axis=0, keepdims=True)
    y = (y - mean) * (g_ref[...] * jax.lax.rsqrt(var + BN_EPS)) + beta_ref[...]
    o_ref[...] = res_ref[...] + y


def encode_head_kernel(a_ref, w_ref, b_ref, eps_ref, z_ref, kld_ref):
    """Final 1x1 encoder conv + reparametrize + KLD, fused."""
    zb = jnp.dot(a_ref[...], w_ref[...], preferred_element_type=jnp.float32)
    zb = zb + b_ref[...]
    nh = z_ref.shape[-1]
    z_mean = zb[:, :nh]
    z_logstd = zb[:, nh:]
    z_std = jnp.exp(0.5 * z_logstd)
    z_ref[...] = z_mean + z_std * eps_ref[...]
    # KLD = -0.5 * sum(1 + logstd - mean^2 - exp(logstd))
    kld_terms = 1.0 + z_logstd - z_mean * z_mean - z_std * z_std
    row = jnp.sum(kld_terms, axis=1, keepdims=True)
    kld_ref[...] = -0.5 * jnp.sum(row, axis=0, keepdims=True)


def decode_head_kernel(a_ref, w_ref, b_ref, x_ref, invvar_ref, dec_ref, recon_ref):
    """Final 1x1 decoder conv + channel-weighted MSE reconstruction loss, fused.
    batch_mask is None in this setup -> mask of ones (no multiplication needed)."""
    dec = jnp.dot(a_ref[...], w_ref[...], preferred_element_type=jnp.float32)
    dec = dec + b_ref[...]
    dec_ref[...] = dec
    diff = dec - x_ref[...]
    row = jnp.sum(diff * diff * invvar_ref[...], axis=1, keepdims=True)
    recon_ref[...] = jnp.sum(row, axis=0, keepdims=True)


# ------------------------------ Pallas wrappers ------------------------------
def _zero_index_map(nd):
    return lambda i: (0,) * nd


def _full_spec(shape):
    return pl.BlockSpec(tuple(shape), _zero_index_map(len(shape)))


def pallas_full_call(kernel, out_shape, *inputs):
    """Single-block call: every operand fits in VMEM (largest ~0.3 MiB), so
    grid=(1,) minimizes launch count (the dominant cost for this tiny net)."""
    multi = isinstance(out_shape, (tuple, list))
    shapes = tuple(out_shape) if multi else (out_shape,)
    out_specs = tuple(_full_spec(s.shape) for s in shapes)
    return pl.pallas_call(
        kernel,
        out_shape=tuple(shapes) if multi else shapes[0],
        grid=(1,),
        in_specs=[_full_spec(x.shape) for x in inputs],
        out_specs=out_specs if multi else out_specs[0],
        compiler_params=pltpu.CompilerParams(dimension_semantics=("arbitrary",)),
    )(*inputs)


def conv_gemm(patches, w2d, bias, relu):
    M, _ = patches.shape
    cout = w2d.shape[1]
    return pallas_full_call(
        functools.partial(gemm_bias_kernel, relu=relu),
        jax.ShapeDtypeStruct((M, cout), jnp.float32),
        patches.astype(jnp.bfloat16), w2d.astype(jnp.bfloat16),
        bias.reshape(1, cout))


def conv_bn_gemm(patches, w2d, bias, gamma, beta, relu, residual=None):
    M, _ = patches.shape
    cout = w2d.shape[1]
    a = patches.astype(jnp.bfloat16)
    w = w2d.astype(jnp.bfloat16)
    b = bias.reshape(1, cout)
    g = gamma.reshape(1, cout)
    bt = beta.reshape(1, cout)
    out = jax.ShapeDtypeStruct((M, cout), jnp.float32)
    if residual is None:
        return pallas_full_call(
            functools.partial(gemm_bias_bn_kernel, relu=relu), out, a, w, b, g, bt)
    return pallas_full_call(gemm_bias_bn_add_kernel, out, a, w, b, g, bt, residual)


# ------------------------------- conv building -------------------------------
def im2col(x, kh, kw, stride, pad):
    """x: (N,H,W,C) -> patches (N*oh*ow, kh*kw*C), column order (kh, kw, C).
    Kept in XLA (tiny tensors; it fuses into a few slices/concat)."""
    N, H, W, C = x.shape
    xp = jnp.pad(x, ((0, 0), (pad, pad), (pad, pad), (0, 0)))
    oh = (H + 2 * pad - kh) // stride + 1
    ow = (W + 2 * pad - kw) // stride + 1
    cols = []
    for i in range(kh):
        for j in range(kw):
            cols.append(xp[:, i:i + stride * oh:stride, j:j + stride * ow:stride, :])
    patches = jnp.concatenate(cols, axis=-1)
    return patches.reshape(N * oh * ow, kh * kw * C), (N, oh, ow)


def conv2d(x, w_hwio, b, stride=1, pad=0, *, gamma=None, beta=None,
           relu=False, residual=None):
    """Conv2d(+BN+ReLU+residual) via a single fused Pallas GEMM."""
    kh, kw, cin, cout = w_hwio.shape
    patches, (N, oh, ow) = im2col(x, kh, kw, stride, pad)
    w2d = w_hwio.reshape(kh * kw * cin, cout)
    if gamma is None:
        y = conv_gemm(patches, w2d, b, relu)
    else:
        res2d = None if residual is None else residual.reshape(-1, cout)
        y = conv_bn_gemm(patches, w2d, b, gamma, beta, relu, res2d)
    return y.reshape(N, oh, ow, cout)


# ConvTranspose2d(k=4, stride=2, pad=1): out[2m+r, 2q+c] only depends on a 2x2
# input neighbourhood per phase (r,c).  Tap map (phase, patch offset)->kernel
# index, derived from ky = oy - 2*iy + 1:
_CT_TAPS = {(0, 0): 3, (0, 1): 1, (1, 1): 2, (1, 2): 0}


def build_subpixel_weight(w_t):
    """w_t: (4,4,Cin,Cout) transposed-conv kernel (ky,kx,ci,co) ->
    (9*Cin, 4*Cout) phase weight matrix matching 3x3 im2col patches."""
    cin, cout = w_t.shape[2], w_t.shape[3]
    wp = jnp.zeros((3, 3, cin, 2, 2, cout), w_t.dtype)
    for (r, dy), ky in _CT_TAPS.items():
        for (c, dx), kx in _CT_TAPS.items():
            wp = wp.at[dy, dx, :, r, c, :].set(w_t[ky, kx])
    return wp.reshape(9 * cin, 4 * cout)


def conv_transpose2d_s2(x, w_t, b, relu):
    """Sub-pixel ConvTranspose2d(4, stride=2, padding=1): one stride-1 GEMM
    over 3x3 patches produces all 4 output phases (lane width 4*Cout), then an
    XLA pixel-shuffle interleaves them.  No zero-dilated input."""
    N, H, W, cin = x.shape
    cout = w_t.shape[-1]
    xp = jnp.pad(x, ((0, 0), (1, 1), (1, 1), (0, 0)))
    cols = []
    for dy in range(3):
        for dx in range(3):
            cols.append(xp[:, dy:dy + H, dx:dx + W, :])
    patches = jnp.concatenate(cols, axis=-1).reshape(N * H * W, 9 * cin)
    wp = build_subpixel_weight(w_t)
    y = conv_gemm(patches, wp, jnp.tile(b, 4), relu)          # (N*H*W, 4*Cout)
    y = y.reshape(N, H, W, 2, 2, cout)
    y = y.transpose(0, 1, 3, 2, 4, 5).reshape(N, 2 * H, 2 * W, cout)
    return y


# ------------------------------ parameter init -------------------------------
def init_params(key):
    nh, ni, nrh = NUM_HIDDENS, NUM_INPUTS, NUM_RES_HIDDENS
    conv_specs = {
        "e0": (1, 1, ni, nh // 2),
        "e1": (4, 4, nh // 2, nh // 2),
        "e2": (4, 4, nh // 2, nh),
        "e3": (4, 4, nh, nh),
        "e4": (3, 3, nh, nh),
        "e5": (1, 1, nh, 2 * nh),
        # decoder transposed-conv kernels stored as (ky, kx, cin, cout)
        "d0": (4, 4, nh, nh // 2),
        "d1": (4, 4, nh // 2, nh // 4),
        "d2": (4, 4, nh // 4, nh // 4),
        "d3": (1, 1, nh // 4, ni),
    }
    for i in range(NUM_RES_LAYERS):
        conv_specs[f"r{i}a"] = (3, 3, nh, nrh)
        conv_specs[f"r{i}b"] = (1, 1, nrh, nh)

    bn_specs = {"bn1": nh // 2, "bn2": nh, "bn3": nh, "bn4": nh}
    for i in range(NUM_RES_LAYERS):
        bn_specs[f"r{i}_bn1"] = nrh
        bn_specs[f"r{i}_bn2"] = nh

    params = {}
    keys = jax.random.split(key, 2 * (len(conv_specs) + len(bn_specs)))
    it = iter(range(len(keys)))
    for name, shp in conv_specs.items():
        params[name + "_w"] = 0.05 * jax.random.normal(keys[next(it)], shp, jnp.float32)
        params[name + "_b"] = 0.01 * jax.random.normal(keys[next(it)], (shp[-1],), jnp.float32)
    for name, c in bn_specs.items():
        params[name + "_g"] = 1.0 + 0.05 * jax.random.normal(keys[next(it)], (c,), jnp.float32)
        params[name + "_b"] = 0.01 * jax.random.normal(keys[next(it)], (c,), jnp.float32)
    return params


# --------------------------------- model ------------------------------------
def encoder(p, x):
    x = conv2d(x, p["e0_w"], p["e0_b"])                                    # 1x1
    x = conv2d(x, p["e1_w"], p["e1_b"], stride=2, pad=1,
               gamma=p["bn1_g"], beta=p["bn1_b"], relu=True)
    x = conv2d(x, p["e2_w"], p["e2_b"], stride=2, pad=1,
               gamma=p["bn2_g"], beta=p["bn2_b"], relu=True)
    x = conv2d(x, p["e3_w"], p["e3_b"], stride=2, pad=1,
               gamma=p["bn3_g"], beta=p["bn3_b"], relu=True)
    x = conv2d(x, p["e4_w"], p["e4_b"], stride=1, pad=1,
               gamma=p["bn4_g"], beta=p["bn4_b"], relu=False)
    for i in range(NUM_RES_LAYERS):
        # leading ReLU of the residual branch fuses with im2col in XLA.
        h = jnp.maximum(x, 0.0)
        h = conv2d(h, p[f"r{i}a_w"], p[f"r{i}a_b"], stride=1, pad=1,
                   gamma=p[f"r{i}_bn1_g"], beta=p[f"r{i}_bn1_b"], relu=True)
        x = conv2d(h, p[f"r{i}b_w"], p[f"r{i}b_b"],
                   gamma=p[f"r{i}_bn2_g"], beta=p[f"r{i}_bn2_b"], relu=False,
                   residual=x)
    return x


def encode_head(p, x, eps):
    """Final 1x1 conv to 2*nh channels + reparametrize + KLD in one kernel."""
    N, H, W, C = x.shape
    nh = NUM_HIDDENS
    patches = x.reshape(N * H * W, C)
    w2d = p["e5_w"].reshape(C, 2 * nh)
    z, kld = pallas_full_call(
        encode_head_kernel,
        (jax.ShapeDtypeStruct((N * H * W, nh), jnp.float32),
         jax.ShapeDtypeStruct((1, 1), jnp.float32)),
        patches.astype(jnp.bfloat16), w2d.astype(jnp.bfloat16),
        p["e5_b"].reshape(1, 2 * nh), eps.reshape(N * H * W, nh))
    return z.reshape(N, H, W, nh), kld[0, 0]


def decoder_body(p, z):
    x = conv_transpose2d_s2(z, p["d0_w"], p["d0_b"], relu=True)
    x = conv_transpose2d_s2(x, p["d1_w"], p["d1_b"], relu=True)
    x = conv_transpose2d_s2(x, p["d2_w"], p["d2_b"], relu=True)
    return x


def decode_head(p, x, inputs_nhwc):
    """Final 1x1 conv + channel-weighted MSE reconstruction loss in one kernel."""
    N, H, W, C = x.shape
    ni = NUM_INPUTS
    patches = x.reshape(N * H * W, C)
    w2d = p["d3_w"].reshape(C, ni)
    inp_flat = inputs_nhwc.reshape(N * H * W, ni)
    invvar = (1.0 / CHANNEL_VAR).reshape(1, ni)
    dec, recon = pallas_full_call(
        decode_head_kernel,
        (jax.ShapeDtypeStruct((N * H * W, ni), jnp.float32),
         jax.ShapeDtypeStruct((1, 1), jnp.float32)),
        patches.astype(jnp.bfloat16), w2d.astype(jnp.bfloat16),
        p["d3_b"].reshape(1, ni), inp_flat, invvar)
    return dec.reshape(N, H, W, ni), recon[0, 0]


def vae_forward(params, inputs_nchw, rng_key):
    # NCHW (PyTorch convention) -> NHWC for the kernels.
    x = jnp.transpose(inputs_nchw, (0, 2, 3, 1)).astype(jnp.float32)
    N, H, W, _ = x.shape

    h_enc = encoder(params, x)
    eps = jax.random.normal(rng_key, (N, H // 8, W // 8, NUM_HIDDENS), jnp.float32)
    z, kld = encode_head(params, h_enc, eps)

    h_dec = decoder_body(params, z)
    decoded, recon_loss = decode_head(params, h_dec, x)

    total_loss = WEIGHT_RECON * recon_loss + WEIGHT_KLD * kld
    # TODO(synk): time_matching_mat branch not exercised (None in this setup).
    time_matching_loss = jnp.zeros((), jnp.float32)

    losses = {
        # The reference module divides by a hardcoded 32768 regardless of input size.
        "recon_loss": recon_loss / (N * 32768),
        "KLD": kld,
        "time_matching_loss": time_matching_loss,
        "total_loss": total_loss,
        "perplexity": jnp.zeros((), jnp.float32),
    }
    return jnp.transpose(decoded, (0, 3, 1, 2)), losses


# ---------------------------------- main -------------------------------------
if __name__ == "__main__":
    key = jax.random.PRNGKey(0)
    k_param, k_input, k_eps = jax.random.split(key, 3)

    params = init_params(k_param)
    # NCHW, 2 channels, 32x32 spatial (divisible by 8 for the stride-2 stages).
    x = jax.random.normal(k_input, (2, NUM_INPUTS, 32, 32), dtype=jnp.float32)

    fwd = jax.jit(vae_forward)
    decoded, losses = fwd(params, x, k_eps)
    jax.block_until_ready((decoded, losses["total_loss"]))

    print("KERNEL_OK")
</pallas_src>

<mosaic_0001>
module attributes {stable_mosaic.version = 11 : i64} {
  func.func @gemm_bias_kernel(%arg0: i32, %arg1: memref<2048x2xbf16, #tpu.memory_space<vmem>>, %arg2: memref<2x8xbf16, #tpu.memory_space<vmem>>, %arg3: memref<1x8xf32, #tpu.memory_space<vmem>>, %arg4: memref<2048x8xf32, #tpu.memory_space<vmem>>) attributes {dimension_semantics = [#tpu.dimension_semantics<arbitrary>], iteration_bounds = array<i64: 1>, scalar_prefetch = 0 : i64, scratch_operands = 0 : i64, tpu.core_type = #tpu.core_type<tc>, window_params = [{pipeline_mode = #tpu.pipeline_mode<synchronous>, transform_indices = @transform_0, window_bounds = array<i64: 2048, 2>}, {pipeline_mode = #tpu.pipeline_mode<synchronous>, transform_indices = @transform_1, window_bounds = array<i64: 2, 8>}, {pipeline_mode = #tpu.pipeline_mode<synchronous>, transform_indices = @transform_2, window_bounds = array<i64: 1, 8>}, {pipeline_mode = #tpu.pipeline_mode<synchronous>, transform_indices = @transform_3, window_bounds = array<i64: 2048, 8>}]} {
    %c0 = arith.constant 0 : index
    %c0_0 = arith.constant 0 : index
    %0 = vector.load %arg1[%c0, %c0_0] : memref<2048x2xbf16, #tpu.memory_space<vmem>>, vector<2048x2xbf16>
    %c0_1 = arith.constant 0 : index
    %c0_2 = arith.constant 0 : index
    %1 = vector.load %arg2[%c0_1, %c0_2] : memref<2x8xbf16, #tpu.memory_space<vmem>>, vector<2x8xbf16>
    %cst = arith.constant dense<0.000000e+00> : vector<2048x8xf32>
    %2 = tpu.matmul %0, %1, %cst {dimension_numbers = #tpu.dot_dimension_numbers<[1], [0], [0], [1], [0, 0, 1, 1], [], []>} : vector<2048x2xbf16>, vector<2x8xbf16>, vector<2048x8xf32> -> vector<2048x8xf32>
    %c0_3 = arith.constant 0 : index
    %c0_4 = arith.constant 0 : index
    %3 = vector.load %arg3[%c0_3, %c0_4] : memref<1x8xf32, #tpu.memory_space<vmem>>, vector<1x8xf32>
    %4 = vector.broadcast %3 : vector<1x8xf32> to vector<2048x8xf32>
    %5 = arith.addf %2, %4 : vector<2048x8xf32>
    %c0_5 = arith.constant 0 : index
    %c0_6 = arith.constant 0 : index
    %6 = vector.load %arg4[%c0_5, %c0_6] : memref<2048x8xf32, #tpu.memory_space<vmem>>, vector<2048x8xf32>
    tpu.vector_store %arg4[%c0_5, %c0_6], %5 {strides = array<i32>} : memref<2048x8xf32, #tpu.memory_space<vmem>>, vector<2048x8xf32>,
    return
  }
  func.func @transform_0(%arg0: i32) -> (i32, i32) {
    %c0_i32 = arith.constant 0 : i32
    %c0_i32_0 = arith.constant 0 : i32
    %c0_i32_1 = arith.constant 0 : i32
    return %c0_i32, %c0_i32_0 : i32, i32
  }
  func.func @transform_1(%arg0: i32) -> (i32, i32) {
    %c0_i32 = arith.constant 0 : i32
    %c0_i32_0 = arith.constant 0 : i32
    %c0_i32_1 = arith.constant 0 : i32
    return %c0_i32, %c0_i32_0 : i32, i32
  }
  func.func @transform_2(%arg0: i32) -> (i32, i32) {
    %c0_i32 = arith.constant 0 : i32
    %c0_i32_0 = arith.constant 0 : i32
    %c0_i32_1 = arith.constant 0 : i32
    return %c0_i32, %c0_i32_0 : i32, i32
  }
  func.func @transform_3(%arg0: i32) -> (i32, i32) {
    %c0_i32 = arith.constant 0 : i32
    %c0_i32_0 = arith.constant 0 : i32
    %c0_i32_1 = arith.constant 0 : i32
    return %c0_i32, %c0_i32_0 : i32, i32
  }
}

module attributes {stable_mosaic.version = 11 : i64} {
  func.func @gemm_bias_bn_kernel(%arg0: i32, %arg1: memref<512x128xbf16, #tpu.memory_space<vmem>>, %arg2: memref<128x8xbf16, #tpu.memory_space<vmem>>, %arg3: memref<1x8xf32, #tpu.memory_space<vmem>>, %arg4: memref<1x8xf32, #tpu.memory_space<vmem>>, %arg5: memref<1x8xf32, #tpu.memory_space<vmem>>, %arg6: memref<512x8xf32, #tpu.memory_space<vmem>>) attributes {dimension_semantics = [#tpu.dimension_semantics<arbitrary>], iteration_bounds = array<i64: 1>, scalar_prefetch = 0 : i64, scratch_operands = 0 : i64, tpu.core_type = #tpu.core_type<tc>, window_params = [{pipeline_mode = #tpu.pipeline_mode<synchronous>, transform_indices = @transform_0, window_bounds = array<i64: 512, 128>}, {pipeline_mode = #tpu.pipeline_mode<synchronous>, transform_indices = @transform_1, window_bounds = array<i64: 128, 8>}, {pipeline_mode = #tpu.pipeline_mode<synchronous>, transform_indices = @transform_2, window_bounds = array<i64: 1, 8>}, {pipeline_mode = #tpu.pipeline_mode<synchronous>, transform_indices = @transform_3, window_bounds = array<i64: 1, 8>}, {pipeline_mode = #tpu.pipeline_mode<synchronous>, transform_indices = @transform_4, window_bounds = array<i64: 1, 8>}, {pipeline_mode = #tpu.pipeline_mode<synchronous>, transform_indices = @transform_5, window_bounds = array<i64: 512, 8>}]} {
    %c0 = arith.constant 0 : index
    %c0_0 = arith.constant 0 : index
    %0 = vector.load %arg1[%c0, %c0_0] : memref<512x128xbf16, #tpu.memory_space<vmem>>, vector<512x128xbf16>
    %c0_1 = arith.constant 0 : index
    %c0_2 = arith.constant 0 : index
    %1 = vector.load %arg2[%c0_1, %c0_2] : memref<128x8xbf16, #tpu.memory_space<vmem>>, vector<128x8xbf16>
    %cst = arith.constant dense<0.000000e+00> : vector<512x8xf32>
    %2 = tpu.matmul %0, %1, %cst {dimension_numbers = #tpu.dot_dimension_numbers<[1], [0], [0], [1], [0, 0, 1, 1], [], []>} : vector<512x128xbf16>, vector<128x8xbf16>, vector<512x8xf32> -> vector<512x8xf32>
    %c0_3 = arith.constant 0 : index
    %c0_4 = arith.constant 0 : index
    %3 = vector.load %arg3[%c0_3, %c0_4] : memref<1x8xf32, #tpu.memory_space<vmem>>, vector<1x8xf32>
    %4 = vector.broadcast %3 : vector<1x8xf32> to vector<512x8xf32>
    %5 = arith.addf %2, %4 : vector<512x8xf32>
    %cst_5 = arith.constant dense<0.000000e+00> : vector<8xf32>
    %6 = vector.multi_reduction <add>, %5, %cst_5 [0] : vector<512x8xf32> to vector<8xf32>
    %7 = vector.shape_cast %6 : vector<8xf32> to vector<1x8xf32>
    %cst_6 = arith.constant 5.120000e+02 : f32
    %8 = vector.broadcast %cst_6 : f32 to vector<1x8xf32>
    %9 = arith.divf %7, %8 : vector<1x8xf32>
    %10 = vector.broadcast %9 : vector<1x8xf32> to vector<512x8xf32>
    %11 = arith.subf %5, %10 : vector<512x8xf32>
    %12 = arith.mulf %11, %11 : vector<512x8xf32>
    %cst_7 = arith.constant dense<0.000000e+00> : vector<8xf32>
    %13 = vector.multi_reduction <add>, %12, %cst_7 [0] : vector<512x8xf32> to vector<8xf32>
    %14 = vector.shape_cast %13 : vector<8xf32> to vector<1x8xf32>
    %cst_8 = arith.constant 5.120000e+02 : f32
    %15 = vector.broadcast %cst_8 : f32 to vector<1x8xf32>
    %16 = arith.divf %14, %15 : vector<1x8xf32>
    %17 = vector.broadcast %9 : vector<1x8xf32> to vector<512x8xf32>
    %18 = arith.subf %5, %17 : vector<512x8xf32>
    %c0_9 = arith.constant 0 : index
    %c0_10 = arith.constant 0 : index
    %19 = vector.load %arg4[%c0_9, %c0_10] : memref<1x8xf32, #tpu.memory_space<vmem>>, vector<1x8xf32>
    %cst_11 = arith.constant 9.99999974E-6 : f32
    %20 = vector.broadcast %cst_11 : f32 to vector<1x8xf32>
    %21 = arith.addf %16, %20 : vector<1x8xf32>
    %22 = math.rsqrt %21 : vector<1x8xf32>
    %23 = arith.mulf %19, %22 : vector<1x8xf32>
    %24 = vector.broadcast %23 : vector<1x8xf32> to vector<512x8xf32>
    %25 = arith.mulf %18, %24 : vector<512x8xf32>
    %c0_12 = arith.constant 0 : index
    %c0_13 = arith.constant 0 : index
    %26 = vector.load %arg5[%c0_12, %c0_13] : memref<1x8xf32, #tpu.memory_space<vmem>>, vector<1x8xf32>
    %27 = vector.broadcast %26 : vector<1x8xf32> to vector<512x8xf32>
    %28 = arith.addf %25, %27 : vector<512x8xf32>
    %cst_14 = arith.constant 0.000000e+00 : f32
    %29 = vector.broadcast %cst_14 : f32 to vector<512x8xf32>
    %30 = arith.maximumf %28, %29 : vector<512x8xf32>
    %c0_15 = arith.constant 0 : index
    %c0_16 = arith.constant 0 : index
    %31 = vector.load %arg6[%c0_15, %c0_16] : memref<512x8xf32, #tpu.memory_space<vmem>>, vector<512x8xf32>
    tpu.vector_store %arg6[%c0_15, %c0_16], %30 {strides = array<i32>} : memref<512x8xf32, #tpu.memory_space<vmem>>, vector<512x8xf32>,
    return
  }
  func.func @transform_0(%arg0: i32) -> (i32, i32) {
    %c0_i32 = arith.constant 0 : i32
    %c0_i32_0 = arith.constant 0 : i32
    %c0_i32_1 = arith.constant 0 : i32
    return %c0_i32, %c0_i32_0 : i32, i32
  }
  func.func @transform_1(%arg0: i32) -> (i32, i32) {
    %c0_i32 = arith.constant 0 : i32
    %c0_i32_0 = arith.constant 0 : i32
    %c0_i32_1 = arith.constant 0 : i32
    return %c0_i32, %c0_i32_0 : i32, i32
  }
  func.func @transform_2(%arg0: i32) -> (i32, i32) {
    %c0_i32 = arith.constant 0 : i32
    %c0_i32_0 = arith.constant 0 : i32
    %c0_i32_1 = arith.constant 0 : i32
    return %c0_i32, %c0_i32_0 : i32, i32
  }
  func.func @transform_3(%arg0: i32) -> (i32, i32) {
    %c0_i32 = arith.constant 0 : i32
    %c0_i32_0 = arith.constant 0 : i32
    %c0_i32_1 = arith.constant 0 : i32
    return %c0_i32, %c0_i32_0 : i32, i32
  }
  func.func @transform_4(%arg0: i32) -> (i32, i32) {
    %c0_i32 = arith.constant 0 : i32
    %c0_i32_0 = arith.constant 0 : i32
    %c0_i32_1 = arith.constant 0 : i32
    return %c0_i32, %c0_i32_0 : i32, i32
  }
  func.func @transform_5(%arg0: i32) -> (i32, i32) {
    %c0_i32 = arith.constant 0 : i32
    %c0_i32_0 = arith.constant 0 : i32
    %c0_i32_1 = arith.constant 0 : i32
    return %c0_i32, %c0_i32_0 : i32, i32
  }
}

module attributes {stable_mosaic.version = 11 : i64} {
  func.func @gemm_bias_bn_kernel(%arg0: i32, %arg1: memref<128x128xbf16, #tpu.memory_space<vmem>>, %arg2: memref<128x16xbf16, #tpu.memory_space<vmem>>, %arg3: memref<1x16xf32, #tpu.memory_space<vmem>>, %arg4: memref<1x16xf32, #tpu.memory_space<vmem>>, %arg5: memref<1x16xf32, #tpu.memory_space<vmem>>, %arg6: memref<128x16xf32, #tpu.memory_space<vmem>>) attributes {dimension_semantics = [#tpu.dimension_semantics<arbitrary>], iteration_bounds = array<i64: 1>, scalar_prefetch = 0 : i64, scratch_operands = 0 : i64, tpu.core_type = #tpu.core_type<tc>, window_params = [{pipeline_mode = #tpu.pipeline_mode<synchronous>, transform_indices = @transform_0, window_bounds = array<i64: 128, 128>}, {pipeline_mode = #tpu.pipeline_mode<synchronous>, transform_indices = @transform_1, window_bounds = array<i64: 128, 16>}, {pipeline_mode = #tpu.pipeline_mode<synchronous>, transform_indices = @transform_2, window_bounds = array<i64: 1, 16>}, {pipeline_mode = #tpu.pipeline_mode<synchronous>, transform_indices = @transform_3, window_bounds = array<i64: 1, 16>}, {pipeline_mode = #tpu.pipeline_mode<synchronous>, transform_indices = @transform_4, window_bounds = array<i64: 1, 16>}, {pipeline_mode = #tpu.pipeline_mode<synchronous>, transform_indices = @transform_5, window_bounds = array<i64: 128, 16>}]} {
    %c0 = arith.constant 0 : index
    %c0_0 = arith.constant 0 : index
    %0 = vector.load %arg1[%c0, %c0_0] : memref<128x128xbf16, #tpu.memory_space<vmem>>, vector<128x128xbf16>
    %c0_1 = arith.constant 0 : index
    %c0_2 = arith.constant 0 : index
    %1 = vector.load %arg2[%c0_1, %c0_2] : memref<128x16xbf16, #tpu.memory_space<vmem>>, vector<128x16xbf16>
    %cst = arith.constant dense<0.000000e+00> : vector<128x16xf32>
    %2 = tpu.matmul %0, %1, %cst {dimension_numbers = #tpu.dot_dimension_numbers<[1], [0], [0], [1], [0, 0, 1, 1], [], []>} : vector<128x128xbf16>, vector<128x16xbf16>, vector<128x16xf32> -> vector<128x16xf32>
    %c0_3 = arith.constant 0 : index
    %c0_4 = arith.constant 0 : index
    %3 = vector.load %arg3[%c0_3, %c0_4] : memref<1x16xf32, #tpu.memory_space<vmem>>, vector<1x16xf32>
    %4 = vector.broadcast %3 : vector<1x16xf32> to vector<128x16xf32>
    %5 = arith.addf %2, %4 : vector<128x16xf32>
    %cst_5 = arith.constant dense<0.000000e+00> : vector<16xf32>
    %6 = vector.multi_reduction <add>, %5, %cst_5 [0] : vector<128x16xf32> to vector<16xf32>
    %7 = vector.shape_cast %6 : vector<16xf32> to vector<1x16xf32>
    %cst_6 = arith.constant 1.280000e+02 : f32
    %8 = vector.broadcast %cst_6 : f32 to vector<1x16xf32>
    %9 = arith.divf %7, %8 : vector<1x16xf32>
    %10 = vector.broadcast %9 : vector<1x16xf32> to vector<128x16xf32>
    %11 = arith.subf %5, %10 : vector<128x16xf32>
    %12 = arith.mulf %11, %11 : vector<128x16xf32>
    %cst_7 = arith.constant dense<0.000000e+00> : vector<16xf32>
    %13 = vector.multi_reduction <add>, %12, %cst_7 [0] : vector<128x16xf32> to vector<16xf32>
    %14 = vector.shape_cast %13 : vector<16xf32> to vector<1x16xf32>
    %cst_8 = arith.constant 1.280000e+02 : f32
    %15 = vector.broadcast %cst_8 : f32 to vector<1x16xf32>
    %16 = arith.divf %14, %15 : vector<1x16xf32>
    %17 = vector.broadcast %9 : vector<1x16xf32> to vector<128x16xf32>
    %18 = arith.subf %5, %17 : vector<128x16xf32>
    %c0_9 = arith.constant 0 : index
    %c0_10 = arith.constant 0 : index
    %19 = vector.load %arg4[%c0_9, %c0_10] : memref<1x16xf32, #tpu.memory_space<vmem>>, vector<1x16xf32>
    %cst_11 = arith.constant 9.99999974E-6 : f32
    %20 = vector.broadcast %cst_11 : f32 to vector<1x16xf32>
    %21 = arith.addf %16, %20 : vector<1x16xf32>
    %22 = math.rsqrt %21 : vector<1x16xf32>
    %23 = arith.mulf %19, %22 : vector<1x16xf32>
    %24 = vector.broadcast %23 : vector<1x16xf32> to vector<128x16xf32>
    %25 = arith.mulf %18, %24 : vector<128x16xf32>
    %c0_12 = arith.constant 0 : index
    %c0_13 = arith.constant 0 : index
    %26 = vector.load %arg5[%c0_12, %c0_13] : memref<1x16xf32, #tpu.memory_space<vmem>>, vector<1x16xf32>
    %27 = vector.broadcast %26 : vector<1x16xf32> to vector<128x16xf32>
    %28 = arith.addf %25, %27 : vector<128x16xf32>
    %cst_14 = arith.constant 0.000000e+00 : f32
    %29 = vector.broadcast %cst_14 : f32 to vector<128x16xf32>
    %30 = arith.maximumf %28, %29 : vector<128x16xf32>
    %c0_15 = arith.constant 0 : index
    %c0_16 = arith.constant 0 : index
    %31 = vector.load %arg6[%c0_15, %c0_16] : memref<128x16xf32, #tpu.memory_space<vmem>>, vector<128x16xf32>
    tpu.vector_store %arg6[%c0_15, %c0_16], %30 {strides = array<i32>} : memref<128x16xf32, #tpu.memory_space<vmem>>, vector<128x16xf32>,
    return
  }
  func.func @transform_0(%arg0: i32) -> (i32, i32) {
    %c0_i32 = arith.constant 0 : i32
    %c0_i32_0 = arith.constant 0 : i32
    %c0_i32_1 = arith.constant 0 : i32
    return %c0_i32, %c0_i32_0 : i32, i32
  }
  func.func @transform_1(%arg0: i32) -> (i32, i32) {
    %c0_i32 = arith.constant 0 : i32
    %c0_i32_0 = arith.constant 0 : i32
    %c0_i32_1 = arith.constant 0 : i32
    return %c0_i32, %c0_i32_0 : i32, i32
  }
  func.func @transform_2(%arg0: i32) -> (i32, i32) {
    %c0_i32 = arith.constant 0 : i32
    %c0_i32_0 = arith.constant 0 : i32
    %c0_i32_1 = arith.constant 0 : i32
    return %c0_i32, %c0_i32_0 : i32, i32
  }
  func.func @transform_3(%arg0: i32) -> (i32, i32) {
    %c0_i32 = arith.constant 0 : i32
    %c0_i32_0 = arith.constant 0 : i32
    %c0_i32_1 = arith.constant 0 : i32
    return %c0_i32, %c0_i32_0 : i32, i32
  }
  func.func @transform_4(%arg0: i32) -> (i32, i32) {
    %c0_i32 = arith.constant 0 : i32
    %c0_i32_0 = arith.constant 0 : i32
    %c0_i32_1 = arith.constant 0 : i32
    return %c0_i32, %c0_i32_0 : i32, i32
  }
  func.func @transform_5(%arg0: i32) -> (i32, i32) {
    %c0_i32 = arith.constant 0 : i32
    %c0_i32_0 = arith.constant 0 : i32
    %c0_i32_1 = arith.constant 0 : i32
    return %c0_i32, %c0_i32_0 : i32, i32
  }
}

module attributes {stable_mosaic.version = 11 : i64} {
  func.func @gemm_bias_bn_kernel(%arg0: i32, %arg1: memref<32x256xbf16, #tpu.memory_space<vmem>>, %arg2: memref<256x16xbf16, #tpu.memory_space<vmem>>, %arg3: memref<1x16xf32, #tpu.memory_space<vmem>>, %arg4: memref<1x16xf32, #tpu.memory_space<vmem>>, %arg5: memref<1x16xf32, #tpu.memory_space<vmem>>, %arg6: memref<32x16xf32, #tpu.memory_space<vmem>>) attributes {dimension_semantics = [#tpu.dimension_semantics<arbitrary>], iteration_bounds = array<i64: 1>, scalar_prefetch = 0 : i64, scratch_operands = 0 : i64, tpu.core_type = #tpu.core_type<tc>, window_params = [{pipeline_mode = #tpu.pipeline_mode<synchronous>, transform_indices = @transform_0, window_bounds = array<i64: 32, 256>}, {pipeline_mode = #tpu.pipeline_mode<synchronous>, transform_indices = @transform_1, window_bounds = array<i64: 256, 16>}, {pipeline_mode = #tpu.pipeline_mode<synchronous>, transform_indices = @transform_2, window_bounds = array<i64: 1, 16>}, {pipeline_mode = #tpu.pipeline_mode<synchronous>, transform_indices = @transform_3, window_bounds = array<i64: 1, 16>}, {pipeline_mode = #tpu.pipeline_mode<synchronous>, transform_indices = @transform_4, window_bounds = array<i64: 1, 16>}, {pipeline_mode = #tpu.pipeline_mode<synchronous>, transform_indices = @transform_5, window_bounds = array<i64: 32, 16>}]} {
    %c0 = arith.constant 0 : index
    %c0_0 = arith.constant 0 : index
    %0 = vector.load %arg1[%c0, %c0_0] : memref<32x256xbf16, #tpu.memory_space<vmem>>, vector<32x256xbf16>
    %c0_1 = arith.constant 0 : index
    %c0_2 = arith.constant 0 : index
    %1 = vector.load %arg2[%c0_1, %c0_2] : memref<256x16xbf16, #tpu.memory_space<vmem>>, vector<256x16xbf16>
    %cst = arith.constant dense<0.000000e+00> : vector<32x16xf32>
    %2 = tpu.matmul %0, %1, %cst {dimension_numbers = #tpu.dot_dimension_numbers<[1], [0], [0], [1], [0, 0, 1, 1], [], []>} : vector<32x256xbf16>, vector<256x16xbf16>, vector<32x16xf32> -> vector<32x16xf32>
    %c0_3 = arith.constant 0 : index
    %c0_4 = arith.constant 0 : index
    %3 = vector.load %arg3[%c0_3, %c0_4] : memref<1x16xf32, #tpu.memory_space<vmem>>, vector<1x16xf32>
    %4 = vector.broadcast %3 : vector<1x16xf32> to vector<32x16xf32>
    %5 = arith.addf %2, %4 : vector<32x16xf32>
    %cst_5 = arith.constant dense<0.000000e+00> : vector<16xf32>
    %6 = vector.multi_reduction <add>, %5, %cst_5 [0] : vector<32x16xf32> to vector<16xf32>
    %7 = vector.shape_cast %6 : vector<16xf32> to vector<1x16xf32>
    %cst_6 = arith.constant 3.200000e+01 : f32
    %8 = vector.broadcast %cst_6 : f32 to vector<1x16xf32>
    %9 = arith.divf %7, %8 : vector<1x16xf32>
    %10 = vector.broadcast %9 : vector<1x16xf32> to vector<32x16xf32>
    %11 = arith.subf %5, %10 : vector<32x16xf32>
    %12 = arith.mulf %11, %11 : vector<32x16xf32>
    %cst_7 = arith.constant dense<0.000000e+00> : vector<16xf32>
    %13 = vector.multi_reduction <add>, %12, %cst_7 [0] : vector<32x16xf32> to vector<16xf32>
    %14 = vector.shape_cast %13 : vector<16xf32> to vector<1x16xf32>
    %cst_8 = arith.constant 3.200000e+01 : f32
    %15 = vector.broadcast %cst_8 : f32 to vector<1x16xf32>
    %16 = arith.divf %14, %15 : vector<1x16xf32>
    %17 = vector.broadcast %9 : vector<1x16xf32> to vector<32x16xf32>
    %18 = arith.subf %5, %17 : vector<32x16xf32>
    %c0_9 = arith.constant 0 : index
    %c0_10 = arith.constant 0 : index
    %19 = vector.load %arg4[%c0_9, %c0_10] : memref<1x16xf32, #tpu.memory_space<vmem>>, vector<1x16xf32>
    %cst_11 = arith.constant 9.99999974E-6 : f32
    %20 = vector.broadcast %cst_11 : f32 to vector<1x16xf32>
    %21 = arith.addf %16, %20 : vector<1x16xf32>
    %22 = math.rsqrt %21 : vector<1x16xf32>
    %23 = arith.mulf %19, %22 : vector<1x16xf32>
    %24 = vector.broadcast %23 : vector<1x16xf32> to vector<32x16xf32>
    %25 = arith.mulf %18, %24 : vector<32x16xf32>
    %c0_12 = arith.constant 0 : index
    %c0_13 = arith.constant 0 : index
    %26 = vector.load %arg5[%c0_12, %c0_13] : memref<1x16xf32, #tpu.memory_space<vmem>>, vector<1x16xf32>
    %27 = vector.broadcast %26 : vector<1x16xf32> to vector<32x16xf32>
    %28 = arith.addf %25, %27 : vector<32x16xf32>
    %cst_14 = arith.constant 0.000000e+00 : f32
    %29 = vector.broadcast %cst_14 : f32 to vector<32x16xf32>
    %30 = arith.maximumf %28, %29 : vector<32x16xf32>
    %c0_15 = arith.constant 0 : index
    %c0_16 = arith.constant 0 : index
    %31 = vector.load %arg6[%c0_15, %c0_16] : memref<32x16xf32, #tpu.memory_space<vmem>>, vector<32x16xf32>
    tpu.vector_store %arg6[%c0_15, %c0_16], %30 {strides = array<i32>} : memref<32x16xf32, #tpu.memory_space<vmem>>, vector<32x16xf32>,
    return
  }
  func.func @transform_0(%arg0: i32) -> (i32, i32) {
    %c0_i32 = arith.constant 0 : i32
    %c0_i32_0 = arith.constant 0 : i32
    %c0_i32_1 = arith.constant 0 : i32
    return %c0_i32, %c0_i32_0 : i32, i32
  }
  func.func @transform_1(%arg0: i32) -> (i32, i32) {
    %c0_i32 = arith.constant 0 : i32
    %c0_i32_0 = arith.constant 0 : i32
    %c0_i32_1 = arith.constant 0 : i32
    return %c0_i32, %c0_i32_0 : i32, i32
  }
  func.func @transform_2(%arg0: i32) -> (i32, i32) {
    %c0_i32 = arith.constant 0 : i32
    %c0_i32_0 = arith.constant 0 : i32
    %c0_i32_1 = arith.constant 0 : i32
    return %c0_i32, %c0_i32_0 : i32, i32
  }
  func.func @transform_3(%arg0: i32) -> (i32, i32) {
    %c0_i32 = arith.constant 0 : i32
    %c0_i32_0 = arith.constant 0 : i32
    %c0_i32_1 = arith.constant 0 : i32
    return %c0_i32, %c0_i32_0 : i32, i32
  }
  func.func @transform_4(%arg0: i32) -> (i32, i32) {
    %c0_i32 = arith.constant 0 : i32
    %c0_i32_0 = arith.constant 0 : i32
    %c0_i32_1 = arith.constant 0 : i32
    return %c0_i32, %c0_i32_0 : i32, i32
  }
  func.func @transform_5(%arg0: i32) -> (i32, i32) {
    %c0_i32 = arith.constant 0 : i32
    %c0_i32_0 = arith.constant 0 : i32
    %c0_i32_1 = arith.constant 0 : i32
    return %c0_i32, %c0_i32_0 : i32, i32
  }
}

module attributes {stable_mosaic.version = 11 : i64} {
  func.func @gemm_bias_bn_kernel(%arg0: i32, %arg1: memref<32x144xbf16, #tpu.memory_space<vmem>>, %arg2: memref<144x16xbf16, #tpu.memory_space<vmem>>, %arg3: memref<1x16xf32, #tpu.memory_space<vmem>>, %arg4: memref<1x16xf32, #tpu.memory_space<vmem>>, %arg5: memref<1x16xf32, #tpu.memory_space<vmem>>, %arg6: memref<32x16xf32, #tpu.memory_space<vmem>>) attributes {dimension_semantics = [#tpu.dimension_semantics<arbitrary>], iteration_bounds = array<i64: 1>, scalar_prefetch = 0 : i64, scratch_operands = 0 : i64, tpu.core_type = #tpu.core_type<tc>, window_params = [{pipeline_mode = #tpu.pipeline_mode<synchronous>, transform_indices = @transform_0, window_bounds = array<i64: 32, 144>}, {pipeline_mode = #tpu.pipeline_mode<synchronous>, transform_indices = @transform_1, window_bounds = array<i64: 144, 16>}, {pipeline_mode = #tpu.pipeline_mode<synchronous>, transform_indices = @transform_2, window_bounds = array<i64: 1, 16>}, {pipeline_mode = #tpu.pipeline_mode<synchronous>, transform_indices = @transform_3, window_bounds = array<i64: 1, 16>}, {pipeline_mode = #tpu.pipeline_mode<synchronous>, transform_indices = @transform_4, window_bounds = array<i64: 1, 16>}, {pipeline_mode = #tpu.pipeline_mode<synchronous>, transform_indices = @transform_5, window_bounds = array<i64: 32, 16>}]} {
    %c0 = arith.constant 0 : index
    %c0_0 = arith.constant 0 : index
    %0 = vector.load %arg1[%c0, %c0_0] : memref<32x144xbf16, #tpu.memory_space<vmem>>, vector<32x144xbf16>
    %c0_1 = arith.constant 0 : index
    %c0_2 = arith.constant 0 : index
    %1 = vector.load %arg2[%c0_1, %c0_2] : memref<144x16xbf16, #tpu.memory_space<vmem>>, vector<144x16xbf16>
    %cst = arith.constant dense<0.000000e+00> : vector<32x16xf32>
    %2 = tpu.matmul %0, %1, %cst {dimension_numbers = #tpu.dot_dimension_numbers<[1], [0], [0], [1], [0, 0, 1, 1], [], []>} : vector<32x144xbf16>, vector<144x16xbf16>, vector<32x16xf32> -> vector<32x16xf32>
    %c0_3 = arith.constant 0 : index
    %c0_4 = arith.constant 0 : index
    %3 = vector.load %arg3[%c0_3, %c0_4] : memref<1x16xf32, #tpu.memory_space<vmem>>, vector<1x16xf32>
    %4 = vector.broadcast %3 : vector<1x16xf32> to vector<32x16xf32>
    %5 = arith.addf %2, %4 : vector<32x16xf32>
    %cst_5 = arith.constant dense<0.000000e+00> : vector<16xf32>
    %6 = vector.multi_reduction <add>, %5, %cst_5 [0] : vector<32x16xf32> to vector<16xf32>
    %7 = vector.shape_cast %6 : vector<16xf32> to vector<1x16xf32>
    %cst_6 = arith.constant 3.200000e+01 : f32
    %8 = vector.broadcast %cst_6 : f32 to vector<1x16xf32>
    %9 = arith.divf %7, %8 : vector<1x16xf32>
    %10 = vector.broadcast %9 : vector<1x16xf32> to vector<32x16xf32>
    %11 = arith.subf %5, %10 : vector<32x16xf32>
    %12 = arith.mulf %11, %11 : vector<32x16xf32>
    %cst_7 = arith.constant dense<0.000000e+00> : vector<16xf32>
    %13 = vector.multi_reduction <add>, %12, %cst_7 [0] : vector<32x16xf32> to vector<16xf32>
    %14 = vector.shape_cast %13 : vector<16xf32> to vector<1x16xf32>
    %cst_8 = arith.constant 3.200000e+01 : f32
    %15 = vector.broadcast %cst_8 : f32 to vector<1x16xf32>
    %16 = arith.divf %14, %15 : vector<1x16xf32>
    %17 = vector.broadcast %9 : vector<1x16xf32> to vector<32x16xf32>
    %18 = arith.subf %5, %17 : vector<32x16xf32>
    %c0_9 = arith.constant 0 : index
    %c0_10 = arith.constant 0 : index
    %19 = vector.load %arg4[%c0_9, %c0_10] : memref<1x16xf32, #tpu.memory_space<vmem>>, vector<1x16xf32>
    %cst_11 = arith.constant 9.99999974E-6 : f32
    %20 = vector.broadcast %cst_11 : f32 to vector<1x16xf32>
    %21 = arith.addf %16, %20 : vector<1x16xf32>
    %22 = math.rsqrt %21 : vector<1x16xf32>
    %23 = arith.mulf %19, %22 : vector<1x16xf32>
    %24 = vector.broadcast %23 : vector<1x16xf32> to vector<32x16xf32>
    %25 = arith.mulf %18, %24 : vector<32x16xf32>
    %c0_12 = arith.constant 0 : index
    %c0_13 = arith.constant 0 : index
    %26 = vector.load %arg5[%c0_12, %c0_13] : memref<1x16xf32, #tpu.memory_space<vmem>>, vector<1x16xf32>
    %27 = vector.broadcast %26 : vector<1x16xf32> to vector<32x16xf32>
    %28 = arith.addf %25, %27 : vector<32x16xf32>
    %c0_14 = arith.constant 0 : index
    %c0_15 = arith.constant 0 : index
    %29 = vector.load %arg6[%c0_14, %c0_15] : memref<32x16xf32, #tpu.memory_space<vmem>>, vector<32x16xf32>
    tpu.vector_store %arg6[%c0_14, %c0_15], %28 {strides = array<i32>} : memref<32x16xf32, #tpu.memory_space<vmem>>, vector<32x16xf32>,
    return
  }
  func.func @transform_0(%arg0: i32) -> (i32, i32) {
    %c0_i32 = arith.constant 0 : i32
    %c0_i32_0 = arith.constant 0 : i32
    %c0_i32_1 = arith.constant 0 : i32
    return %c0_i32, %c0_i32_0 : i32, i32
  }
  func.func @transform_1(%arg0: i32) -> (i32, i32) {
    %c0_i32 = arith.constant 0 : i32
    %c0_i32_0 = arith.constant 0 : i32
    %c0_i32_1 = arith.constant 0 : i32
    return %c0_i32, %c0_i32_0 : i32, i32
  }
  func.func @transform_2(%arg0: i32) -> (i32, i32) {
    %c0_i32 = arith.constant 0 : i32
    %c0_i32_0 = arith.constant 0 : i32
    %c0_i32_1 = arith.constant 0 : i32
    return %c0_i32, %c0_i32_0 : i32, i32
  }
  func.func @transform_3(%arg0: i32) -> (i32, i32) {
    %c0_i32 = arith.constant 0 : i32
    %c0_i32_0 = arith.constant 0 : i32
    %c0_i32_1 = arith.constant 0 : i32
    return %c0_i32, %c0_i32_0 : i32, i32
  }
  func.func @transform_4(%arg0: i32) -> (i32, i32) {
    %c0_i32 = arith.constant 0 : i32
    %c0_i32_0 = arith.constant 0 : i32
    %c0_i32_1 = arith.constant 0 : i32
    return %c0_i32, %c0_i32_0 : i32, i32
  }
  func.func @transform_5(%arg0: i32) -> (i32, i32) {
    %c0_i32 = arith.constant 0 : i32
    %c0_i32_0 = arith.constant 0 : i32
    %c0_i32_1 = arith.constant 0 : i32
    return %c0_i32, %c0_i32_0 : i32, i32
  }
}

module attributes {stable_mosaic.version = 11 : i64} {
  func.func @gemm_bias_bn_add_kernel(%arg0: i32, %arg1: memref<32x32xbf16, #tpu.memory_space<vmem>>, %arg2: memref<32x16xbf16, #tpu.memory_space<vmem>>, %arg3: memref<1x16xf32, #tpu.memory_space<vmem>>, %arg4: memref<1x16xf32, #tpu.memory_space<vmem>>, %arg5: memref<1x16xf32, #tpu.memory_space<vmem>>, %arg6: memref<32x16xf32, #tpu.memory_space<vmem>>, %arg7: memref<32x16xf32, #tpu.memory_space<vmem>>) attributes {dimension_semantics = [#tpu.dimension_semantics<arbitrary>], iteration_bounds = array<i64: 1>, scalar_prefetch = 0 : i64, scratch_operands = 0 : i64, tpu.core_type = #tpu.core_type<tc>, window_params = [{pipeline_mode = #tpu.pipeline_mode<synchronous>, transform_indices = @transform_0, window_bounds = array<i64: 32, 32>}, {pipeline_mode = #tpu.pipeline_mode<synchronous>, transform_indices = @transform_1, window_bounds = array<i64: 32, 16>}, {pipeline_mode = #tpu.pipeline_mode<synchronous>, transform_indices = @transform_2, window_bounds = array<i64: 1, 16>}, {pipeline_mode = #tpu.pipeline_mode<synchronous>, transform_indices = @transform_3, window_bounds = array<i64: 1, 16>}, {pipeline_mode = #tpu.pipeline_mode<synchronous>, transform_indices = @transform_4, window_bounds = array<i64: 1, 16>}, {pipeline_mode = #tpu.pipeline_mode<synchronous>, transform_indices = @transform_5, window_bounds = array<i64: 32, 16>}, {pipeline_mode = #tpu.pipeline_mode<synchronous>, transform_indices = @transform_6, window_bounds = array<i64: 32, 16>}]} {
    %c0 = arith.constant 0 : index
    %c0_0 = arith.constant 0 : index
    %0 = vector.load %arg1[%c0, %c0_0] : memref<32x32xbf16, #tpu.memory_space<vmem>>, vector<32x32xbf16>
    %c0_1 = arith.constant 0 : index
    %c0_2 = arith.constant 0 : index
    %1 = vector.load %arg2[%c0_1, %c0_2] : memref<32x16xbf16, #tpu.memory_space<vmem>>, vector<32x16xbf16>
    %cst = arith.constant dense<0.000000e+00> : vector<32x16xf32>
    %2 = tpu.matmul %0, %1, %cst {dimension_numbers = #tpu.dot_dimension_numbers<[1], [0], [0], [1], [0, 0, 1, 1], [], []>} : vector<32x32xbf16>, vector<32x16xbf16>, vector<32x16xf32> -> vector<32x16xf32>
    %c0_3 = arith.constant 0 : index
    %c0_4 = arith.constant 0 : index
    %3 = vector.load %arg3[%c0_3, %c0_4] : memref<1x16xf32, #tpu.memory_space<vmem>>, vector<1x16xf32>
    %4 = vector.broadcast %3 : vector<1x16xf32> to vector<32x16xf32>
    %5 = arith.addf %2, %4 : vector<32x16xf32>
    %cst_5 = arith.constant dense<0.000000e+00> : vector<16xf32>
    %6 = vector.multi_reduction <add>, %5, %cst_5 [0] : vector<32x16xf32> to vector<16xf32>
    %7 = vector.shape_cast %6 : vector<16xf32> to vector<1x16xf32>
    %cst_6 = arith.constant 3.200000e+01 : f32
    %8 = vector.broadcast %cst_6 : f32 to vector<1x16xf32>
    %9 = arith.divf %7, %8 : vector<1x16xf32>
    %10 = vector.broadcast %9 : vector<1x16xf32> to vector<32x16xf32>
    %11 = arith.subf %5, %10 : vector<32x16xf32>
    %12 = arith.mulf %11, %11 : vector<32x16xf32>
    %cst_7 = arith.constant dense<0.000000e+00> : vector<16xf32>
    %13 = vector.multi_reduction <add>, %12, %cst_7 [0] : vector<32x16xf32> to vector<16xf32>
    %14 = vector.shape_cast %13 : vector<16xf32> to vector<1x16xf32>
    %cst_8 = arith.constant 3.200000e+01 : f32
    %15 = vector.broadcast %cst_8 : f32 to vector<1x16xf32>
    %16 = arith.divf %14, %15 : vector<1x16xf32>
    %17 = vector.broadcast %9 : vector<1x16xf32> to vector<32x16xf32>
    %18 = arith.subf %5, %17 : vector<32x16xf32>
    %c0_9 = arith.constant 0 : index
    %c0_10 = arith.constant 0 : index
    %19 = vector.load %arg4[%c0_9, %c0_10] : memref<1x16xf32, #tpu.memory_space<vmem>>, vector<1x16xf32>
    %cst_11 = arith.constant 9.99999974E-6 : f32
    %20 = vector.broadcast %cst_11 : f32 to vector<1x16xf32>
    %21 = arith.addf %16, %20 : vector<1x16xf32>
    %22 = math.rsqrt %21 : vector<1x16xf32>
    %23 = arith.mulf %19, %22 : vector<1x16xf32>
    %24 = vector.broadcast %23 : vector<1x16xf32> to vector<32x16xf32>
    %25 = arith.mulf %18, %24 : vector<32x16xf32>
    %c0_12 = arith.constant 0 : index
    %c0_13 = arith.constant 0 : index
    %26 = vector.load %arg5[%c0_12, %c0_13] : memref<1x16xf32, #tpu.memory_space<vmem>>, vector<1x16xf32>
    %27 = vector.broadcast %26 : vector<1x16xf32> to vector<32x16xf32>
    %28 = arith.addf %25, %27 : vector<32x16xf32>
    %c0_14 = arith.constant 0 : index
    %c0_15 = arith.constant 0 : index
    %29 = vector.load %arg6[%c0_14, %c0_15] : memref<32x16xf32, #tpu.memory_space<vmem>>, vector<32x16xf32>
    %30 = arith.addf %29, %28 : vector<32x16xf32>
    %c0_16 = arith.constant 0 : index
    %c0_17 = arith.constant 0 : index
    %31 = vector.load %arg7[%c0_16, %c0_17] : memref<32x16xf32, #tpu.memory_space<vmem>>, vector<32x16xf32>
    tpu.vector_store %arg7[%c0_16, %c0_17], %30 {strides = array<i32>} : memref<32x16xf32, #tpu.memory_space<vmem>>, vector<32x16xf32>,
    return
  }
  func.func @transform_0(%arg0: i32) -> (i32, i32) {
    %c0_i32 = arith.constant 0 : i32
    %c0_i32_0 = arith.constant 0 : i32
    %c0_i32_1 = arith.constant 0 : i32
    return %c0_i32, %c0_i32_0 : i32, i32
  }
  func.func @transform_1(%arg0: i32) -> (i32, i32) {
    %c0_i32 = arith.constant 0 : i32
    %c0_i32_0 = arith.constant 0 : i32
    %c0_i32_1 = arith.constant 0 : i32
    return %c0_i32, %c0_i32_0 : i32, i32
  }
  func.func @transform_2(%arg0: i32) -> (i32, i32) {
    %c0_i32 = arith.constant 0 : i32
    %c0_i32_0 = arith.constant 0 : i32
    %c0_i32_1 = arith.constant 0 : i32
    return %c0_i32, %c0_i32_0 : i32, i32
  }
  func.func @transform_3(%arg0: i32) -> (i32, i32) {
    %c0_i32 = arith.constant 0 : i32
    %c0_i32_0 = arith.constant 0 : i32
    %c0_i32_1 = arith.constant 0 : i32
    return %c0_i32, %c0_i32_0 : i32, i32
  }
  func.func @transform_4(%arg0: i32) -> (i32, i32) {
    %c0_i32 = arith.constant 0 : i32
    %c0_i32_0 = arith.constant 0 : i32
    %c0_i32_1 = arith.constant 0 : i32
    return %c0_i32, %c0_i32_0 : i32, i32
  }
  func.func @transform_5(%arg0: i32) -> (i32, i32) {
    %c0_i32 = arith.constant 0 : i32
    %c0_i32_0 = arith.constant 0 : i32
    %c0_i32_1 = arith.constant 0 : i32
    return %c0_i32, %c0_i32_0 : i32, i32
  }
  func.func @transform_6(%arg0: i32) -> (i32, i32) {
    %c0_i32 = arith.constant 0 : i32
    %c0_i32_0 = arith.constant 0 : i32
    %c0_i32_1 = arith.constant 0 : i32
    return %c0_i32, %c0_i32_0 : i32, i32
  }
}

module attributes {stable_mosaic.version = 11 : i64} {
  func.func @gemm_bias_bn_kernel(%arg0: i32, %arg1: memref<32x144xbf16, #tpu.memory_space<vmem>>, %arg2: memref<144x32xbf16, #tpu.memory_space<vmem>>, %arg3: memref<1x32xf32, #tpu.memory_space<vmem>>, %arg4: memref<1x32xf32, #tpu.memory_space<vmem>>, %arg5: memref<1x32xf32, #tpu.memory_space<vmem>>, %arg6: memref<32x32xf32, #tpu.memory_space<vmem>>) attributes {dimension_semantics = [#tpu.dimension_semantics<arbitrary>], iteration_bounds = array<i64: 1>, scalar_prefetch = 0 : i64, scratch_operands = 0 : i64, tpu.core_type = #tpu.core_type<tc>, window_params = [{pipeline_mode = #tpu.pipeline_mode<synchronous>, transform_indices = @transform_0, window_bounds = array<i64: 32, 144>}, {pipeline_mode = #tpu.pipeline_mode<synchronous>, transform_indices = @transform_1, window_bounds = array<i64: 144, 32>}, {pipeline_mode = #tpu.pipeline_mode<synchronous>, transform_indices = @transform_2, window_bounds = array<i64: 1, 32>}, {pipeline_mode = #tpu.pipeline_mode<synchronous>, transform_indices = @transform_3, window_bounds = array<i64: 1, 32>}, {pipeline_mode = #tpu.pipeline_mode<synchronous>, transform_indices = @transform_4, window_bounds = array<i64: 1, 32>}, {pipeline_mode = #tpu.pipeline_mode<synchronous>, transform_indices = @transform_5, window_bounds = array<i64: 32, 32>}]} {
    %c0 = arith.constant 0 : index
    %c0_0 = arith.constant 0 : index
    %0 = vector.load %arg1[%c0, %c0_0] : memref<32x144xbf16, #tpu.memory_space<vmem>>, vector<32x144xbf16>
    %c0_1 = arith.constant 0 : index
    %c0_2 = arith.constant 0 : index
    %1 = vector.load %arg2[%c0_1, %c0_2] : memref<144x32xbf16, #tpu.memory_space<vmem>>, vector<144x32xbf16>
    %cst = arith.constant dense<0.000000e+00> : vector<32x32xf32>
    %2 = tpu.matmul %0, %1, %cst {dimension_numbers = #tpu.dot_dimension_numbers<[1], [0], [0], [1], [0, 0, 1, 1], [], []>} : vector<32x144xbf16>, vector<144x32xbf16>, vector<32x32xf32> -> vector<32x32xf32>
    %c0_3 = arith.constant 0 : index
    %c0_4 = arith.constant 0 : index
    %3 = vector.load %arg3[%c0_3, %c0_4] : memref<1x32xf32, #tpu.memory_space<vmem>>, vector<1x32xf32>
    %4 = vector.broadcast %3 : vector<1x32xf32> to vector<32x32xf32>
    %5 = arith.addf %2, %4 : vector<32x32xf32>
    %cst_5 = arith.constant dense<0.000000e+00> : vector<32xf32>
    %6 = vector.multi_reduction <add>, %5, %cst_5 [0] : vector<32x32xf32> to vector<32xf32>
    %7 = vector.shape_cast %6 : vector<32xf32> to vector<1x32xf32>
    %cst_6 = arith.constant 3.200000e+01 : f32
    %8 = vector.broadcast %cst_6 : f32 to vector<1x32xf32>
    %9 = arith.divf %7, %8 : vector<1x32xf32>
    %10 = vector.broadcast %9 : vector<1x32xf32> to vector<32x32xf32>
    %11 = arith.subf %5, %10 : vector<32x32xf32>
    %12 = arith.mulf %11, %11 : vector<32x32xf32>
    %cst_7 = arith.constant dense<0.000000e+00> : vector<32xf32>
    %13 = vector.multi_reduction <add>, %12, %cst_7 [0] : vector<32x32xf32> to vector<32xf32>
    %14 = vector.shape_cast %13 : vector<32xf32> to vector<1x32xf32>
    %cst_8 = arith.constant 3.200000e+01 : f32
    %15 = vector.broadcast %cst_8 : f32 to vector<1x32xf32>
    %16 = arith.divf %14, %15 : vector<1x32xf32>
    %17 = vector.broadcast %9 : vector<1x32xf32> to vector<32x32xf32>
    %18 = arith.subf %5, %17 : vector<32x32xf32>
    %c0_9 = arith.constant 0 : index
    %c0_10 = arith.constant 0 : index
    %19 = vector.load %arg4[%c0_9, %c0_10] : memref<1x32xf32, #tpu.memory_space<vmem>>, vector<1x32xf32>
    %cst_11 = arith.constant 9.99999974E-6 : f32
    %20 = vector.broadcast %cst_11 : f32 to vector<1x32xf32>
    %21 = arith.addf %16, %20 : vector<1x32xf32>
    %22 = math.rsqrt %21 : vector<1x32xf32>
    %23 = arith.mulf %19, %22 : vector<1x32xf32>
    %24 = vector.broadcast %23 : vector<1x32xf32> to vector<32x32xf32>
    %25 = arith.mulf %18, %24 : vector<32x32xf32>
    %c0_12 = arith.constant 0 : index
    %c0_13 = arith.constant 0 : index
    %26 = vector.load %arg5[%c0_12, %c0_13] : memref<1x32xf32, #tpu.memory_space<vmem>>, vector<1x32xf32>
    %27 = vector.broadcast %26 : vector<1x32xf32> to vector<32x32xf32>
    %28 = arith.addf %25, %27 : vector<32x32xf32>
    %cst_14 = arith.constant 0.000000e+00 : f32
    %29 = vector.broadcast %cst_14 : f32 to vector<32x32xf32>
    %30 = arith.maximumf %28, %29 : vector<32x32xf32>
    %c0_15 = arith.constant 0 : index
    %c0_16 = arith.constant 0 : index
    %31 = vector.load %arg6[%c0_15, %c0_16] : memref<32x32xf32, #tpu.memory_space<vmem>>, vector<32x32xf32>
    tpu.vector_store %arg6[%c0_15, %c0_16], %30 {strides = array<i32>} : memref<32x32xf32, #tpu.memory_space<vmem>>, vector<32x32xf32>,
    return
  }
  func.func @transform_0(%arg0: i32) -> (i32, i32) {
    %c0_i32 = arith.constant 0 : i32
    %c0_i32_0 = arith.constant 0 : i32
    %c0_i32_1 = arith.constant 0 : i32
    return %c0_i32, %c0_i32_0 : i32, i32
  }
  func.func @transform_1(%arg0: i32) -> (i32, i32) {
    %c0_i32 = arith.constant 0 : i32
    %c0_i32_0 = arith.constant 0 : i32
    %c0_i32_1 = arith.constant 0 : i32
    return %c0_i32, %c0_i32_0 : i32, i32
  }
  func.func @transform_2(%arg0: i32) -> (i32, i32) {
    %c0_i32 = arith.constant 0 : i32
    %c0_i32_0 = arith.constant 0 : i32
    %c0_i32_1 = arith.constant 0 : i32
    return %c0_i32, %c0_i32_0 : i32, i32
  }
  func.func @transform_3(%arg0: i32) -> (i32, i32) {
    %c0_i32 = arith.constant 0 : i32
    %c0_i32_0 = arith.constant 0 : i32
    %c0_i32_1 = arith.constant 0 : i32
    return %c0_i32, %c0_i32_0 : i32, i32
  }
  func.func @transform_4(%arg0: i32) -> (i32, i32) {
    %c0_i32 = arith.constant 0 : i32
    %c0_i32_0 = arith.constant 0 : i32
    %c0_i32_1 = arith.constant 0 : i32
    return %c0_i32, %c0_i32_0 : i32, i32
  }
  func.func @transform_5(%arg0: i32) -> (i32, i32) {
    %c0_i32 = arith.constant 0 : i32
    %c0_i32_0 = arith.constant 0 : i32
    %c0_i32_1 = arith.constant 0 : i32
    return %c0_i32, %c0_i32_0 : i32, i32
  }
}

module attributes {stable_mosaic.version = 11 : i64} {
  func.func @encode_head_kernel(%arg0: i32, %arg1: memref<32x16xbf16, #tpu.memory_space<vmem>>, %arg2: memref<16x32xbf16, #tpu.memory_space<vmem>>, %arg3: memref<1x32xf32, #tpu.memory_space<vmem>>, %arg4: memref<32x16xf32, #tpu.memory_space<vmem>>, %arg5: memref<32x16xf32, #tpu.memory_space<vmem>>, %arg6: memref<1x1xf32, #tpu.memory_space<vmem>>) attributes {dimension_semantics = [#tpu.dimension_semantics<arbitrary>], iteration_bounds = array<i64: 1>, scalar_prefetch = 0 : i64, scratch_operands = 0 : i64, tpu.core_type = #tpu.core_type<tc>, window_params = [{pipeline_mode = #tpu.pipeline_mode<synchronous>, transform_indices = @transform_0, window_bounds = array<i64: 32, 16>}, {pipeline_mode = #tpu.pipeline_mode<synchronous>, transform_indices = @transform_1, window_bounds = array<i64: 16, 32>}, {pipeline_mode = #tpu.pipeline_mode<synchronous>, transform_indices = @transform_2, window_bounds = array<i64: 1, 32>}, {pipeline_mode = #tpu.pipeline_mode<synchronous>, transform_indices = @transform_3, window_bounds = array<i64: 32, 16>}, {pipeline_mode = #tpu.pipeline_mode<synchronous>, transform_indices = @transform_4, window_bounds = array<i64: 32, 16>}, {pipeline_mode = #tpu.pipeline_mode<synchronous>, transform_indices = @transform_5, window_bounds = array<i64: 1, 1>}]} {
    %c0 = arith.constant 0 : index
    %c0_0 = arith.constant 0 : index
    %0 = vector.load %arg1[%c0, %c0_0] : memref<32x16xbf16, #tpu.memory_space<vmem>>, vector<32x16xbf16>
    %c0_1 = arith.constant 0 : index
    %c0_2 = arith.constant 0 : index
    %1 = vector.load %arg2[%c0_1, %c0_2] : memref<16x32xbf16, #tpu.memory_space<vmem>>, vector<16x32xbf16>
    %cst = arith.constant dense<0.000000e+00> : vector<32x32xf32>
    %2 = tpu.matmul %0, %1, %cst {dimension_numbers = #tpu.dot_dimension_numbers<[1], [0], [0], [1], [0, 0, 1, 1], [], []>} : vector<32x16xbf16>, vector<16x32xbf16>, vector<32x32xf32> -> vector<32x32xf32>
    %c0_3 = arith.constant 0 : index
    %c0_4 = arith.constant 0 : index
    %3 = vector.load %arg3[%c0_3, %c0_4] : memref<1x32xf32, #tpu.memory_space<vmem>>, vector<1x32xf32>
    %4 = vector.broadcast %3 : vector<1x32xf32> to vector<32x32xf32>
    %5 = arith.addf %2, %4 : vector<32x32xf32>
    %6 = vector.extract_strided_slice %5 {offsets = [0, 0], sizes = [32, 16], strides = [1, 1]} : vector<32x32xf32> to vector<32x16xf32>
    %7 = vector.extract_strided_slice %5 {offsets = [0, 16], sizes = [32, 16], strides = [1, 1]} : vector<32x32xf32> to vector<32x16xf32>
    %cst_5 = arith.constant 5.000000e-01 : f32
    %8 = vector.broadcast %cst_5 : f32 to vector<32x16xf32>
    %9 = arith.mulf %8, %7 : vector<32x16xf32>
    %10 = math.exp %9 : vector<32x16xf32>
    %c0_6 = arith.constant 0 : index
    %c0_7 = arith.constant 0 : index
    %11 = vector.load %arg4[%c0_6, %c0_7] : memref<32x16xf32, #tpu.memory_space<vmem>>, vector<32x16xf32>
    %12 = arith.mulf %10, %11 : vector<32x16xf32>
    %13 = arith.addf %6, %12 : vector<32x16xf32>
    %c0_8 = arith.constant 0 : index
    %c0_9 = arith.constant 0 : index
    %14 = vector.load %arg5[%c0_8, %c0_9] : memref<32x16xf32, #tpu.memory_space<vmem>>, vector<32x16xf32>
    tpu.vector_store %arg5[%c0_8, %c0_9], %13 {strides = array<i32>} : memref<32x16xf32, #tpu.memory_space<vmem>>, vector<32x16xf32>,
    %cst_10 = arith.constant 1.000000e+00 : f32
    %15 = vector.broadcast %cst_10 : f32 to vector<32x16xf32>
    %16 = arith.addf %15, %7 : vector<32x16xf32>
    %17 = arith.mulf %6, %6 : vector<32x16xf32>
    %18 = arith.subf %16, %17 : vector<32x16xf32>
    %19 = arith.mulf %10, %10 : vector<32x16xf32>
    %20 = arith.subf %18, %19 : vector<32x16xf32>
    %cst_11 = arith.constant dense<0.000000e+00> : vector<32xf32>
    %21 = vector.multi_reduction <add>, %20, %cst_11 [1] : vector<32x16xf32> to vector<32xf32>
    %22 = vector.shape_cast %21 : vector<32xf32> to vector<32x1xf32>
    %cst_12 = arith.constant dense<0.000000e+00> : vector<1xf32>
    %23 = vector.multi_reduction <add>, %22, %cst_12 [0] : vector<32x1xf32> to vector<1xf32>
    %24 = vector.shape_cast %23 : vector<1xf32> to vector<1x1xf32>
    %cst_13 = arith.constant -5.000000e-01 : f32
    %25 = vector.broadcast %cst_13 : f32 to vector<1x1xf32>
    %26 = arith.mulf %25, %24 : vector<1x1xf32>
    %c0_14 = arith.constant 0 : index
    %c0_15 = arith.constant 0 : index
    %27 = vector.load %arg6[%c0_14, %c0_15] : memref<1x1xf32, #tpu.memory_space<vmem>>, vector<1x1xf32>
    tpu.vector_store %arg6[%c0_14, %c0_15], %26 {strides = array<i32>} : memref<1x1xf32, #tpu.memory_space<vmem>>, vector<1x1xf32>,
    return
  }
  func.func @transform_0(%arg0: i32) -> (i32, i32) {
    %c0_i32 = arith.constant 0 : i32
    %c0_i32_0 = arith.constant 0 : i32
    %c0_i32_1 = arith.constant 0 : i32
    return %c0_i32, %c0_i32_0 : i32, i32
  }
  func.func @transform_1(%arg0: i32) -> (i32, i32) {
    %c0_i32 = arith.constant 0 : i32
    %c0_i32_0 = arith.constant 0 : i32
    %c0_i32_1 = arith.constant 0 : i32
    return %c0_i32, %c0_i32_0 : i32, i32
  }
  func.func @transform_2(%arg0: i32) -> (i32, i32) {
    %c0_i32 = arith.constant 0 : i32
    %c0_i32_0 = arith.constant 0 : i32
    %c0_i32_1 = arith.constant 0 : i32
    return %c0_i32, %c0_i32_0 : i32, i32
  }
  func.func @transform_3(%arg0: i32) -> (i32, i32) {
    %c0_i32 = arith.constant 0 : i32
    %c0_i32_0 = arith.constant 0 : i32
    %c0_i32_1 = arith.constant 0 : i32
    return %c0_i32, %c0_i32_0 : i32, i32
  }
  func.func @transform_4(%arg0: i32) -> (i32, i32) {
    %c0_i32 = arith.constant 0 : i32
    %c0_i32_0 = arith.constant 0 : i32
    %c0_i32_1 = arith.constant 0 : i32
    return %c0_i32, %c0_i32_0 : i32, i32
  }
  func.func @transform_5(%arg0: i32) -> (i32, i32) {
    %c0_i32 = arith.constant 0 : i32
    %c0_i32_0 = arith.constant 0 : i32
    %c0_i32_1 = arith.constant 0 : i32
    return %c0_i32, %c0_i32_0 : i32, i32
  }
}

module attributes {stable_mosaic.version = 11 : i64} {
  func.func @gemm_bias_kernel(%arg0: i32, %arg1: memref<32x144xbf16, #tpu.memory_space<vmem>>, %arg2: memref<144x32xbf16, #tpu.memory_space<vmem>>, %arg3: memref<1x32xf32, #tpu.memory_space<vmem>>, %arg4: memref<32x32xf32, #tpu.memory_space<vmem>>) attributes {dimension_semantics = [#tpu.dimension_semantics<arbitrary>], iteration_bounds = array<i64: 1>, scalar_prefetch = 0 : i64, scratch_operands = 0 : i64, tpu.core_type = #tpu.core_type<tc>, window_params = [{pipeline_mode = #tpu.pipeline_mode<synchronous>, transform_indices = @transform_0, window_bounds = array<i64: 32, 144>}, {pipeline_mode = #tpu.pipeline_mode<synchronous>, transform_indices = @transform_1, window_bounds = array<i64: 144, 32>}, {pipeline_mode = #tpu.pipeline_mode<synchronous>, transform_indices = @transform_2, window_bounds = array<i64: 1, 32>}, {pipeline_mode = #tpu.pipeline_mode<synchronous>, transform_indices = @transform_3, window_bounds = array<i64: 32, 32>}]} {
    %c0 = arith.constant 0 : index
    %c0_0 = arith.constant 0 : index
    %0 = vector.load %arg1[%c0, %c0_0] : memref<32x144xbf16, #tpu.memory_space<vmem>>, vector<32x144xbf16>
    %c0_1 = arith.constant 0 : index
    %c0_2 = arith.constant 0 : index
    %1 = vector.load %arg2[%c0_1, %c0_2] : memref<144x32xbf16, #tpu.memory_space<vmem>>, vector<144x32xbf16>
    %cst = arith.constant dense<0.000000e+00> : vector<32x32xf32>
    %2 = tpu.matmul %0, %1, %cst {dimension_numbers = #tpu.dot_dimension_numbers<[1], [0], [0], [1], [0, 0, 1, 1], [], []>} : vector<32x144xbf16>, vector<144x32xbf16>, vector<32x32xf32> -> vector<32x32xf32>
    %c0_3 = arith.constant 0 : index
    %c0_4 = arith.constant 0 : index
    %3 = vector.load %arg3[%c0_3, %c0_4] : memref<1x32xf32, #tpu.memory_space<vmem>>, vector<1x32xf32>
    %4 = vector.broadcast %3 : vector<1x32xf32> to vector<32x32xf32>
    %5 = arith.addf %2, %4 : vector<32x32xf32>
    %cst_5 = arith.constant 0.000000e+00 : f32
    %6 = vector.broadcast %cst_5 : f32 to vector<32x32xf32>
    %7 = arith.maximumf %5, %6 : vector<32x32xf32>
    %c0_6 = arith.constant 0 : index
    %c0_7 = arith.constant 0 : index
    %8 = vector.load %arg4[%c0_6, %c0_7] : memref<32x32xf32, #tpu.memory_space<vmem>>, vector<32x32xf32>
    tpu.vector_store %arg4[%c0_6, %c0_7], %7 {strides = array<i32>} : memref<32x32xf32, #tpu.memory_space<vmem>>, vector<32x32xf32>,
    return
  }
  func.func @transform_0(%arg0: i32) -> (i32, i32) {
    %c0_i32 = arith.constant 0 : i32
    %c0_i32_0 = arith.constant 0 : i32
    %c0_i32_1 = arith.constant 0 : i32
    return %c0_i32, %c0_i32_0 : i32, i32
  }
  func.func @transform_1(%arg0: i32) -> (i32, i32) {
    %c0_i32 = arith.constant 0 : i32
    %c0_i32_0 = arith.constant 0 : i32
    %c0_i32_1 = arith.constant 0 : i32
    return %c0_i32, %c0_i32_0 : i32, i32
  }
  func.func @transform_2(%arg0: i32) -> (i32, i32) {
    %c0_i32 = arith.constant 0 : i32
    %c0_i32_0 = arith.constant 0 : i32
    %c0_i32_1 = arith.constant 0 : i32
    return %c0_i32, %c0_i32_0 : i32, i32
  }
  func.func @transform_3(%arg0: i32) -> (i32, i32) {
    %c0_i32 = arith.constant 0 : i32
    %c0_i32_0 = arith.constant 0 : i32
    %c0_i32_1 = arith.constant 0 : i32
    return %c0_i32, %c0_i32_0 : i32, i32
  }
}

module attributes {stable_mosaic.version = 11 : i64} {
  func.func @gemm_bias_kernel(%arg0: i32, %arg1: memref<128x72xbf16, #tpu.memory_space<vmem>>, %arg2: memref<72x16xbf16, #tpu.memory_space<vmem>>, %arg3: memref<1x16xf32, #tpu.memory_space<vmem>>, %arg4: memref<128x16xf32, #tpu.memory_space<vmem>>) attributes {dimension_semantics = [#tpu.dimension_semantics<arbitrary>], iteration_bounds = array<i64: 1>, scalar_prefetch = 0 : i64, scratch_operands = 0 : i64, tpu.core_type = #tpu.core_type<tc>, window_params = [{pipeline_mode = #tpu.pipeline_mode<synchronous>, transform_indices = @transform_0, window_bounds = array<i64: 128, 72>}, {pipeline_mode = #tpu.pipeline_mode<synchronous>, transform_indices = @transform_1, window_bounds = array<i64: 72, 16>}, {pipeline_mode = #tpu.pipeline_mode<synchronous>, transform_indices = @transform_2, window_bounds = array<i64: 1, 16>}, {pipeline_mode = #tpu.pipeline_mode<synchronous>, transform_indices = @transform_3, window_bounds = array<i64: 128, 16>}]} {
    %c0 = arith.constant 0 : index
    %c0_0 = arith.constant 0 : index
    %0 = vector.load %arg1[%c0, %c0_0] : memref<128x72xbf16, #tpu.memory_space<vmem>>, vector<128x72xbf16>
    %c0_1 = arith.constant 0 : index
    %c0_2 = arith.constant 0 : index
    %1 = vector.load %arg2[%c0_1, %c0_2] : memref<72x16xbf16, #tpu.memory_space<vmem>>, vector<72x16xbf16>
    %cst = arith.constant dense<0.000000e+00> : vector<128x16xf32>
    %2 = tpu.matmul %0, %1, %cst {dimension_numbers = #tpu.dot_dimension_numbers<[1], [0], [0], [1], [0, 0, 1, 1], [], []>} : vector<128x72xbf16>, vector<72x16xbf16>, vector<128x16xf32> -> vector<128x16xf32>
    %c0_3 = arith.constant 0 : index
    %c0_4 = arith.constant 0 : index
    %3 = vector.load %arg3[%c0_3, %c0_4] : memref<1x16xf32, #tpu.memory_space<vmem>>, vector<1x16xf32>
    %4 = vector.broadcast %3 : vector<1x16xf32> to vector<128x16xf32>
    %5 = arith.addf %2, %4 : vector<128x16xf32>
    %cst_5 = arith.constant 0.000000e+00 : f32
    %6 = vector.broadcast %cst_5 : f32 to vector<128x16xf32>
    %7 = arith.maximumf %5, %6 : vector<128x16xf32>
    %c0_6 = arith.constant 0 : index
    %c0_7 = arith.constant 0 : index
    %8 = vector.load %arg4[%c0_6, %c0_7] : memref<128x16xf32, #tpu.memory_space<vmem>>, vector<128x16xf32>
    tpu.vector_store %arg4[%c0_6, %c0_7], %7 {strides = array<i32>} : memref<128x16xf32, #tpu.memory_space<vmem>>, vector<128x16xf32>,
    return
  }
  func.func @transform_0(%arg0: i32) -> (i32, i32) {
    %c0_i32 = arith.constant 0 : i32
    %c0_i32_0 = arith.constant 0 : i32
    %c0_i32_1 = arith.constant 0 : i32
    return %c0_i32, %c0_i32_0 : i32, i32
  }
  func.func @transform_1(%arg0: i32) -> (i32, i32) {
    %c0_i32 = arith.constant 0 : i32
    %c0_i32_0 = arith.constant 0 : i32
    %c0_i32_1 = arith.constant 0 : i32
    return %c0_i32, %c0_i32_0 : i32, i32
  }
  func.func @transform_2(%arg0: i32) -> (i32, i32) {
    %c0_i32 = arith.constant 0 : i32
    %c0_i32_0 = arith.constant 0 : i32
    %c0_i32_1 = arith.constant 0 : i32
    return %c0_i32, %c0_i32_0 : i32, i32
  }
  func.func @transform_3(%arg0: i32) -> (i32, i32) {
    %c0_i32 = arith.constant 0 : i32
    %c0_i32_0 = arith.constant 0 : i32
    %c0_i32_1 = arith.constant 0 : i32
    return %c0_i32, %c0_i32_0 : i32, i32
  }
}

module attributes {stable_mosaic.version = 11 : i64} {
  func.func @gemm_bias_kernel(%arg0: i32, %arg1: memref<512x36xbf16, #tpu.memory_space<vmem>>, %arg2: memref<36x16xbf16, #tpu.memory_space<vmem>>, %arg3: memref<1x16xf32, #tpu.memory_space<vmem>>, %arg4: memref<512x16xf32, #tpu.memory_space<vmem>>) attributes {dimension_semantics = [#tpu.dimension_semantics<arbitrary>], iteration_bounds = array<i64: 1>, scalar_prefetch = 0 : i64, scratch_operands = 0 : i64, tpu.core_type = #tpu.core_type<tc>, window_params = [{pipeline_mode = #tpu.pipeline_mode<synchronous>, transform_indices = @transform_0, window_bounds = array<i64: 512, 36>}, {pipeline_mode = #tpu.pipeline_mode<synchronous>, transform_indices = @transform_1, window_bounds = array<i64: 36, 16>}, {pipeline_mode = #tpu.pipeline_mode<synchronous>, transform_indices = @transform_2, window_bounds = array<i64: 1, 16>}, {pipeline_mode = #tpu.pipeline_mode<synchronous>, transform_indices = @transform_3, window_bounds = array<i64: 512, 16>}]} {
    %c0 = arith.constant 0 : index
    %c0_0 = arith.constant 0 : index
    %0 = vector.load %arg1[%c0, %c0_0] : memref<512x36xbf16, #tpu.memory_space<vmem>>, vector<512x36xbf16>
    %c0_1 = arith.constant 0 : index
    %c0_2 = arith.constant 0 : index
    %1 = vector.load %arg2[%c0_1, %c0_2] : memref<36x16xbf16, #tpu.memory_space<vmem>>, vector<36x16xbf16>
    %cst = arith.constant dense<0.000000e+00> : vector<512x16xf32>
    %2 = tpu.matmul %0, %1, %cst {dimension_numbers = #tpu.dot_dimension_numbers<[1], [0], [0], [1], [0, 0, 1, 1], [], []>} : vector<512x36xbf16>, vector<36x16xbf16>, vector<512x16xf32> -> vector<512x16xf32>
    %c0_3 = arith.constant 0 : index
    %c0_4 = arith.constant 0 : index
    %3 = vector.load %arg3[%c0_3, %c0_4] : memref<1x16xf32, #tpu.memory_space<vmem>>, vector<1x16xf32>
    %4 = vector.broadcast %3 : vector<1x16xf32> to vector<512x16xf32>
    %5 = arith.addf %2, %4 : vector<512x16xf32>
    %cst_5 = arith.constant 0.000000e+00 : f32
    %6 = vector.broadcast %cst_5 : f32 to vector<512x16xf32>
    %7 = arith.maximumf %5, %6 : vector<512x16xf32>
    %c0_6 = arith.constant 0 : index
    %c0_7 = arith.constant 0 : index
    %8 = vector.load %arg4[%c0_6, %c0_7] : memref<512x16xf32, #tpu.memory_space<vmem>>, vector<512x16xf32>
    tpu.vector_store %arg4[%c0_6, %c0_7], %7 {strides = array<i32>} : memref<512x16xf32, #tpu.memory_space<vmem>>, vector<512x16xf32>,
    return
  }
  func.func @transform_0(%arg0: i32) -> (i32, i32) {
    %c0_i32 = arith.constant 0 : i32
    %c0_i32_0 = arith.constant 0 : i32
    %c0_i32_1 = arith.constant 0 : i32
    return %c0_i32, %c0_i32_0 : i32, i32
  }
  func.func @transform_1(%arg0: i32) -> (i32, i32) {
    %c0_i32 = arith.constant 0 : i32
    %c0_i32_0 = arith.constant 0 : i32
    %c0_i32_1 = arith.constant 0 : i32
    return %c0_i32, %c0_i32_0 : i32, i32
  }
  func.func @transform_2(%arg0: i32) -> (i32, i32) {
    %c0_i32 = arith.constant 0 : i32
    %c0_i32_0 = arith.constant 0 : i32
    %c0_i32_1 = arith.constant 0 : i32
    return %c0_i32, %c0_i32_0 : i32, i32
  }
  func.func @transform_3(%arg0: i32) -> (i32, i32) {
    %c0_i32 = arith.constant 0 : i32
    %c0_i32_0 = arith.constant 0 : i32
    %c0_i32_1 = arith.constant 0 : i32
    return %c0_i32, %c0_i32_0 : i32, i32
  }
}

module attributes {stable_mosaic.version = 11 : i64} {
  func.func @decode_head_kernel(%arg0: i32, %arg1: memref<2048x4xbf16, #tpu.memory_space<vmem>>, %arg2: memref<4x2xbf16, #tpu.memory_space<vmem>>, %arg3: memref<1x2xf32, #tpu.memory_space<vmem>>, %arg4: memref<2048x2xf32, #tpu.memory_space<vmem>>, %arg5: memref<1x2xf32, #tpu.memory_space<vmem>>, %arg6: memref<2048x2xf32, #tpu.memory_space<vmem>>, %arg7: memref<1x1xf32, #tpu.memory_space<vmem>>) attributes {dimension_semantics = [#tpu.dimension_semantics<arbitrary>], iteration_bounds = array<i64: 1>, scalar_prefetch = 0 : i64, scratch_operands = 0 : i64, tpu.core_type = #tpu.core_type<tc>, window_params = [{pipeline_mode = #tpu.pipeline_mode<synchronous>, transform_indices = @transform_0, window_bounds = array<i64: 2048, 4>}, {pipeline_mode = #tpu.pipeline_mode<synchronous>, transform_indices = @transform_1, window_bounds = array<i64: 4, 2>}, {pipeline_mode = #tpu.pipeline_mode<synchronous>, transform_indices = @transform_2, window_bounds = array<i64: 1, 2>}, {pipeline_mode = #tpu.pipeline_mode<synchronous>, transform_indices = @transform_3, window_bounds = array<i64: 2048, 2>}, {pipeline_mode = #tpu.pipeline_mode<synchronous>, transform_indices = @transform_4, window_bounds = array<i64: 1, 2>}, {pipeline_mode = #tpu.pipeline_mode<synchronous>, transform_indices = @transform_5, window_bounds = array<i64: 2048, 2>}, {pipeline_mode = #tpu.pipeline_mode<synchronous>, transform_indices = @transform_6, window_bounds = array<i64: 1, 1>}]} {
    %c0 = arith.constant 0 : index
    %c0_0 = arith.constant 0 : index
    %0 = vector.load %arg1[%c0, %c0_0] : memref<2048x4xbf16, #tpu.memory_space<vmem>>, vector<2048x4xbf16>
    %c0_1 = arith.constant 0 : index
    %c0_2 = arith.constant 0 : index
    %1 = vector.load %arg2[%c0_1, %c0_2] : memref<4x2xbf16, #tpu.memory_space<vmem>>, vector<4x2xbf16>
    %cst = arith.constant dense<0.000000e+00> : vector<2048x2xf32>
    %2 = tpu.matmul %0, %1, %cst {dimension_numbers = #tpu.dot_dimension_numbers<[1], [0], [0], [1], [0, 0, 1, 1], [], []>} : vector<2048x4xbf16>, vector<4x2xbf16>, vector<2048x2xf32> -> vector<2048x2xf32>
    %c0_3 = arith.constant 0 : index
    %c0_4 = arith.constant 0 : index
    %3 = vector.load %arg3[%c0_3, %c0_4] : memref<1x2xf32, #tpu.memory_space<vmem>>, vector<1x2xf32>
    %4 = vector.broadcast %3 : vector<1x2xf32> to vector<2048x2xf32>
    %5 = arith.addf %2, %4 : vector<2048x2xf32>
    %c0_5 = arith.constant 0 : index
    %c0_6 = arith.constant 0 : index
    %6 = vector.load %arg6[%c0_5, %c0_6] : memref<2048x2xf32, #tpu.memory_space<vmem>>, vector<2048x2xf32>
    tpu.vector_store %arg6[%c0_5, %c0_6], %5 {strides = array<i32>} : memref<2048x2xf32, #tpu.memory_space<vmem>>, vector<2048x2xf32>,
    %c0_7 = arith.constant 0 : index
    %c0_8 = arith.constant 0 : index
    %7 = vector.load %arg4[%c0_7, %c0_8] : memref<2048x2xf32, #tpu.memory_space<vmem>>, vector<2048x2xf32>
    %8 = arith.subf %5, %7 : vector<2048x2xf32>
    %9 = arith.mulf %8, %8 : vector<2048x2xf32>
    %c0_9 = arith.constant 0 : index
    %c0_10 = arith.constant 0 : index
    %10 = vector.load %arg5[%c0_9, %c0_10] : memref<1x2xf32, #tpu.memory_space<vmem>>, vector<1x2xf32>
    %11 = vector.broadcast %10 : vector<1x2xf32> to vector<2048x2xf32>
    %12 = arith.mulf %9, %11 : vector<2048x2xf32>
    %cst_11 = arith.constant dense<0.000000e+00> : vector<2048xf32>
    %13 = vector.multi_reduction <add>, %12, %cst_11 [1] : vector<2048x2xf32> to vector<2048xf32>
    %14 = vector.shape_cast %13 : vector<2048xf32> to vector<2048x1xf32>
    %cst_12 = arith.constant dense<0.000000e+00> : vector<1xf32>
    %15 = vector.multi_reduction <add>, %14, %cst_12 [0] : vector<2048x1xf32> to vector<1xf32>
    %16 = vector.shape_cast %15 : vector<1xf32> to vector<1x1xf32>
    %c0_13 = arith.constant 0 : index
    %c0_14 = arith.constant 0 : index
    %17 = vector.load %arg7[%c0_13, %c0_14] : memref<1x1xf32, #tpu.memory_space<vmem>>, vector<1x1xf32>
    tpu.vector_store %arg7[%c0_13, %c0_14], %16 {strides = array<i32>} : memref<1x1xf32, #tpu.memory_space<vmem>>, vector<1x1xf32>,
    return
  }
  func.func @transform_0(%arg0: i32) -> (i32, i32) {
    %c0_i32 = arith.constant 0 : i32
    %c0_i32_0 = arith.constant 0 : i32
    %c0_i32_1 = arith.constant 0 : i32
    return %c0_i32, %c0_i32_0 : i32, i32
  }
  func.func @transform_1(%arg0: i32) -> (i32, i32) {
    %c0_i32 = arith.constant 0 : i32
    %c0_i32_0 = arith.constant 0 : i32
    %c0_i32_1 = arith.constant 0 : i32
    return %c0_i32, %c0_i32_0 : i32, i32
  }
  func.func @transform_2(%arg0: i32) -> (i32, i32) {
    %c0_i32 = arith.constant 0 : i32
    %c0_i32_0 = arith.constant 0 : i32
    %c0_i32_1 = arith.constant 0 : i32
    return %c0_i32, %c0_i32_0 : i32, i32
  }
  func.func @transform_3(%arg0: i32) -> (i32, i32) {
    %c0_i32 = arith.constant 0 : i32
    %c0_i32_0 = arith.constant 0 : i32
    %c0_i32_1 = arith.constant 0 : i32
    return %c0_i32, %c0_i32_0 : i32, i32
  }
  func.func @transform_4(%arg0: i32) -> (i32, i32) {
    %c0_i32 = arith.constant 0 : i32
    %c0_i32_0 = arith.constant 0 : i32
    %c0_i32_1 = arith.constant 0 : i32
    return %c0_i32, %c0_i32_0 : i32, i32
  }
  func.func @transform_5(%arg0: i32) -> (i32, i32) {
    %c0_i32 = arith.constant 0 : i32
    %c0_i32_0 = arith.constant 0 : i32
    %c0_i32_1 = arith.constant 0 : i32
    return %c0_i32, %c0_i32_0 : i32, i32
  }
  func.func @transform_6(%arg0: i32) -> (i32, i32) {
    %c0_i32 = arith.constant 0 : i32
    %c0_i32_0 = arith.constant 0 : i32
    %c0_i32_1 = arith.constant 0 : i32
    return %c0_i32, %c0_i32_0 : i32, i32
  }
}

</mosaic_0001>

<llo_original>
// kernel: vae_forward.14
$region0: #{vae_forward.14}
  #allocation0 [shape = 'u32[]', space=smem, size = 0x4, offset = 0x4, fixed_abs, tag = 'smem constant byte address 0x4 - core index']
  #allocation1 [shape = 'u32[144,128]{1,0:T(1,128)}', space=vmem, size = 0x12000, scoped, tag = 'internal scratch']
  %s0 = inlined_call_operand.vmem [shape: bf16[2048,2], index: 0, kind: input, shape index: {}]
  %s1 = inlined_call_operand.vmem [shape: bf16[2,8], index: 1, kind: input, shape index: {}]
  %s2 = inlined_call_operand.vmem [shape: f32[1,8], index: 2, kind: input, shape index: {}]
  %s3 = inlined_call_operand.vmem [shape: f32[2048,8], index: 3, kind: output, shape index: {}]
  %s4 = sld [smem:[#allocation0]]
  $region22: #{vae_forward.14} parent=0
    _
  %s6 = ssub.s32 1, %s4
  %s7 = scalar_select 0, %s6, %s4
  // Predicated region
  $region2: #{vae_forward.14} parent=0 // pred_check
    _
  $region3: #{vae_forward.14} parent=0 // pred_check_branch
    %9 = sbr.rel (0) target = $region5
  $region4: #{vae_forward.14} parent=0 // pred_region
    _
  $region5: #{vae_forward.14} parent=0 // pred_fallthru
    _
  // Predicated region
  $region6: #{vae_forward.14} parent=0 // pred_check
    _
  $region7: #{vae_forward.14} parent=0 // pred_check_branch
    %11 = sbr.rel (0) target = $region9
  $region8: #{vae_forward.14} parent=0 // pred_region
    _
  $region9: #{vae_forward.14} parent=0 // pred_fallthru
    _
  // Predicated region
  $region10: #{vae_forward.14} parent=0 // pred_check
    _
  $region11: #{vae_forward.14} parent=0 // pred_check_branch
    %13 = sbr.rel (0) target = $region13
  $region12: #{vae_forward.14} parent=0 // pred_region
    _
  $region13: #{vae_forward.14} parent=0 // pred_fallthru
    _
  %v15 = vld [vmem:[%s0] sm:$0xf]
  %v16 = vld [vmem:[%s0 + $0x4] sm:$0xf]
  %v17 = vld [vmem:[%s0 + $0x8] sm:$0xf]
  %v18 = vld [vmem:[%s0 + $0xc] sm:$0xf]
  %v19 = vld [vmem:[%s0 + $0x10] sm:$0xf]
  %v20 = vld [vmem:[%s0 + $0x14] sm:$0xf]
  %v21 = vld [vmem:[%s0 + $0x18] sm:$0xf]
  %v22 = vld [vmem:[%s0 + $0x1c] sm:$0xf]
  %v23 = vld [vmem:[%s0 + $0x20] sm:$0xf]
  %v24 = vld [vmem:[%s0 + $0x24] sm:$0xf]
  %v25 = vld [vmem:[%s0 + $0x28] sm:$0xf]
  %v26 = vld [vmem:[%s0 + $0x2c] sm:$0xf]
  %v27 = vld [vmem:[%s0 + $0x30] sm:$0xf]
  %v28 = vld [vmem:[%s0 + $0x34] sm:$0xf]
  %v29 = vld [vmem:[%s0 + $0x38] sm:$0xf]
  %v30 = vld [vmem:[%s0 + $0x3c] sm:$0xf]
  %v31 = vld [vmem:[%s0 + $0x40] sm:$0xf]
  %v32 = vld [vmem:[%s0 + $0x44] sm:$0xf]
  %v33 = vld [vmem:[%s0 + $0x48] sm:$0xf]
  %v34 = vld [vmem:[%s0 + $0x4c] sm:$0xf]
  %v35 = vld [vmem:[%s0 + $0x50] sm:$0xf]
  %v36 = vld [vmem:[%s0 + $0x54] sm:$0xf]
  %v37 = vld [vmem:[%s0 + $0x58] sm:$0xf]
  %v38 = vld [vmem:[%s0 + $0x5c] sm:$0xf]
  %v39 = vld [vmem:[%s0 + $0x60] sm:$0xf]
  %v40 = vld [vmem:[%s0 + $0x64] sm:$0xf]
  %v41 = vld [vmem:[%s0 + $0x68] sm:$0xf]
  %v42 = vld [vmem:[%s0 + $0x6c] sm:$0xf]
  %v43 = vld [vmem:[%s0 + $0x70] sm:$0xf]
  %v44 = vld [vmem:[%s0 + $0x74] sm:$0xf]
  %v45 = vld [vmem:[%s0 + $0x78] sm:$0xf]
  %v46 = vld [vmem:[%s0 + $0x7c] sm:$0xf]
  %v47 = vld [vmem:[%s0 + $0x80] sm:$0xf]
  %v48 = vld [vmem:[%s0 + $0x84] sm:$0xf]
  %v49 = vld [vmem:[%s0 + $0x88] sm:$0xf]
  %v50 = vld [vmem:[%s0 + $0x8c] sm:$0xf]
  %v51 = vld [vmem:[%s0 + $0x90] sm:$0xf]
  %v52 = vld [vmem:[%s0 + $0x94] sm:$0xf]
  %v53 = vld [vmem:[%s0 + $0x98] sm:$0xf]
  %v54 = vld [vmem:[%s0 + $0x9c] sm:$0xf]
  %v55 = vld [vmem:[%s0 + $0xa0] sm:$0xf]
  %v56 = vld [vmem:[%s0 + $0xa4] sm:$0xf]
  %v57 = vld [vmem:[%s0 + $0xa8] sm:$0xf]
  %v58 = vld [vmem:[%s0 + $0xac] sm:$0xf]
  %v59 = vld [vmem:[%s0 + $0xb0] sm:$0xf]
  %v60 = vld [vmem:[%s0 + $0xb4] sm:$0xf]
  %v61 = vld [vmem:[%s0 + $0xb8] sm:$0xf]
  %v62 = vld [vmem:[%s0 + $0xbc] sm:$0xf]
  %v63 = vld [vmem:[%s0 + $0xc0] sm:$0xf]
  %v64 = vld [vmem:[%s0 + $0xc4] sm:$0xf]
  %v65 = vld [vmem:[%s0 + $0xc8] sm:$0xf]
  %v66 = vld [vmem:[%s0 + $0xcc] sm:$0xf]
  %v67 = vld [vmem:[%s0 + $0xd0] sm:$0xf]
  %v68 = vld [vmem:[%s0 + $0xd4] sm:$0xf]
  %v69 = vld [vmem:[%s0 + $0xd8] sm:$0xf]
  %v70 = vld [vmem:[%s0 + $0xdc] sm:$0xf]
  %v71 = vld [vmem:[%s0 + $0xe0] sm:$0xf]
  %v72 = vld [vmem:[%s0 + $0xe4] sm:$0xf]
  %v73 = vld [vmem:[%s0 + $0xe8] sm:$0xf]
  %v74 = vld [vmem:[%s0 + $0xec] sm:$0xf]
  %v75 = vld [vmem:[%s0 + $0xf0] sm:$0xf]
  %v76 = vld [vmem:[%s0 + $0xf4] sm:$0xf]
  %v77 = vld [vmem:[%s0 + $0xf8] sm:$0xf]
  %v78 = vld [vmem:[%s0 + $0xfc] sm:$0xf]
  %v79 = vld [vmem:[%s0 + $0x100] sm:$0xf]
  %v80 = vld [vmem:[%s0 + $0x104] sm:$0xf]
  %v81 = vld [vmem:[%s0 + $0x108] sm:$0xf]
  %v82 = vld [vmem:[%s0 + $0x10c] sm:$0xf]
  %v83 = vld [vmem:[%s0 + $0x110] sm:$0xf]
  %v84 = vld [vmem:[%s0 + $0x114] sm:$0xf]
  %v85 = vld [vmem:[%s0 + $0x118] sm:$0xf]
  %v86 = vld [vmem:[%s0 + $0x11c] sm:$0xf]
  %v87 = vld [vmem:[%s0 + $0x120] sm:$0xf]
  %v88 = vld [vmem:[%s0 + $0x124] sm:$0xf]
  %v89 = vld [vmem:[%s0 + $0x128] sm:$0xf]
  %v90 = vld [vmem:[%s0 + $0x12c] sm:$0xf]
  %v91 = vld [vmem:[%s0 + $0x130] sm:$0xf]
  %v92 = vld [vmem:[%s0 + $0x134] sm:$0xf]
  %v93 = vld [vmem:[%s0 + $0x138] sm:$0xf]
  %v94 = vld [vmem:[%s0 + $0x13c] sm:$0xf]
  %v95 = vld [vmem:[%s0 + $0x140] sm:$0xf]
  %v96 = vld [vmem:[%s0 + $0x144] sm:$0xf]
  %v97 = vld [vmem:[%s0 + $0x148] sm:$0xf]
  %v98 = vld [vmem:[%s0 + $0x14c] sm:$0xf]
  %v99 = vld [vmem:[%s0 + $0x150] sm:$0xf]
  %v100 = vld [vmem:[%s0 + $0x154] sm:$0xf]
  %v101 = vld [vmem:[%s0 + $0x158] sm:$0xf]
  %v102 = vld [vmem:[%s0 + $0x15c] sm:$0xf]
  %v103 = vld [vmem:[%s0 + $0x160] sm:$0xf]
  %v104 = vld [vmem:[%s0 + $0x164] sm:$0xf]
  %v105 = vld [vmem:[%s0 + $0x168] sm:$0xf]
  %v106 = vld [vmem:[%s0 + $0x16c] sm:$0xf]
  %v107 = vld [vmem:[%s0 + $0x170] sm:$0xf]
  %v108 = vld [vmem:[%s0 + $0x174] sm:$0xf]
  %v109 = vld [vmem:[%s0 + $0x178] sm:$0xf]
  %v110 = vld [vmem:[%s0 + $0x17c] sm:$0xf]
  %v111 = vld [vmem:[%s0 + $0x180] sm:$0xf]
  %v112 = vld [vmem:[%s0 + $0x184] sm:$0xf]
  %v113 = vld [vmem:[%s0 + $0x188] sm:$0xf]
  %v114 = vld [vmem:[%s0 + $0x18c] sm:$0xf]
  %v115 = vld [vmem:[%s0 + $0x190] sm:$0xf]
  %v116 = vld [vmem:[%s0 + $0x194] sm:$0xf]
  %v117 = vld [vmem:[%s0 + $0x198] sm:$0xf]
  %v118 = vld [vmem:[%s0 + $0x19c] sm:$0xf]
  %v119 = vld [vmem:[%s0 + $0x1a0] sm:$0xf]
  %v120 = vld [vmem:[%s0 + $0x1a4] sm:$0xf]
  %v121 = vld [vmem:[%s0 + $0x1a8] sm:$0xf]
  %v122 = vld [vmem:[%s0 + $0x1ac] sm:$0xf]
  %v123 = vld [vmem:[%s0 + $0x1b0] sm:$0xf]
  %v124 = vld [vmem:[%s0 + $0x1b4] sm:$0xf]
  %v125 = vld [vmem:[%s0 + $0x1b8] sm:$0xf]
  %v126 = vld [vmem:[%s0 + $0x1bc] sm:$0xf]
  %v127 = vld [vmem:[%s0 + $0x1c0] sm:$0xf]
  %v128 = vld [vmem:[%s0 + $0x1c4] sm:$0xf]
  %v129 = vld [vmem:[%s0 + $0x1c8] sm:$0xf]
  %v130 = vld [vmem:[%s0 + $0x1cc] sm:$0xf]
  %v131 = vld [vmem:[%s0 + $0x1d0] sm:$0xf]
  %v132 = vld [vmem:[%s0 + $0x1d4] sm:$0xf]
  %v133 = vld [vmem:[%s0 + $0x1d8] sm:$0xf]
  %v134 = vld [vmem:[%s0 + $0x1dc] sm:$0xf]
  %v135 = vld [vmem:[%s0 + $0x1e0] sm:$0xf]
  %v136 = vld [vmem:[%s0 + $0x1e4] sm:$0xf]
  %v137 = vld [vmem:[%s0 + $0x1e8] sm:$0xf]
  %v138 = vld [vmem:[%s0 + $0x1ec] sm:$0xf]
  %v139 = vld [vmem:[%s0 + $0x1f0] sm:$0xf]
  %v140 = vld [vmem:[%s0 + $0x1f4] sm:$0xf]
  %v141 = vld [vmem:[%s0 + $0x1f8] sm:$0xf]
  %v142 = vld [vmem:[%s0 + $0x1fc] sm:$0xf]
  %v143 = vld [vmem:[%s0 + $0x200] sm:$0xf]
  %v144 = vld [vmem:[%s0 + $0x204] sm:$0xf]
  %v145 = vld [vmem:[%s0 + $0x208] sm:$0xf]
  %v146 = vld [vmem:[%s0 + $0x20c] sm:$0xf]
  %v147 = vld [vmem:[%s0 + $0x210] sm:$0xf]
  %v148 = vld [vmem:[%s0 + $0x214] sm:$0xf]
  %v149 = vld [vmem:[%s0 + $0x218] sm:$0xf]
  %v150 = vld [vmem:[%s0 + $0x21c] sm:$0xf]
  %v151 = vld [vmem:[%s0 + $0x220] sm:$0xf]
  %v152 = vld [vmem:[%s0 + $0x224] sm:$0xf]
  %v153 = vld [vmem:[%s0 + $0x228] sm:$0xf]
  %v154 = vld [vmem:[%s0 + $0x22c] sm:$0xf]
  %v155 = vld [vmem:[%s0 + $0x230] sm:$0xf]
  %v156 = vld [vmem:[%s0 + $0x234] sm:$0xf]
  %v157 = vld [vmem:[%s0 + $0x238] sm:$0xf]
  %v158 = vld [vmem:[%s0 + $0x23c] sm:$0xf]
  %v159 = vld [vmem:[%s0 + $0x240] sm:$0xf]
  %v160 = vld [vmem:[%s0 + $0x244] sm:$0xf]
  %v161 = vld [vmem:[%s0 + $0x248] sm:$0xf]
  %v162 = vld [vmem:[%s0 + $0x24c] sm:$0xf]
  %v163 = vld [vmem:[%s0 + $0x250] sm:$0xf]
  %v164 = vld [vmem:[%s0 + $0x254] sm:$0xf]
  %v165 = vld [vmem:[%s0 + $0x258] sm:$0xf]
  %v166 = vld [vmem:[%s0 + $0x25c] sm:$0xf]
  %v167 = vld [vmem:[%s0 + $0x260] sm:$0xf]
  %v168 = vld [vmem:[%s0 + $0x264] sm:$0xf]
  %v169 = vld [vmem:[%s0 + $0x268] sm:$0xf]
  %v170 = vld [vmem:[%s0 + $0x26c] sm:$0xf]
  %v171 = vld [vmem:[%s0 + $0x270] sm:$0xf]
  %v172 = vld [vmem:[%s0 + $0x274] sm:$0xf]
  %v173 = vld [vmem:[%s0 + $0x278] sm:$0xf]
  %v174 = vld [vmem:[%s0 + $0x27c] sm:$0xf]
  %v175 = vld [vmem:[%s0 + $0x280] sm:$0xf]
  %v176 = vld [vmem:[%s0 + $0x284] sm:$0xf]
  %v177 = vld [vmem:[%s0 + $0x288] sm:$0xf]
  %v178 = vld [vmem:[%s0 + $0x28c] sm:$0xf]
  %v179 = vld [vmem:[%s0 + $0x290] sm:$0xf]
  %v180 = vld [vmem:[%s0 + $0x294] sm:$0xf]
  %v181 = vld [vmem:[%s0 + $0x298] sm:$0xf]
  %v182 = vld [vmem:[%s0 + $0x29c] sm:$0xf]
  %v183 = vld [vmem:[%s0 + $0x2a0] sm:$0xf]
  %v184 = vld [vmem:[%s0 + $0x2a4] sm:$0xf]
  %v185 = vld [vmem:[%s0 + $0x2a8] sm:$0xf]
  %v186 = vld [vmem:[%s0 + $0x2ac] sm:$0xf]
  %v187 = vld [vmem:[%s0 + $0x2b0] sm:$0xf]
  %v188 = vld [vmem:[%s0 + $0x2b4] sm:$0xf]
  %v189 = vld [vmem:[%s0 + $0x2b8] sm:$0xf]
  %v190 = vld [vmem:[%s0 + $0x2bc] sm:$0xf]
  %v191 = vld [vmem:[%s0 + $0x2c0] sm:$0xf]
  %v192 = vld [vmem:[%s0 + $0x2c4] sm:$0xf]
  %v193 = vld [vmem:[%s0 + $0x2c8] sm:$0xf]
  %v194 = vld [vmem:[%s0 + $0x2cc] sm:$0xf]
  %v195 = vld [vmem:[%s0 + $0x2d0] sm:$0xf]
  %v196 = vld [vmem:[%s0 + $0x2d4] sm:$0xf]
  %v197 = vld [vmem:[%s0 + $0x2d8] sm:$0xf]
  %v198 = vld [vmem:[%s0 + $0x2dc] sm:$0xf]
  %v199 = vld [vmem:[%s0 + $0x2e0] sm:$0xf]
  %v200 = vld [vmem:[%s0 + $0x2e4] sm:$0xf]
  %v201 = vld [vmem:[%s0 + $0x2e8] sm:$0xf]
  %v202 = vld [vmem:[%s0 + $0x2ec] sm:$0xf]
  %v203 = vld [vmem:[%s0 + $0x2f0] sm:$0xf]
  %v204 = vld [vmem:[%s0 + $0x2f4] sm:$0xf]
  %v205 = vld [vmem:[%s0 + $0x2f8] sm:$0xf]
  %v206 = vld [vmem:[%s0 + $0x2fc] sm:$0xf]
  %v207 = vld [vmem:[%s0 + $0x300] sm:$0xf]
  %v208 = vld [vmem:[%s0 + $0x304] sm:$0xf]
  %v209 = vld [vmem:[%s0 + $0x308] sm:$0xf]
  %v210 = vld [vmem:[%s0 + $0x30c] sm:$0xf]
  %v211 = vld [vmem:[%s0 + $0x310] sm:$0xf]
  %v212 = vld [vmem:[%s0 + $0x314] sm:$0xf]
  %v213 = vld [vmem:[%s0 + $0x318] sm:$0xf]
  %v214 = vld [vmem:[%s0 + $0x31c] sm:$0xf]
  %v215 = vld [vmem:[%s0 + $0x320] sm:$0xf]
  %v216 = vld [vmem:[%s0 + $0x324] sm:$0xf]
  %v217 = vld [vmem:[%s0 + $0x328] sm:$0xf]
  %v218 = vld [vmem:[%s0 + $0x32c] sm:$0xf]
  %v219 = vld [vmem:[%s0 + $0x330] sm:$0xf]
  %v220 = vld [vmem:[%s0 + $0x334] sm:$0xf]
  %v221 = vld [vmem:[%s0 + $0x338] sm:$0xf]
  %v222 = vld [vmem:[%s0 + $0x33c] sm:$0xf]
  %v223 = vld [vmem:[%s0 + $0x340] sm:$0xf]
  %v224 = vld [vmem:[%s0 + $0x344] sm:$0xf]
  %v225 = vld [vmem:[%s0 + $0x348] sm:$0xf]
  %v226 = vld [vmem:[%s0 + $0x34c] sm:$0xf]
  %v227 = vld [vmem:[%s0 + $0x350] sm:$0xf]
  %v228 = vld [vmem:[%s0 + $0x354] sm:$0xf]
  %v229 = vld [vmem:[%s0 + $0x358] sm:$0xf]
  %v230 = vld [vmem:[%s0 + $0x35c] sm:$0xf]
  %v231 = vld [vmem:[%s0 + $0x360] sm:$0xf]
  %v232 = vld [vmem:[%s0 + $0x364] sm:$0xf]
  %v233 = vld [vmem:[%s0 + $0x368] sm:$0xf]
  %v234 = vld [vmem:[%s0 + $0x36c] sm:$0xf]
  %v235 = vld [vmem:[%s0 + $0x370] sm:$0xf]
  %v236 = vld [vmem:[%s0 + $0x374] sm:$0xf]
  %v237 = vld [vmem:[%s0 + $0x378] sm:$0xf]
  %v238 = vld [vmem:[%s0 + $0x37c] sm:$0xf]
  %v239 = vld [vmem:[%s0 + $0x380] sm:$0xf]
  %v240 = vld [vmem:[%s0 + $0x384] sm:$0xf]
  %v241 = vld [vmem:[%s0 + $0x388] sm:$0xf]
  %v242 = vld [vmem:[%s0 + $0x38c] sm:$0xf]
  %v243 = vld [vmem:[%s0 + $0x390] sm:$0xf]
  %v244 = vld [vmem:[%s0 + $0x394] sm:$0xf]
  %v245 = vld [vmem:[%s0 + $0x398] sm:$0xf]
  %v246 = vld [vmem:[%s0 + $0x39c] sm:$0xf]
  %v247 = vld [vmem:[%s0 + $0x3a0] sm:$0xf]
  %v248 = vld [vmem:[%s0 + $0x3a4] sm:$0xf]
  %v249 = vld [vmem:[%s0 + $0x3a8] sm:$0xf]
  %v250 = vld [vmem:[%s0 + $0x3ac] sm:$0xf]
  %v251 = vld [vmem:[%s0 + $0x3b0] sm:$0xf]
  %v252 = vld [vmem:[%s0 + $0x3b4] sm:$0xf]
  %v253 = vld [vmem:[%s0 + $0x3b8] sm:$0xf]
  %v254 = vld [vmem:[%s0 + $0x3bc] sm:$0xf]
  %v255 = vld [vmem:[%s0 + $0x3c0] sm:$0xf]
  %v256 = vld [vmem:[%s0 + $0x3c4] sm:$0xf]
  %v257 = vld [vmem:[%s0 + $0x3c8] sm:$0xf]
  %v258 = vld [vmem:[%s0 + $0x3cc] sm:$0xf]
  %v259 = vld [vmem:[%s0 + $0x3d0] sm:$0xf]
  %v260 = vld [vmem:[%s0 + $0x3d4] sm:$0xf]
  %v261 = vld [vmem:[%s0 + $0x3d8] sm:$0xf]
  %v262 = vld [vmem:[%s0 + $0x3dc] sm:$0xf]
  %v263 = vld [vmem:[%s0 + $0x3e0] sm:$0xf]
  %v264 = vld [vmem:[%s0 + $0x3e4] sm:$0xf]
  %v265 = vld [vmem:[%s0 + $0x3e8] sm:$0xf]
  %v266 = vld [vmem:[%s0 + $0x3ec] sm:$0xf]
  %v267 = vld [vmem:[%s0 + $0x3f0] sm:$0xf]
  %v268 = vld [vmem:[%s0 + $0x3f4] sm:$0xf]
  %v269 = vld [vmem:[%s0 + $0x3f8] sm:$0xf]
  %v270 = vld [vmem:[%s0 + $0x3fc] sm:$0xf]
  %v271 = vld [vmem:[%s1] sm:$0x1]
  %v272 = vld [vmem:[%s2] sm:$0x1]
  %v274 = vlaneseq
  %v275 = vshrl.u32 %v274, 7
  %v276 = vsub.s32 0, %v275
  %v277 = vrot.slane %v272, %v276
  %v535 = vunpack.c.l.b16 %v15
  %v536 = vunpack.c.l.b16 %v16
  %v537 = vunpack.c.l.b16 %v17
  %v538 = vunpack.c.l.b16 %v18
  %v539 = vunpack.c.l.b16 %v19
  %v540 = vunpack.c.l.b16 %v20
  %v541 = vunpack.c.l.b16 %v21
  %v542 = vunpack.c.l.b16 %v22
  %v543 = vunpack.c.l.b16 %v23
  %v544 = vunpack.c.l.b16 %v24
  %v545 = vunpack.c.l.b16 %v25
  %v546 = vunpack.c.l.b16 %v26
  %v547 = vunpack.c.l.b16 %v27
  %v548 = vunpack.c.l.b16 %v28
  %v549 = vunpack.c.l.b16 %v29
  %v550 = vunpack.c.l.b16 %v30
  %v551 = vunpack.c.l.b16 %v31
  %v552 = vunpack.c.l.b16 %v32
  %v553 = vunpack.c.l.b16 %v33
  %v554 = vunpack.c.l.b16 %v34
  %v555 = vunpack.c.l.b16 %v35
  %v556 = vunpack.c.l.b16 %v36
  %v557 = vunpack.c.l.b16 %v37
  %v558 = vunpack.c.l.b16 %v38
  %v559 = vunpack.c.l.b16 %v39
  %v560 = vunpack.c.l.b16 %v40
  %v561 = vunpack.c.l.b16 %v41
  %v562 = vunpack.c.l.b16 %v42
  %v563 = vunpack.c.l.b16 %v43
  %v564 = vunpack.c.l.b16 %v44
  %v565 = vunpack.c.l.b16 %v45
  %v566 = vunpack.c.l.b16 %v46
  %v567 = vunpack.c.l.b16 %v47
  %v568 = vunpack.c.l.b16 %v48
  %v569 = vunpack.c.l.b16 %v49
  %v570 = vunpack.c.l.b16 %v50
  %v571 = vunpack.c.l.b16 %v51
  %v572 = vunpack.c.l.b16 %v52
  %v573 = vunpack.c.l.b16 %v53
  %v574 = vunpack.c.l.b16 %v54
  %v575 = vunpack.c.l.b16 %v55
  %v576 = vunpack.c.l.b16 %v56
  %v577 = vunpack.c.l.b16 %v57
  %v578 = vunpack.c.l.b16 %v58
  %v579 = vunpack.c.l.b16 %v59
  %v580 = vunpack.c.l.b16 %v60
  %v581 = vunpack.c.l.b16 %v61
  %v582 = vunpack.c.l.b16 %v62
  %v583 = vunpack.c.l.b16 %v63
  %v584 = vunpack.c.l.b16 %v64
  %v585 = vunpack.c.l.b16 %v65
  %v586 = vunpack.c.l.b16 %v66
  %v587 = vunpack.c.l.b16 %v67
  %v588 = vunpack.c.l.b16 %v68
  %v589 = vunpack.c.l.b16 %v69
  %v590 = vunpack.c.l.b16 %v70
  %v591 = vunpack.c.l.b16 %v71
  %v592 = vunpack.c.l.b16 %v72
  %v593 = vunpack.c.l.b16 %v73
  %v594 = vunpack.c.l.b16 %v74
  %v595 = vunpack.c.l.b16 %v75
  %v596 = vunpack.c.l.b16 %v76
  %v597 = vunpack.c.l.b16 %v77
  %v598 = vunpack.c.l.b16 %v78
  %v599 = vunpack.c.l.b16 %v79
  %v600 = vunpack.c.l.b16 %v80
  %v601 = vunpack.c.l.b16 %v81
  %v602 = vunpack.c.l.b16 %v82
  %v603 = vunpack.c.l.b16 %v83
  %v604 = vunpack.c.l.b16 %v84
  %v605 = vunpack.c.l.b16 %v85
  %v606 = vunpack.c.l.b16 %v86
  %v607 = vunpack.c.l.b16 %v87
  %v608 = vunpack.c.l.b16 %v88
  %v609 = vunpack.c.l.b16 %v89
  %v610 = vunpack.c.l.b16 %v90
  %v611 = vunpack.c.l.b16 %v91
  %v612 = vunpack.c.l.b16 %v92
  %v613 = vunpack.c.l.b16 %v93
  %v614 = vunpack.c.l.b16 %v94
  %v615 = vunpack.c.l.b16 %v95
  %v616 = vunpack.c.l.b16 %v96
  %v617 = vunpack.c.l.b16 %v97
  %v618 = vunpack.c.l.b16 %v98
  %v619 = vunpack.c.l.b16 %v99
  %v620 = vunpack.c.l.b16 %v100
  %v621 = vunpack.c.l.b16 %v101
  %v622 = vunpack.c.l.b16 %v102
  %v623 = vunpack.c.l.b16 %v103
  %v624 = vunpack.c.l.b16 %v104
  %v625 = vunpack.c.l.b16 %v105
  %v626 = vunpack.c.l.b16 %v106
  %v627 = vunpack.c.l.b16 %v107
  %v628 = vunpack.c.l.b16 %v108
  %v629 = vunpack.c.l.b16 %v109
  %v630 = vunpack.c.l.b16 %v110
  %v631 = vunpack.c.l.b16 %v111
  %v632 = vunpack.c.l.b16 %v112
  %v633 = vunpack.c.l.b16 %v113
  %v634 = vunpack.c.l.b16 %v114
  %v635 = vunpack.c.l.b16 %v115
  %v636 = vunpack.c.l.b16 %v116
  %v637 = vunpack.c.l.b16 %v117
  %v638 = vunpack.c.l.b16 %v118
  %v639 = vunpack.c.l.b16 %v119
  %v640 = vunpack.c.l.b16 %v120
  %v641 = vunpack.c.l.b16 %v121
  %v642 = vunpack.c.l.b16 %v122
  %v643 = vunpack.c.l.b16 %v123
  %v644 = vunpack.c.l.b16 %v124
  %v645 = vunpack.c.l.b16 %v125
  %v646 = vunpack.c.l.b16 %v126
  %v647 = vunpack.c.l.b16 %v127
  %v648 = vunpack.c.l.b16 %v128
  %v649 = vunpack.c.l.b16 %v129
  %v650 = vunpack.c.l.b16 %v130
  %v651 = vunpack.c.l.b16 %v131
  %v652 = vunpack.c.l.b16 %v132
  %v653 = vunpack.c.l.b16 %v133
  %v654 = vunpack.c.l.b16 %v134
  %v655 = vunpack.c.l.b16 %v135
  %v656 = vunpack.c.l.b16 %v136
  %v657 = vunpack.c.l.b16 %v137
  %v658 = vunpack.c.l.b16 %v138
  %v659 = vunpack.c.l.b16 %v139
  %v660 = vunpack.c.l.b16 %v140
  %v661 = vunpack.c.l.b16 %v141
  %v662 = vunpack.c.l.b16 %v142
  %v663 = vunpack.c.l.b16 %v143
  %v664 = vunpack.c.l.b16 %v144
  %v665 = vunpack.c.l.b16 %v145
  %v666 = vunpack.c.l.b16 %v146
  %v667 = vunpack.c.l.b16 %v147
  %v668 = vunpack.c.l.b16 %v148
  %v669 = vunpack.c.l.b16 %v149
  %v670 = vunpack.c.l.b16 %v150
  %v671 = vunpack.c.l.b16 %v151
  %v672 = vunpack.c.l.b16 %v152
  %v673 = vunpack.c.l.b16 %v153
  %v674 = vunpack.c.l.b16 %v154
  %v675 = vunpack.c.l.b16 %v155
  %v676 = vunpack.c.l.b16 %v156
  %v677 = vunpack.c.l.b16 %v157
  %v678 = vunpack.c.l.b16 %v158
  %v679 = vunpack.c.l.b16 %v159
  %v680 = vunpack.c.l.b16 %v160
  %v681 = vunpack.c.l.b16 %v161
  %v682 = vunpack.c.l.b16 %v162
  %v683 = vunpack.c.l.b16 %v163
  %v684 = vunpack.c.l.b16 %v164
  %v685 = vunpack.c.l.b16 %v165
  %v686 = vunpack.c.l.b16 %v166
  %v687 = vunpack.c.l.b16 %v167
  %v688 = vunpack.c.l.b16 %v168
  %v689 = vunpack.c.l.b16 %v169
  %v690 = vunpack.c.l.b16 %v170
  %v691 = vunpack.c.l.b16 %v171
  %v692 = vunpack.c.l.b16 %v172
  %v693 = vunpack.c.l.b16 %v173
  %v694 = vunpack.c.l.b16 %v174
  %v695 = vunpack.c.l.b16 %v175
  %v696 = vunpack.c.l.b16 %v176
  %v697 = vunpack.c.l.b16 %v177
  %v698 = vunpack.c.l.b16 %v178
  %v699 = vunpack.c.l.b16 %v179
  %v700 = vunpack.c.l.b16 %v180
  %v701 = vunpack.c.l.b16 %v181
  %v702 = vunpack.c.l.b16 %v182
  %v703 = vunpack.c.l.b16 %v183
  %v704 = vunpack.c.l.b16 %v184
  %v705 = vunpack.c.l.b16 %v185
  %v706 = vunpack.c.l.b16 %v186
  %v707 = vunpack.c.l.b16 %v187
  %v708 = vunpack.c.l.b16 %v188
  %v709 = vunpack.c.l.b16 %v189
  %v710 = vunpack.c.l.b16 %v190
  %v711 = vunpack.c.l.b16 %v191
  %v712 = vunpack.c.l.b16 %v192
  %v713 = vunpack.c.l.b16 %v193
  %v714 = vunpack.c.l.b16 %v194
  %v715 = vunpack.c.l.b16 %v195
  %v716 = vunpack.c.l.b16 %v196
  %v717 = vunpack.c.l.b16 %v197
  %v718 = vunpack.c.l.b16 %v198
  %v719 = vunpack.c.l.b16 %v199
  %v720 = vunpack.c.l.b16 %v200
  %v721 = vunpack.c.l.b16 %v201
  %v722 = vunpack.c.l.b16 %v202
  %v723 = vunpack.c.l.b16 %v203
  %v724 = vunpack.c.l.b16 %v204
  %v725 = vunpack.c.l.b16 %v205
  %v726 = vunpack.c.l.b16 %v206
  %v727 = vunpack.c.l.b16 %v207
  %v728 = vunpack.c.l.b16 %v208
  %v729 = vunpack.c.l.b16 %v209
  %v730 = vunpack.c.l.b16 %v210
  %v731 = vunpack.c.l.b16 %v211
  %v732 = vunpack.c.l.b16 %v212
  %v733 = vunpack.c.l.b16 %v213
  %v734 = vunpack.c.l.b16 %v214
  %v735 = vunpack.c.l.b16 %v215
  %v736 = vunpack.c.l.b16 %v216
  %v737 = vunpack.c.l.b16 %v217
  %v738 = vunpack.c.l.b16 %v218
  %v739 = vunpack.c.l.b16 %v219
  %v740 = vunpack.c.l.b16 %v220
  %v741 = vunpack.c.l.b16 %v221
  %v742 = vunpack.c.l.b16 %v222
  %v743 = vunpack.c.l.b16 %v223
  %v744 = vunpack.c.l.b16 %v224
  %v745 = vunpack.c.l.b16 %v225
  %v746 = vunpack.c.l.b16 %v226
  %v747 = vunpack.c.l.b16 %v227
  %v748 = vunpack.c.l.b16 %v228
  %v749 = vunpack.c.l.b16 %v229
  %v750 = vunpack.c.l.b16 %v230
  %v751 = vunpack.c.l.b16 %v231
  %v752 = vunpack.c.l.b16 %v232
  %v753 = vunpack.c.l.b16 %v233
  %v754 = vunpack.c.l.b16 %v234
  %v755 = vunpack.c.l.b16 %v235
  %v756 = vunpack.c.l.b16 %v236
  %v757 = vunpack.c.l.b16 %v237
  %v758 = vunpack.c.l.b16 %v238
  %v759 = vunpack.c.l.b16 %v239
  %v760 = vunpack.c.l.b16 %v240
  %v761 = vunpack.c.l.b16 %v241
  %v762 = vunpack.c.l.b16 %v242
  %v763 = vunpack.c.l.b16 %v243
  %v764 = vunpack.c.l.b16 %v244
  %v765 = vunpack.c.l.b16 %v245
  %v766 = vunpack.c.l.b16 %v246
  %v767 = vunpack.c.l.b16 %v247
  %v768 = vunpack.c.l.b16 %v248
  %v769 = vunpack.c.l.b16 %v249
  %v770 = vunpack.c.l.b16 %v250
  %v771 = vunpack.c.l.b16 %v251
  %v772 = vunpack.c.l.b16 %v252
  %v773 = vunpack.c.l.b16 %v253
  %v774 = vunpack.c.l.b16 %v254
  %v775 = vunpack.c.l.b16 %v255
  %v776 = vunpack.c.l.b16 %v256
  %v777 = vunpack.c.l.b16 %v257
  %v778 = vunpack.c.l.b16 %v258
  %v779 = vunpack.c.l.b16 %v259
  %v780 = vunpack.c.l.b16 %v260
  %v781 = vunpack.c.l.b16 %v261
  %v782 = vunpack.c.l.b16 %v262
  %v783 = vunpack.c.l.b16 %v263
  %v784 = vunpack.c.l.b16 %v264
  %v785 = vunpack.c.l.b16 %v265
  %v786 = vunpack.c.l.b16 %v266
  %v787 = vunpack.c.l.b16 %v267
  %v788 = vunpack.c.l.b16 %v268
  %v789 = vunpack.c.l.b16 %v269
  %v790 = vunpack.c.l.b16 %v270
  %v791 = vpack.c.b16 %v536, %v535
  %v792 = vpack.c.b16 %v538, %v537
  %v793 = vpack.c.b16 %v540, %v539
  %v794 = vpack.c.b16 %v542, %v541
  %v795 = vpack.c.b16 %v544, %v543
  %v796 = vpack.c.b16 %v546, %v545
  %v797 = vpack.c.b16 %v548, %v547
  %v798 = vpack.c.b16 %v550, %v549
  %v799 = vpack.c.b16 %v552, %v551
  %v800 = vpack.c.b16 %v554, %v553
  %v801 = vpack.c.b16 %v556, %v555
  %v802 = vpack.c.b16 %v558, %v557
  %v803 = vpack.c.b16 %v560, %v559
  %v804 = vpack.c.b16 %v562, %v561
  %v805 = vpack.c.b16 %v564, %v563
  %v806 = vpack.c.b16 %v566, %v565
  %v807 = vpack.c.b16 %v568, %v567
  %v808 = vpack.c.b16 %v570, %v569
  %v809 = vpack.c.b16 %v572, %v571
  %v810 = vpack.c.b16 %v574, %v573
  %v811 = vpack.c.b16 %v576, %v575
  %v812 = vpack.c.b16 %v578, %v577
  %v813 = vpack.c.b16 %v580, %v579
  %v814 = vpack.c.b16 %v582, %v581
  %v815 = vpack.c.b16 %v584, %v583
  %v816 = vpack.c.b16 %v586, %v585
  %v817 = vpack.c.b16 %v588, %v587
  %v818 = vpack.c.b16 %v590, %v589
  %v819 = vpack.c.b16 %v592, %v591
  %v820 = vpack.c.b16 %v594, %v593
  %v821 = vpack.c.b16 %v596, %v595
  %v822 = vpack.c.b16 %v598, %v597
  %v823 = vpack.c.b16 %v600, %v599
  %v824 = vpack.c.b16 %v602, %v601
  %v825 = vpack.c.b16 %v604, %v603
  %v826 = vpack.c.b16 %v606, %v605
  %v827 = vpack.c.b16 %v608, %v607
  %v828 = vpack.c.b16 %v610, %v609
  %v829 = vpack.c.b16 %v612, %v611
  %v830 = vpack.c.b16 %v614, %v613
  %v831 = vpack.c.b16 %v616, %v615
  %v832 = vpack.c.b16 %v618, %v617
  %v833 = vpack.c.b16 %v620, %v619
  %v834 = vpack.c.b16 %v622, %v621
  %v835 = vpack.c.b16 %v624, %v623
  %v836 = vpack.c.b16 %v626, %v625
  %v837 = vpack.c.b16 %v628, %v627
  %v838 = vpack.c.b16 %v630, %v629
  %v839 = vpack.c.b16 %v632, %v631
  %v840 = vpack.c.b16 %v634, %v633
  %v841 = vpack.c.b16 %v636, %v635
  %v842 = vpack.c.b16 %v638, %v637
  %v843 = vpack.c.b16 %v640, %v639
  %v844 = vpack.c.b16 %v642, %v641
  %v845 = vpack.c.b16 %v644, %v643
  %v846 = vpack.c.b16 %v646, %v645
  %v847 = vpack.c.b16 %v648, %v647
  %v848 = vpack.c.b16 %v650, %v649
  %v849 = vpack.c.b16 %v652, %v651
  %v850 = vpack.c.b16 %v654, %v653
  %v851 = vpack.c.b16 %v656, %v655
  %v852 = vpack.c.b16 %v658, %v657
  %v853 = vpack.c.b16 %v660, %v659
  %v854 = vpack.c.b16 %v662, %v661
  %v855 = vpack.c.b16 %v664, %v663
  %v856 = vpack.c.b16 %v666, %v665
  %v857 = vpack.c.b16 %v668, %v667
  %v858 = vpack.c.b16 %v670, %v669
  %v859 = vpack.c.b16 %v672, %v671
  %v860 = vpack.c.b16 %v674, %v673
  %v861 = vpack.c.b16 %v676, %v675
  %v862 = vpack.c.b16 %v678, %v677
  %v863 = vpack.c.b16 %v680, %v679
  %v864 = vpack.c.b16 %v682, %v681
  %v865 = vpack.c.b16 %v684, %v683
  %v866 = vpack.c.b16 %v686, %v685
  %v867 = vpack.c.b16 %v688, %v687
  %v868 = vpack.c.b16 %v690, %v689
  %v869 = vpack.c.b16 %v692, %v691
  %v870 = vpack.c.b16 %v694, %v693
  %v871 = vpack.c.b16 %v696, %v695
  %v872 = vpack.c.b16 %v698, %v697
  %v873 = vpack.c.b16 %v700, %v699
  %v874 = vpack.c.b16 %v702, %v701
  %v875 = vpack.c.b16 %v704, %v703
  %v876 = vpack.c.b16 %v706, %v705
  %v877 = vpack.c.b16 %v708, %v707
  %v878 = vpack.c.b16 %v710, %v709
  %v879 = vpack.c.b16 %v712, %v711
  %v880 = vpack.c.b16 %v714, %v713
  %v881 = vpack.c.b16 %v716, %v715
  %v882 = vpack.c.b16 %v718, %v717
  %v883 = vpack.c.b16 %v720, %v719
  %v884 = vpack.c.b16 %v722, %v721
  %v885 = vpack.c.b16 %v724, %v723
  %v886 = vpack.c.b16 %v726, %v725
  %v887 = vpack.c.b16 %v728, %v727
  %v888 = vpack.c.b16 %v730, %v729
  %v889 = vpack.c.b16 %v732, %v731
  %v890 = vpack.c.b16 %v734, %v733
  %v891 = vpack.c.b16 %v736, %v735
  %v892 = vpack.c.b16 %v738, %v737
  %v893 = vpack.c.b16 %v740, %v739
  %v894 = vpack.c.b16 %v742, %v741
  %v895 = vpack.c.b16 %v744, %v743
  %v896 = vpack.c.b16 %v746, %v745
  %v897 = vpack.c.b16 %v748, %v747
  %v898 = vpack.c.b16 %v750, %v749
  %v899 = vpack.c.b16 %v752, %v751
  %v900 = vpack.c.b16 %v754, %v753
  %v901 = vpack.c.b16 %v756, %v755
  %v902 = vpack.c.b16 %v758, %v757
  %v903 = vpack.c.b16 %v760, %v759
  %v904 = vpack.c.b16 %v762, %v761
  %v905 = vpack.c.b16 %v764, %v763
  %v906 = vpack.c.b16 %v766, %v765
  %v907 = vpack.c.b16 %v768, %v767
  %v908 = vpack.c.b16 %v770, %v769
  %v909 = vpack.c.b16 %v772, %v771
  %v910 = vpack.c.b16 %v774, %v773
  %v911 = vpack.c.b16 %v776, %v775
  %v912 = vpack.c.b16 %v778, %v777
  %v913 = vpack.c.b16 %v780, %v779
  %v914 = vpack.c.b16 %v782, %v781
  %v915 = vpack.c.b16 %v784, %v783
  %v916 = vpack.c.b16 %v786, %v785
  %v917 = vpack.c.b16 %v788, %v787
  %v918 = vpack.c.b16 %v790, %v789
  %vm919 = vcmask 15360
  %v921 = vsel %vm919, %v791, 0
  %v924 = vsel %vm919, %v792, 0
  %v927 = vsel %vm919, %v793, 0
  %v930 = vsel %vm919, %v794, 0
  %v933 = vsel %vm919, %v795, 0
  %v936 = vsel %vm919, %v796, 0
  %v939 = vsel %vm919, %v797, 0
  %v942 = vsel %vm919, %v798, 0
  %v945 = vsel %vm919, %v799, 0
  %v948 = vsel %vm919, %v800, 0
  %v951 = vsel %vm919, %v801, 0
  %v954 = vsel %vm919, %v802, 0
  %v957 = vsel %vm919, %v803, 0
  %v960 = vsel %vm919, %v804, 0
  %v963 = vsel %vm919, %v805, 0
  %v966 = vsel %vm919, %v806, 0
  %v969 = vsel %vm919, %v807, 0
  %v972 = vsel %vm919, %v808, 0
  %v975 = vsel %vm919, %v809, 0
  %v978 = vsel %vm919, %v810, 0
  %v981 = vsel %vm919, %v811, 0
  %v984 = vsel %vm919, %v812, 0
  %v987 = vsel %vm919, %v813, 0
  %v990 = vsel %vm919, %v814, 0
  %v993 = vsel %vm919, %v815, 0
  %v996 = vsel %vm919, %v816, 0
  %v999 = vsel %vm919, %v817, 0
  %v1002 = vsel %vm919, %v818, 0
  %v1005 = vsel %vm919, %v819, 0
  %v1008 = vsel %vm919, %v820, 0
  %v1011 = vsel %vm919, %v821, 0
  %v1014 = vsel %vm919, %v822, 0
  %v1017 = vsel %vm919, %v823, 0
  %v1020 = vsel %vm919, %v824, 0
  %v1023 = vsel %vm919, %v825, 0
  %v1026 = vsel %vm919, %v826, 0
  %v1029 = vsel %vm919, %v827, 0
  %v1032 = vsel %vm919, %v828, 0
  %v1035 = vsel %vm919, %v829, 0
  %v1038 = vsel %vm919, %v830, 0
  %v1041 = vsel %vm919, %v831, 0
  %v1044 = vsel %vm919, %v832, 0
  %v1047 = vsel %vm919, %v833, 0
  %v1050 = vsel %vm919, %v834, 0
  %v1053 = vsel %vm919, %v835, 0
  %v1056 = vsel %vm919, %v836, 0
  %v1059 = vsel %vm919, %v837, 0
  %v1062 = vsel %vm919, %v838, 0
  %v1065 = vsel %vm919, %v839, 0
  %v1068 = vsel %vm919, %v840, 0
  %v1071 = vsel %vm919, %v841, 0
  %v1074 = vsel %vm919, %v842, 0
  %v1077 = vsel %vm919, %v843, 0
  %v1080 = vsel %vm919, %v844, 0
  %v1083 = vsel %vm919, %v845, 0
  %v1086 = vsel %vm919, %v846, 0
  %v1089 = vsel %vm919, %v847, 0
  %v1092 = vsel %vm919, %v848, 0
  %v1095 = vsel %vm919, %v849, 0
  %v1098 = vsel %vm919, %v850, 0
  %v1101 = vsel %vm919, %v851, 0
  %v1104 = vsel %vm919, %v852, 0
  %v1107 = vsel %vm919, %v853, 0
  %v1110 = vsel %vm919, %v854, 0
  %v1113 = vsel %vm919, %v855, 0
  %v1116 = vsel %vm919, %v856, 0
  %v1119 = vsel %vm919, %v857, 0
  %v1122 = vsel %vm919, %v858, 0
  %v1125 = vsel %vm919, %v859, 0
  %v1128 = vsel %vm919, %v860, 0
  %v1131 = vsel %vm919, %v861, 0
  %v1134 = vsel %vm919, %v862, 0
  %v1137 = vsel %vm919, %v863, 0
  %v1140 = vsel %vm919, %v864, 0
  %v1143 = vsel %vm919, %v865, 0
  %v1146 = vsel %vm919, %v866, 0
  %v1149 = vsel %vm919, %v867, 0
  %v1152 = vsel %vm919, %v868, 0
  %v1155 = vsel %vm919, %v869, 0
  %v1158 = vsel %vm919, %v870, 0
  %v1161 = vsel %vm919, %v871, 0
  %v1164 = vsel %vm919, %v872, 0
  %v1167 = vsel %vm919, %v873, 0
  %v1170 = vsel %vm919, %v874, 0
  %v1173 = vsel %vm919, %v875, 0
  %v1176 = vsel %vm919, %v876, 0
  %v1179 = vsel %vm919, %v877, 0
  %v1182 = vsel %vm919, %v878, 0
  %v1185 = vsel %vm919, %v879, 0
  %v1188 = vsel %vm919, %v880, 0
  %v1191 = vsel %vm919, %v881, 0
  %v1194 = vsel %vm919, %v882, 0
  %v1197 = vsel %vm919, %v883, 0
  %v1200 = vsel %vm919, %v884, 0
  %v1203 = vsel %vm919, %v885, 0
  %v1206 = vsel %vm919, %v886, 0
  %v1209 = vsel %vm919, %v887, 0
  %v1212 = vsel %vm919, %v888, 0
  %v1215 = vsel %vm919, %v889, 0
  %v1218 = vsel %vm919, %v890, 0
  %v1221 = vsel %vm919, %v891, 0
  %v1224 = vsel %vm919, %v892, 0
  %v1227 = vsel %vm919, %v893, 0
  %v1230 = vsel %vm919, %v894, 0
  %v1233 = vsel %vm919, %v895, 0
  %v1236 = vsel %vm919, %v896, 0
  %v1239 = vsel %vm919, %v897, 0
  %v1242 = vsel %vm919, %v898, 0
  %v1245 = vsel %vm919, %v899, 0
  %v1248 = vsel %vm919, %v900, 0
  %v1251 = vsel %vm919, %v901, 0
  %v1254 = vsel %vm919, %v902, 0
  %v1257 = vsel %vm919, %v903, 0
  %v1260 = vsel %vm919, %v904, 0
  %v1263 = vsel %vm919, %v905, 0
  %v1266 = vsel %vm919, %v906, 0
  %v1269 = vsel %vm919, %v907, 0
  %v1272 = vsel %vm919, %v908, 0
  %v1275 = vsel %vm919, %v909, 0
  %v1278 = vsel %vm919, %v910, 0
  %v1281 = vsel %vm919, %v911, 0
  %v1284 = vsel %vm919, %v912, 0
  %v1287 = vsel %vm919, %v913, 0
  %v1290 = vsel %vm919, %v914, 0
  %v1293 = vsel %vm919, %v915, 0
  %v1296 = vsel %vm919, %v916, 0
  %v1299 = vsel %vm919, %v917, 0
  %v1302 = vsel %vm919, %v918, 0
  %vm1304 = vcmask 1040384
  %v1306 = vsel %vm1304, %v271, 0
  %1308 = vmatprep.subr.bf16.mxu0 0
  %1309 = vmatpush1.bf16.msra.mxu0 %v1306
  %1310 = vmatprep.subr.bf16.mxu0 0
  %1311 = vmatpush1.bf16.msra.mxu0 0
  %1312 = vmatprep.subr.bf16.mxu0 0
  %1313 = vmatpush1.bf16.msra.mxu0 0
  %1314 = vmatprep.subr.bf16.mxu0 0
  %1315 = vmatpush1.bf16.msra.mxu0 0
  %1316 = vmatprep.subr.bf16.mxu0 0
  %1317 = vmatpush1.bf16.msra.mxu0 0
  %1318 = vmatprep.subr.bf16.mxu0 0
  %1319 = vmatpush1.bf16.msra.mxu0 0
  %1320 = vmatprep.subr.bf16.mxu0 0
  %1321 = vmatpush1.bf16.msra.mxu0 0
  %1322 = vmatprep.subr.bf16.mxu0 0
  %1323 = vmatpush1.bf16.msra.mxu0 0
  %1324 = vmatprep.subr.bf16.mxu0 0
  %1325 = vmatpush1.bf16.msra.mxu0 0
  %1326 = vmatprep.subr.bf16.mxu0 0
  %1327 = vmatpush1.bf16.msra.mxu0 0
  %1328 = vmatprep.subr.bf16.mxu0 0
  %1329 = vmatpush1.bf16.msra.mxu0 0
  %1330 = vmatprep.subr.bf16.mxu0 0
  %1331 = vmatpush1.bf16.msra.mxu0 0
  %1332 = vmatprep.subr.bf16.mxu0 0
  %1333 = vmatpush1.bf16.msra.mxu0 0
  %1334 = vmatprep.subr.bf16.mxu0 0
  %1335 = vmatpush1.bf16.msra.mxu0 0
  %1336 = vmatprep.subr.bf16.mxu0 0
  %1337 = vmatpush1.bf16.msra.mxu0 0
  %1338 = vmatprep.subr.bf16.mxu0 0
  %1339 = vmatpush1.bf16.msra.mxu0 0
  %1340 = vmatprep.mubr.bf16.mxu0 0
  %1341 = vmatmul.mubr.bf16.gmra.mrb[0].mxu0 %v921
  %v1342 = vpop.f32.mrb[0].mxu0
  %v1343 = vadd.f32 %v277, %v1342
  %v1344 = vpop.f32.mrb[0].mxu0
  %v1345 = vpop.f32.mrb[0].mxu0
  %v1346 = vadd.f32 %v277, %v1345
  %v1347 = vpop.f32.mrb[0].mxu0
  %1348 = vmatprep.mubr.bf16.mxu0 0
  %1349 = vmatmul.mubr.bf16.gmra.mrb[0].mxu0 %v924
  %v1350 = vpop.f32.mrb[0].mxu0
  %v1351 = vadd.f32 %v277, %v1350
  %v1352 = vpop.f32.mrb[0].mxu0
  %v1353 = vpop.f32.mrb[0].mxu0
  %v1354 = vadd.f32 %v277, %v1353
  %v1355 = vpop.f32.mrb[0].mxu0
  %1356 = vmatprep.mubr.bf16.mxu0 0
  %1357 = vmatmul.mubr.bf16.gmra.mrb[0].mxu0 %v927
  %v1358 = vpop.f32.mrb[0].mxu0
  %v1359 = vadd.f32 %v277, %v1358
  %v1360 = vpop.f32.mrb[0].mxu0
  %v1361 = vpop.f32.mrb[0].mxu0
  %v1362 = vadd.f32 %v277, %v1361
  %v1363 = vpop.f32.mrb[0].mxu0
  %1364 = vmatprep.mubr.bf16.mxu0 0
  %1365 = vmatmul.mubr.bf16.gmra.mrb[0].mxu0 %v930
  %v1366 = vpop.f32.mrb[0].mxu0
  %v1367 = vadd.f32 %v277, %v1366
  %v1368 = vpop.f32.mrb[0].mxu0
  %v1369 = vpop.f32.mrb[0].mxu0
  %v1370 = vadd.f32 %v277, %v1369
  %v1371 = vpop.f32.mrb[0].mxu0
  %1372 = vmatprep.mubr.bf16.mxu0 0
  %1373 = vmatmul.mubr.bf16.gmra.mrb[0].mxu0 %v933
  %v1374 = vpop.f32.mrb[0].mxu0
  %v1375 = vadd.f32 %v277, %v1374
  %v1376 = vpop.f32.mrb[0].mxu0
  %v1377 = vpop.f32.mrb[0].mxu0
  %v1378 = vadd.f32 %v277, %v1377
  %v1379 = vpop.f32.mrb[0].mxu0
  %1380 = vmatprep.mubr.bf16.mxu0 0
  %1381 = vmatmul.mubr.bf16.gmra.mrb[0].mxu0 %v936
  %v1382 = vpop.f32.mrb[0].mxu0
  %v1383 = vadd.f32 %v277, %v1382
  %v1384 = vpop.f32.mrb[0].mxu0
  %v1385 = vpop.f32.mrb[0].mxu0
  %v1386 = vadd.f32 %v277, %v1385
  %v1387 = vpop.f32.mrb[0].mxu0
  %1388 = vmatprep.mubr.bf16.mxu0 0
  %1389 = vmatmul.mubr.bf16.gmra.mrb[0].mxu0 %v939
  %v1390 = vpop.f32.mrb[0].mxu0
  %v1391 = vadd.f32 %v277, %v1390
  %v1392 = vpop.f32.mrb[0].mxu0
  %v1393 = vpop.f32.mrb[0].mxu0
  %v1394 = vadd.f32 %v277, %v1393
  %v1395 = vpop.f32.mrb[0].mxu0
  %1396 = vmatprep.mubr.bf16.mxu0 0
  %1397 = vmatmul.mubr.bf16.gmra.mrb[0].mxu0 %v942
  %v1398 = vpop.f32.mrb[0].mxu0
  %v1399 = vadd.f32 %v277, %v1398
  %v1400 = vpop.f32.mrb[0].mxu0
  %v1401 = vpop.f32.mrb[0].mxu0
  %v1402 = vadd.f32 %v277, %v1401
  %v1403 = vpop.f32.mrb[0].mxu0
  %1404 = vmatprep.mubr.bf16.mxu0 0
  %1405 = vmatmul.mubr.bf16.gmra.mrb[0].mxu0 %v945
  %v1406 = vpop.f32.mrb[0].mxu0
  %v1407 = vadd.f32 %v277, %v1406
  %v1408 = vpop.f32.mrb[0].mxu0
  %v1409 = vpop.f32.mrb[0].mxu0
  %v1410 = vadd.f32 %v277, %v1409
  %v1411 = vpop.f32.mrb[0].mxu0
  %1412 = vmatprep.mubr.bf16.mxu0 0
  %1413 = vmatmul.mubr.bf16.gmra.mrb[0].mxu0 %v948
  %v1414 = vpop.f32.mrb[0].mxu0
  %v1415 = vadd.f32 %v277, %v1414
  %v1416 = vpop.f32.mrb[0].mxu0
  %v1417 = vpop.f32.mrb[0].mxu0
  %v1418 = vadd.f32 %v277, %v1417
  %v1419 = vpop.f32.mrb[0].mxu0
  %1420 = vmatprep.mubr.bf16.mxu0 0
  %1421 = vmatmul.mubr.bf16.gmra.mrb[0].mxu0 %v951
  %v1422 = vpop.f32.mrb[0].mxu0
  %v1423 = vadd.f32 %v277, %v1422
  %v1424 = vpop.f32.mrb[0].mxu0
  %v1425 = vpop.f32.mrb[0].mxu0
  %v1426 = vadd.f32 %v277, %v1425
  %v1427 = vpop.f32.mrb[0].mxu0
  %1428 = vmatprep.mubr.bf16.mxu0 0
  %1429 = vmatmul.mubr.bf16.gmra.mrb[0].mxu0 %v954
  %v1430 = vpop.f32.mrb[0].mxu0
  %v1431 = vadd.f32 %v277, %v1430
  %v1432 = vpop.f32.mrb[0].mxu0
  %v1433 = vpop.f32.mrb[0].mxu0
  %v1434 = vadd.f32 %v277, %v1433
  %v1435 = vpop.f32.mrb[0].mxu0
  %1436 = vmatprep.mubr.bf16.mxu0 0
  %1437 = vmatmul.mubr.bf16.gmra.mrb[0].mxu0 %v957
  %v1438 = vpop.f32.mrb[0].mxu0
  %v1439 = vadd.f32 %v277, %v1438
  %v1440 = vpop.f32.mrb[0].mxu0
  %v1441 = vpop.f32.mrb[0].mxu0
  %v1442 = vadd.f32 %v277, %v1441
  %v1443 = vpop.f32.mrb[0].mxu0
  %1444 = vmatprep.mubr.bf16.mxu0 0
  %1445 = vmatmul.mubr.bf16.gmra.mrb[0].mxu0 %v960
  %v1446 = vpop.f32.mrb[0].mxu0
  %v1447 = vadd.f32 %v277, %v1446
  %v1448 = vpop.f32.mrb[0].mxu0
  %v1449 = vpop.f32.mrb[0].mxu0
  %v1450 = vadd.f32 %v277, %v1449
  %v1451 = vpop.f32.mrb[0].mxu0
  %1452 = vmatprep.mubr.bf16.mxu0 0
  %1453 = vmatmul.mubr.bf16.gmra.mrb[0].mxu0 %v963
  %v1454 = vpop.f32.mrb[0].mxu0
  %v1455 = vadd.f32 %v277, %v1454
  %v1456 = vpop.f32.mrb[0].mxu0
  %v1457 = vpop.f32.mrb[0].mxu0
  %v1458 = vadd.f32 %v277, %v1457
  %v1459 = vpop.f32.mrb[0].mxu0
  %1460 = vmatprep.mubr.bf16.mxu0 0
  %1461 = vmatmul.mubr.bf16.gmra.mrb[0].mxu0 %v966
  %v1462 = vpop.f32.mrb[0].mxu0
  %v1463 = vadd.f32 %v277, %v1462
  %v1464 = vpop.f32.mrb[0].mxu0
  %v1465 = vpop.f32.mrb[0].mxu0
  %v1466 = vadd.f32 %v277, %v1465
  %v1467 = vpop.f32.mrb[0].mxu0
  %1468 = vmatprep.mubr.bf16.mxu0 0
  %1469 = vmatmul.mubr.bf16.gmra.mrb[0].mxu0 %v969
  %v1470 = vpop.f32.mrb[0].mxu0
  %v1471 = vadd.f32 %v277, %v1470
  %v1472 = vpop.f32.mrb[0].mxu0
  %v1473 = vpop.f32.mrb[0].mxu0
  %v1474 = vadd.f32 %v277, %v1473
  %v1475 = vpop.f32.mrb[0].mxu0
  %1476 = vmatprep.mubr.bf16.mxu0 0
  %1477 = vmatmul.mubr.bf16.gmra.mrb[0].mxu0 %v972
  %v1478 = vpop.f32.mrb[0].mxu0
  %v1479 = vadd.f32 %v277, %v1478
  %v1480 = vpop.f32.mrb[0].mxu0
  %v1481 = vpop.f32.mrb[0].mxu0
  %v1482 = vadd.f32 %v277, %v1481
  %v1483 = vpop.f32.mrb[0].mxu0
  %1484 = vmatprep.mubr.bf16.mxu0 0
  %1485 = vmatmul.mubr.bf16.gmra.mrb[0].mxu0 %v975
  %v1486 = vpop.f32.mrb[0].mxu0
  %v1487 = vadd.f32 %v277, %v1486
  %v1488 = vpop.f32.mrb[0].mxu0
  %v1489 = vpop.f32.mrb[0].mxu0
  %v1490 = vadd.f32 %v277, %v1489
  %v1491 = vpop.f32.mrb[0].mxu0
  %1492 = vmatprep.mubr.bf16.mxu0 0
  %1493 = vmatmul.mubr.bf16.gmra.mrb[0].mxu0 %v978
  %v1494 = vpop.f32.mrb[0].mxu0
  %v1495 = vadd.f32 %v277, %v1494
  %v1496 = vpop.f32.mrb[0].mxu0
  %v1497 = vpop.f32.mrb[0].mxu0
  %v1498 = vadd.f32 %v277, %v1497
  %v1499 = vpop.f32.mrb[0].mxu0
  %1500 = vmatprep.mubr.bf16.mxu0 0
  %1501 = vmatmul.mubr.bf16.gmra.mrb[0].mxu0 %v981
  %v1502 = vpop.f32.mrb[0].mxu0
  %v1503 = vadd.f32 %v277, %v1502
  %v1504 = vpop.f32.mrb[0].mxu0
  %v1505 = vpop.f32.mrb[0].mxu0
  %v1506 = vadd.f32 %v277, %v1505
  %v1507 = vpop.f32.mrb[0].mxu0
  %1508 = vmatprep.mubr.bf16.mxu0 0
  %1509 = vmatmul.mubr.bf16.gmra.mrb[0].mxu0 %v984
  %v1510 = vpop.f32.mrb[0].mxu0
  %v1511 = vadd.f32 %v277, %v1510
  %v1512 = vpop.f32.mrb[0].mxu0
  %v1513 = vpop.f32.mrb[0].mxu0
  %v1514 = vadd.f32 %v277, %v1513
  %v1515 = vpop.f32.mrb[0].mxu0
  %1516 = vmatprep.mubr.bf16.mxu0 0
  %1517 = vmatmul.mubr.bf16.gmra.mrb[0].mxu0 %v987
  %v1518 = vpop.f32.mrb[0].mxu0
  %v1519 = vadd.f32 %v277, %v1518
  %v1520 = vpop.f32.mrb[0].mxu0
  %v1521 = vpop.f32.mrb[0].mxu0
  %v1522 = vadd.f32 %v277, %v1521
  %v1523 = vpop.f32.mrb[0].mxu0
  %1524 = vmatprep.mubr.bf16.mxu0 0
  %1525 = vmatmul.mubr.bf16.gmra.mrb[0].mxu0 %v990
  %v1526 = vpop.f32.mrb[0].mxu0
  %v1527 = vadd.f32 %v277, %v1526
  %v1528 = vpop.f32.mrb[0].mxu0
  %v1529 = vpop.f32.mrb[0].mxu0
  %v1530 = vadd.f32 %v277, %v1529
  %v1531 = vpop.f32.mrb[0].mxu0
  %1532 = vmatprep.mubr.bf16.mxu0 0
  %1533 = vmatmul.mubr.bf16.gmra.mrb[0].mxu0 %v993
  %v1534 = vpop.f32.mrb[0].mxu0
  %v1535 = vadd.f32 %v277, %v1534
  %v1536 = vpop.f32.mrb[0].mxu0
  %v1537 = vpop.f32.mrb[0].mxu0
  %v1538 = vadd.f32 %v277, %v1537
  %v1539 = vpop.f32.mrb[0].mxu0
  %1540 = vmatprep.mubr.bf16.mxu0 0
  %1541 = vmatmul.mubr.bf16.gmra.mrb[0].mxu0 %v996
  %v1542 = vpop.f32.mrb[0].mxu0
  %v1543 = vadd.f32 %v277, %v1542
  %v1544 = vpop.f32.mrb[0].mxu0
  %v1545 = vpop.f32.mrb[0].mxu0
  %v1546 = vadd.f32 %v277, %v1545
  %v1547 = vpop.f32.mrb[0].mxu0
  %1548 = vmatprep.mubr.bf16.mxu0 0
  %1549 = vmatmul.mubr.bf16.gmra.mrb[0].mxu0 %v999
  %v1550 = vpop.f32.mrb[0].mxu0
  %v1551 = vadd.f32 %v277, %v1550
  %v1552 = vpop.f32.mrb[0].mxu0
  %v1553 = vpop.f32.mrb[0].mxu0
  %v1554 = vadd.f32 %v277, %v1553
  %v1555 = vpop.f32.mrb[0].mxu0
  %1556 = vmatprep.mubr.bf16.mxu0 0
  %1557 = vmatmul.mubr.bf16.gmra.mrb[0].mxu0 %v1002
  %v1558 = vpop.f32.mrb[0].mxu0
  %v1559 = vadd.f32 %v277, %v1558
  %v1560 = vpop.f32.mrb[0].mxu0
  %v1561 = vpop.f32.mrb[0].mxu0
  %v1562 = vadd.f32 %v277, %v1561
  %v1563 = vpop.f32.mrb[0].mxu0
  %1564 = vmatprep.mubr.bf16.mxu0 0
  %1565 = vmatmul.mubr.bf16.gmra.mrb[0].mxu0 %v1005
  %v1566 = vpop.f32.mrb[0].mxu0
  %v1567 = vadd.f32 %v277, %v1566
  %v1568 = vpop.f32.mrb[0].mxu0
  %v1569 = vpop.f32.mrb[0].mxu0
  %v1570 = vadd.f32 %v277, %v1569
  %v1571 = vpop.f32.mrb[0].mxu0
  %1572 = vmatprep.mubr.bf16.mxu0 0
  %1573 = vmatmul.mubr.bf16.gmra.mrb[0].mxu0 %v1008
  %v1574 = vpop.f32.mrb[0].mxu0
  %v1575 = vadd.f32 %v277, %v1574
  %v1576 = vpop.f32.mrb[0].mxu0
  %v1577 = vpop.f32.mrb[0].mxu0
  %v1578 = vadd.f32 %v277, %v1577
  %v1579 = vpop.f32.mrb[0].mxu0
  %1580 = vmatprep.mubr.bf16.mxu0 0
  %1581 = vmatmul.mubr.bf16.gmra.mrb[0].mxu0 %v1011
  %v1582 = vpop.f32.mrb[0].mxu0
  %v1583 = vadd.f32 %v277, %v1582
  %v1584 = vpop.f32.mrb[0].mxu0
  %v1585 = vpop.f32.mrb[0].mxu0
  %v1586 = vadd.f32 %v277, %v1585
  %v1587 = vpop.f32.mrb[0].mxu0
  %1588 = vmatprep.mubr.bf16.mxu0 0
  %1589 = vmatmul.mubr.bf16.gmra.mrb[0].mxu0 %v1014
  %v1590 = vpop.f32.mrb[0].mxu0
  %v1591 = vadd.f32 %v277, %v1590
  %v1592 = vpop.f32.mrb[0].mxu0
  %v1593 = vpop.f32.mrb[0].mxu0
  %v1594 = vadd.f32 %v277, %v1593
  %v1595 = vpop.f32.mrb[0].mxu0
  %1596 = vmatprep.mubr.bf16.mxu0 0
  %1597 = vmatmul.mubr.bf16.gmra.mrb[0].mxu0 %v1017
  %v1598 = vpop.f32.mrb[0].mxu0
  %v1599 = vadd.f32 %v277, %v1598
  %v1600 = vpop.f32.mrb[0].mxu0
  %v1601 = vpop.f32.mrb[0].mxu0
  %v1602 = vadd.f32 %v277, %v1601
  %v1603 = vpop.f32.mrb[0].mxu0
  %1604 = vmatprep.mubr.bf16.mxu0 0
  %1605 = vmatmul.mubr.bf16.gmra.mrb[0].mxu0 %v1020
  %v1606 = vpop.f32.mrb[0].mxu0
  %v1607 = vadd.f32 %v277, %v1606
  %v1608 = vpop.f32.mrb[0].mxu0
  %v1609 = vpop.f32.mrb[0].mxu0
  %v1610 = vadd.f32 %v277, %v1609
  %v1611 = vpop.f32.mrb[0].mxu0
  %1612 = vmatprep.mubr.bf16.mxu0 0
  %1613 = vmatmul.mubr.bf16.gmra.mrb[0].mxu0 %v1023
  %v1614 = vpop.f32.mrb[0].mxu0
  %v1615 = vadd.f32 %v277, %v1614
  %v1616 = vpop.f32.mrb[0].mxu0
  %v1617 = vpop.f32.mrb[0].mxu0
  %v1618 = vadd.f32 %v277, %v1617
  %v1619 = vpop.f32.mrb[0].mxu0
  %1620 = vmatprep.mubr.bf16.mxu0 0
  %1621 = vmatmul.mubr.bf16.gmra.mrb[0].mxu0 %v1026
  %v1622 = vpop.f32.mrb[0].mxu0
  %v1623 = vadd.f32 %v277, %v1622
  %v1624 = vpop.f32.mrb[0].mxu0
  %v1625 = vpop.f32.mrb[0].mxu0
  %v1626 = vadd.f32 %v277, %v1625
  %v1627 = vpop.f32.mrb[0].mxu0
  %1628 = vmatprep.mubr.bf16.mxu0 0
  %1629 = vmatmul.mubr.bf16.gmra.mrb[0].mxu0 %v1029
  %v1630 = vpop.f32.mrb[0].mxu0
  %v1631 = vadd.f32 %v277, %v1630
  %v1632 = vpop.f32.mrb[0].mxu0
  %v1633 = vpop.f32.mrb[0].mxu0
  %v1634 = vadd.f32 %v277, %v1633
  %v1635 = vpop.f32.mrb[0].mxu0
  %1636 = vmatprep.mubr.bf16.mxu0 0
  %1637 = vmatmul.mubr.bf16.gmra.mrb[0].mxu0 %v1032
  %v1638 = vpop.f32.mrb[0].mxu0
  %v1639 = vadd.f32 %v277, %v1638
  %v1640 = vpop.f32.mrb[0].mxu0
  %v1641 = vpop.f32.mrb[0].mxu0
  %v1642 = vadd.f32 %v277, %v1641
  %v1643 = vpop.f32.mrb[0].mxu0
  %1644 = vmatprep.mubr.bf16.mxu0 0
  %1645 = vmatmul.mubr.bf16.gmra.mrb[0].mxu0 %v1035
  %v1646 = vpop.f32.mrb[0].mxu0
  %v1647 = vadd.f32 %v277, %v1646
  %v1648 = vpop.f32.mrb[0].mxu0
  %v1649 = vpop.f32.mrb[0].mxu0
  %v1650 = vadd.f32 %v277, %v1649
  %v1651 = vpop.f32.mrb[0].mxu0
  %1652 = vmatprep.mubr.bf16.mxu0 0
  %1653 = vmatmul.mubr.bf16.gmra.mrb[0].mxu0 %v1038
  %v1654 = vpop.f32.mrb[0].mxu0
  %v1655 = vadd.f32 %v277, %v1654
  %v1656 = vpop.f32.mrb[0].mxu0
  %v1657 = vpop.f32.mrb[0].mxu0
  %v1658 = vadd.f32 %v277, %v1657
  %v1659 = vpop.f32.mrb[0].mxu0
  %1660 = vmatprep.mubr.bf16.mxu0 0
  %1661 = vmatmul.mubr.bf16.gmra.mrb[0].mxu0 %v1041
  %v1662 = vpop.f32.mrb[0].mxu0
  %v1663 = vadd.f32 %v277, %v1662
  %v1664 = vpop.f32.mrb[0].mxu0
  %v1665 = vpop.f32.mrb[0].mxu0
  %v1666 = vadd.f32 %v277, %v1665
  %v1667 = vpop.f32.mrb[0].mxu0
  %1668 = vmatprep.mubr.bf16.mxu0 0
  %1669 = vmatmul.mubr.bf16.gmra.mrb[0].mxu0 %v1044
  %v1670 = vpop.f32.mrb[0].mxu0
  %v1671 = vadd.f32 %v277, %v1670
  %v1672 = vpop.f32.mrb[0].mxu0
  %v1673 = vpop.f32.mrb[0].mxu0
  %v1674 = vadd.f32 %v277, %v1673
  %v1675 = vpop.f32.mrb[0].mxu0
  %1676 = vmatprep.mubr.bf16.mxu0 0
  %1677 = vmatmul.mubr.bf16.gmra.mrb[0].mxu0 %v1047
  %v1678 = vpop.f32.mrb[0].mxu0
  %v1679 = vadd.f32 %v277, %v1678
  %v1680 = vpop.f32.mrb[0].mxu0
  %v1681 = vpop.f32.mrb[0].mxu0
  %v1682 = vadd.f32 %v277, %v1681
  %v1683 = vpop.f32.mrb[0].mxu0
  %1684 = vmatprep.mubr.bf16.mxu0 0
  %1685 = vmatmul.mubr.bf16.gmra.mrb[0].mxu0 %v1050
  %v1686 = vpop.f32.mrb[0].mxu0
  %v1687 = vadd.f32 %v277, %v1686
  %v1688 = vpop.f32.mrb[0].mxu0
  %v1689 = vpop.f32.mrb[0].mxu0
  %v1690 = vadd.f32 %v277, %v1689
  %v1691 = vpop.f32.mrb[0].mxu0
  %1692 = vmatprep.mubr.bf16.mxu0 0
  %1693 = vmatmul.mubr.bf16.gmra.mrb[0].mxu0 %v1053
  %v1694 = vpop.f32.mrb[0].mxu0
  %v1695 = vadd.f32 %v277, %v1694
  %v1696 = vpop.f32.mrb[0].mxu0
  %v1697 = vpop.f32.mrb[0].mxu0
  %v1698 = vadd.f32 %v277, %v1697
  %v1699 = vpop.f32.mrb[0].mxu0
  %1700 = vmatprep.mubr.bf16.mxu0 0
  %1701 = vmatmul.mubr.bf16.gmra.mrb[0].mxu0 %v1056
  %v1702 = vpop.f32.mrb[0].mxu0
  %v1703 = vadd.f32 %v277, %v1702
  %v1704 = vpop.f32.mrb[0].mxu0
  %v1705 = vpop.f32.mrb[0].mxu0
  %v1706 = vadd.f32 %v277, %v1705
  %v1707 = vpop.f32.mrb[0].mxu0
  %1708 = vmatprep.mubr.bf16.mxu0 0
  %1709 = vmatmul.mubr.bf16.gmra.mrb[0].mxu0 %v1059
  %v1710 = vpop.f32.mrb[0].mxu0
  %v1711 = vadd.f32 %v277, %v1710
  %v1712 = vpop.f32.mrb[0].mxu0
  %v1713 = vpop.f32.mrb[0].mxu0
  %v1714 = vadd.f32 %v277, %v1713
  %v1715 = vpop.f32.mrb[0].mxu0
  %1716 = vmatprep.mubr.bf16.mxu0 0
  %1717 = vmatmul.mubr.bf16.gmra.mrb[0].mxu0 %v1062
  %v1718 = vpop.f32.mrb[0].mxu0
  %v1719 = vadd.f32 %v277, %v1718
  %v1720 = vpop.f32.mrb[0].mxu0
  %v1721 = vpop.f32.mrb[0].mxu0
  %v1722 = vadd.f32 %v277, %v1721
  %v1723 = vpop.f32.mrb[0].mxu0
  %1724 = vmatprep.mubr.bf16.mxu0 0
  %1725 = vmatmul.mubr.bf16.gmra.mrb[0].mxu0 %v1065
  %v1726 = vpop.f32.mrb[0].mxu0
  %v1727 = vadd.f32 %v277, %v1726
  %v1728 = vpop.f32.mrb[0].mxu0
  %v1729 = vpop.f32.mrb[0].mxu0
  %v1730 = vadd.f32 %v277, %v1729
  %v1731 = vpop.f32.mrb[0].mxu0
  %1732 = vmatprep.mubr.bf16.mxu0 0
  %1733 = vmatmul.mubr.bf16.gmra.mrb[0].mxu0 %v1068
  %v1734 = vpop.f32.mrb[0].mxu0
  %v1735 = vadd.f32 %v277, %v1734
  %v1736 = vpop.f32.mrb[0].mxu0
  %v1737 = vpop.f32.mrb[0].mxu0
  %v1738 = vadd.f32 %v277, %v1737
  %v1739 = vpop.f32.mrb[0].mxu0
  %1740 = vmatprep.mubr.bf16.mxu0 0
  %1741 = vmatmul.mubr.bf16.gmra.mrb[0].mxu0 %v1071
  %v1742 = vpop.f32.mrb[0].mxu0
  %v1743 = vadd.f32 %v277, %v1742
  %v1744 = vpop.f32.mrb[0].mxu0
  %v1745 = vpop.f32.mrb[0].mxu0
  %v1746 = vadd.f32 %v277, %v1745
  %v1747 = vpop.f32.mrb[0].mxu0
  %1748 = vmatprep.mubr.bf16.mxu0 0
  %1749 = vmatmul.mubr.bf16.gmra.mrb[0].mxu0 %v1074
  %v1750 = vpop.f32.mrb[0].mxu0
  %v1751 = vadd.f32 %v277, %v1750
  %v1752 = vpop.f32.mrb[0].mxu0
  %v1753 = vpop.f32.mrb[0].mxu0
  %v1754 = vadd.f32 %v277, %v1753
  %v1755 = vpop.f32.mrb[0].mxu0
  %1756 = vmatprep.mubr.bf16.mxu0 0
  %1757 = vmatmul.mubr.bf16.gmra.mrb[0].mxu0 %v1077
  %v1758 = vpop.f32.mrb[0].mxu0
  %v1759 = vadd.f32 %v277, %v1758
  %v1760 = vpop.f32.mrb[0].mxu0
  %v1761 = vpop.f32.mrb[0].mxu0
  %v1762 = vadd.f32 %v277, %v1761
  %v1763 = vpop.f32.mrb[0].mxu0
  %1764 = vmatprep.mubr.bf16.mxu0 0
  %1765 = vmatmul.mubr.bf16.gmra.mrb[0].mxu0 %v1080
  %v1766 = vpop.f32.mrb[0].mxu0
  %v1767 = vadd.f32 %v277, %v1766
  %v1768 = vpop.f32.mrb[0].mxu0
  %v1769 = vpop.f32.mrb[0].mxu0
  %v1770 = vadd.f32 %v277, %v1769
  %v1771 = vpop.f32.mrb[0].mxu0
  %1772 = vmatprep.mubr.bf16.mxu0 0
  %1773 = vmatmul.mubr.bf16.gmra.mrb[0].mxu0 %v1083
  %v1774 = vpop.f32.mrb[0].mxu0
  %v1775 = vadd.f32 %v277, %v1774
  %v1776 = vpop.f32.mrb[0].mxu0
  %v1777 = vpop.f32.mrb[0].mxu0
  %v1778 = vadd.f32 %v277, %v1777
  %v1779 = vpop.f32.mrb[0].mxu0
  %1780 = vmatprep.mubr.bf16.mxu0 0
  %1781 = vmatmul.mubr.bf16.gmra.mrb[0].mxu0 %v1086
  %v1782 = vpop.f32.mrb[0].mxu0
  %v1783 = vadd.f32 %v277, %v1782
  %v1784 = vpop.f32.mrb[0].mxu0
  %v1785 = vpop.f32.mrb[0].mxu0
  %v1786 = vadd.f32 %v277, %v1785
  %v1787 = vpop.f32.mrb[0].mxu0
  %1788 = vmatprep.mubr.bf16.mxu0 0
  %1789 = vmatmul.mubr.bf16.gmra.mrb[0].mxu0 %v1089
  %v1790 = vpop.f32.mrb[0].mxu0
  %v1791 = vadd.f32 %v277, %v1790
  %v1792 = vpop.f32.mrb[0].mxu0
  %v1793 = vpop.f32.mrb[0].mxu0
  %v1794 = vadd.f32 %v277, %v1793
  %v1795 = vpop.f32.mrb[0].mxu0
  %1796 = vmatprep.mubr.bf16.mxu0 0
  %1797 = vmatmul.mubr.bf16.gmra.mrb[0].mxu0 %v1092
  %v1798 = vpop.f32.mrb[0].mxu0
  %v1799 = vadd.f32 %v277, %v1798
  %v1800 = vpop.f32.mrb[0].mxu0
  %v1801 = vpop.f32.mrb[0].mxu0
  %v1802 = vadd.f32 %v277, %v1801
  %v1803 = vpop.f32.mrb[0].mxu0
  %1804 = vmatprep.mubr.bf16.mxu0 0
  %1805 = vmatmul.mubr.bf16.gmra.mrb[0].mxu0 %v1095
  %v1806 = vpop.f32.mrb[0].mxu0
  %v1807 = vadd.f32 %v277, %v1806
  %v1808 = vpop.f32.mrb[0].mxu0
  %v1809 = vpop.f32.mrb[0].mxu0
  %v1810 = vadd.f32 %v277, %v1809
  %v1811 = vpop.f32.mrb[0].mxu0
  %1812 = vmatprep.mubr.bf16.mxu0 0
  %1813 = vmatmul.mubr.bf16.gmra.mrb[0].mxu0 %v1098
  %v1814 = vpop.f32.mrb[0].mxu0
  %v1815 = vadd.f32 %v277, %v1814
  %v1816 = vpop.f32.mrb[0].mxu0
  %v1817 = vpop.f32.mrb[0].mxu0
  %v1818 = vadd.f32 %v277, %v1817
  %v1819 = vpop.f32.mrb[0].mxu0
  %1820 = vmatprep.mubr.bf16.mxu0 0
  %1821 = vmatmul.mubr.bf16.gmra.mrb[0].mxu0 %v1101
  %v1822 = vpop.f32.mrb[0].mxu0
  %v1823 = vadd.f32 %v277, %v1822
  %v1824 = vpop.f32.mrb[0].mxu0
  %v1825 = vpop.f32.mrb[0].mxu0
  %v1826 = vadd.f32 %v277, %v1825
  %v1827 = vpop.f32.mrb[0].mxu0
  %1828 = vmatprep.mubr.bf16.mxu0 0
  %1829 = vmatmul.mubr.bf16.gmra.mrb[0].mxu0 %v1104
  %v1830 = vpop.f32.mrb[0].mxu0
  %v1831 = vadd.f32 %v277, %v1830
  %v1832 = vpop.f32.mrb[0].mxu0
  %v1833 = vpop.f32.mrb[0].mxu0
  %v1834 = vadd.f32 %v277, %v1833
  %v1835 = vpop.f32.mrb[0].mxu0
  %1836 = vmatprep.mubr.bf16.mxu0 0
  %1837 = vmatmul.mubr.bf16.gmra.mrb[0].mxu0 %v1107
  %v1838 = vpop.f32.mrb[0].mxu0
  %v1839 = vadd.f32 %v277, %v1838
  %v1840 = vpop.f32.mrb[0].mxu0
  %v1841 = vpop.f32.mrb[0].mxu0
  %v1842 = vadd.f32 %v277, %v1841
  %v1843 = vpop.f32.mrb[0].mxu0
  %1844 = vmatprep.mubr.bf16.mxu0 0
  %1845 = vmatmul.mubr.bf16.gmra.mrb[0].mxu0 %v1110
  %v1846 = vpop.f32.mrb[0].mxu0
  %v1847 = vadd.f32 %v277, %v1846
  %v1848 = vpop.f32.mrb[0].mxu0
  %v1849 = vpop.f32.mrb[0].mxu0
  %v1850 = vadd.f32 %v277, %v1849
  %v1851 = vpop.f32.mrb[0].mxu0
  %1852 = vmatprep.mubr.bf16.mxu0 0
  %1853 = vmatmul.mubr.bf16.gmra.mrb[0].mxu0 %v1113
  %v1854 = vpop.f32.mrb[0].mxu0
  %v1855 = vadd.f32 %v277, %v1854
  %v1856 = vpop.f32.mrb[0].mxu0
  %v1857 = vpop.f32.mrb[0].mxu0
  %v1858 = vadd.f32 %v277, %v1857
  %v1859 = vpop.f32.mrb[0].mxu0
  %1860 = vmatprep.mubr.bf16.mxu0 0
  %1861 = vmatmul.mubr.bf16.gmra.mrb[0].mxu0 %v1116
  %v1862 = vpop.f32.mrb[0].mxu0
  %v1863 = vadd.f32 %v277, %v1862
  %v1864 = vpop.f32.mrb[0].mxu0
  %v1865 = vpop.f32.mrb[0].mxu0
  %v1866 = vadd.f32 %v277, %v1865
  %v1867 = vpop.f32.mrb[0].mxu0
  %1868 = vmatprep.mubr.bf16.mxu0 0
  %1869 = vmatmul.mubr.bf16.gmra.mrb[0].mxu0 %v1119
  %v1870 = vpop.f32.mrb[0].mxu0
  %v1871 = vadd.f32 %v277, %v1870
  %v1872 = vpop.f32.mrb[0].mxu0
  %v1873 = vpop.f32.mrb[0].mxu0
  %v1874 = vadd.f32 %v277, %v1873
  %v1875 = vpop.f32.mrb[0].mxu0
  %1876 = vmatprep.mubr.bf16.mxu0 0
  %1877 = vmatmul.mubr.bf16.gmra.mrb[0].mxu0 %v1122
  %v1878 = vpop.f32.mrb[0].mxu0
  %v1879 = vadd.f32 %v277, %v1878
  %v1880 = vpop.f32.mrb[0].mxu0
  %v1881 = vpop.f32.mrb[0].mxu0
  %v1882 = vadd.f32 %v277, %v1881
  %v1883 = vpop.f32.mrb[0].mxu0
  %1884 = vmatprep.mubr.bf16.mxu0 0
  %1885 = vmatmul.mubr.bf16.gmra.mrb[0].mxu0 %v1125
  %v1886 = vpop.f32.mrb[0].mxu0
  %v1887 = vadd.f32 %v277, %v1886
  %v1888 = vpop.f32.mrb[0].mxu0
  %v1889 = vpop.f32.mrb[0].mxu0
  %v1890 = vadd.f32 %v277, %v1889
  %v1891 = vpop.f32.mrb[0].mxu0
  %1892 = vmatprep.mubr.bf16.mxu0 0
  %1893 = vmatmul.mubr.bf16.gmra.mrb[0].mxu0 %v1128
  %v1894 = vpop.f32.mrb[0].mxu0
  %v1895 = vadd.f32 %v277, %v1894
  %v1896 = vpop.f32.mrb[0].mxu0
  %v1897 = vpop.f32.mrb[0].mxu0
  %v1898 = vadd.f32 %v277, %v1897
  %v1899 = vpop.f32.mrb[0].mxu0
  %1900 = vmatprep.mubr.bf16.mxu0 0
  %1901 = vmatmul.mubr.bf16.gmra.mrb[0].mxu0 %v1131
  %v1902 = vpop.f32.mrb[0].mxu0
  %v1903 = vadd.f32 %v277, %v1902
  %v1904 = vpop.f32.mrb[0].mxu0
  %v1905 = vpop.f32.mrb[0].mxu0
  %v1906 = vadd.f32 %v277, %v1905
  %v1907 = vpop.f32.mrb[0].mxu0
  %1908 = vmatprep.mubr.bf16.mxu0 0
  %1909 = vmatmul.mubr.bf16.gmra.mrb[0].mxu0 %v1134
  %v1910 = vpop.f32.mrb[0].mxu0
  %v1911 = vadd.f32 %v277, %v1910
  %v1912 = vpop.f32.mrb[0].mxu0
  %v1913 = vpop.f32.mrb[0].mxu0
  %v1914 = vadd.f32 %v277, %v1913
  %v1915 = vpop.f32.mrb[0].mxu0
  %1916 = vmatprep.mubr.bf16.mxu0 0
  %1917 = vmatmul.mubr.bf16.gmra.mrb[0].mxu0 %v1137
  %v1918 = vpop.f32.mrb[0].mxu0
  %v1919 = vadd.f32 %v277, %v1918
  %v1920 = vpop.f32.mrb[0].mxu0
  %v1921 = vpop.f32.mrb[0].mxu0
  %v1922 = vadd.f32 %v277, %v1921
  %v1923 = vpop.f32.mrb[0].mxu0
  %1924 = vmatprep.mubr.bf16.mxu0 0
  %1925 = vmatmul.mubr.bf16.gmra.mrb[0].mxu0 %v1140
  %v1926 = vpop.f32.mrb[0].mxu0
  %v1927 = vadd.f32 %v277, %v1926
  %v1928 = vpop.f32.mrb[0].mxu0
  %v1929 = vpop.f32.mrb[0].mxu0
  %v1930 = vadd.f32 %v277, %v1929
  %v1931 = vpop.f32.mrb[0].mxu0
  %1932 = vmatprep.mubr.bf16.mxu0 0
  %1933 = vmatmul.mubr.bf16.gmra.mrb[0].mxu0 %v1143
  %v1934 = vpop.f32.mrb[0].mxu0
  %v1935 = vadd.f32 %v277, %v1934
  %v1936 = vpop.f32.mrb[0].mxu0
  %v1937 = vpop.f32.mrb[0].mxu0
  %v1938 = vadd.f32 %v277, %v1937
  %v1939 = vpop.f32.mrb[0].mxu0
  %1940 = vmatprep.mubr.bf16.mxu0 0
  %1941 = vmatmul.mubr.bf16.gmra.mrb[0].mxu0 %v1146
  %v1942 = vpop.f32.mrb[0].mxu0
  %v1943 = vadd.f32 %v277, %v1942
  %v1944 = vpop.f32.mrb[0].mxu0
  %v1945 = vpop.f32.mrb[0].mxu0
  %v1946 = vadd.f32 %v277, %v1945
  %v1947 = vpop.f32.mrb[0].mxu0
  %1948 = vmatprep.mubr.bf16.mxu0 0
  %1949 = vmatmul.mubr.bf16.gmra.mrb[0].mxu0 %v1149
  %v1950 = vpop.f32.mrb[0].mxu0
  %v1951 = vadd.f32 %v277, %v1950
  %v1952 = vpop.f32.mrb[0].mxu0
  %v1953 = vpop.f32.mrb[0].mxu0
  %v1954 = vadd.f32 %v277, %v1953
  %v1955 = vpop.f32.mrb[0].mxu0
  %1956 = vmatprep.mubr.bf16.mxu0 0
  %1957 = vmatmul.mubr.bf16.gmra.mrb[0].mxu0 %v1152
  %v1958 = vpop.f32.mrb[0].mxu0
  %v1959 = vadd.f32 %v277, %v1958
  %v1960 = vpop.f32.mrb[0].mxu0
  %v1961 = vpop.f32.mrb[0].mxu0
  %v1962 = vadd.f32 %v277, %v1961
  %v1963 = vpop.f32.mrb[0].mxu0
  %1964 = vmatprep.mubr.bf16.mxu0 0
  %1965 = vmatmul.mubr.bf16.gmra.mrb[0].mxu0 %v1155
  %v1966 = vpop.f32.mrb[0].mxu0
  %v1967 = vadd.f32 %v277, %v1966
  %v1968 = vpop.f32.mrb[0].mxu0
  %v1969 = vpop.f32.mrb[0].mxu0
  %v1970 = vadd.f32 %v277, %v1969
  %v1971 = vpop.f32.mrb[0].mxu0
  %1972 = vmatprep.mubr.bf16.mxu0 0
  %1973 = vmatmul.mubr.bf16.gmra.mrb[0].mxu0 %v1158
  %v1974 = vpop.f32.mrb[0].mxu0
  %v1975 = vadd.f32 %v277, %v1974
  %v1976 = vpop.f32.mrb[0].mxu0
  %v1977 = vpop.f32.mrb[0].mxu0
  %v1978 = vadd.f32 %v277, %v1977
  %v1979 = vpop.f32.mrb[0].mxu0
  %1980 = vmatprep.mubr.bf16.mxu0 0
  %1981 = vmatmul.mubr.bf16.gmra.mrb[0].mxu0 %v1161
  %v1982 = vpop.f32.mrb[0].mxu0
  %v1983 = vadd.f32 %v277, %v1982
  %v1984 = vpop.f32.mrb[0].mxu0
  %v1985 = vpop.f32.mrb[0].mxu0
  %v1986 = vadd.f32 %v277, %v1985
  %v1987 = vpop.f32.mrb[0].mxu0
  %1988 = vmatprep.mubr.bf16.mxu0 0
  %1989 = vmatmul.mubr.bf16.gmra.mrb[0].mxu0 %v1164
  %v1990 = vpop.f32.mrb[0].mxu0
  %v1991 = vadd.f32 %v277, %v1990
  %v1992 = vpop.f32.mrb[0].mxu0
  %v1993 = vpop.f32.mrb[0].mxu0
  %v1994 = vadd.f32 %v277, %v1993
  %v1995 = vpop.f32.mrb[0].mxu0
  %1996 = vmatprep.mubr.bf16.mxu0 0
  %1997 = vmatmul.mubr.bf16.gmra.mrb[0].mxu0 %v1167
  %v1998 = vpop.f32.mrb[0].mxu0
  %v1999 = vadd.f32 %v277, %v1998
  %v2000 = vpop.f32.mrb[0].mxu0
  %v2001 = vpop.f32.mrb[0].mxu0
  %v2002 = vadd.f32 %v277, %v2001
  %v2003 = vpop.f32.mrb[0].mxu0
  %2004 = vmatprep.mubr.bf16.mxu0 0
  %2005 = vmatmul.mubr.bf16.gmra.mrb[0].mxu0 %v1170
  %v2006 = vpop.f32.mrb[0].mxu0
  %v2007 = vadd.f32 %v277, %v2006
  %v2008 = vpop.f32.mrb[0].mxu0
  %v2009 = vpop.f32.mrb[0].mxu0
  %v2010 = vadd.f32 %v277, %v2009
  %v2011 = vpop.f32.mrb[0].mxu0
  %2012 = vmatprep.mubr.bf16.mxu0 0
  %2013 = vmatmul.mubr.bf16.gmra.mrb[0].mxu0 %v1173
  %v2014 = vpop.f32.mrb[0].mxu0
  %v2015 = vadd.f32 %v277, %v2014
  %v2016 = vpop.f32.mrb[0].mxu0
  %v2017 = vpop.f32.mrb[0].mxu0
  %v2018 = vadd.f32 %v277, %v2017
  %v2019 = vpop.f32.mrb[0].mxu0
  %2020 = vmatprep.mubr.bf16.mxu0 0
  %2021 = vmatmul.mubr.bf16.gmra.mrb[0].mxu0 %v1176
  %v2022 = vpop.f32.mrb[0].mxu0
  %v2023 = vadd.f32 %v277, %v2022
  %v2024 = vpop.f32.mrb[0].mxu0
  %v2025 = vpop.f32.mrb[0].mxu0
  %v2026 = vadd.f32 %v277, %v2025
  %v2027 = vpop.f32.mrb[0].mxu0
  %2028 = vmatprep.mubr.bf16.mxu0 0
  %2029 = vmatmul.mubr.bf16.gmra.mrb[0].mxu0 %v1179
  %v2030 = vpop.f32.mrb[0].mxu0
  %v2031 = vadd.f32 %v277, %v2030
  %v2032 = vpop.f32.mrb[0].mxu0
  %v2033 = vpop.f32.mrb[0].mxu0
  %v2034 = vadd.f32 %v277, %v2033
  %v2035 = vpop.f32.mrb[0].mxu0
  %2036 = vmatprep.mubr.bf16.mxu0 0
  %2037 = vmatmul.mubr.bf16.gmra.mrb[0].mxu0 %v1182
  %v2038 = vpop.f32.mrb[0].mxu0
  %v2039 = vadd.f32 %v277, %v2038
  %v2040 = vpop.f32.mrb[0].mxu0
  %v2041 = vpop.f32.mrb[0].mxu0
  %v2042 = vadd.f32 %v277, %v2041
  %v2043 = vpop.f32.mrb[0].mxu0
  %2044 = vmatprep.mubr.bf16.mxu0 0
  %2045 = vmatmul.mubr.bf16.gmra.mrb[0].mxu0 %v1185
  %v2046 = vpop.f32.mrb[0].mxu0
  %v2047 = vadd.f32 %v277, %v2046
  %v2048 = vpop.f32.mrb[0].mxu0
  %v2049 = vpop.f32.mrb[0].mxu0
  %v2050 = vadd.f32 %v277, %v2049
  %v2051 = vpop.f32.mrb[0].mxu0
  %2052 = vmatprep.mubr.bf16.mxu0 0
  %2053 = vmatmul.mubr.bf16.gmra.mrb[0].mxu0 %v1188
  %v2054 = vpop.f32.mrb[0].mxu0
  %v2055 = vadd.f32 %v277, %v2054
  %v2056 = vpop.f32.mrb[0].mxu0
  %v2057 = vpop.f32.mrb[0].mxu0
  %v2058 = vadd.f32 %v277, %v2057
  %v2059 = vpop.f32.mrb[0].mxu0
  %2060 = vmatprep.mubr.bf16.mxu0 0
  %2061 = vmatmul.mubr.bf16.gmra.mrb[0].mxu0 %v1191
  %v2062 = vpop.f32.mrb[0].mxu0
  %v2063 = vadd.f32 %v277, %v2062
  %v2064 = vpop.f32.mrb[0].mxu0
  %v2065 = vpop.f32.mrb[0].mxu0
  %v2066 = vadd.f32 %v277, %v2065
  %v2067 = vpop.f32.mrb[0].mxu0
  %2068 = vmatprep.mubr.bf16.mxu0 0
  %2069 = vmatmul.mubr.bf16.gmra.mrb[0].mxu0 %v1194
  %v2070 = vpop.f32.mrb[0].mxu0
  %v2071 = vadd.f32 %v277, %v2070
  %v2072 = vpop.f32.mrb[0].mxu0
  %v2073 = vpop.f32.mrb[0].mxu0
  %v2074 = vadd.f32 %v277, %v2073
  %v2075 = vpop.f32.mrb[0].mxu0
  %2076 = vmatprep.mubr.bf16.mxu0 0
  %2077 = vmatmul.mubr.bf16.gmra.mrb[0].mxu0 %v1197
  %v2078 = vpop.f32.mrb[0].mxu0
  %v2079 = vadd.f32 %v277, %v2078
  %v2080 = vpop.f32.mrb[0].mxu0
  %v2081 = vpop.f32.mrb[0].mxu0
  %v2082 = vadd.f32 %v277, %v2081
  %v2083 = vpop.f32.mrb[0].mxu0
  %2084 = vmatprep.mubr.bf16.mxu0 0
  %2085 = vmatmul.mubr.bf16.gmra.mrb[0].mxu0 %v1200
  %v2086 = vpop.f32.mrb[0].mxu0
  %v2087 = vadd.f32 %v277, %v2086
  %v2088 = vpop.f32.mrb[0].mxu0
  %v2089 = vpop.f32.mrb[0].mxu0
  %v2090 = vadd.f32 %v277, %v2089
  %v2091 = vpop.f32.mrb[0].mxu0
  %2092 = vmatprep.mubr.bf16.mxu0 0
  %2093 = vmatmul.mubr.bf16.gmra.mrb[0].mxu0 %v1203
  %v2094 = vpop.f32.mrb[0].mxu0
  %v2095 = vadd.f32 %v277, %v2094
  %v2096 = vpop.f32.mrb[0].mxu0
  %v2097 = vpop.f32.mrb[0].mxu0
  %v2098 = vadd.f32 %v277, %v2097
  %v2099 = vpop.f32.mrb[0].mxu0
  %2100 = vmatprep.mubr.bf16.mxu0 0
  %2101 = vmatmul.mubr.bf16.gmra.mrb[0].mxu0 %v1206
  %v2102 = vpop.f32.mrb[0].mxu0
  %v2103 = vadd.f32 %v277, %v2102
  %v2104 = vpop.f32.mrb[0].mxu0
  %v2105 = vpop.f32.mrb[0].mxu0
  %v2106 = vadd.f32 %v277, %v2105
  %v2107 = vpop.f32.mrb[0].mxu0
  %2108 = vmatprep.mubr.bf16.mxu0 0
  %2109 = vmatmul.mubr.bf16.gmra.mrb[0].mxu0 %v1209
  %v2110 = vpop.f32.mrb[0].mxu0
  %v2111 = vadd.f32 %v277, %v2110
  %v2112 = vpop.f32.mrb[0].mxu0
  %v2113 = vpop.f32.mrb[0].mxu0
  %v2114 = vadd.f32 %v277, %v2113
  %v2115 = vpop.f32.mrb[0].mxu0
  %2116 = vmatprep.mubr.bf16.mxu0 0
  %2117 = vmatmul.mubr.bf16.gmra.mrb[0].mxu0 %v1212
  %v2118 = vpop.f32.mrb[0].mxu0
  %v2119 = vadd.f32 %v277, %v2118
  %v2120 = vpop.f32.mrb[0].mxu0
  %v2121 = vpop.f32.mrb[0].mxu0
  %v2122 = vadd.f32 %v277, %v2121
  %v2123 = vpop.f32.mrb[0].mxu0
  %2124 = vmatprep.mubr.bf16.mxu0 0
  %2125 = vmatmul.mubr.bf16.gmra.mrb[0].mxu0 %v1215
  %v2126 = vpop.f32.mrb[0].mxu0
  %v2127 = vadd.f32 %v277, %v2126
  %v2128 = vpop.f32.mrb[0].mxu0
  %v2129 = vpop.f32.mrb[0].mxu0
  %v2130 = vadd.f32 %v277, %v2129
  %v2131 = vpop.f32.mrb[0].mxu0
  %2132 = vmatprep.mubr.bf16.mxu0 0
  %2133 = vmatmul.mubr.bf16.gmra.mrb[0].mxu0 %v1218
  %v2134 = vpop.f32.mrb[0].mxu0
  %v2135 = vadd.f32 %v277, %v2134
  %v2136 = vpop.f32.mrb[0].mxu0
  %v2137 = vpop.f32.mrb[0].mxu0
  %v2138 = vadd.f32 %v277, %v2137
  %v2139 = vpop.f32.mrb[0].mxu0
  %2140 = vmatprep.mubr.bf16.mxu0 0
  %2141 = vmatmul.mubr.bf16.gmra.mrb[0].mxu0 %v1221
  %v2142 = vpop.f32.mrb[0].mxu0
  %v2143 = vadd.f32 %v277, %v2142
  %v2144 = vpop.f32.mrb[0].mxu0
  %v2145 = vpop.f32.mrb[0].mxu0
  %v2146 = vadd.f32 %v277, %v2145
  %v2147 = vpop.f32.mrb[0].mxu0
  %2148 = vmatprep.mubr.bf16.mxu0 0
  %2149 = vmatmul.mubr.bf16.gmra.mrb[0].mxu0 %v1224
  %v2150 = vpop.f32.mrb[0].mxu0
  %v2151 = vadd.f32 %v277, %v2150
  %v2152 = vpop.f32.mrb[0].mxu0
  %v2153 = vpop.f32.mrb[0].mxu0
  %v2154 = vadd.f32 %v277, %v2153
  %v2155 = vpop.f32.mrb[0].mxu0
  %2156 = vmatprep.mubr.bf16.mxu0 0
  %2157 = vmatmul.mubr.bf16.gmra.mrb[0].mxu0 %v1227
  %v2158 = vpop.f32.mrb[0].mxu0
  %v2159 = vadd.f32 %v277, %v2158
  %v2160 = vpop.f32.mrb[0].mxu0
  %v2161 = vpop.f32.mrb[0].mxu0
  %v2162 = vadd.f32 %v277, %v2161
  %v2163 = vpop.f32.mrb[0].mxu0
  %2164 = vmatprep.mubr.bf16.mxu0 0
  %2165 = vmatmul.mubr.bf16.gmra.mrb[0].mxu0 %v1230
  %v2166 = vpop.f32.mrb[0].mxu0
  %v2167 = vadd.f32 %v277, %v2166
  %v2168 = vpop.f32.mrb[0].mxu0
  %v2169 = vpop.f32.mrb[0].mxu0
  %v2170 = vadd.f32 %v277, %v2169
  %v2171 = vpop.f32.mrb[0].mxu0
  %2172 = vmatprep.mubr.bf16.mxu0 0
  %2173 = vmatmul.mubr.bf16.gmra.mrb[0].mxu0 %v1233
  %v2174 = vpop.f32.mrb[0].mxu0
  %v2175 = vadd.f32 %v277, %v2174
  %v2176 = vpop.f32.mrb[0].mxu0
  %v2177 = vpop.f32.mrb[0].mxu0
  %v2178 = vadd.f32 %v277, %v2177
  %v2179 = vpop.f32.mrb[0].mxu0
  %2180 = vmatprep.mubr.bf16.mxu0 0
  %2181 = vmatmul.mubr.bf16.gmra.mrb[0].mxu0 %v1236
  %v2182 = vpop.f32.mrb[0].mxu0
  %v2183 = vadd.f32 %v277, %v2182
  %v2184 = vpop.f32.mrb[0].mxu0
  %v2185 = vpop.f32.mrb[0].mxu0
  %v2186 = vadd.f32 %v277, %v2185
  %v2187 = vpop.f32.mrb[0].mxu0
  %2188 = vmatprep.mubr.bf16.mxu0 0
  %2189 = vmatmul.mubr.bf16.gmra.mrb[0].mxu0 %v1239
  %v2190 = vpop.f32.mrb[0].mxu0
  %v2191 = vadd.f32 %v277, %v2190
  %v2192 = vpop.f32.mrb[0].mxu0
  %v2193 = vpop.f32.mrb[0].mxu0
  %v2194 = vadd.f32 %v277, %v2193
  %v2195 = vpop.f32.mrb[0].mxu0
  %2196 = vmatprep.mubr.bf16.mxu0 0
  %2197 = vmatmul.mubr.bf16.gmra.mrb[0].mxu0 %v1242
  %v2198 = vpop.f32.mrb[0].mxu0
  %v2199 = vadd.f32 %v277, %v2198
  %v2200 = vpop.f32.mrb[0].mxu0
  %v2201 = vpop.f32.mrb[0].mxu0
  %v2202 = vadd.f32 %v277, %v2201
  %v2203 = vpop.f32.mrb[0].mxu0
  %2204 = vmatprep.mubr.bf16.mxu0 0
  %2205 = vmatmul.mubr.bf16.gmra.mrb[0].mxu0 %v1245
  %v2206 = vpop.f32.mrb[0].mxu0
  %v2207 = vadd.f32 %v277, %v2206
  %v2208 = vpop.f32.mrb[0].mxu0
  %v2209 = vpop.f32.mrb[0].mxu0
  %v2210 = vadd.f32 %v277, %v2209
  %v2211 = vpop.f32.mrb[0].mxu0
  %2212 = vmatprep.mubr.bf16.mxu0 0
  %2213 = vmatmul.mubr.bf16.gmra.mrb[0].mxu0 %v1248
  %v2214 = vpop.f32.mrb[0].mxu0
  %v2215 = vadd.f32 %v277, %v2214
  %v2216 = vpop.f32.mrb[0].mxu0
  %v2217 = vpop.f32.mrb[0].mxu0
  %v2218 = vadd.f32 %v277, %v2217
  %v2219 = vpop.f32.mrb[0].mxu0
  %2220 = vmatprep.mubr.bf16.mxu0 0
  %2221 = vmatmul.mubr.bf16.gmra.mrb[0].mxu0 %v1251
  %v2222 = vpop.f32.mrb[0].mxu0
  %v2223 = vadd.f32 %v277, %v2222
  %v2224 = vpop.f32.mrb[0].mxu0
  %v2225 = vpop.f32.mrb[0].mxu0
  %v2226 = vadd.f32 %v277, %v2225
  %v2227 = vpop.f32.mrb[0].mxu0
  %2228 = vmatprep.mubr.bf16.mxu0 0
  %2229 = vmatmul.mubr.bf16.gmra.mrb[0].mxu0 %v1254
  %v2230 = vpop.f32.mrb[0].mxu0
  %v2231 = vadd.f32 %v277, %v2230
  %v2232 = vpop.f32.mrb[0].mxu0
  %v2233 = vpop.f32.mrb[0].mxu0
  %v2234 = vadd.f32 %v277, %v2233
  %v2235 = vpop.f32.mrb[0].mxu0
  %2236 = vmatprep.mubr.bf16.mxu0 0
  %2237 = vmatmul.mubr.bf16.gmra.mrb[0].mxu0 %v1257
  %v2238 = vpop.f32.mrb[0].mxu0
  %v2239 = vadd.f32 %v277, %v2238
  %v2240 = vpop.f32.mrb[0].mxu0
  %v2241 = vpop.f32.mrb[0].mxu0
  %v2242 = vadd.f32 %v277, %v2241
  %v2243 = vpop.f32.mrb[0].mxu0
  %2244 = vmatprep.mubr.bf16.mxu0 0
  %2245 = vmatmul.mubr.bf16.gmra.mrb[0].mxu0 %v1260
  %v2246 = vpop.f32.mrb[0].mxu0
  %v2247 = vadd.f32 %v277, %v2246
  %v2248 = vpop.f32.mrb[0].mxu0
  %v2249 = vpop.f32.mrb[0].mxu0
  %v2250 = vadd.f32 %v277, %v2249
  %v2251 = vpop.f32.mrb[0].mxu0
  %2252 = vmatprep.mubr.bf16.mxu0 0
  %2253 = vmatmul.mubr.bf16.gmra.mrb[0].mxu0 %v1263
  %v2254 = vpop.f32.mrb[0].mxu0
  %v2255 = vadd.f32 %v277, %v2254
  %v2256 = vpop.f32.mrb[0].mxu0
  %v2257 = vpop.f32.mrb[0].mxu0
  %v2258 = vadd.f32 %v277, %v2257
  %v2259 = vpop.f32.mrb[0].mxu0
  %2260 = vmatprep.mubr.bf16.mxu0 0
  %2261 = vmatmul.mubr.bf16.gmra.mrb[0].mxu0 %v1266
  %v2262 = vpop.f32.mrb[0].mxu0
  %v2263 = vadd.f32 %v277, %v2262
  %v2264 = vpop.f32.mrb[0].mxu0
  %v2265 = vpop.f32.mrb[0].mxu0
  %v2266 = vadd.f32 %v277, %v2265
  %v2267 = vpop.f32.mrb[0].mxu0
  %2268 = vmatprep.mubr.bf16.mxu0 0
  %2269 = vmatmul.mubr.bf16.gmra.mrb[0].mxu0 %v1269
  %v2270 = vpop.f32.mrb[0].mxu0
  %v2271 = vadd.f32 %v277, %v2270
  %v2272 = vpop.f32.mrb[0].mxu0
  %v2273 = vpop.f32.mrb[0].mxu0
  %v2274 = vadd.f32 %v277, %v2273
  %v2275 = vpop.f32.mrb[0].mxu0
  %2276 = vmatprep.mubr.bf16.mxu0 0
  %2277 = vmatmul.mubr.bf16.gmra.mrb[0].mxu0 %v1272
  %v2278 = vpop.f32.mrb[0].mxu0
  %v2279 = vadd.f32 %v277, %v2278
  %v2280 = vpop.f32.mrb[0].mxu0
  %v2281 = vpop.f32.mrb[0].mxu0
  %v2282 = vadd.f32 %v277, %v2281
  %v2283 = vpop.f32.mrb[0].mxu0
  %2284 = vmatprep.mubr.bf16.mxu0 0
  %2285 = vmatmul.mubr.bf16.gmra.mrb[0].mxu0 %v1275
  %v2286 = vpop.f32.mrb[0].mxu0
  %v2287 = vadd.f32 %v277, %v2286
  %v2288 = vpop.f32.mrb[0].mxu0
  %v2289 = vpop.f32.mrb[0].mxu0
  %v2290 = vadd.f32 %v277, %v2289
  %v2291 = vpop.f32.mrb[0].mxu0
  %2292 = vmatprep.mubr.bf16.mxu0 0
  %2293 = vmatmul.mubr.bf16.gmra.mrb[0].mxu0 %v1278
  %v2294 = vpop.f32.mrb[0].mxu0
  %v2295 = vadd.f32 %v277, %v2294
  %v2296 = vpop.f32.mrb[0].mxu0
  %v2297 = vpop.f32.mrb[0].mxu0
  %v2298 = vadd.f32 %v277, %v2297
  %v2299 = vpop.f32.mrb[0].mxu0
  %2300 = vmatprep.mubr.bf16.mxu0 0
  %2301 = vmatmul.mubr.bf16.gmra.mrb[0].mxu0 %v1281
  %v2302 = vpop.f32.mrb[0].mxu0
  %v2303 = vadd.f32 %v277, %v2302
  %v2304 = vpop.f32.mrb[0].mxu0
  %v2305 = vpop.f32.mrb[0].mxu0
  %v2306 = vadd.f32 %v277, %v2305
  %v2307 = vpop.f32.mrb[0].mxu0
  %2308 = vmatprep.mubr.bf16.mxu0 0
  %2309 = vmatmul.mubr.bf16.gmra.mrb[0].mxu0 %v1284
  %v2310 = vpop.f32.mrb[0].mxu0
  %v2311 = vadd.f32 %v277, %v2310
  %v2312 = vpop.f32.mrb[0].mxu0
  %v2313 = vpop.f32.mrb[0].mxu0
  %v2314 = vadd.f32 %v277, %v2313
  %v2315 = vpop.f32.mrb[0].mxu0
  %2316 = vmatprep.mubr.bf16.mxu0 0
  %2317 = vmatmul.mubr.bf16.gmra.mrb[0].mxu0 %v1287
  %v2318 = vpop.f32.mrb[0].mxu0
  %v2319 = vadd.f32 %v277, %v2318
  %v2320 = vpop.f32.mrb[0].mxu0
  %v2321 = vpop.f32.mrb[0].mxu0
  %v2322 = vadd.f32 %v277, %v2321
  %v2323 = vpop.f32.mrb[0].mxu0
  %2324 = vmatprep.mubr.bf16.mxu0 0
  %2325 = vmatmul.mubr.bf16.gmra.mrb[0].mxu0 %v1290
  %v2326 = vpop.f32.mrb[0].mxu0
  %v2327 = vadd.f32 %v277, %v2326
  %v2328 = vpop.f32.mrb[0].mxu0
  %v2329 = vpop.f32.mrb[0].mxu0
  %v2330 = vadd.f32 %v277, %v2329
  %v2331 = vpop.f32.mrb[0].mxu0
  %2332 = vmatprep.mubr.bf16.mxu0 0
  %2333 = vmatmul.mubr.bf16.gmra.mrb[0].mxu0 %v1293
  %v2334 = vpop.f32.mrb[0].mxu0
  %v2335 = vadd.f32 %v277, %v2334
  %v2336 = vpop.f32.mrb[0].mxu0
  %v2337 = vpop.f32.mrb[0].mxu0
  %v2338 = vadd.f32 %v277, %v2337
  %v2339 = vpop.f32.mrb[0].mxu0
  %2340 = vmatprep.mubr.bf16.mxu0 0
  %2341 = vmatmul.mubr.bf16.gmra.mrb[0].mxu0 %v1296
  %v2342 = vpop.f32.mrb[0].mxu0
  %v2343 = vadd.f32 %v277, %v2342
  %v2344 = vpop.f32.mrb[0].mxu0
  %v2345 = vpop.f32.mrb[0].mxu0
  %v2346 = vadd.f32 %v277, %v2345
  %v2347 = vpop.f32.mrb[0].mxu0
  %2348 = vmatprep.mubr.bf16.mxu0 0
  %2349 = vmatmul.mubr.bf16.gmra.mrb[0].mxu0 %v1299
  %v2350 = vpop.f32.mrb[0].mxu0
  %v2351 = vadd.f32 %v277, %v2350
  %v2352 = vpop.f32.mrb[0].mxu0
  %v2353 = vpop.f32.mrb[0].mxu0
  %v2354 = vadd.f32 %v277, %v2353
  %v2355 = vpop.f32.mrb[0].mxu0
  %2356 = vmatprep.mubr.bf16.mxu0 0
  %2357 = vmatmul.mubr.bf16.gmra.mrb[0].mxu0 %v1302
  %v2358 = vpop.f32.mrb[0].mxu0
  %v2359 = vadd.f32 %v277, %v2358
  %v2360 = vpop.f32.mrb[0].mxu0
  %v2361 = vpop.f32.mrb[0].mxu0
  %v2362 = vadd.f32 %v277, %v2361
  %v2363 = vpop.f32.mrb[0].mxu0
  %2364 = vdwg.mxu0
  %vm2365 = vcmask 64512
  %2366 = vst.msk [vmem:[%s3] sm:$0xff] %vm2365, %v1343
  %2367 = vst.msk [vmem:[%s3 + $0x8] sm:$0xff] %vm2365, %v1346
  %2368 = vst.msk [vmem:[%s3 + $0x10] sm:$0xff] %vm2365, %v1351
  %2369 = vst.msk [vmem:[%s3 + $0x18] sm:$0xff] %vm2365, %v1354
  %2370 = vst.msk [vmem:[%s3 + $0x20] sm:$0xff] %vm2365, %v1359
  %2371 = vst.msk [vmem:[%s3 + $0x28] sm:$0xff] %vm2365, %v1362
  %2372 = vst.msk [vmem:[%s3 + $0x30] sm:$0xff] %vm2365, %v1367
  %2373 = vst.msk [vmem:[%s3 + $0x38] sm:$0xff] %vm2365, %v1370
  %2374 = vst.msk [vmem:[%s3 + $0x40] sm:$0xff] %vm2365, %v1375
  %2375 = vst.msk [vmem:[%s3 + $0x48] sm:$0xff] %vm2365, %v1378
  %2376 = vst.msk [vmem:[%s3 + $0x50] sm:$0xff] %vm2365, %v1383
  %2377 = vst.msk [vmem:[%s3 + $0x58] sm:$0xff] %vm2365, %v1386
  %2378 = vst.msk [vmem:[%s3 + $0x60] sm:$0xff] %vm2365, %v1391
  %2379 = vst.msk [vmem:[%s3 + $0x68] sm:$0xff] %vm2365, %v1394
  %2380 = vst.msk [vmem:[%s3 + $0x70] sm:$0xff] %vm2365, %v1399
  %2381 = vst.msk [vmem:[%s3 + $0x78] sm:$0xff] %vm2365, %v1402
  %2382 = vst.msk [vmem:[%s3 + $0x80] sm:$0xff] %vm2365, %v1407
  %2383 = vst.msk [vmem:[%s3 + $0x88] sm:$0xff] %vm2365, %v1410
  %2384 = vst.msk [vmem:[%s3 + $0x90] sm:$0xff] %vm2365, %v1415
  %2385 = vst.msk [vmem:[%s3 + $0x98] sm:$0xff] %vm2365, %v1418
  %2386 = vst.msk [vmem:[%s3 + $0xa0] sm:$0xff] %vm2365, %v1423
  %2387 = vst.msk [vmem:[%s3 + $0xa8] sm:$0xff] %vm2365, %v1426
  %2388 = vst.msk [vmem:[%s3 + $0xb0] sm:$0xff] %vm2365, %v1431
  %2389 = vst.msk [vmem:[%s3 + $0xb8] sm:$0xff] %vm2365, %v1434
  %2390 = vst.msk [vmem:[%s3 + $0xc0] sm:$0xff] %vm2365, %v1439
  %2391 = vst.msk [vmem:[%s3 + $0xc8] sm:$0xff] %vm2365, %v1442
  %2392 = vst.msk [vmem:[%s3 + $0xd0] sm:$0xff] %vm2365, %v1447
  %2393 = vst.msk [vmem:[%s3 + $0xd8] sm:$0xff] %vm2365, %v1450
  %2394 = vst.msk [vmem:[%s3 + $0xe0] sm:$0xff] %vm2365, %v1455
  %2395 = vst.msk [vmem:[%s3 + $0xe8] sm:$0xff] %vm2365, %v1458
  %2396 = vst.msk [vmem:[%s3 + $0xf0] sm:$0xff] %vm2365, %v1463
  %2397 = vst.msk [vmem:[%s3 + $0xf8] sm:$0xff] %vm2365, %v1466
  %2398 = vst.msk [vmem:[%s3 + $0x100] sm:$0xff] %vm2365, %v1471
  %2399 = vst.msk [vmem:[%s3 + $0x108] sm:$0xff] %vm2365, %v1474
  %2400 = vst.msk [vmem:[%s3 + $0x110] sm:$0xff] %vm2365, %v1479
  %2401 = vst.msk [vmem:[%s3 + $0x118] sm:$0xff] %vm2365, %v1482
  %2402 = vst.msk [vmem:[%s3 + $0x120] sm:$0xff] %vm2365, %v1487
  %2403 = vst.msk [vmem:[%s3 + $0x128] sm:$0xff] %vm2365, %v1490
  %2404 = vst.msk [vmem:[%s3 + $0x130] sm:$0xff] %vm2365, %v1495
  %2405 = vst.msk [vmem:[%s3 + $0x138] sm:$0xff] %vm2365, %v1498
  %2406 = vst.msk [vmem:[%s3 + $0x140] sm:$0xff] %vm2365, %v1503
  %2407 = vst.msk [vmem:[%s3 + $0x148] sm:$0xff] %vm2365, %v1506
  %2408 = vst.msk [vmem:[%s3 + $0x150] sm:$0xff] %vm2365, %v1511
  %2409 = vst.msk [vmem:[%s3 + $0x158] sm:$0xff] %vm2365, %v1514
  %2410 = vst.msk [vmem:[%s3 + $0x160] sm:$0xff] %vm2365, %v1519
  %2411 = vst.msk [vmem:[%s3 + $0x168] sm:$0xff] %vm2365, %v1522
  %2412 = vst.msk [vmem:[%s3 + $0x170] sm:$0xff] %vm2365, %v1527
  %2413 = vst.msk [vmem:[%s3 + $0x178] sm:$0xff] %vm2365, %v1530
  %2414 = vst.msk [vmem:[%s3 + $0x180] sm:$0xff] %vm2365, %v1535
  %2415 = vst.msk [vmem:[%s3 + $0x188] sm:$0xff] %vm2365, %v1538
  %2416 = vst.msk [vmem:[%s3 + $0x190] sm:$0xff] %vm2365, %v1543
  %2417 = vst.msk [vmem:[%s3 + $0x198] sm:$0xff] %vm2365, %v1546
  %2418 = vst.msk [vmem:[%s3 + $0x1a0] sm:$0xff] %vm2365, %v1551
  %2419 = vst.msk [vmem:[%s3 + $0x1a8] sm:$0xff] %vm2365, %v1554
  %2420 = vst.msk [vmem:[%s3 + $0x1b0] sm:$0xff] %vm2365, %v1559
  %2421 = vst.msk [vmem:[%s3 + $0x1b8] sm:$0xff] %vm2365, %v1562
  %2422 = vst.msk [vmem:[%s3 + $0x1c0] sm:$0xff] %vm2365, %v1567
  %2423 = vst.msk [vmem:[%s3 + $0x1c8] sm:$0xff] %vm2365, %v1570
  %2424 = vst.msk [vmem:[%s3 + $0x1d0] sm:$0xff] %vm2365, %v1575
  %2425 = vst.msk [vmem:[%s3 + $0x1d8] sm:$0xff] %vm2365, %v1578
  %2426 = vst.msk [vmem:[%s3 + $0x1e0] sm:$0xff] %vm2365, %v1583
  %2427 = vst.msk [vmem:[%s3 + $0x1e8] sm:$0xff] %vm2365, %v1586
  %2428 = vst.msk [vmem:[%s3 + $0x1f0] sm:$0xff] %vm2365, %v1591
  %2429 = vst.msk [vmem:[%s3 + $0x1f8] sm:$0xff] %vm2365, %v1594
  %2430 = vst.msk [vmem:[%s3 + $0x200] sm:$0xff] %vm2365, %v1599
  %2431 = vst.msk [vmem:[%s3 + $0x208] sm:$0xff] %vm2365, %v1602
  %2432 = vst.msk [vmem:[%s3 + $0x210] sm:$0xff] %vm2365, %v1607
  %2433 = vst.msk [vmem:[%s3 + $0x218] sm:$0xff] %vm2365, %v1610
  %2434 = vst.msk [vmem:[%s3 + $0x220] sm:$0xff] %vm2365, %v1615
  %2435 = vst.msk [vmem:[%s3 + $0x228] sm:$0xff] %vm2365, %v1618
  %2436 = vst.msk [vmem:[%s3 + $0x230] sm:$0xff] %vm2365, %v1623
  %2437 = vst.msk [vmem:[%s3 + $0x238] sm:$0xff] %vm2365, %v1626
  %2438 = vst.msk [vmem:[%s3 + $0x240] sm:$0xff] %vm2365, %v1631
  %2439 = vst.msk [vmem:[%s3 + $0x248] sm:$0xff] %vm2365, %v1634
  %2440 = vst.msk [vmem:[%s3 + $0x250] sm:$0xff] %vm2365, %v1639
  %2441 = vst.msk [vmem:[%s3 + $0x258] sm:$0xff] %vm2365, %v1642
  %2442 = vst.msk [vmem:[%s3 + $0x260] sm:$0xff] %vm2365, %v1647
  %2443 = vst.msk [vmem:[%s3 + $0x268] sm:$0xff] %vm2365, %v1650
  %2444 = vst.msk [vmem:[%s3 + $0x270] sm:$0xff] %vm2365, %v1655
  %2445 = vst.msk [vmem:[%s3 + $0x278] sm:$0xff] %vm2365, %v1658
  %2446 = vst.msk [vmem:[%s3 + $0x280] sm:$0xff] %vm2365, %v1663
  %2447 = vst.msk [vmem:[%s3 + $0x288] sm:$0xff] %vm2365, %v1666
  %2448 = vst.msk [vmem:[%s3 + $0x290] sm:$0xff] %vm2365, %v1671
  %2449 = vst.msk [vmem:[%s3 + $0x298] sm:$0xff] %vm2365, %v1674
  %2450 = vst.msk [vmem:[%s3 + $0x2a0] sm:$0xff] %vm2365, %v1679
  %2451 = vst.msk [vmem:[%s3 + $0x2a8] sm:$0xff] %vm2365, %v1682
  %2452 = vst.msk [vmem:[%s3 + $0x2b0] sm:$0xff] %vm2365, %v1687
  %2453 = vst.msk [vmem:[%s3 + $0x2b8] sm:$0xff] %vm2365, %v1690
  %2454 = vst.msk [vmem:[%s3 + $0x2c0] sm:$0xff] %vm2365, %v1695
  %2455 = vst.msk [vmem:[%s3 + $0x2c8] sm:$0xff] %vm2365, %v1698
  %2456 = vst.msk [vmem:[%s3 + $0x2d0] sm:$0xff] %vm2365, %v1703
  %2457 = vst.msk [vmem:[%s3 + $0x2d8] sm:$0xff] %vm2365, %v1706
  %2458 = vst.msk [vmem:[%s3 + $0x2e0] sm:$0xff] %vm2365, %v1711
  %2459 = vst.msk [vmem:[%s3 + $0x2e8] sm:$0xff] %vm2365, %v1714
  %2460 = vst.msk [vmem:[%s3 + $0x2f0] sm:$0xff] %vm2365, %v1719
  %2461 = vst.msk [vmem:[%s3 + $0x2f8] sm:$0xff] %vm2365, %v1722
  %2462 = vst.msk [vmem:[%s3 + $0x300] sm:$0xff] %vm2365, %v1727
  %2463 = vst.msk [vmem:[%s3 + $0x308] sm:$0xff] %vm2365, %v1730
  %2464 = vst.msk [vmem:[%s3 + $0x310] sm:$0xff] %vm2365, %v1735
  %2465 = vst.msk [vmem:[%s3 + $0x318] sm:$0xff] %vm2365, %v1738
  %2466 = vst.msk [vmem:[%s3 + $0x320] sm:$0xff] %vm2365, %v1743
  %2467 = vst.msk [vmem:[%s3 + $0x328] sm:$0xff] %vm2365, %v1746
  %2468 = vst.msk [vmem:[%s3 + $0x330] sm:$0xff] %vm2365, %v1751
  %2469 = vst.msk [vmem:[%s3 + $0x338] sm:$0xff] %vm2365, %v1754
  %2470 = vst.msk [vmem:[%s3 + $0x340] sm:$0xff] %vm2365, %v1759
  %2471 = vst.msk [vmem:[%s3 + $0x348] sm:$0xff] %vm2365, %v1762
  %2472 = vst.msk [vmem:[%s3 + $0x350] sm:$0xff] %vm2365, %v1767
  %2473 = vst.msk [vmem:[%s3 + $0x358] sm:$0xff] %vm2365, %v1770
  %2474 = vst.msk [vmem:[%s3 + $0x360] sm:$0xff] %vm2365, %v1775
  %2475 = vst.msk [vmem:[%s3 + $0x368] sm:$0xff] %vm2365, %v1778
  %2476 = vst.msk [vmem:[%s3 + $0x370] sm:$0xff] %vm2365, %v1783
  %2477 = vst.msk [vmem:[%s3 + $0x378] sm:$0xff] %vm2365, %v1786
  %2478 = vst.msk [vmem:[%s3 + $0x380] sm:$0xff] %vm2365, %v1791
  %2479 = vst.msk [vmem:[%s3 + $0x388] sm:$0xff] %vm2365, %v1794
  %2480 = vst.msk [vmem:[%s3 + $0x390] sm:$0xff] %vm2365, %v1799
  %2481 = vst.msk [vmem:[%s3 + $0x398] sm:$0xff] %vm2365, %v1802
  %2482 = vst.msk [vmem:[%s3 + $0x3a0] sm:$0xff] %vm2365, %v1807
  %2483 = vst.msk [vmem:[%s3 + $0x3a8] sm:$0xff] %vm2365, %v1810
  %2484 = vst.msk [vmem:[%s3 + $0x3b0] sm:$0xff] %vm2365, %v1815
  %2485 = vst.msk [vmem:[%s3 + $0x3b8] sm:$0xff] %vm2365, %v1818
  %2486 = vst.msk [vmem:[%s3 + $0x3c0] sm:$0xff] %vm2365, %v1823
  %2487 = vst.msk [vmem:[%s3 + $0x3c8] sm:$0xff] %vm2365, %v1826
  %2488 = vst.msk [vmem:[%s3 + $0x3d0] sm:$0xff] %vm2365, %v1831
  %2489 = vst.msk [vmem:[%s3 + $0x3d8] sm:$0xff] %vm2365, %v1834
  %2490 = vst.msk [vmem:[%s3 + $0x3e0] sm:$0xff] %vm2365, %v1839
  %2491 = vst.msk [vmem:[%s3 + $0x3e8] sm:$0xff] %vm2365, %v1842
  %2492 = vst.msk [vmem:[%s3 + $0x3f0] sm:$0xff] %vm2365, %v1847
  %2493 = vst.msk [vmem:[%s3 + $0x3f8] sm:$0xff] %vm2365, %v1850
  %2494 = vst.msk [vmem:[%s3 + $0x400] sm:$0xff] %vm2365, %v1855
  %2495 = vst.msk [vmem:[%s3 + $0x408] sm:$0xff] %vm2365, %v1858
  %2496 = vst.msk [vmem:[%s3 + $0x410] sm:$0xff] %vm2365, %v1863
  %2497 = vst.msk [vmem:[%s3 + $0x418] sm:$0xff] %vm2365, %v1866
  %2498 = vst.msk [vmem:[%s3 + $0x420] sm:$0xff] %vm2365, %v1871
  %2499 = vst.msk [vmem:[%s3 + $0x428] sm:$0xff] %vm2365, %v1874
  %2500 = vst.msk [vmem:[%s3 + $0x430] sm:$0xff] %vm2365, %v1879
  %2501 = vst.msk [vmem:[%s3 + $0x438] sm:$0xff] %vm2365, %v1882
  %2502 = vst.msk [vmem:[%s3 + $0x440] sm:$0xff] %vm2365, %v1887
  %2503 = vst.msk [vmem:[%s3 + $0x448] sm:$0xff] %vm2365, %v1890
  %2504 = vst.msk [vmem:[%s3 + $0x450] sm:$0xff] %vm2365, %v1895
  %2505 = vst.msk [vmem:[%s3 + $0x458] sm:$0xff] %vm2365, %v1898
  %2506 = vst.msk [vmem:[%s3 + $0x460] sm:$0xff] %vm2365, %v1903
  %2507 = vst.msk [vmem:[%s3 + $0x468] sm:$0xff] %vm2365, %v1906
  %2508 = vst.msk [vmem:[%s3 + $0x470] sm:$0xff] %vm2365, %v1911
  %2509 = vst.msk [vmem:[%s3 + $0x478] sm:$0xff] %vm2365, %v1914
  %2510 = vst.msk [vmem:[%s3 + $0x480] sm:$0xff] %vm2365, %v1919
  %2511 = vst.msk [vmem:[%s3 + $0x488] sm:$0xff] %vm2365, %v1922
  %2512 = vst.msk [vmem:[%s3 + $0x490] sm:$0xff] %vm2365, %v1927
  %2513 = vst.msk [vmem:[%s3 + $0x498] sm:$0xff] %vm2365, %v1930
  %2514 = vst.msk [vmem:[%s3 + $0x4a0] sm:$0xff] %vm2365, %v1935
  %2515 = vst.msk [vmem:[%s3 + $0x4a8] sm:$0xff] %vm2365, %v1938
  %2516 = vst.msk [vmem:[%s3 + $0x4b0] sm:$0xff] %vm2365, %v1943
  %2517 = vst.msk [vmem:[%s3 + $0x4b8] sm:$0xff] %vm2365, %v1946
  %2518 = vst.msk [vmem:[%s3 + $0x4c0] sm:$0xff] %vm2365, %v1951
  %2519 = vst.msk [vmem:[%s3 + $0x4c8] sm:$0xff] %vm2365, %v1954
  %2520 = vst.msk [vmem:[%s3 + $0x4d0] sm:$0xff] %vm2365, %v1959
  %2521 = vst.msk [vmem:[%s3 + $0x4d8] sm:$0xff] %vm2365, %v1962
  %2522 = vst.msk [vmem:[%s3 + $0x4e0] sm:$0xff] %vm2365, %v1967
  %2523 = vst.msk [vmem:[%s3 + $0x4e8] sm:$0xff] %vm2365, %v1970
  %2524 = vst.msk [vmem:[%s3 + $0x4f0] sm:$0xff] %vm2365, %v1975
  %2525 = vst.msk [vmem:[%s3 + $0x4f8] sm:$0xff] %vm2365, %v1978
  %2526 = vst.msk [vmem:[%s3 + $0x500] sm:$0xff] %vm2365, %v1983
  %2527 = vst.msk [vmem:[%s3 + $0x508] sm:$0xff] %vm2365, %v1986
  %2528 = vst.msk [vmem:[%s3 + $0x510] sm:$0xff] %vm2365, %v1991
  %2529 = vst.msk [vmem:[%s3 + $0x518] sm:$0xff] %vm2365, %v1994
  %2530 = vst.msk [vmem:[%s3 + $0x520] sm:$0xff] %vm2365, %v1999
  %2531 = vst.msk [vmem:[%s3 + $0x528] sm:$0xff] %vm2365, %v2002
  %2532 = vst.msk [vmem:[%s3 + $0x530] sm:$0xff] %vm2365, %v2007
  %2533 = vst.msk [vmem:[%s3 + $0x538] sm:$0xff] %vm2365, %v2010
  %2534 = vst.msk [vmem:[%s3 + $0x540] sm:$0xff] %vm2365, %v2015
  %2535 = vst.msk [vmem:[%s3 + $0x548] sm:$0xff] %vm2365, %v2018
  %2536 = vst.msk [vmem:[%s3 + $0x550] sm:$0xff] %vm2365, %v2023
  %2537 = vst.msk [vmem:[%s3 + $0x558] sm:$0xff] %vm2365, %v2026
  %2538 = vst.msk [vmem:[%s3 + $0x560] sm:$0xff] %vm2365, %v2031
  %2539 = vst.msk [vmem:[%s3 + $0x568] sm:$0xff] %vm2365, %v2034
  %2540 = vst.msk [vmem:[%s3 + $0x570] sm:$0xff] %vm2365, %v2039
  %2541 = vst.msk [vmem:[%s3 + $0x578] sm:$0xff] %vm2365, %v2042
  %2542 = vst.msk [vmem:[%s3 + $0x580] sm:$0xff] %vm2365, %v2047
  %2543 = vst.msk [vmem:[%s3 + $0x588] sm:$0xff] %vm2365, %v2050
  %2544 = vst.msk [vmem:[%s3 + $0x590] sm:$0xff] %vm2365, %v2055
  %2545 = vst.msk [vmem:[%s3 + $0x598] sm:$0xff] %vm2365, %v2058
  %2546 = vst.msk [vmem:[%s3 + $0x5a0] sm:$0xff] %vm2365, %v2063
  %2547 = vst.msk [vmem:[%s3 + $0x5a8] sm:$0xff] %vm2365, %v2066
  %2548 = vst.msk [vmem:[%s3 + $0x5b0] sm:$0xff] %vm2365, %v2071
  %2549 = vst.msk [vmem:[%s3 + $0x5b8] sm:$0xff] %vm2365, %v2074
  %2550 = vst.msk [vmem:[%s3 + $0x5c0] sm:$0xff] %vm2365, %v2079
  %2551 = vst.msk [vmem:[%s3 + $0x5c8] sm:$0xff] %vm2365, %v2082
  %2552 = vst.msk [vmem:[%s3 + $0x5d0] sm:$0xff] %vm2365, %v2087
  %2553 = vst.msk [vmem:[%s3 + $0x5d8] sm:$0xff] %vm2365, %v2090
  %2554 = vst.msk [vmem:[%s3 + $0x5e0] sm:$0xff] %vm2365, %v2095
  %2555 = vst.msk [vmem:[%s3 + $0x5e8] sm:$0xff] %vm2365, %v2098
  %2556 = vst.msk [vmem:[%s3 + $0x5f0] sm:$0xff] %vm2365, %v2103
  %2557 = vst.msk [vmem:[%s3 + $0x5f8] sm:$0xff] %vm2365, %v2106
  %2558 = vst.msk [vmem:[%s3 + $0x600] sm:$0xff] %vm2365, %v2111
  %2559 = vst.msk [vmem:[%s3 + $0x608] sm:$0xff] %vm2365, %v2114
  %2560 = vst.msk [vmem:[%s3 + $0x610] sm:$0xff] %vm2365, %v2119
  %2561 = vst.msk [vmem:[%s3 + $0x618] sm:$0xff] %vm2365, %v2122
  %2562 = vst.msk [vmem:[%s3 + $0x620] sm:$0xff] %vm2365, %v2127
  %2563 = vst.msk [vmem:[%s3 + $0x628] sm:$0xff] %vm2365, %v2130
  %2564 = vst.msk [vmem:[%s3 + $0x630] sm:$0xff] %vm2365, %v2135
  %2565 = vst.msk [vmem:[%s3 + $0x638] sm:$0xff] %vm2365, %v2138
  %2566 = vst.msk [vmem:[%s3 + $0x640] sm:$0xff] %vm2365, %v2143
  %2567 = vst.msk [vmem:[%s3 + $0x648] sm:$0xff] %vm2365, %v2146
  %2568 = vst.msk [vmem:[%s3 + $0x650] sm:$0xff] %vm2365, %v2151
  %2569 = vst.msk [vmem:[%s3 + $0x658] sm:$0xff] %vm2365, %v2154
  %2570 = vst.msk [vmem:[%s3 + $0x660] sm:$0xff] %vm2365, %v2159
  %2571 = vst.msk [vmem:[%s3 + $0x668] sm:$0xff] %vm2365, %v2162
  %2572 = vst.msk [vmem:[%s3 + $0x670] sm:$0xff] %vm2365, %v2167
  %2573 = vst.msk [vmem:[%s3 + $0x678] sm:$0xff] %vm2365, %v2170
  %2574 = vst.msk [vmem:[%s3 + $0x680] sm:$0xff] %vm2365, %v2175
  %2575 = vst.msk [vmem:[%s3 + $0x688] sm:$0xff] %vm2365, %v2178
  %2576 = vst.msk [vmem:[%s3 + $0x690] sm:$0xff] %vm2365, %v2183
  %2577 = vst.msk [vmem:[%s3 + $0x698] sm:$0xff] %vm2365, %v2186
  %2578 = vst.msk [vmem:[%s3 + $0x6a0] sm:$0xff] %vm2365, %v2191
  %2579 = vst.msk [vmem:[%s3 + $0x6a8] sm:$0xff] %vm2365, %v2194
  %2580 = vst.msk [vmem:[%s3 + $0x6b0] sm:$0xff] %vm2365, %v2199
  %2581 = vst.msk [vmem:[%s3 + $0x6b8] sm:$0xff] %vm2365, %v2202
  %2582 = vst.msk [vmem:[%s3 + $0x6c0] sm:$0xff] %vm2365, %v2207
  %2583 = vst.msk [vmem:[%s3 + $0x6c8] sm:$0xff] %vm2365, %v2210
  %2584 = vst.msk [vmem:[%s3 + $0x6d0] sm:$0xff] %vm2365, %v2215
  %2585 = vst.msk [vmem:[%s3 + $0x6d8] sm:$0xff] %vm2365, %v2218
  %2586 = vst.msk [vmem:[%s3 + $0x6e0] sm:$0xff] %vm2365, %v2223
  %2587 = vst.msk [vmem:[%s3 + $0x6e8] sm:$0xff] %vm2365, %v2226
  %2588 = vst.msk [vmem:[%s3 + $0x6f0] sm:$0xff] %vm2365, %v2231
  %2589 = vst.msk [vmem:[%s3 + $0x6f8] sm:$0xff] %vm2365, %v2234
  %2590 = vst.msk [vmem:[%s3 + $0x700] sm:$0xff] %vm2365, %v2239
  %2591 = vst.msk [vmem:[%s3 + $0x708] sm:$0xff] %vm2365, %v2242
  %2592 = vst.msk [vmem:[%s3 + $0x710] sm:$0xff] %vm2365, %v2247
  %2593 = vst.msk [vmem:[%s3 + $0x718] sm:$0xff] %vm2365, %v2250
  %2594 = vst.msk [vmem:[%s3 + $0x720] sm:$0xff] %vm2365, %v2255
  %2595 = vst.msk [vmem:[%s3 + $0x728] sm:$0xff] %vm2365, %v2258
  %2596 = vst.msk [vmem:[%s3 + $0x730] sm:$0xff] %vm2365, %v2263
  %2597 = vst.msk [vmem:[%s3 + $0x738] sm:$0xff] %vm2365, %v2266
  %2598 = vst.msk [vmem:[%s3 + $0x740] sm:$0xff] %vm2365, %v2271
  %2599 = vst.msk [vmem:[%s3 + $0x748] sm:$0xff] %vm2365, %v2274
  %2600 = vst.msk [vmem:[%s3 + $0x750] sm:$0xff] %vm2365, %v2279
  %2601 = vst.msk [vmem:[%s3 + $0x758] sm:$0xff] %vm2365, %v2282
  %2602 = vst.msk [vmem:[%s3 + $0x760] sm:$0xff] %vm2365, %v2287
  %2603 = vst.msk [vmem:[%s3 + $0x768] sm:$0xff] %vm2365, %v2290
  %2604 = vst.msk [vmem:[%s3 + $0x770] sm:$0xff] %vm2365, %v2295
  %2605 = vst.msk [vmem:[%s3 + $0x778] sm:$0xff] %vm2365, %v2298
  %2606 = vst.msk [vmem:[%s3 + $0x780] sm:$0xff] %vm2365, %v2303
  %2607 = vst.msk [vmem:[%s3 + $0x788] sm:$0xff] %vm2365, %v2306
  %2608 = vst.msk [vmem:[%s3 + $0x790] sm:$0xff] %vm2365, %v2311
  %2609 = vst.msk [vmem:[%s3 + $0x798] sm:$0xff] %vm2365, %v2314
  %2610 = vst.msk [vmem:[%s3 + $0x7a0] sm:$0xff] %vm2365, %v2319
  %2611 = vst.msk [vmem:[%s3 + $0x7a8] sm:$0xff] %vm2365, %v2322
  %2612 = vst.msk [vmem:[%s3 + $0x7b0] sm:$0xff] %vm2365, %v2327
  %2613 = vst.msk [vmem:[%s3 + $0x7b8] sm:$0xff] %vm2365, %v2330
  %2614 = vst.msk [vmem:[%s3 + $0x7c0] sm:$0xff] %vm2365, %v2335
  %2615 = vst.msk [vmem:[%s3 + $0x7c8] sm:$0xff] %vm2365, %v2338
  %2616 = vst.msk [vmem:[%s3 + $0x7d0] sm:$0xff] %vm2365, %v2343
  %2617 = vst.msk [vmem:[%s3 + $0x7d8] sm:$0xff] %vm2365, %v2346
  %2618 = vst.msk [vmem:[%s3 + $0x7e0] sm:$0xff] %vm2365, %v2351
  %2619 = vst.msk [vmem:[%s3 + $0x7e8] sm:$0xff] %vm2365, %v2354
  %2620 = vst.msk [vmem:[%s3 + $0x7f0] sm:$0xff] %vm2365, %v2359
  %2621 = vst.msk [vmem:[%s3 + $0x7f8] sm:$0xff] %vm2365, %v2362
  // Predicated region
  $region14: #{vae_forward.14} parent=0 // pred_check
    _
  $region15: #{vae_forward.14} parent=0 // pred_check_branch
    %2623 = sbr.rel (0) target = $region17
  $region16: #{vae_forward.14} parent=0 // pred_region
    _
  $region17: #{vae_forward.14} parent=0 // pred_fallthru
    _
  // Predicated region
  $region18: #{vae_forward.14} parent=0 // pred_check
    _
  $region19: #{vae_forward.14} parent=0 // pred_check_branch
    %2625 = sbr.rel (0) target = $region21
  $region20: #{vae_forward.14} parent=0 // pred_region
    _
  $region21: #{vae_forward.14} parent=0 // pred_fallthru
    _

// kernel: vae_forward.15
$region0: #{vae_forward.15}
  #allocation0 [shape = 'u32[]', space=smem, size = 0x4, offset = 0x4, fixed_abs, tag = 'smem constant byte address 0x4 - core index']
  #allocation1 [shape = 'u32[144,128]{1,0:T(1,128)}', space=vmem, size = 0x12000, scoped, tag = 'internal scratch']
  %s0 = inlined_call_operand.vmem [shape: bf16[512,128], index: 0, kind: input, shape index: {}]
  %s1 = inlined_call_operand.vmem [shape: bf16[128,8], index: 1, kind: input, shape index: {}]
  %s2 = inlined_call_operand.vmem [shape: f32[1,8], index: 2, kind: input, shape index: {}]
  %s3 = inlined_call_operand.vmem [shape: f32[1,8], index: 3, kind: input, shape index: {}]
  %s4 = inlined_call_operand.vmem [shape: f32[1,8], index: 4, kind: input, shape index: {}]
  %s5 = inlined_call_operand.vmem [shape: f32[512,8], index: 5, kind: output, shape index: {}]
  %s6 = sld [smem:[#allocation0]]
  $region30: #{vae_forward.15} parent=0
    _
  %s8 = ssub.s32 1, %s6
  %s9 = scalar_select 0, %s8, %s6
  // Predicated region
  $region2: #{vae_forward.15} parent=0 // pred_check
    _
  $region3: #{vae_forward.15} parent=0 // pred_check_branch
    %11 = sbr.rel (0) target = $region5
  $region4: #{vae_forward.15} parent=0 // pred_region
    _
  $region5: #{vae_forward.15} parent=0 // pred_fallthru
    _
  // Predicated region
  $region6: #{vae_forward.15} parent=0 // pred_check
    _
  $region7: #{vae_forward.15} parent=0 // pred_check_branch
    %13 = sbr.rel (0) target = $region9
  $region8: #{vae_forward.15} parent=0 // pred_region
    _
  $region9: #{vae_forward.15} parent=0 // pred_fallthru
    _
  // Predicated region
  $region10: #{vae_forward.15} parent=0 // pred_check
    _
  $region11: #{vae_forward.15} parent=0 // pred_check_branch
    %15 = sbr.rel (0) target = $region13
  $region12: #{vae_forward.15} parent=0 // pred_region
    _
  $region13: #{vae_forward.15} parent=0 // pred_fallthru
    _
  // Predicated region
  $region14: #{vae_forward.15} parent=0 // pred_check
    _
  $region15: #{vae_forward.15} parent=0 // pred_check_branch
    %17 = sbr.rel (0) target = $region17
  $region16: #{vae_forward.15} parent=0 // pred_region
    _
  $region17: #{vae_forward.15} parent=0 // pred_fallthru
    _
  // Predicated region
  $region18: #{vae_forward.15} parent=0 // pred_check
    _
  $region19: #{vae_forward.15} parent=0 // pred_check_branch
    %19 = sbr.rel (0) target = $region21
  $region20: #{vae_forward.15} parent=0 // pred_region
    _
  $region21: #{vae_forward.15} parent=0 // pred_fallthru
    _
  %v21 = vld [vmem:[%s0] sm:$0xf]
  %v22 = vld [vmem:[%s0 + $0x4] sm:$0xf]
  %v23 = vld [vmem:[%s0 + $0x8] sm:$0xf]
  %v24 = vld [vmem:[%s0 + $0xc] sm:$0xf]
  %v25 = vld [vmem:[%s0 + $0x10] sm:$0xf]
  %v26 = vld [vmem:[%s0 + $0x14] sm:$0xf]
  %v27 = vld [vmem:[%s0 + $0x18] sm:$0xf]
  %v28 = vld [vmem:[%s0 + $0x1c] sm:$0xf]
  %v29 = vld [vmem:[%s0 + $0x20] sm:$0xf]
  %v30 = vld [vmem:[%s0 + $0x24] sm:$0xf]
  %v31 = vld [vmem:[%s0 + $0x28] sm:$0xf]
  %v32 = vld [vmem:[%s0 + $0x2c] sm:$0xf]
  %v33 = vld [vmem:[%s0 + $0x30] sm:$0xf]
  %v34 = vld [vmem:[%s0 + $0x34] sm:$0xf]
  %v35 = vld [vmem:[%s0 + $0x38] sm:$0xf]
  %v36 = vld [vmem:[%s0 + $0x3c] sm:$0xf]
  %v37 = vld [vmem:[%s0 + $0x40] sm:$0xf]
  %v38 = vld [vmem:[%s0 + $0x44] sm:$0xf]
  %v39 = vld [vmem:[%s0 + $0x48] sm:$0xf]
  %v40 = vld [vmem:[%s0 + $0x4c] sm:$0xf]
  %v41 = vld [vmem:[%s0 + $0x50] sm:$0xf]
  %v42 = vld [vmem:[%s0 + $0x54] sm:$0xf]
  %v43 = vld [vmem:[%s0 + $0x58] sm:$0xf]
  %v44 = vld [vmem:[%s0 + $0x5c] sm:$0xf]
  %v45 = vld [vmem:[%s0 + $0x60] sm:$0xf]
  %v46 = vld [vmem:[%s0 + $0x64] sm:$0xf]
  %v47 = vld [vmem:[%s0 + $0x68] sm:$0xf]
  %v48 = vld [vmem:[%s0 + $0x6c] sm:$0xf]
  %v49 = vld [vmem:[%s0 + $0x70] sm:$0xf]
  %v50 = vld [vmem:[%s0 + $0x74] sm:$0xf]
  %v51 = vld [vmem:[%s0 + $0x78] sm:$0xf]
  %v52 = vld [vmem:[%s0 + $0x7c] sm:$0xf]
  %v53 = vld [vmem:[%s0 + $0x80] sm:$0xf]
  %v54 = vld [vmem:[%s0 + $0x84] sm:$0xf]
  %v55 = vld [vmem:[%s0 + $0x88] sm:$0xf]
  %v56 = vld [vmem:[%s0 + $0x8c] sm:$0xf]
  %v57 = vld [vmem:[%s0 + $0x90] sm:$0xf]
  %v58 = vld [vmem:[%s0 + $0x94] sm:$0xf]
  %v59 = vld [vmem:[%s0 + $0x98] sm:$0xf]
  %v60 = vld [vmem:[%s0 + $0x9c] sm:$0xf]
  %v61 = vld [vmem:[%s0 + $0xa0] sm:$0xf]
  %v62 = vld [vmem:[%s0 + $0xa4] sm:$0xf]
  %v63 = vld [vmem:[%s0 + $0xa8] sm:$0xf]
  %v64 = vld [vmem:[%s0 + $0xac] sm:$0xf]
  %v65 = vld [vmem:[%s0 + $0xb0] sm:$0xf]
  %v66 = vld [vmem:[%s0 + $0xb4] sm:$0xf]
  %v67 = vld [vmem:[%s0 + $0xb8] sm:$0xf]
  %v68 = vld [vmem:[%s0 + $0xbc] sm:$0xf]
  %v69 = vld [vmem:[%s0 + $0xc0] sm:$0xf]
  %v70 = vld [vmem:[%s0 + $0xc4] sm:$0xf]
  %v71 = vld [vmem:[%s0 + $0xc8] sm:$0xf]
  %v72 = vld [vmem:[%s0 + $0xcc] sm:$0xf]
  %v73 = vld [vmem:[%s0 + $0xd0] sm:$0xf]
  %v74 = vld [vmem:[%s0 + $0xd4] sm:$0xf]
  %v75 = vld [vmem:[%s0 + $0xd8] sm:$0xf]
  %v76 = vld [vmem:[%s0 + $0xdc] sm:$0xf]
  %v77 = vld [vmem:[%s0 + $0xe0] sm:$0xf]
  %v78 = vld [vmem:[%s0 + $0xe4] sm:$0xf]
  %v79 = vld [vmem:[%s0 + $0xe8] sm:$0xf]
  %v80 = vld [vmem:[%s0 + $0xec] sm:$0xf]
  %v81 = vld [vmem:[%s0 + $0xf0] sm:$0xf]
  %v82 = vld [vmem:[%s0 + $0xf4] sm:$0xf]
  %v83 = vld [vmem:[%s0 + $0xf8] sm:$0xf]
  %v84 = vld [vmem:[%s0 + $0xfc] sm:$0xf]
  %v85 = vld [vmem:[%s1] sm:$0xf]
  %v86 = vld [vmem:[%s1 + $0x4] sm:$0xf]
  %v87 = vld [vmem:[%s1 + $0x8] sm:$0xf]
  %v88 = vld [vmem:[%s1 + $0xc] sm:$0xf]
  %v89 = vld [vmem:[%s1 + $0x10] sm:$0xf]
  %v90 = vld [vmem:[%s1 + $0x14] sm:$0xf]
  %v91 = vld [vmem:[%s1 + $0x18] sm:$0xf]
  %v92 = vld [vmem:[%s1 + $0x1c] sm:$0xf]
  %v93 = vld [vmem:[%s1 + $0x20] sm:$0xf]
  %v94 = vld [vmem:[%s1 + $0x24] sm:$0xf]
  %v95 = vld [vmem:[%s1 + $0x28] sm:$0xf]
  %v96 = vld [vmem:[%s1 + $0x2c] sm:$0xf]
  %v97 = vld [vmem:[%s1 + $0x30] sm:$0xf]
  %v98 = vld [vmem:[%s1 + $0x34] sm:$0xf]
  %v99 = vld [vmem:[%s1 + $0x38] sm:$0xf]
  %v100 = vld [vmem:[%s1 + $0x3c] sm:$0xf]
  %v101 = vld [vmem:[%s2] sm:$0x1]
  %v103 = vlaneseq
  %v104 = vshrl.u32 %v103, 7
  %v105 = vsub.s32 0, %v104
  %v106 = vrot.slane %v101, %v105
  %v172 = vunpack.c.l.b16 %v21
  %v173 = vunpack.c.l.b16 %v22
  %v174 = vunpack.c.l.b16 %v23
  %v175 = vunpack.c.l.b16 %v24
  %v176 = vunpack.c.l.b16 %v25
  %v177 = vunpack.c.l.b16 %v26
  %v178 = vunpack.c.l.b16 %v27
  %v179 = vunpack.c.l.b16 %v28
  %v180 = vunpack.c.l.b16 %v29
  %v181 = vunpack.c.l.b16 %v30
  %v182 = vunpack.c.l.b16 %v31
  %v183 = vunpack.c.l.b16 %v32
  %v184 = vunpack.c.l.b16 %v33
  %v185 = vunpack.c.l.b16 %v34
  %v186 = vunpack.c.l.b16 %v35
  %v187 = vunpack.c.l.b16 %v36
  %v188 = vunpack.c.l.b16 %v37
  %v189 = vunpack.c.l.b16 %v38
  %v190 = vunpack.c.l.b16 %v39
  %v191 = vunpack.c.l.b16 %v40
  %v192 = vunpack.c.l.b16 %v41
  %v193 = vunpack.c.l.b16 %v42
  %v194 = vunpack.c.l.b16 %v43
  %v195 = vunpack.c.l.b16 %v44
  %v196 = vunpack.c.l.b16 %v45
  %v197 = vunpack.c.l.b16 %v46
  %v198 = vunpack.c.l.b16 %v47
  %v199 = vunpack.c.l.b16 %v48
  %v200 = vunpack.c.l.b16 %v49
  %v201 = vunpack.c.l.b16 %v50
  %v202 = vunpack.c.l.b16 %v51
  %v203 = vunpack.c.l.b16 %v52
  %v204 = vunpack.c.l.b16 %v53
  %v205 = vunpack.c.l.b16 %v54
  %v206 = vunpack.c.l.b16 %v55
  %v207 = vunpack.c.l.b16 %v56
  %v208 = vunpack.c.l.b16 %v57
  %v209 = vunpack.c.l.b16 %v58
  %v210 = vunpack.c.l.b16 %v59
  %v211 = vunpack.c.l.b16 %v60
  %v212 = vunpack.c.l.b16 %v61
  %v213 = vunpack.c.l.b16 %v62
  %v214 = vunpack.c.l.b16 %v63
  %v215 = vunpack.c.l.b16 %v64
  %v216 = vunpack.c.l.b16 %v65
  %v217 = vunpack.c.l.b16 %v66
  %v218 = vunpack.c.l.b16 %v67
  %v219 = vunpack.c.l.b16 %v68
  %v220 = vunpack.c.l.b16 %v69
  %v221 = vunpack.c.l.b16 %v70
  %v222 = vunpack.c.l.b16 %v71
  %v223 = vunpack.c.l.b16 %v72
  %v224 = vunpack.c.l.b16 %v73
  %v225 = vunpack.c.l.b16 %v74
  %v226 = vunpack.c.l.b16 %v75
  %v227 = vunpack.c.l.b16 %v76
  %v228 = vunpack.c.l.b16 %v77
  %v229 = vunpack.c.l.b16 %v78
  %v230 = vunpack.c.l.b16 %v79
  %v231 = vunpack.c.l.b16 %v80
  %v232 = vunpack.c.l.b16 %v81
  %v233 = vunpack.c.l.b16 %v82
  %v234 = vunpack.c.l.b16 %v83
  %v235 = vunpack.c.l.b16 %v84
  %v236 = vpack.c.b16 %v173, %v172
  %v237 = vpack.c.b16 %v175, %v174
  %v238 = vpack.c.b16 %v177, %v176
  %v239 = vpack.c.b16 %v179, %v178
  %v240 = vpack.c.b16 %v181, %v180
  %v241 = vpack.c.b16 %v183, %v182
  %v242 = vpack.c.b16 %v185, %v184
  %v243 = vpack.c.b16 %v187, %v186
  %v244 = vpack.c.b16 %v189, %v188
  %v245 = vpack.c.b16 %v191, %v190
  %v246 = vpack.c.b16 %v193, %v192
  %v247 = vpack.c.b16 %v195, %v194
  %v248 = vpack.c.b16 %v197, %v196
  %v249 = vpack.c.b16 %v199, %v198
  %v250 = vpack.c.b16 %v201, %v200
  %v251 = vpack.c.b16 %v203, %v202
  %v252 = vpack.c.b16 %v205, %v204
  %v253 = vpack.c.b16 %v207, %v206
  %v254 = vpack.c.b16 %v209, %v208
  %v255 = vpack.c.b16 %v211, %v210
  %v256 = vpack.c.b16 %v213, %v212
  %v257 = vpack.c.b16 %v215, %v214
  %v258 = vpack.c.b16 %v217, %v216
  %v259 = vpack.c.b16 %v219, %v218
  %v260 = vpack.c.b16 %v221, %v220
  %v261 = vpack.c.b16 %v223, %v222
  %v262 = vpack.c.b16 %v225, %v224
  %v263 = vpack.c.b16 %v227, %v226
  %v264 = vpack.c.b16 %v229, %v228
  %v265 = vpack.c.b16 %v231, %v230
  %v266 = vpack.c.b16 %v233, %v232
  %v267 = vpack.c.b16 %v235, %v234
  %v316 = vunpack.c.l.b16 %v85
  %v317 = vunpack.c.l.b16 %v86
  %v318 = vunpack.c.l.b16 %v87
  %v319 = vunpack.c.l.b16 %v88
  %v320 = vunpack.c.l.b16 %v89
  %v321 = vunpack.c.l.b16 %v90
  %v322 = vunpack.c.l.b16 %v91
  %v323 = vunpack.c.l.b16 %v92
  %v324 = vunpack.c.l.b16 %v93
  %v325 = vunpack.c.l.b16 %v94
  %v326 = vunpack.c.l.b16 %v95
  %v327 = vunpack.c.l.b16 %v96
  %v328 = vunpack.c.l.b16 %v97
  %v329 = vunpack.c.l.b16 %v98
  %v330 = vunpack.c.l.b16 %v99
  %v331 = vunpack.c.l.b16 %v100
  %v332 = vpack.c.b16 %v317, %v316
  %v333 = vpack.c.b16 %v319, %v318
  %v334 = vpack.c.b16 %v321, %v320
  %v335 = vpack.c.b16 %v323, %v322
  %v336 = vpack.c.b16 %v325, %v324
  %v337 = vpack.c.b16 %v327, %v326
  %v338 = vpack.c.b16 %v329, %v328
  %v339 = vpack.c.b16 %v331, %v330
  %348 = vmatprep.subr.bf16.mxu0 0
  %349 = vmatpush1.bf16.msra.mxu0 %v332
  %350 = vmatprep.subr.bf16.mxu0 0
  %351 = vmatpush1.bf16.msra.mxu0 %v333
  %352 = vmatprep.subr.bf16.mxu0 0
  %353 = vmatpush1.bf16.msra.mxu0 %v334
  %354 = vmatprep.subr.bf16.mxu0 0
  %355 = vmatpush1.bf16.msra.mxu0 %v335
  %356 = vmatprep.subr.bf16.mxu0 0
  %357 = vmatpush1.bf16.msra.mxu0 %v336
  %358 = vmatprep.subr.bf16.mxu0 0
  %359 = vmatpush1.bf16.msra.mxu0 %v337
  %360 = vmatprep.subr.bf16.mxu0 0
  %361 = vmatpush1.bf16.msra.mxu0 %v338
  %362 = vmatprep.subr.bf16.mxu0 0
  %363 = vmatpush1.bf16.msra.mxu0 %v339
  %364 = vmatprep.subr.bf16.mxu0 0
  %365 = vmatpush1.bf16.msra.mxu0 0
  %366 = vmatprep.subr.bf16.mxu0 0
  %367 = vmatpush1.bf16.msra.mxu0 0
  %368 = vmatprep.subr.bf16.mxu0 0
  %369 = vmatpush1.bf16.msra.mxu0 0
  %370 = vmatprep.subr.bf16.mxu0 0
  %371 = vmatpush1.bf16.msra.mxu0 0
  %372 = vmatprep.subr.bf16.mxu0 0
  %373 = vmatpush1.bf16.msra.mxu0 0
  %374 = vmatprep.subr.bf16.mxu0 0
  %375 = vmatpush1.bf16.msra.mxu0 0
  %376 = vmatprep.subr.bf16.mxu0 0
  %377 = vmatpush1.bf16.msra.mxu0 0
  %378 = vmatprep.subr.bf16.mxu0 0
  %379 = vmatpush1.bf16.msra.mxu0 0
  %380 = vmatprep.mubr.bf16.mxu0 0
  %381 = vmatmul.mubr.bf16.gmra.mrb[0].mxu0 %v236
  %v382 = vpop.f32.mrb[0].mxu0
  %v383 = vadd.f32 %v106, %v382
  %v384 = vpop.f32.mrb[0].mxu0
  %v385 = vpop.f32.mrb[0].mxu0
  %v386 = vadd.f32 %v106, %v385
  %v387 = vpop.f32.mrb[0].mxu0
  %388 = vmatprep.mubr.bf16.mxu0 0
  %389 = vmatmul.mubr.bf16.gmra.mrb[0].mxu0 %v237
  %v390 = vpop.f32.mrb[0].mxu0
  %v391 = vadd.f32 %v106, %v390
  %v392 = vpop.f32.mrb[0].mxu0
  %v393 = vpop.f32.mrb[0].mxu0
  %v394 = vadd.f32 %v106, %v393
  %v395 = vpop.f32.mrb[0].mxu0
  %396 = vmatprep.mubr.bf16.mxu0 0
  %397 = vmatmul.mubr.bf16.gmra.mrb[0].mxu0 %v238
  %v398 = vpop.f32.mrb[0].mxu0
  %v399 = vadd.f32 %v106, %v398
  %v400 = vpop.f32.mrb[0].mxu0
  %v401 = vpop.f32.mrb[0].mxu0
  %v402 = vadd.f32 %v106, %v401
  %v403 = vpop.f32.mrb[0].mxu0
  %404 = vmatprep.mubr.bf16.mxu0 0
  %405 = vmatmul.mubr.bf16.gmra.mrb[0].mxu0 %v239
  %v406 = vpop.f32.mrb[0].mxu0
  %v407 = vadd.f32 %v106, %v406
  %v408 = vpop.f32.mrb[0].mxu0
  %v409 = vpop.f32.mrb[0].mxu0
  %v410 = vadd.f32 %v106, %v409
  %v411 = vpop.f32.mrb[0].mxu0
  %412 = vmatprep.mubr.bf16.mxu0 0
  %413 = vmatmul.mubr.bf16.gmra.mrb[0].mxu0 %v240
  %v414 = vpop.f32.mrb[0].mxu0
  %v415 = vadd.f32 %v106, %v414
  %v416 = vpop.f32.mrb[0].mxu0
  %v417 = vpop.f32.mrb[0].mxu0
  %v418 = vadd.f32 %v106, %v417
  %v419 = vpop.f32.mrb[0].mxu0
  %420 = vmatprep.mubr.bf16.mxu0 0
  %421 = vmatmul.mubr.bf16.gmra.mrb[0].mxu0 %v241
  %v422 = vpop.f32.mrb[0].mxu0
  %v423 = vadd.f32 %v106, %v422
  %v424 = vpop.f32.mrb[0].mxu0
  %v425 = vpop.f32.mrb[0].mxu0
  %v426 = vadd.f32 %v106, %v425
  %v427 = vpop.f32.mrb[0].mxu0
  %428 = vmatprep.mubr.bf16.mxu0 0
  %429 = vmatmul.mubr.bf16.gmra.mrb[0].mxu0 %v242
  %v430 = vpop.f32.mrb[0].mxu0
  %v431 = vadd.f32 %v106, %v430
  %v432 = vpop.f32.mrb[0].mxu0
  %v433 = vpop.f32.mrb[0].mxu0
  %v434 = vadd.f32 %v106, %v433
  %v435 = vpop.f32.mrb[0].mxu0
  %436 = vmatprep.mubr.bf16.mxu0 0
  %437 = vmatmul.mubr.bf16.gmra.mrb[0].mxu0 %v243
  %v438 = vpop.f32.mrb[0].mxu0
  %v439 = vadd.f32 %v106, %v438
  %v440 = vpop.f32.mrb[0].mxu0
  %v441 = vpop.f32.mrb[0].mxu0
  %v442 = vadd.f32 %v106, %v441
  %v443 = vpop.f32.mrb[0].mxu0
  %444 = vmatprep.mubr.bf16.mxu0 0
  %445 = vmatmul.mubr.bf16.gmra.mrb[0].mxu0 %v244
  %v446 = vpop.f32.mrb[0].mxu0
  %v447 = vadd.f32 %v106, %v446
  %v448 = vpop.f32.mrb[0].mxu0
  %v449 = vpop.f32.mrb[0].mxu0
  %v450 = vadd.f32 %v106, %v449
  %v451 = vpop.f32.mrb[0].mxu0
  %452 = vmatprep.mubr.bf16.mxu0 0
  %453 = vmatmul.mubr.bf16.gmra.mrb[0].mxu0 %v245
  %v454 = vpop.f32.mrb[0].mxu0
  %v455 = vadd.f32 %v106, %v454
  %v456 = vpop.f32.mrb[0].mxu0
  %v457 = vpop.f32.mrb[0].mxu0
  %v458 = vadd.f32 %v106, %v457
  %v459 = vpop.f32.mrb[0].mxu0
  %460 = vmatprep.mubr.bf16.mxu0 0
  %461 = vmatmul.mubr.bf16.gmra.mrb[0].mxu0 %v246
  %v462 = vpop.f32.mrb[0].mxu0
  %v463 = vadd.f32 %v106, %v462
  %v464 = vpop.f32.mrb[0].mxu0
  %v465 = vpop.f32.mrb[0].mxu0
  %v466 = vadd.f32 %v106, %v465
  %v467 = vpop.f32.mrb[0].mxu0
  %468 = vmatprep.mubr.bf16.mxu0 0
  %469 = vmatmul.mubr.bf16.gmra.mrb[0].mxu0 %v247
  %v470 = vpop.f32.mrb[0].mxu0
  %v471 = vadd.f32 %v106, %v470
  %v472 = vpop.f32.mrb[0].mxu0
  %v473 = vpop.f32.mrb[0].mxu0
  %v474 = vadd.f32 %v106, %v473
  %v475 = vpop.f32.mrb[0].mxu0
  %476 = vmatprep.mubr.bf16.mxu0 0
  %477 = vmatmul.mubr.bf16.gmra.mrb[0].mxu0 %v248
  %v478 = vpop.f32.mrb[0].mxu0
  %v479 = vadd.f32 %v106, %v478
  %v480 = vpop.f32.mrb[0].mxu0
  %v481 = vpop.f32.mrb[0].mxu0
  %v482 = vadd.f32 %v106, %v481
  %v483 = vpop.f32.mrb[0].mxu0
  %484 = vmatprep.mubr.bf16.mxu0 0
  %485 = vmatmul.mubr.bf16.gmra.mrb[0].mxu0 %v249
  %v486 = vpop.f32.mrb[0].mxu0
  %v487 = vadd.f32 %v106, %v486
  %v488 = vpop.f32.mrb[0].mxu0
  %v489 = vpop.f32.mrb[0].mxu0
  %v490 = vadd.f32 %v106, %v489
  %v491 = vpop.f32.mrb[0].mxu0
  %492 = vmatprep.mubr.bf16.mxu0 0
  %493 = vmatmul.mubr.bf16.gmra.mrb[0].mxu0 %v250
  %v494 = vpop.f32.mrb[0].mxu0
  %v495 = vadd.f32 %v106, %v494
  %v496 = vpop.f32.mrb[0].mxu0
  %v497 = vpop.f32.mrb[0].mxu0
  %v498 = vadd.f32 %v106, %v497
  %v499 = vpop.f32.mrb[0].mxu0
  %500 = vmatprep.mubr.bf16.mxu0 0
  %501 = vmatmul.mubr.bf16.gmra.mrb[0].mxu0 %v251
  %v502 = vpop.f32.mrb[0].mxu0
  %v503 = vadd.f32 %v106, %v502
  %v504 = vpop.f32.mrb[0].mxu0
  %v505 = vpop.f32.mrb[0].mxu0
  %v506 = vadd.f32 %v106, %v505
  %v507 = vpop.f32.mrb[0].mxu0
  %508 = vmatprep.mubr.bf16.mxu0 0
  %509 = vmatmul.mubr.bf16.gmra.mrb[0].mxu0 %v252
  %v510 = vpop.f32.mrb[0].mxu0
  %v511 = vadd.f32 %v106, %v510
  %v512 = vpop.f32.mrb[0].mxu0
  %v513 = vpop.f32.mrb[0].mxu0
  %v514 = vadd.f32 %v106, %v513
  %v515 = vpop.f32.mrb[0].mxu0
  %516 = vmatprep.mubr.bf16.mxu0 0
  %517 = vmatmul.mubr.bf16.gmra.mrb[0].mxu0 %v253
  %v518 = vpop.f32.mrb[0].mxu0
  %v519 = vadd.f32 %v106, %v518
  %v520 = vpop.f32.mrb[0].mxu0
  %v521 = vpop.f32.mrb[0].mxu0
  %v522 = vadd.f32 %v106, %v521
  %v523 = vpop.f32.mrb[0].mxu0
  %524 = vmatprep.mubr.bf16.mxu0 0
  %525 = vmatmul.mubr.bf16.gmra.mrb[0].mxu0 %v254
  %v526 = vpop.f32.mrb[0].mxu0
  %v527 = vadd.f32 %v106, %v526
  %v528 = vpop.f32.mrb[0].mxu0
  %v529 = vpop.f32.mrb[0].mxu0
  %v530 = vadd.f32 %v106, %v529
  %v531 = vpop.f32.mrb[0].mxu0
  %532 = vmatprep.mubr.bf16.mxu0 0
  %533 = vmatmul.mubr.bf16.gmra.mrb[0].mxu0 %v255
  %v534 = vpop.f32.mrb[0].mxu0
  %v535 = vadd.f32 %v106, %v534
  %v536 = vpop.f32.mrb[0].mxu0
  %v537 = vpop.f32.mrb[0].mxu0
  %v538 = vadd.f32 %v106, %v537
  %v539 = vpop.f32.mrb[0].mxu0
  %540 = vmatprep.mubr.bf16.mxu0 0
  %541 = vmatmul.mubr.bf16.gmra.mrb[0].mxu0 %v256
  %v542 = vpop.f32.mrb[0].mxu0
  %v543 = vadd.f32 %v106, %v542
  %v544 = vpop.f32.mrb[0].mxu0
  %v545 = vpop.f32.mrb[0].mxu0
  %v546 = vadd.f32 %v106, %v545
  %v547 = vpop.f32.mrb[0].mxu0
  %548 = vmatprep.mubr.bf16.mxu0 0
  %549 = vmatmul.mubr.bf16.gmra.mrb[0].mxu0 %v257
  %v550 = vpop.f32.mrb[0].mxu0
  %v551 = vadd.f32 %v106, %v550
  %v552 = vpop.f32.mrb[0].mxu0
  %v553 = vpop.f32.mrb[0].mxu0
  %v554 = vadd.f32 %v106, %v553
  %v555 = vpop.f32.mrb[0].mxu0
  %556 = vmatprep.mubr.bf16.mxu0 0
  %557 = vmatmul.mubr.bf16.gmra.mrb[0].mxu0 %v258
  %v558 = vpop.f32.mrb[0].mxu0
  %v559 = vadd.f32 %v106, %v558
  %v560 = vpop.f32.mrb[0].mxu0
  %v561 = vpop.f32.mrb[0].mxu0
  %v562 = vadd.f32 %v106, %v561
  %v563 = vpop.f32.mrb[0].mxu0
  %564 = vmatprep.mubr.bf16.mxu0 0
  %565 = vmatmul.mubr.bf16.gmra.mrb[0].mxu0 %v259
  %v566 = vpop.f32.mrb[0].mxu0
  %v567 = vadd.f32 %v106, %v566
  %v568 = vpop.f32.mrb[0].mxu0
  %v569 = vpop.f32.mrb[0].mxu0
  %v570 = vadd.f32 %v106, %v569
  %v571 = vpop.f32.mrb[0].mxu0
  %572 = vmatprep.mubr.bf16.mxu0 0
  %573 = vmatmul.mubr.bf16.gmra.mrb[0].mxu0 %v260
  %v574 = vpop.f32.mrb[0].mxu0
  %v575 = vadd.f32 %v106, %v574
  %v576 = vpop.f32.mrb[0].mxu0
  %v577 = vpop.f32.mrb[0].mxu0
  %v578 = vadd.f32 %v106, %v577
  %v579 = vpop.f32.mrb[0].mxu0
  %580 = vmatprep.mubr.bf16.mxu0 0
  %581 = vmatmul.mubr.bf16.gmra.mrb[0].mxu0 %v261
  %v582 = vpop.f32.mrb[0].mxu0
  %v583 = vadd.f32 %v106, %v582
  %v584 = vpop.f32.mrb[0].mxu0
  %v585 = vpop.f32.mrb[0].mxu0
  %v586 = vadd.f32 %v106, %v585
  %v587 = vpop.f32.mrb[0].mxu0
  %588 = vmatprep.mubr.bf16.mxu0 0
  %589 = vmatmul.mubr.bf16.gmra.mrb[0].mxu0 %v262
  %v590 = vpop.f32.mrb[0].mxu0
  %v591 = vadd.f32 %v106, %v590
  %v592 = vpop.f32.mrb[0].mxu0
  %v593 = vpop.f32.mrb[0].mxu0
  %v594 = vadd.f32 %v106, %v593
  %v595 = vpop.f32.mrb[0].mxu0
  %596 = vmatprep.mubr.bf16.mxu0 0
  %597 = vmatmul.mubr.bf16.gmra.mrb[0].mxu0 %v263
  %v598 = vpop.f32.mrb[0].mxu0
  %v599 = vadd.f32 %v106, %v598
  %v600 = vpop.f32.mrb[0].mxu0
  %v601 = vpop.f32.mrb[0].mxu0
  %v602 = vadd.f32 %v106, %v601
  %v603 = vpop.f32.mrb[0].mxu0
  %604 = vmatprep.mubr.bf16.mxu0 0
  %605 = vmatmul.mubr.bf16.gmra.mrb[0].mxu0 %v264
  %v606 = vpop.f32.mrb[0].mxu0
  %v607 = vadd.f32 %v106, %v606
  %v608 = vpop.f32.mrb[0].mxu0
  %v609 = vpop.f32.mrb[0].mxu0
  %v610 = vadd.f32 %v106, %v609
  %v611 = vpop.f32.mrb[0].mxu0
  %612 = vmatprep.mubr.bf16.mxu0 0
  %613 = vmatmul.mubr.bf16.gmra.mrb[0].mxu0 %v265
  %v614 = vpop.f32.mrb[0].mxu0
  %v615 = vadd.f32 %v106, %v614
  %v616 = vpop.f32.mrb[0].mxu0
  %v617 = vpop.f32.mrb[0].mxu0
  %v618 = vadd.f32 %v106, %v617
  %v619 = vpop.f32.mrb[0].mxu0
  %620 = vmatprep.mubr.bf16.mxu0 0
  %621 = vmatmul.mubr.bf16.gmra.mrb[0].mxu0 %v266
  %v622 = vpop.f32.mrb[0].mxu0
  %v623 = vadd.f32 %v106, %v622
  %v624 = vpop.f32.mrb[0].mxu0
  %v625 = vpop.f32.mrb[0].mxu0
  %v626 = vadd.f32 %v106, %v625
  %v627 = vpop.f32.mrb[0].mxu0
  %628 = vmatprep.mubr.bf16.mxu0 0
  %629 = vmatmul.mubr.bf16.gmra.mrb[0].mxu0 %v267
  %v630 = vpop.f32.mrb[0].mxu0
  %v631 = vadd.f32 %v106, %v630
  %v632 = vpop.f32.mrb[0].mxu0
  %v633 = vpop.f32.mrb[0].mxu0
  %v634 = vadd.f32 %v106, %v633
  %v635 = vpop.f32.mrb[0].mxu0
  %636 = vdwg.mxu0
  %vm637 = vcmask 64512
  %v638 = vsel %vm637, %v383, 0.0
  %v639 = vsel %vm637, %v386, 0.0
  %v640 = vadd.f32 %v638, %v639
  %v641 = vsel %vm637, %v391, 0.0
  %v642 = vadd.f32 %v640, %v641
  %v643 = vsel %vm637, %v394, 0.0
  %v644 = vadd.f32 %v642, %v643
  %v645 = vsel %vm637, %v399, 0.0
  %v646 = vadd.f32 %v644, %v645
  %v647 = vsel %vm637, %v402, 0.0
  %v648 = vadd.f32 %v646, %v647
  %v649 = vsel %vm637, %v407, 0.0
  %v650 = vadd.f32 %v648, %v649
  %v651 = vsel %vm637, %v410, 0.0
  %v652 = vadd.f32 %v650, %v651
  %v653 = vsel %vm637, %v415, 0.0
  %v654 = vadd.f32 %v652, %v653
  %v655 = vsel %vm637, %v418, 0.0
  %v656 = vadd.f32 %v654, %v655
  %v657 = vsel %vm637, %v423, 0.0
  %v658 = vadd.f32 %v656, %v657
  %v659 = vsel %vm637, %v426, 0.0
  %v660 = vadd.f32 %v658, %v659
  %v661 = vsel %vm637, %v431, 0.0
  %v662 = vadd.f32 %v660, %v661
  %v663 = vsel %vm637, %v434, 0.0
  %v664 = vadd.f32 %v662, %v663
  %v665 = vsel %vm637, %v439, 0.0
  %v666 = vadd.f32 %v664, %v665
  %v667 = vsel %vm637, %v442, 0.0
  %v668 = vadd.f32 %v666, %v667
  %v669 = vsel %vm637, %v447, 0.0
  %v670 = vadd.f32 %v668, %v669
  %v671 = vsel %vm637, %v450, 0.0
  %v672 = vadd.f32 %v670, %v671
  %v673 = vsel %vm637, %v455, 0.0
  %v674 = vadd.f32 %v672, %v673
  %v675 = vsel %vm637, %v458, 0.0
  %v676 = vadd.f32 %v674, %v675
  %v677 = vsel %vm637, %v463, 0.0
  %v678 = vadd.f32 %v676, %v677
  %v679 = vsel %vm637, %v466, 0.0
  %v680 = vadd.f32 %v678, %v679
  %v681 = vsel %vm637, %v471, 0.0
  %v682 = vadd.f32 %v680, %v681
  %v683 = vsel %vm637, %v474, 0.0
  %v684 = vadd.f32 %v682, %v683
  %v685 = vsel %vm637, %v479, 0.0
  %v686 = vadd.f32 %v684, %v685
  %v687 = vsel %vm637, %v482, 0.0
  %v688 = vadd.f32 %v686, %v687
  %v689 = vsel %vm637, %v487, 0.0
  %v690 = vadd.f32 %v688, %v689
  %v691 = vsel %vm637, %v490, 0.0
  %v692 = vadd.f32 %v690, %v691
  %v693 = vsel %vm637, %v495, 0.0
  %v694 = vadd.f32 %v692, %v693
  %v695 = vsel %vm637, %v498, 0.0
  %v696 = vadd.f32 %v694, %v695
  %v697 = vsel %vm637, %v503, 0.0
  %v698 = vadd.f32 %v696, %v697
  %v699 = vsel %vm637, %v506, 0.0
  %v700 = vadd.f32 %v698, %v699
  %v701 = vsel %vm637, %v511, 0.0
  %v702 = vadd.f32 %v700, %v701
  %v703 = vsel %vm637, %v514, 0.0
  %v704 = vadd.f32 %v702, %v703
  %v705 = vsel %vm637, %v519, 0.0
  %v706 = vadd.f32 %v704, %v705
  %v707 = vsel %vm637, %v522, 0.0
  %v708 = vadd.f32 %v706, %v707
  %v709 = vsel %vm637, %v527, 0.0
  %v710 = vadd.f32 %v708, %v709
  %v711 = vsel %vm637, %v530, 0.0
  %v712 = vadd.f32 %v710, %v711
  %v713 = vsel %vm637, %v535, 0.0
  %v714 = vadd.f32 %v712, %v713
  %v715 = vsel %vm637, %v538, 0.0
  %v716 = vadd.f32 %v714, %v715
  %v717 = vsel %vm637, %v543, 0.0
  %v718 = vadd.f32 %v716, %v717
  %v719 = vsel %vm637, %v546, 0.0
  %v720 = vadd.f32 %v718, %v719
  %v721 = vsel %vm637, %v551, 0.0
  %v722 = vadd.f32 %v720, %v721
  %v723 = vsel %vm637, %v554, 0.0
  %v724 = vadd.f32 %v722, %v723
  %v725 = vsel %vm637, %v559, 0.0
  %v726 = vadd.f32 %v724, %v725
  %v727 = vsel %vm637, %v562, 0.0
  %v728 = vadd.f32 %v726, %v727
  %v729 = vsel %vm637, %v567, 0.0
  %v730 = vadd.f32 %v728, %v729
  %v731 = vsel %vm637, %v570, 0.0
  %v732 = vadd.f32 %v730, %v731
  %v733 = vsel %vm637, %v575, 0.0
  %v734 = vadd.f32 %v732, %v733
  %v735 = vsel %vm637, %v578, 0.0
  %v736 = vadd.f32 %v734, %v735
  %v737 = vsel %vm637, %v583, 0.0
  %v738 = vadd.f32 %v736, %v737
  %v739 = vsel %vm637, %v586, 0.0
  %v740 = vadd.f32 %v738, %v739
  %v741 = vsel %vm637, %v591, 0.0
  %v742 = vadd.f32 %v740, %v741
  %v743 = vsel %vm637, %v594, 0.0
  %v744 = vadd.f32 %v742, %v743
  %v745 = vsel %vm637, %v599, 0.0
  %v746 = vadd.f32 %v744, %v745
  %v747 = vsel %vm637, %v602, 0.0
  %v748 = vadd.f32 %v746, %v747
  %v749 = vsel %vm637, %v607, 0.0
  %v750 = vadd.f32 %v748, %v749
  %v751 = vsel %vm637, %v610, 0.0
  %v752 = vadd.f32 %v750, %v751
  %v753 = vsel %vm637, %v615, 0.0
  %v754 = vadd.f32 %v752, %v753
  %v755 = vsel %vm637, %v618, 0.0
  %v756 = vadd.f32 %v754, %v755
  %v757 = vsel %vm637, %v623, 0.0
  %v758 = vadd.f32 %v756, %v757
  %v759 = vsel %vm637, %v626, 0.0
  %v760 = vadd.f32 %v758, %v759
  %v761 = vsel %vm637, %v631, 0.0
  %v762 = vadd.f32 %v760, %v761
  %v763 = vsel %vm637, %v634, 0.0
  %v764 = vadd.f32 %v762, %v763
  %v765 = vrot.slane %v764, 4
  %v766 = vadd.f32 %v764, %v765
  %v767 = vrot.slane %v766, 2
  %v768 = vadd.f32 %v766, %v767
  %v769 = vrot.slane %v768, 1
  %v770 = vadd.f32 %v768, %v769
  %v771 = vrcp.pop 512.0
  %v772 = vmul.f32 %v770, %v771
  %v773 = vsub.f32 %v383, %v772
  %v774 = vsub.f32 %v386, %v772
  %v775 = vsub.f32 %v391, %v772
  %v776 = vsub.f32 %v394, %v772
  %v777 = vsub.f32 %v399, %v772
  %v778 = vsub.f32 %v402, %v772
  %v779 = vsub.f32 %v407, %v772
  %v780 = vsub.f32 %v410, %v772
  %v781 = vsub.f32 %v415, %v772
  %v782 = vsub.f32 %v418, %v772
  %v783 = vsub.f32 %v423, %v772
  %v784 = vsub.f32 %v426, %v772
  %v785 = vsub.f32 %v431, %v772
  %v786 = vsub.f32 %v434, %v772
  %v787 = vsub.f32 %v439, %v772
  %v788 = vsub.f32 %v442, %v772
  %v789 = vsub.f32 %v447, %v772
  %v790 = vsub.f32 %v450, %v772
  %v791 = vsub.f32 %v455, %v772
  %v792 = vsub.f32 %v458, %v772
  %v793 = vsub.f32 %v463, %v772
  %v794 = vsub.f32 %v466, %v772
  %v795 = vsub.f32 %v471, %v772
  %v796 = vsub.f32 %v474, %v772
  %v797 = vsub.f32 %v479, %v772
  %v798 = vsub.f32 %v482, %v772
  %v799 = vsub.f32 %v487, %v772
  %v800 = vsub.f32 %v490, %v772
  %v801 = vsub.f32 %v495, %v772
  %v802 = vsub.f32 %v498, %v772
  %v803 = vsub.f32 %v503, %v772
  %v804 = vsub.f32 %v506, %v772
  %v805 = vsub.f32 %v511, %v772
  %v806 = vsub.f32 %v514, %v772
  %v807 = vsub.f32 %v519, %v772
  %v808 = vsub.f32 %v522, %v772
  %v809 = vsub.f32 %v527, %v772
  %v810 = vsub.f32 %v530, %v772
  %v811 = vsub.f32 %v535, %v772
  %v812 = vsub.f32 %v538, %v772
  %v813 = vsub.f32 %v543, %v772
  %v814 = vsub.f32 %v546, %v772
  %v815 = vsub.f32 %v551, %v772
  %v816 = vsub.f32 %v554, %v772
  %v817 = vsub.f32 %v559, %v772
  %v818 = vsub.f32 %v562, %v772
  %v819 = vsub.f32 %v567, %v772
  %v820 = vsub.f32 %v570, %v772
  %v821 = vsub.f32 %v575, %v772
  %v822 = vsub.f32 %v578, %v772
  %v823 = vsub.f32 %v583, %v772
  %v824 = vsub.f32 %v586, %v772
  %v825 = vsub.f32 %v591, %v772
  %v826 = vsub.f32 %v594, %v772
  %v827 = vsub.f32 %v599, %v772
  %v828 = vsub.f32 %v602, %v772
  %v829 = vsub.f32 %v607, %v772
  %v830 = vsub.f32 %v610, %v772
  %v831 = vsub.f32 %v615, %v772
  %v832 = vsub.f32 %v618, %v772
  %v833 = vsub.f32 %v623, %v772
  %v834 = vsub.f32 %v626, %v772
  %v835 = vsub.f32 %v631, %v772
  %v836 = vsub.f32 %v634, %v772
  %v837 = vmul.f32 %v773, %v773
  %v838 = vmul.f32 %v774, %v774
  %v839 = vmul.f32 %v775, %v775
  %v840 = vmul.f32 %v776, %v776
  %v841 = vmul.f32 %v777, %v777
  %v842 = vmul.f32 %v778, %v778
  %v843 = vmul.f32 %v779, %v779
  %v844 = vmul.f32 %v780, %v780
  %v845 = vmul.f32 %v781, %v781
  %v846 = vmul.f32 %v782, %v782
  %v847 = vmul.f32 %v783, %v783
  %v848 = vmul.f32 %v784, %v784
  %v849 = vmul.f32 %v785, %v785
  %v850 = vmul.f32 %v786, %v786
  %v851 = vmul.f32 %v787, %v787
  %v852 = vmul.f32 %v788, %v788
  %v853 = vmul.f32 %v789, %v789
  %v854 = vmul.f32 %v790, %v790
  %v855 = vmul.f32 %v791, %v791
  %v856 = vmul.f32 %v792, %v792
  %v857 = vmul.f32 %v793, %v793
  %v858 = vmul.f32 %v794, %v794
  %v859 = vmul.f32 %v795, %v795
  %v860 = vmul.f32 %v796, %v796
  %v861 = vmul.f32 %v797, %v797
  %v862 = vmul.f32 %v798, %v798
  %v863 = vmul.f32 %v799, %v799
  %v864 = vmul.f32 %v800, %v800
  %v865 = vmul.f32 %v801, %v801
  %v866 = vmul.f32 %v802, %v802
  %v867 = vmul.f32 %v803, %v803
  %v868 = vmul.f32 %v804, %v804
  %v869 = vmul.f32 %v805, %v805
  %v870 = vmul.f32 %v806, %v806
  %v871 = vmul.f32 %v807, %v807
  %v872 = vmul.f32 %v808, %v808
  %v873 = vmul.f32 %v809, %v809
  %v874 = vmul.f32 %v810, %v810
  %v875 = vmul.f32 %v811, %v811
  %v876 = vmul.f32 %v812, %v812
  %v877 = vmul.f32 %v813, %v813
  %v878 = vmul.f32 %v814, %v814
  %v879 = vmul.f32 %v815, %v815
  %v880 = vmul.f32 %v816, %v816
  %v881 = vmul.f32 %v817, %v817
  %v882 = vmul.f32 %v818, %v818
  %v883 = vmul.f32 %v819, %v819
  %v884 = vmul.f32 %v820, %v820
  %v885 = vmul.f32 %v821, %v821
  %v886 = vmul.f32 %v822, %v822
  %v887 = vmul.f32 %v823, %v823
  %v888 = vmul.f32 %v824, %v824
  %v889 = vmul.f32 %v825, %v825
  %v890 = vmul.f32 %v826, %v826
  %v891 = vmul.f32 %v827, %v827
  %v892 = vmul.f32 %v828, %v828
  %v893 = vmul.f32 %v829, %v829
  %v894 = vmul.f32 %v830, %v830
  %v895 = vmul.f32 %v831, %v831
  %v896 = vmul.f32 %v832, %v832
  %v897 = vmul.f32 %v833, %v833
  %v898 = vmul.f32 %v834, %v834
  %v899 = vmul.f32 %v835, %v835
  %v900 = vmul.f32 %v836, %v836
  %v901 = vsel %vm637, %v837, 0.0
  %v902 = vsel %vm637, %v838, 0.0
  %v903 = vadd.f32 %v901, %v902
  %v904 = vsel %vm637, %v839, 0.0
  %v905 = vadd.f32 %v903, %v904
  %v906 = vsel %vm637, %v840, 0.0
  %v907 = vadd.f32 %v905, %v906
  %v908 = vsel %vm637, %v841, 0.0
  %v909 = vadd.f32 %v907, %v908
  %v910 = vsel %vm637, %v842, 0.0
  %v911 = vadd.f32 %v909, %v910
  %v912 = vsel %vm637, %v843, 0.0
  %v913 = vadd.f32 %v911, %v912
  %v914 = vsel %vm637, %v844, 0.0
  %v915 = vadd.f32 %v913, %v914
  %v916 = vsel %vm637, %v845, 0.0
  %v917 = vadd.f32 %v915, %v916
  %v918 = vsel %vm637, %v846, 0.0
  %v919 = vadd.f32 %v917, %v918
  %v920 = vsel %vm637, %v847, 0.0
  %v921 = vadd.f32 %v919, %v920
  %v922 = vsel %vm637, %v848, 0.0
  %v923 = vadd.f32 %v921, %v922
  %v924 = vsel %vm637, %v849, 0.0
  %v925 = vadd.f32 %v923, %v924
  %v926 = vsel %vm637, %v850, 0.0
  %v927 = vadd.f32 %v925, %v926
  %v928 = vsel %vm637, %v851, 0.0
  %v929 = vadd.f32 %v927, %v928
  %v930 = vsel %vm637, %v852, 0.0
  %v931 = vadd.f32 %v929, %v930
  %v932 = vsel %vm637, %v853, 0.0
  %v933 = vadd.f32 %v931, %v932
  %v934 = vsel %vm637, %v854, 0.0
  %v935 = vadd.f32 %v933, %v934
  %v936 = vsel %vm637, %v855, 0.0
  %v937 = vadd.f32 %v935, %v936
  %v938 = vsel %vm637, %v856, 0.0
  %v939 = vadd.f32 %v937, %v938
  %v940 = vsel %vm637, %v857, 0.0
  %v941 = vadd.f32 %v939, %v940
  %v942 = vsel %vm637, %v858, 0.0
  %v943 = vadd.f32 %v941, %v942
  %v944 = vsel %vm637, %v859, 0.0
  %v945 = vadd.f32 %v943, %v944
  %v946 = vsel %vm637, %v860, 0.0
  %v947 = vadd.f32 %v945, %v946
  %v948 = vsel %vm637, %v861, 0.0
  %v949 = vadd.f32 %v947, %v948
  %v950 = vsel %vm637, %v862, 0.0
  %v951 = vadd.f32 %v949, %v950
  %v952 = vsel %vm637, %v863, 0.0
  %v953 = vadd.f32 %v951, %v952
  %v954 = vsel %vm637, %v864, 0.0
  %v955 = vadd.f32 %v953, %v954
  %v956 = vsel %vm637, %v865, 0.0
  %v957 = vadd.f32 %v955, %v956
  %v958 = vsel %vm637, %v866, 0.0
  %v959 = vadd.f32 %v957, %v958
  %v960 = vsel %vm637, %v867, 0.0
  %v961 = vadd.f32 %v959, %v960
  %v962 = vsel %vm637, %v868, 0.0
  %v963 = vadd.f32 %v961, %v962
  %v964 = vsel %vm637, %v869, 0.0
  %v965 = vadd.f32 %v963, %v964
  %v966 = vsel %vm637, %v870, 0.0
  %v967 = vadd.f32 %v965, %v966
  %v968 = vsel %vm637, %v871, 0.0
  %v969 = vadd.f32 %v967, %v968
  %v970 = vsel %vm637, %v872, 0.0
  %v971 = vadd.f32 %v969, %v970
  %v972 = vsel %vm637, %v873, 0.0
  %v973 = vadd.f32 %v971, %v972
  %v974 = vsel %vm637, %v874, 0.0
  %v975 = vadd.f32 %v973, %v974
  %v976 = vsel %vm637, %v875, 0.0
  %v977 = vadd.f32 %v975, %v976
  %v978 = vsel %vm637, %v876, 0.0
  %v979 = vadd.f32 %v977, %v978
  %v980 = vsel %vm637, %v877, 0.0
  %v981 = vadd.f32 %v979, %v980
  %v982 = vsel %vm637, %v878, 0.0
  %v983 = vadd.f32 %v981, %v982
  %v984 = vsel %vm637, %v879, 0.0
  %v985 = vadd.f32 %v983, %v984
  %v986 = vsel %vm637, %v880, 0.0
  %v987 = vadd.f32 %v985, %v986
  %v988 = vsel %vm637, %v881, 0.0
  %v989 = vadd.f32 %v987, %v988
  %v990 = vsel %vm637, %v882, 0.0
  %v991 = vadd.f32 %v989, %v990
  %v992 = vsel %vm637, %v883, 0.0
  %v993 = vadd.f32 %v991, %v992
  %v994 = vsel %vm637, %v884, 0.0
  %v995 = vadd.f32 %v993, %v994
  %v996 = vsel %vm637, %v885, 0.0
  %v997 = vadd.f32 %v995, %v996
  %v998 = vsel %vm637, %v886, 0.0
  %v999 = vadd.f32 %v997, %v998
  %v1000 = vsel %vm637, %v887, 0.0
  %v1001 = vadd.f32 %v999, %v1000
  %v1002 = vsel %vm637, %v888, 0.0
  %v1003 = vadd.f32 %v1001, %v1002
  %v1004 = vsel %vm637, %v889, 0.0
  %v1005 = vadd.f32 %v1003, %v1004
  %v1006 = vsel %vm637, %v890, 0.0
  %v1007 = vadd.f32 %v1005, %v1006
  %v1008 = vsel %vm637, %v891, 0.0
  %v1009 = vadd.f32 %v1007, %v1008
  %v1010 = vsel %vm637, %v892, 0.0
  %v1011 = vadd.f32 %v1009, %v1010
  %v1012 = vsel %vm637, %v893, 0.0
  %v1013 = vadd.f32 %v1011, %v1012
  %v1014 = vsel %vm637, %v894, 0.0
  %v1015 = vadd.f32 %v1013, %v1014
  %v1016 = vsel %vm637, %v895, 0.0
  %v1017 = vadd.f32 %v1015, %v1016
  %v1018 = vsel %vm637, %v896, 0.0
  %v1019 = vadd.f32 %v1017, %v1018
  %v1020 = vsel %vm637, %v897, 0.0
  %v1021 = vadd.f32 %v1019, %v1020
  %v1022 = vsel %vm637, %v898, 0.0
  %v1023 = vadd.f32 %v1021, %v1022
  %v1024 = vsel %vm637, %v899, 0.0
  %v1025 = vadd.f32 %v1023, %v1024
  %v1026 = vsel %vm637, %v900, 0.0
  %v1027 = vadd.f32 %v1025, %v1026
  %v1028 = vrot.slane %v1027, 4
  %v1029 = vadd.f32 %v1027, %v1028
  %v1030 = vrot.slane %v1029, 2
  %v1031 = vadd.f32 %v1029, %v1030
  %v1032 = vrot.slane %v1031, 1
  %v1033 = vadd.f32 %v1031, %v1032
  %v1034 = vmul.f32 %v1033, %v771
  %v1035 = vld [vmem:[%s3] sm:$0x1]
  %v1036 = vadd.f32 %v1034, 1e-05
  %v1037 = vrsqrt.pop %v1036
  %v1038 = vmul.f32 %v1035, %v1037
  %v1040 = vlaneseq
  %v1041 = vshrl.u32 %v1040, 7
  %v1042 = vsub.s32 0, %v1041
  %v1043 = vrot.slane %v1038, %v1042
  %v1045 = vmul.f32 %v773, %v1043
  %v1046 = vmul.f32 %v774, %v1043
  %v1047 = vmul.f32 %v775, %v1043
  %v1048 = vmul.f32 %v776, %v1043
  %v1049 = vmul.f32 %v777, %v1043
  %v1050 = vmul.f32 %v778, %v1043
  %v1051 = vmul.f32 %v779, %v1043
  %v1052 = vmul.f32 %v780, %v1043
  %v1053 = vmul.f32 %v781, %v1043
  %v1054 = vmul.f32 %v782, %v1043
  %v1055 = vmul.f32 %v783, %v1043
  %v1056 = vmul.f32 %v784, %v1043
  %v1057 = vmul.f32 %v785, %v1043
  %v1058 = vmul.f32 %v786, %v1043
  %v1059 = vmul.f32 %v787, %v1043
  %v1060 = vmul.f32 %v788, %v1043
  %v1061 = vmul.f32 %v789, %v1043
  %v1062 = vmul.f32 %v790, %v1043
  %v1063 = vmul.f32 %v791, %v1043
  %v1064 = vmul.f32 %v792, %v1043
  %v1065 = vmul.f32 %v793, %v1043
  %v1066 = vmul.f32 %v794, %v1043
  %v1067 = vmul.f32 %v795, %v1043
  %v1068 = vmul.f32 %v796, %v1043
  %v1069 = vmul.f32 %v797, %v1043
  %v1070 = vmul.f32 %v798, %v1043
  %v1071 = vmul.f32 %v799, %v1043
  %v1072 = vmul.f32 %v800, %v1043
  %v1073 = vmul.f32 %v801, %v1043
  %v1074 = vmul.f32 %v802, %v1043
  %v1075 = vmul.f32 %v803, %v1043
  %v1076 = vmul.f32 %v804, %v1043
  %v1077 = vmul.f32 %v805, %v1043
  %v1078 = vmul.f32 %v806, %v1043
  %v1079 = vmul.f32 %v807, %v1043
  %v1080 = vmul.f32 %v808, %v1043
  %v1081 = vmul.f32 %v809, %v1043
  %v1082 = vmul.f32 %v810, %v1043
  %v1083 = vmul.f32 %v811, %v1043
  %v1084 = vmul.f32 %v812, %v1043
  %v1085 = vmul.f32 %v813, %v1043
  %v1086 = vmul.f32 %v814, %v1043
  %v1087 = vmul.f32 %v815, %v1043
  %v1088 = vmul.f32 %v816, %v1043
  %v1089 = vmul.f32 %v817, %v1043
  %v1090 = vmul.f32 %v818, %v1043
  %v1091 = vmul.f32 %v819, %v1043
  %v1092 = vmul.f32 %v820, %v1043
  %v1093 = vmul.f32 %v821, %v1043
  %v1094 = vmul.f32 %v822, %v1043
  %v1095 = vmul.f32 %v823, %v1043
  %v1096 = vmul.f32 %v824, %v1043
  %v1097 = vmul.f32 %v825, %v1043
  %v1098 = vmul.f32 %v826, %v1043
  %v1099 = vmul.f32 %v827, %v1043
  %v1100 = vmul.f32 %v828, %v1043
  %v1101 = vmul.f32 %v829, %v1043
  %v1102 = vmul.f32 %v830, %v1043
  %v1103 = vmul.f32 %v831, %v1043
  %v1104 = vmul.f32 %v832, %v1043
  %v1105 = vmul.f32 %v833, %v1043
  %v1106 = vmul.f32 %v834, %v1043
  %v1107 = vmul.f32 %v835, %v1043
  %v1108 = vmul.f32 %v836, %v1043
  %v1109 = vld [vmem:[%s4] sm:$0x1]
  %v1111 = vlaneseq
  %v1112 = vshrl.u32 %v1111, 7
  %v1113 = vsub.s32 0, %v1112
  %v1114 = vrot.slane %v1109, %v1113
  %v1116 = vadd.f32 %v1045, %v1114
  %v1117 = vadd.f32 %v1046, %v1114
  %v1118 = vadd.f32 %v1047, %v1114
  %v1119 = vadd.f32 %v1048, %v1114
  %v1120 = vadd.f32 %v1049, %v1114
  %v1121 = vadd.f32 %v1050, %v1114
  %v1122 = vadd.f32 %v1051, %v1114
  %v1123 = vadd.f32 %v1052, %v1114
  %v1124 = vadd.f32 %v1053, %v1114
  %v1125 = vadd.f32 %v1054, %v1114
  %v1126 = vadd.f32 %v1055, %v1114
  %v1127 = vadd.f32 %v1056, %v1114
  %v1128 = vadd.f32 %v1057, %v1114
  %v1129 = vadd.f32 %v1058, %v1114
  %v1130 = vadd.f32 %v1059, %v1114
  %v1131 = vadd.f32 %v1060, %v1114
  %v1132 = vadd.f32 %v1061, %v1114
  %v1133 = vadd.f32 %v1062, %v1114
  %v1134 = vadd.f32 %v1063, %v1114
  %v1135 = vadd.f32 %v1064, %v1114
  %v1136 = vadd.f32 %v1065, %v1114
  %v1137 = vadd.f32 %v1066, %v1114
  %v1138 = vadd.f32 %v1067, %v1114
  %v1139 = vadd.f32 %v1068, %v1114
  %v1140 = vadd.f32 %v1069, %v1114
  %v1141 = vadd.f32 %v1070, %v1114
  %v1142 = vadd.f32 %v1071, %v1114
  %v1143 = vadd.f32 %v1072, %v1114
  %v1144 = vadd.f32 %v1073, %v1114
  %v1145 = vadd.f32 %v1074, %v1114
  %v1146 = vadd.f32 %v1075, %v1114
  %v1147 = vadd.f32 %v1076, %v1114
  %v1148 = vadd.f32 %v1077, %v1114
  %v1149 = vadd.f32 %v1078, %v1114
  %v1150 = vadd.f32 %v1079, %v1114
  %v1151 = vadd.f32 %v1080, %v1114
  %v1152 = vadd.f32 %v1081, %v1114
  %v1153 = vadd.f32 %v1082, %v1114
  %v1154 = vadd.f32 %v1083, %v1114
  %v1155 = vadd.f32 %v1084, %v1114
  %v1156 = vadd.f32 %v1085, %v1114
  %v1157 = vadd.f32 %v1086, %v1114
  %v1158 = vadd.f32 %v1087, %v1114
  %v1159 = vadd.f32 %v1088, %v1114
  %v1160 = vadd.f32 %v1089, %v1114
  %v1161 = vadd.f32 %v1090, %v1114
  %v1162 = vadd.f32 %v1091, %v1114
  %v1163 = vadd.f32 %v1092, %v1114
  %v1164 = vadd.f32 %v1093, %v1114
  %v1165 = vadd.f32 %v1094, %v1114
  %v1166 = vadd.f32 %v1095, %v1114
  %v1167 = vadd.f32 %v1096, %v1114
  %v1168 = vadd.f32 %v1097, %v1114
  %v1169 = vadd.f32 %v1098, %v1114
  %v1170 = vadd.f32 %v1099, %v1114
  %v1171 = vadd.f32 %v1100, %v1114
  %v1172 = vadd.f32 %v1101, %v1114
  %v1173 = vadd.f32 %v1102, %v1114
  %v1174 = vadd.f32 %v1103, %v1114
  %v1175 = vadd.f32 %v1104, %v1114
  %v1176 = vadd.f32 %v1105, %v1114
  %v1177 = vadd.f32 %v1106, %v1114
  %v1178 = vadd.f32 %v1107, %v1114
  %v1179 = vadd.f32 %v1108, %v1114
  %v1180 = vmax.f32 %v1116, 0.0
  %v1181 = vmax.f32 %v1117, 0.0
  %v1182 = vmax.f32 %v1118, 0.0
  %v1183 = vmax.f32 %v1119, 0.0
  %v1184 = vmax.f32 %v1120, 0.0
  %v1185 = vmax.f32 %v1121, 0.0
  %v1186 = vmax.f32 %v1122, 0.0
  %v1187 = vmax.f32 %v1123, 0.0
  %v1188 = vmax.f32 %v1124, 0.0
  %v1189 = vmax.f32 %v1125, 0.0
  %v1190 = vmax.f32 %v1126, 0.0
  %v1191 = vmax.f32 %v1127, 0.0
  %v1192 = vmax.f32 %v1128, 0.0
  %v1193 = vmax.f32 %v1129, 0.0
  %v1194 = vmax.f32 %v1130, 0.0
  %v1195 = vmax.f32 %v1131, 0.0
  %v1196 = vmax.f32 %v1132, 0.0
  %v1197 = vmax.f32 %v1133, 0.0
  %v1198 = vmax.f32 %v1134, 0.0
  %v1199 = vmax.f32 %v1135, 0.0
  %v1200 = vmax.f32 %v1136, 0.0
  %v1201 = vmax.f32 %v1137, 0.0
  %v1202 = vmax.f32 %v1138, 0.0
  %v1203 = vmax.f32 %v1139, 0.0
  %v1204 = vmax.f32 %v1140, 0.0
  %v1205 = vmax.f32 %v1141, 0.0
  %v1206 = vmax.f32 %v1142, 0.0
  %v1207 = vmax.f32 %v1143, 0.0
  %v1208 = vmax.f32 %v1144, 0.0
  %v1209 = vmax.f32 %v1145, 0.0
  %v1210 = vmax.f32 %v1146, 0.0
  %v1211 = vmax.f32 %v1147, 0.0
  %v1212 = vmax.f32 %v1148, 0.0
  %v1213 = vmax.f32 %v1149, 0.0
  %v1214 = vmax.f32 %v1150, 0.0
  %v1215 = vmax.f32 %v1151, 0.0
  %v1216 = vmax.f32 %v1152, 0.0
  %v1217 = vmax.f32 %v1153, 0.0
  %v1218 = vmax.f32 %v1154, 0.0
  %v1219 = vmax.f32 %v1155, 0.0
  %v1220 = vmax.f32 %v1156, 0.0
  %v1221 = vmax.f32 %v1157, 0.0
  %v1222 = vmax.f32 %v1158, 0.0
  %v1223 = vmax.f32 %v1159, 0.0
  %v1224 = vmax.f32 %v1160, 0.0
  %v1225 = vmax.f32 %v1161, 0.0
  %v1226 = vmax.f32 %v1162, 0.0
  %v1227 = vmax.f32 %v1163, 0.0
  %v1228 = vmax.f32 %v1164, 0.0
  %v1229 = vmax.f32 %v1165, 0.0
  %v1230 = vmax.f32 %v1166, 0.0
  %v1231 = vmax.f32 %v1167, 0.0
  %v1232 = vmax.f32 %v1168, 0.0
  %v1233 = vmax.f32 %v1169, 0.0
  %v1234 = vmax.f32 %v1170, 0.0
  %v1235 = vmax.f32 %v1171, 0.0
  %v1236 = vmax.f32 %v1172, 0.0
  %v1237 = vmax.f32 %v1173, 0.0
  %v1238 = vmax.f32 %v1174, 0.0
  %v1239 = vmax.f32 %v1175, 0.0
  %v1240 = vmax.f32 %v1176, 0.0
  %v1241 = vmax.f32 %v1177, 0.0
  %v1242 = vmax.f32 %v1178, 0.0
  %v1243 = vmax.f32 %v1179, 0.0
  %1244 = vst.msk [vmem:[%s5] sm:$0xff] %vm637, %v1180
  %1245 = vst.msk [vmem:[%s5 + $0x8] sm:$0xff] %vm637, %v1181
  %1246 = vst.msk [vmem:[%s5 + $0x10] sm:$0xff] %vm637, %v1182
  %1247 = vst.msk [vmem:[%s5 + $0x18] sm:$0xff] %vm637, %v1183
  %1248 = vst.msk [vmem:[%s5 + $0x20] sm:$0xff] %vm637, %v1184
  %1249 = vst.msk [vmem:[%s5 + $0x28] sm:$0xff] %vm637, %v1185
  %1250 = vst.msk [vmem:[%s5 + $0x30] sm:$0xff] %vm637, %v1186
  %1251 = vst.msk [vmem:[%s5 + $0x38] sm:$0xff] %vm637, %v1187
  %1252 = vst.msk [vmem:[%s5 + $0x40] sm:$0xff] %vm637, %v1188
  %1253 = vst.msk [vmem:[%s5 + $0x48] sm:$0xff] %vm637, %v1189
  %1254 = vst.msk [vmem:[%s5 + $0x50] sm:$0xff] %vm637, %v1190
  %1255 = vst.msk [vmem:[%s5 + $0x58] sm:$0xff] %vm637, %v1191
  %1256 = vst.msk [vmem:[%s5 + $0x60] sm:$0xff] %vm637, %v1192
  %1257 = vst.msk [vmem:[%s5 + $0x68] sm:$0xff] %vm637, %v1193
  %1258 = vst.msk [vmem:[%s5 + $0x70] sm:$0xff] %vm637, %v1194
  %1259 = vst.msk [vmem:[%s5 + $0x78] sm:$0xff] %vm637, %v1195
  %1260 = vst.msk [vmem:[%s5 + $0x80] sm:$0xff] %vm637, %v1196
  %1261 = vst.msk [vmem:[%s5 + $0x88] sm:$0xff] %vm637, %v1197
  %1262 = vst.msk [vmem:[%s5 + $0x90] sm:$0xff] %vm637, %v1198
  %1263 = vst.msk [vmem:[%s5 + $0x98] sm:$0xff] %vm637, %v1199
  %1264 = vst.msk [vmem:[%s5 + $0xa0] sm:$0xff] %vm637, %v1200
  %1265 = vst.msk [vmem:[%s5 + $0xa8] sm:$0xff] %vm637, %v1201
  %1266 = vst.msk [vmem:[%s5 + $0xb0] sm:$0xff] %vm637, %v1202
  %1267 = vst.msk [vmem:[%s5 + $0xb8] sm:$0xff] %vm637, %v1203
  %1268 = vst.msk [vmem:[%s5 + $0xc0] sm:$0xff] %vm637, %v1204
  %1269 = vst.msk [vmem:[%s5 + $0xc8] sm:$0xff] %vm637, %v1205
  %1270 = vst.msk [vmem:[%s5 + $0xd0] sm:$0xff] %vm637, %v1206
  %1271 = vst.msk [vmem:[%s5 + $0xd8] sm:$0xff] %vm637, %v1207
  %1272 = vst.msk [vmem:[%s5 + $0xe0] sm:$0xff] %vm637, %v1208
  %1273 = vst.msk [vmem:[%s5 + $0xe8] sm:$0xff] %vm637, %v1209
  %1274 = vst.msk [vmem:[%s5 + $0xf0] sm:$0xff] %vm637, %v1210
  %1275 = vst.msk [vmem:[%s5 + $0xf8] sm:$0xff] %vm637, %v1211
  %1276 = vst.msk [vmem:[%s5 + $0x100] sm:$0xff] %vm637, %v1212
  %1277 = vst.msk [vmem:[%s5 + $0x108] sm:$0xff] %vm637, %v1213
  %1278 = vst.msk [vmem:[%s5 + $0x110] sm:$0xff] %vm637, %v1214
  %1279 = vst.msk [vmem:[%s5 + $0x118] sm:$0xff] %vm637, %v1215
  %1280 = vst.msk [vmem:[%s5 + $0x120] sm:$0xff] %vm637, %v1216
  %1281 = vst.msk [vmem:[%s5 + $0x128] sm:$0xff] %vm637, %v1217
  %1282 = vst.msk [vmem:[%s5 + $0x130] sm:$0xff] %vm637, %v1218
  %1283 = vst.msk [vmem:[%s5 + $0x138] sm:$0xff] %vm637, %v1219
  %1284 = vst.msk [vmem:[%s5 + $0x140] sm:$0xff] %vm637, %v1220
  %1285 = vst.msk [vmem:[%s5 + $0x148] sm:$0xff] %vm637, %v1221
  %1286 = vst.msk [vmem:[%s5 + $0x150] sm:$0xff] %vm637, %v1222
  %1287 = vst.msk [vmem:[%s5 + $0x158] sm:$0xff] %vm637, %v1223
  %1288 = vst.msk [vmem:[%s5 + $0x160] sm:$0xff] %vm637, %v1224
  %1289 = vst.msk [vmem:[%s5 + $0x168] sm:$0xff] %vm637, %v1225
  %1290 = vst.msk [vmem:[%s5 + $0x170] sm:$0xff] %vm637, %v1226
  %1291 = vst.msk [vmem:[%s5 + $0x178] sm:$0xff] %vm637, %v1227
  %1292 = vst.msk [vmem:[%s5 + $0x180] sm:$0xff] %vm637, %v1228
  %1293 = vst.msk [vmem:[%s5 + $0x188] sm:$0xff] %vm637, %v1229
  %1294 = vst.msk [vmem:[%s5 + $0x190] sm:$0xff] %vm637, %v1230
  %1295 = vst.msk [vmem:[%s5 + $0x198] sm:$0xff] %vm637, %v1231
  %1296 = vst.msk [vmem:[%s5 + $0x1a0] sm:$0xff] %vm637, %v1232
  %1297 = vst.msk [vmem:[%s5 + $0x1a8] sm:$0xff] %vm637, %v1233
  %1298 = vst.msk [vmem:[%s5 + $0x1b0] sm:$0xff] %vm637, %v1234
  %1299 = vst.msk [vmem:[%s5 + $0x1b8] sm:$0xff] %vm637, %v1235
  %1300 = vst.msk [vmem:[%s5 + $0x1c0] sm:$0xff] %vm637, %v1236
  %1301 = vst.msk [vmem:[%s5 + $0x1c8] sm:$0xff] %vm637, %v1237
  %1302 = vst.msk [vmem:[%s5 + $0x1d0] sm:$0xff] %vm637, %v1238
  %1303 = vst.msk [vmem:[%s5 + $0x1d8] sm:$0xff] %vm637, %v1239
  %1304 = vst.msk [vmem:[%s5 + $0x1e0] sm:$0xff] %vm637, %v1240
  %1305 = vst.msk [vmem:[%s5 + $0x1e8] sm:$0xff] %vm637, %v1241
  %1306 = vst.msk [vmem:[%s5 + $0x1f0] sm:$0xff] %vm637, %v1242
  %1307 = vst.msk [vmem:[%s5 + $0x1f8] sm:$0xff] %vm637, %v1243
  // Predicated region
  $region22: #{vae_forward.15} parent=0 // pred_check
    _
  $region23: #{vae_forward.15} parent=0 // pred_check_branch
    %1309 = sbr.rel (0) target = $region25
  $region24: #{vae_forward.15} parent=0 // pred_region
    _
  $region25: #{vae_forward.15} parent=0 // pred_fallthru
    _
  // Predicated region
  $region26: #{vae_forward.15} parent=0 // pred_check
    _
  $region27: #{vae_forward.15} parent=0 // pred_check_branch
    %1311 = sbr.rel (0) target = $region29
  $region28: #{vae_forward.15} parent=0 // pred_region
    _
  $region29: #{vae_forward.15} parent=0 // pred_fallthru
    _

// kernel: vae_forward.16
$region0: #{vae_forward.16}
  #allocation0 [shape = 'u32[]', space=smem, size = 0x4, offset = 0x4, fixed_abs, tag = 'smem constant byte address 0x4 - core index']
  #allocation1 [shape = 'u32[144,128]{1,0:T(1,128)}', space=vmem, size = 0x12000, scoped, tag = 'internal scratch']
  %s0 = inlined_call_operand.vmem [shape: bf16[128,128], index: 0, kind: input, shape index: {}]
  %s1 = inlined_call_operand.vmem [shape: bf16[128,16], index: 1, kind: input, shape index: {}]
  %s2 = inlined_call_operand.vmem [shape: f32[1,16], index: 2, kind: input, shape index: {}]
  %s3 = inlined_call_operand.vmem [shape: f32[1,16], index: 3, kind: input, shape index: {}]
  %s4 = inlined_call_operand.vmem [shape: f32[1,16], index: 4, kind: input, shape index: {}]
  %s5 = inlined_call_operand.vmem [shape: f32[128,16], index: 5, kind: output, shape index: {}]
  %s6 = sld [smem:[#allocation0]]
  $region30: #{vae_forward.16} parent=0
    _
  %s8 = ssub.s32 1, %s6
  %s9 = scalar_select 0, %s8, %s6
  // Predicated region
  $region2: #{vae_forward.16} parent=0 // pred_check
    _
  $region3: #{vae_forward.16} parent=0 // pred_check_branch
    %11 = sbr.rel (0) target = $region5
  $region4: #{vae_forward.16} parent=0 // pred_region
    _
  $region5: #{vae_forward.16} parent=0 // pred_fallthru
    _
  // Predicated region
  $region6: #{vae_forward.16} parent=0 // pred_check
    _
  $region7: #{vae_forward.16} parent=0 // pred_check_branch
    %13 = sbr.rel (0) target = $region9
  $region8: #{vae_forward.16} parent=0 // pred_region
    _
  $region9: #{vae_forward.16} parent=0 // pred_fallthru
    _
  // Predicated region
  $region10: #{vae_forward.16} parent=0 // pred_check
    _
  $region11: #{vae_forward.16} parent=0 // pred_check_branch
    %15 = sbr.rel (0) target = $region13
  $region12: #{vae_forward.16} parent=0 // pred_region
    _
  $region13: #{vae_forward.16} parent=0 // pred_fallthru
    _
  // Predicated region
  $region14: #{vae_forward.16} parent=0 // pred_check
    _
  $region15: #{vae_forward.16} parent=0 // pred_check_branch
    %17 = sbr.rel (0) target = $region17
  $region16: #{vae_forward.16} parent=0 // pred_region
    _
  $region17: #{vae_forward.16} parent=0 // pred_fallthru
    _
  // Predicated region
  $region18: #{vae_forward.16} parent=0 // pred_check
    _
  $region19: #{vae_forward.16} parent=0 // pred_check_branch
    %19 = sbr.rel (0) target = $region21
  $region20: #{vae_forward.16} parent=0 // pred_region
    _
  $region21: #{vae_forward.16} parent=0 // pred_fallthru
    _
  %v21 = vld [vmem:[%s0] sm:$0xf]
  %v22 = vld [vmem:[%s0 + $0x4] sm:$0xf]
  %v23 = vld [vmem:[%s0 + $0x8] sm:$0xf]
  %v24 = vld [vmem:[%s0 + $0xc] sm:$0xf]
  %v25 = vld [vmem:[%s0 + $0x10] sm:$0xf]
  %v26 = vld [vmem:[%s0 + $0x14] sm:$0xf]
  %v27 = vld [vmem:[%s0 + $0x18] sm:$0xf]
  %v28 = vld [vmem:[%s0 + $0x1c] sm:$0xf]
  %v29 = vld [vmem:[%s0 + $0x20] sm:$0xf]
  %v30 = vld [vmem:[%s0 + $0x24] sm:$0xf]
  %v31 = vld [vmem:[%s0 + $0x28] sm:$0xf]
  %v32 = vld [vmem:[%s0 + $0x2c] sm:$0xf]
  %v33 = vld [vmem:[%s0 + $0x30] sm:$0xf]
  %v34 = vld [vmem:[%s0 + $0x34] sm:$0xf]
  %v35 = vld [vmem:[%s0 + $0x38] sm:$0xf]
  %v36 = vld [vmem:[%s0 + $0x3c] sm:$0xf]
  %v37 = vld [vmem:[%s1] sm:$0xf]
  %v38 = vld [vmem:[%s1 + $0x4] sm:$0xf]
  %v39 = vld [vmem:[%s1 + $0x8] sm:$0xf]
  %v40 = vld [vmem:[%s1 + $0xc] sm:$0xf]
  %v41 = vld [vmem:[%s1 + $0x10] sm:$0xf]
  %v42 = vld [vmem:[%s1 + $0x14] sm:$0xf]
  %v43 = vld [vmem:[%s1 + $0x18] sm:$0xf]
  %v44 = vld [vmem:[%s1 + $0x1c] sm:$0xf]
  %v45 = vld [vmem:[%s1 + $0x20] sm:$0xf]
  %v46 = vld [vmem:[%s1 + $0x24] sm:$0xf]
  %v47 = vld [vmem:[%s1 + $0x28] sm:$0xf]
  %v48 = vld [vmem:[%s1 + $0x2c] sm:$0xf]
  %v49 = vld [vmem:[%s1 + $0x30] sm:$0xf]
  %v50 = vld [vmem:[%s1 + $0x34] sm:$0xf]
  %v51 = vld [vmem:[%s1 + $0x38] sm:$0xf]
  %v52 = vld [vmem:[%s1 + $0x3c] sm:$0xf]
  %v53 = vld [vmem:[%s2] sm:$0x1]
  %v55 = vlaneseq
  %v56 = vshrl.u32 %v55, 7
  %v57 = vsub.s32 0, %v56
  %v58 = vrot.slane %v53, %v57
  %v76 = vunpack.c.l.b16 %v21
  %v77 = vunpack.c.l.b16 %v22
  %v78 = vunpack.c.l.b16 %v23
  %v79 = vunpack.c.l.b16 %v24
  %v80 = vunpack.c.l.b16 %v25
  %v81 = vunpack.c.l.b16 %v26
  %v82 = vunpack.c.l.b16 %v27
  %v83 = vunpack.c.l.b16 %v28
  %v84 = vunpack.c.l.b16 %v29
  %v85 = vunpack.c.l.b16 %v30
  %v86 = vunpack.c.l.b16 %v31
  %v87 = vunpack.c.l.b16 %v32
  %v88 = vunpack.c.l.b16 %v33
  %v89 = vunpack.c.l.b16 %v34
  %v90 = vunpack.c.l.b16 %v35
  %v91 = vunpack.c.l.b16 %v36
  %v92 = vpack.c.b16 %v77, %v76
  %v93 = vpack.c.b16 %v79, %v78
  %v94 = vpack.c.b16 %v81, %v80
  %v95 = vpack.c.b16 %v83, %v82
  %v96 = vpack.c.b16 %v85, %v84
  %v97 = vpack.c.b16 %v87, %v86
  %v98 = vpack.c.b16 %v89, %v88
  %v99 = vpack.c.b16 %v91, %v90
  %v124 = vunpack.c.l.b16 %v37
  %v125 = vunpack.c.l.b16 %v38
  %v126 = vunpack.c.l.b16 %v39
  %v127 = vunpack.c.l.b16 %v40
  %v128 = vunpack.c.l.b16 %v41
  %v129 = vunpack.c.l.b16 %v42
  %v130 = vunpack.c.l.b16 %v43
  %v131 = vunpack.c.l.b16 %v44
  %v132 = vunpack.c.l.b16 %v45
  %v133 = vunpack.c.l.b16 %v46
  %v134 = vunpack.c.l.b16 %v47
  %v135 = vunpack.c.l.b16 %v48
  %v136 = vunpack.c.l.b16 %v49
  %v137 = vunpack.c.l.b16 %v50
  %v138 = vunpack.c.l.b16 %v51
  %v139 = vunpack.c.l.b16 %v52
  %v140 = vpack.c.b16 %v125, %v124
  %v141 = vpack.c.b16 %v127, %v126
  %v142 = vpack.c.b16 %v129, %v128
  %v143 = vpack.c.b16 %v131, %v130
  %v144 = vpack.c.b16 %v133, %v132
  %v145 = vpack.c.b16 %v135, %v134
  %v146 = vpack.c.b16 %v137, %v136
  %v147 = vpack.c.b16 %v139, %v138
  %156 = vmatprep.subr.bf16.mxu0 0
  %157 = vmatpush1.bf16.msra.mxu0 %v140
  %158 = vmatprep.subr.bf16.mxu0 0
  %159 = vmatpush1.bf16.msra.mxu0 %v141
  %160 = vmatprep.subr.bf16.mxu0 0
  %161 = vmatpush1.bf16.msra.mxu0 %v142
  %162 = vmatprep.subr.bf16.mxu0 0
  %163 = vmatpush1.bf16.msra.mxu0 %v143
  %164 = vmatprep.subr.bf16.mxu0 0
  %165 = vmatpush1.bf16.msra.mxu0 %v144
  %166 = vmatprep.subr.bf16.mxu0 0
  %167 = vmatpush1.bf16.msra.mxu0 %v145
  %168 = vmatprep.subr.bf16.mxu0 0
  %169 = vmatpush1.bf16.msra.mxu0 %v146
  %170 = vmatprep.subr.bf16.mxu0 0
  %171 = vmatpush1.bf16.msra.mxu0 %v147
  %172 = vmatprep.subr.bf16.mxu0 0
  %173 = vmatpush1.bf16.msra.mxu0 0
  %174 = vmatprep.subr.bf16.mxu0 0
  %175 = vmatpush1.bf16.msra.mxu0 0
  %176 = vmatprep.subr.bf16.mxu0 0
  %177 = vmatpush1.bf16.msra.mxu0 0
  %178 = vmatprep.subr.bf16.mxu0 0
  %179 = vmatpush1.bf16.msra.mxu0 0
  %180 = vmatprep.subr.bf16.mxu0 0
  %181 = vmatpush1.bf16.msra.mxu0 0
  %182 = vmatprep.subr.bf16.mxu0 0
  %183 = vmatpush1.bf16.msra.mxu0 0
  %184 = vmatprep.subr.bf16.mxu0 0
  %185 = vmatpush1.bf16.msra.mxu0 0
  %186 = vmatprep.subr.bf16.mxu0 0
  %187 = vmatpush1.bf16.msra.mxu0 0
  %188 = vmatprep.mubr.bf16.mxu0 0
  %189 = vmatmul.mubr.bf16.gmra.mrb[0].mxu0 %v92
  %v190 = vpop.f32.mrb[0].mxu0
  %v191 = vadd.f32 %v58, %v190
  %v192 = vpop.f32.mrb[0].mxu0
  %v193 = vpop.f32.mrb[0].mxu0
  %v194 = vadd.f32 %v58, %v193
  %v195 = vpop.f32.mrb[0].mxu0
  %196 = vmatprep.mubr.bf16.mxu0 0
  %197 = vmatmul.mubr.bf16.gmra.mrb[0].mxu0 %v93
  %v198 = vpop.f32.mrb[0].mxu0
  %v199 = vadd.f32 %v58, %v198
  %v200 = vpop.f32.mrb[0].mxu0
  %v201 = vpop.f32.mrb[0].mxu0
  %v202 = vadd.f32 %v58, %v201
  %v203 = vpop.f32.mrb[0].mxu0
  %204 = vmatprep.mubr.bf16.mxu0 0
  %205 = vmatmul.mubr.bf16.gmra.mrb[0].mxu0 %v94
  %v206 = vpop.f32.mrb[0].mxu0
  %v207 = vadd.f32 %v58, %v206
  %v208 = vpop.f32.mrb[0].mxu0
  %v209 = vpop.f32.mrb[0].mxu0
  %v210 = vadd.f32 %v58, %v209
  %v211 = vpop.f32.mrb[0].mxu0
  %212 = vmatprep.mubr.bf16.mxu0 0
  %213 = vmatmul.mubr.bf16.gmra.mrb[0].mxu0 %v95
  %v214 = vpop.f32.mrb[0].mxu0
  %v215 = vadd.f32 %v58, %v214
  %v216 = vpop.f32.mrb[0].mxu0
  %v217 = vpop.f32.mrb[0].mxu0
  %v218 = vadd.f32 %v58, %v217
  %v219 = vpop.f32.mrb[0].mxu0
  %220 = vmatprep.mubr.bf16.mxu0 0
  %221 = vmatmul.mubr.bf16.gmra.mrb[0].mxu0 %v96
  %v222 = vpop.f32.mrb[0].mxu0
  %v223 = vadd.f32 %v58, %v222
  %v224 = vpop.f32.mrb[0].mxu0
  %v225 = vpop.f32.mrb[0].mxu0
  %v226 = vadd.f32 %v58, %v225
  %v227 = vpop.f32.mrb[0].mxu0
  %228 = vmatprep.mubr.bf16.mxu0 0
  %229 = vmatmul.mubr.bf16.gmra.mrb[0].mxu0 %v97
  %v230 = vpop.f32.mrb[0].mxu0
  %v231 = vadd.f32 %v58, %v230
  %v232 = vpop.f32.mrb[0].mxu0
  %v233 = vpop.f32.mrb[0].mxu0
  %v234 = vadd.f32 %v58, %v233
  %v235 = vpop.f32.mrb[0].mxu0
  %236 = vmatprep.mubr.bf16.mxu0 0
  %237 = vmatmul.mubr.bf16.gmra.mrb[0].mxu0 %v98
  %v238 = vpop.f32.mrb[0].mxu0
  %v239 = vadd.f32 %v58, %v238
  %v240 = vpop.f32.mrb[0].mxu0
  %v241 = vpop.f32.mrb[0].mxu0
  %v242 = vadd.f32 %v58, %v241
  %v243 = vpop.f32.mrb[0].mxu0
  %244 = vmatprep.mubr.bf16.mxu0 0
  %245 = vmatmul.mubr.bf16.gmra.mrb[0].mxu0 %v99
  %v246 = vpop.f32.mrb[0].mxu0
  %v247 = vadd.f32 %v58, %v246
  %v248 = vpop.f32.mrb[0].mxu0
  %v249 = vpop.f32.mrb[0].mxu0
  %v250 = vadd.f32 %v58, %v249
  %v251 = vpop.f32.mrb[0].mxu0
  %252 = vdwg.mxu0
  %vm253 = vcmask 130048
  %v254 = vsel %vm253, %v191, 0.0
  %v255 = vsel %vm253, %v194, 0.0
  %v256 = vadd.f32 %v254, %v255
  %v257 = vsel %vm253, %v199, 0.0
  %v258 = vadd.f32 %v256, %v257
  %v259 = vsel %vm253, %v202, 0.0
  %v260 = vadd.f32 %v258, %v259
  %v261 = vsel %vm253, %v207, 0.0
  %v262 = vadd.f32 %v260, %v261
  %v263 = vsel %vm253, %v210, 0.0
  %v264 = vadd.f32 %v262, %v263
  %v265 = vsel %vm253, %v215, 0.0
  %v266 = vadd.f32 %v264, %v265
  %v267 = vsel %vm253, %v218, 0.0
  %v268 = vadd.f32 %v266, %v267
  %v269 = vsel %vm253, %v223, 0.0
  %v270 = vadd.f32 %v268, %v269
  %v271 = vsel %vm253, %v226, 0.0
  %v272 = vadd.f32 %v270, %v271
  %v273 = vsel %vm253, %v231, 0.0
  %v274 = vadd.f32 %v272, %v273
  %v275 = vsel %vm253, %v234, 0.0
  %v276 = vadd.f32 %v274, %v275
  %v277 = vsel %vm253, %v239, 0.0
  %v278 = vadd.f32 %v276, %v277
  %v279 = vsel %vm253, %v242, 0.0
  %v280 = vadd.f32 %v278, %v279
  %v281 = vsel %vm253, %v247, 0.0
  %v282 = vadd.f32 %v280, %v281
  %v283 = vsel %vm253, %v250, 0.0
  %v284 = vadd.f32 %v282, %v283
  %v285 = vrot.slane %v284, 4
  %v286 = vadd.f32 %v284, %v285
  %v287 = vrot.slane %v286, 2
  %v288 = vadd.f32 %v286, %v287
  %v289 = vrot.slane %v288, 1
  %v290 = vadd.f32 %v288, %v289
  %v291 = vrcp.pop 128.0
  %v292 = vmul.f32 %v290, %v291
  %v293 = vsub.f32 %v191, %v292
  %v294 = vsub.f32 %v194, %v292
  %v295 = vsub.f32 %v199, %v292
  %v296 = vsub.f32 %v202, %v292
  %v297 = vsub.f32 %v207, %v292
  %v298 = vsub.f32 %v210, %v292
  %v299 = vsub.f32 %v215, %v292
  %v300 = vsub.f32 %v218, %v292
  %v301 = vsub.f32 %v223, %v292
  %v302 = vsub.f32 %v226, %v292
  %v303 = vsub.f32 %v231, %v292
  %v304 = vsub.f32 %v234, %v292
  %v305 = vsub.f32 %v239, %v292
  %v306 = vsub.f32 %v242, %v292
  %v307 = vsub.f32 %v247, %v292
  %v308 = vsub.f32 %v250, %v292
  %v309 = vmul.f32 %v293, %v293
  %v310 = vmul.f32 %v294, %v294
  %v311 = vmul.f32 %v295, %v295
  %v312 = vmul.f32 %v296, %v296
  %v313 = vmul.f32 %v297, %v297
  %v314 = vmul.f32 %v298, %v298
  %v315 = vmul.f32 %v299, %v299
  %v316 = vmul.f32 %v300, %v300
  %v317 = vmul.f32 %v301, %v301
  %v318 = vmul.f32 %v302, %v302
  %v319 = vmul.f32 %v303, %v303
  %v320 = vmul.f32 %v304, %v304
  %v321 = vmul.f32 %v305, %v305
  %v322 = vmul.f32 %v306, %v306
  %v323 = vmul.f32 %v307, %v307
  %v324 = vmul.f32 %v308, %v308
  %v325 = vsel %vm253, %v309, 0.0
  %v326 = vsel %vm253, %v310, 0.0
  %v327 = vadd.f32 %v325, %v326
  %v328 = vsel %vm253, %v311, 0.0
  %v329 = vadd.f32 %v327, %v328
  %v330 = vsel %vm253, %v312, 0.0
  %v331 = vadd.f32 %v329, %v330
  %v332 = vsel %vm253, %v313, 0.0
  %v333 = vadd.f32 %v331, %v332
  %v334 = vsel %vm253, %v314, 0.0
  %v335 = vadd.f32 %v333, %v334
  %v336 = vsel %vm253, %v315, 0.0
  %v337 = vadd.f32 %v335, %v336
  %v338 = vsel %vm253, %v316, 0.0
  %v339 = vadd.f32 %v337, %v338
  %v340 = vsel %vm253, %v317, 0.0
  %v341 = vadd.f32 %v339, %v340
  %v342 = vsel %vm253, %v318, 0.0
  %v343 = vadd.f32 %v341, %v342
  %v344 = vsel %vm253, %v319, 0.0
  %v345 = vadd.f32 %v343, %v344
  %v346 = vsel %vm253, %v320, 0.0
  %v347 = vadd.f32 %v345, %v346
  %v348 = vsel %vm253, %v321, 0.0
  %v349 = vadd.f32 %v347, %v348
  %v350 = vsel %vm253, %v322, 0.0
  %v351 = vadd.f32 %v349, %v350
  %v352 = vsel %vm253, %v323, 0.0
  %v353 = vadd.f32 %v351, %v352
  %v354 = vsel %vm253, %v324, 0.0
  %v355 = vadd.f32 %v353, %v354
  %v356 = vrot.slane %v355, 4
  %v357 = vadd.f32 %v355, %v356
  %v358 = vrot.slane %v357, 2
  %v359 = vadd.f32 %v357, %v358
  %v360 = vrot.slane %v359, 1
  %v361 = vadd.f32 %v359, %v360
  %v362 = vmul.f32 %v361, %v291
  %v363 = vld [vmem:[%s3] sm:$0x1]
  %v364 = vadd.f32 %v362, 1e-05
  %v365 = vrsqrt.pop %v364
  %v366 = vmul.f32 %v363, %v365
  %v368 = vlaneseq
  %v369 = vshrl.u32 %v368, 7
  %v370 = vsub.s32 0, %v369
  %v371 = vrot.slane %v366, %v370
  %v373 = vmul.f32 %v293, %v371
  %v374 = vmul.f32 %v294, %v371
  %v375 = vmul.f32 %v295, %v371
  %v376 = vmul.f32 %v296, %v371
  %v377 = vmul.f32 %v297, %v371
  %v378 = vmul.f32 %v298, %v371
  %v379 = vmul.f32 %v299, %v371
  %v380 = vmul.f32 %v300, %v371
  %v381 = vmul.f32 %v301, %v371
  %v382 = vmul.f32 %v302, %v371
  %v383 = vmul.f32 %v303, %v371
  %v384 = vmul.f32 %v304, %v371
  %v385 = vmul.f32 %v305, %v371
  %v386 = vmul.f32 %v306, %v371
  %v387 = vmul.f32 %v307, %v371
  %v388 = vmul.f32 %v308, %v371
  %v389 = vld [vmem:[%s4] sm:$0x1]
  %v391 = vlaneseq
  %v392 = vshrl.u32 %v391, 7
  %v393 = vsub.s32 0, %v392
  %v394 = vrot.slane %v389, %v393
  %v396 = vadd.f32 %v373, %v394
  %v397 = vadd.f32 %v374, %v394
  %v398 = vadd.f32 %v375, %v394
  %v399 = vadd.f32 %v376, %v394
  %v400 = vadd.f32 %v377, %v394
  %v401 = vadd.f32 %v378, %v394
  %v402 = vadd.f32 %v379, %v394
  %v403 = vadd.f32 %v380, %v394
  %v404 = vadd.f32 %v381, %v394
  %v405 = vadd.f32 %v382, %v394
  %v406 = vadd.f32 %v383, %v394
  %v407 = vadd.f32 %v384, %v394
  %v408 = vadd.f32 %v385, %v394
  %v409 = vadd.f32 %v386, %v394
  %v410 = vadd.f32 %v387, %v394
  %v411 = vadd.f32 %v388, %v394
  %v412 = vmax.f32 %v396, 0.0
  %v413 = vmax.f32 %v397, 0.0
  %v414 = vmax.f32 %v398, 0.0
  %v415 = vmax.f32 %v399, 0.0
  %v416 = vmax.f32 %v400, 0.0
  %v417 = vmax.f32 %v401, 0.0
  %v418 = vmax.f32 %v402, 0.0
  %v419 = vmax.f32 %v403, 0.0
  %v420 = vmax.f32 %v404, 0.0
  %v421 = vmax.f32 %v405, 0.0
  %v422 = vmax.f32 %v406, 0.0
  %v423 = vmax.f32 %v407, 0.0
  %v424 = vmax.f32 %v408, 0.0
  %v425 = vmax.f32 %v409, 0.0
  %v426 = vmax.f32 %v410, 0.0
  %v427 = vmax.f32 %v411, 0.0
  %428 = vst.msk [vmem:[%s5] sm:$0xff] %vm253, %v412
  %429 = vst.msk [vmem:[%s5 + $0x8] sm:$0xff] %vm253, %v413
  %430 = vst.msk [vmem:[%s5 + $0x10] sm:$0xff] %vm253, %v414
  %431 = vst.msk [vmem:[%s5 + $0x18] sm:$0xff] %vm253, %v415
  %432 = vst.msk [vmem:[%s5 + $0x20] sm:$0xff] %vm253, %v416
  %433 = vst.msk [vmem:[%s5 + $0x28] sm:$0xff] %vm253, %v417
  %434 = vst.msk [vmem:[%s5 + $0x30] sm:$0xff] %vm253, %v418
  %435 = vst.msk [vmem:[%s5 + $0x38] sm:$0xff] %vm253, %v419
  %436 = vst.msk [vmem:[%s5 + $0x40] sm:$0xff] %vm253, %v420
  %437 = vst.msk [vmem:[%s5 + $0x48] sm:$0xff] %vm253, %v421
  %438 = vst.msk [vmem:[%s5 + $0x50] sm:$0xff] %vm253, %v422
  %439 = vst.msk [vmem:[%s5 + $0x58] sm:$0xff] %vm253, %v423
  %440 = vst.msk [vmem:[%s5 + $0x60] sm:$0xff] %vm253, %v424
  %441 = vst.msk [vmem:[%s5 + $0x68] sm:$0xff] %vm253, %v425
  %442 = vst.msk [vmem:[%s5 + $0x70] sm:$0xff] %vm253, %v426
  %443 = vst.msk [vmem:[%s5 + $0x78] sm:$0xff] %vm253, %v427
  // Predicated region
  $region22: #{vae_forward.16} parent=0 // pred_check
    _
  $region23: #{vae_forward.16} parent=0 // pred_check_branch
    %445 = sbr.rel (0) target = $region25
  $region24: #{vae_forward.16} parent=0 // pred_region
    _
  $region25: #{vae_forward.16} parent=0 // pred_fallthru
    _
  // Predicated region
  $region26: #{vae_forward.16} parent=0 // pred_check
    _
  $region27: #{vae_forward.16} parent=0 // pred_check_branch
    %447 = sbr.rel (0) target = $region29
  $region28: #{vae_forward.16} parent=0 // pred_region
    _
  $region29: #{vae_forward.16} parent=0 // pred_fallthru
    _

// kernel: vae_forward.17
$region0: #{vae_forward.17}
  #allocation0 [shape = 'u32[]', space=smem, size = 0x4, offset = 0x4, fixed_abs, tag = 'smem constant byte address 0x4 - core index']
  #allocation1 [shape = 'u32[144,128]{1,0:T(1,128)}', space=vmem, size = 0x12000, scoped, tag = 'internal scratch']
  %s0 = inlined_call_operand.vmem [shape: bf16[32,256], index: 0, kind: input, shape index: {}]
  %s1 = inlined_call_operand.vmem [shape: bf16[256,16], index: 1, kind: input, shape index: {}]
  %s2 = inlined_call_operand.vmem [shape: f32[1,16], index: 2, kind: input, shape index: {}]
  %s3 = inlined_call_operand.vmem [shape: f32[1,16], index: 3, kind: input, shape index: {}]
  %s4 = inlined_call_operand.vmem [shape: f32[1,16], index: 4, kind: input, shape index: {}]
  %s5 = inlined_call_operand.vmem [shape: f32[32,16], index: 5, kind: output, shape index: {}]
  %s6 = sld [smem:[#allocation0]]
  $region30: #{vae_forward.17} parent=0
    _
  %s8 = ssub.s32 1, %s6
  %s9 = scalar_select 0, %s8, %s6
  // Predicated region
  $region2: #{vae_forward.17} parent=0 // pred_check
    _
  $region3: #{vae_forward.17} parent=0 // pred_check_branch
    %11 = sbr.rel (0) target = $region5
  $region4: #{vae_forward.17} parent=0 // pred_region
    _
  $region5: #{vae_forward.17} parent=0 // pred_fallthru
    _
  // Predicated region
  $region6: #{vae_forward.17} parent=0 // pred_check
    _
  $region7: #{vae_forward.17} parent=0 // pred_check_branch
    %13 = sbr.rel (0) target = $region9
  $region8: #{vae_forward.17} parent=0 // pred_region
    _
  $region9: #{vae_forward.17} parent=0 // pred_fallthru
    _
  // Predicated region
  $region10: #{vae_forward.17} parent=0 // pred_check
    _
  $region11: #{vae_forward.17} parent=0 // pred_check_branch
    %15 = sbr.rel (0) target = $region13
  $region12: #{vae_forward.17} parent=0 // pred_region
    _
  $region13: #{vae_forward.17} parent=0 // pred_fallthru
    _
  // Predicated region
  $region14: #{vae_forward.17} parent=0 // pred_check
    _
  $region15: #{vae_forward.17} parent=0 // pred_check_branch
    %17 = sbr.rel (0) target = $region17
  $region16: #{vae_forward.17} parent=0 // pred_region
    _
  $region17: #{vae_forward.17} parent=0 // pred_fallthru
    _
  // Predicated region
  $region18: #{vae_forward.17} parent=0 // pred_check
    _
  $region19: #{vae_forward.17} parent=0 // pred_check_branch
    %19 = sbr.rel (0) target = $region21
  $region20: #{vae_forward.17} parent=0 // pred_region
    _
  $region21: #{vae_forward.17} parent=0 // pred_fallthru
    _
  %v21 = vld [vmem:[%s0] sm:$0xff]
  %v22 = vld [vmem:[%s0 + $0x8] sm:$0xff]
  %v23 = vld [vmem:[%s0 + $0x10] sm:$0xff]
  %v24 = vld [vmem:[%s0 + $0x18] sm:$0xff]
  %v25 = vld [vmem:[%s1] sm:$0xf]
  %v26 = vld [vmem:[%s1 + $0x4] sm:$0xf]
  %v27 = vld [vmem:[%s1 + $0x8] sm:$0xf]
  %v28 = vld [vmem:[%s1 + $0xc] sm:$0xf]
  %v29 = vld [vmem:[%s1 + $0x10] sm:$0xf]
  %v30 = vld [vmem:[%s1 + $0x14] sm:$0xf]
  %v31 = vld [vmem:[%s1 + $0x18] sm:$0xf]
  %v32 = vld [vmem:[%s1 + $0x1c] sm:$0xf]
  %v33 = vld [vmem:[%s1 + $0x20] sm:$0xf]
  %v34 = vld [vmem:[%s1 + $0x24] sm:$0xf]
  %v35 = vld [vmem:[%s1 + $0x28] sm:$0xf]
  %v36 = vld [vmem:[%s1 + $0x2c] sm:$0xf]
  %v37 = vld [vmem:[%s1 + $0x30] sm:$0xf]
  %v38 = vld [vmem:[%s1 + $0x34] sm:$0xf]
  %v39 = vld [vmem:[%s1 + $0x38] sm:$0xf]
  %v40 = vld [vmem:[%s1 + $0x3c] sm:$0xf]
  %v41 = vld [vmem:[%s1 + $0x40] sm:$0xf]
  %v42 = vld [vmem:[%s1 + $0x44] sm:$0xf]
  %v43 = vld [vmem:[%s1 + $0x48] sm:$0xf]
  %v44 = vld [vmem:[%s1 + $0x4c] sm:$0xf]
  %v45 = vld [vmem:[%s1 + $0x50] sm:$0xf]
  %v46 = vld [vmem:[%s1 + $0x54] sm:$0xf]
  %v47 = vld [vmem:[%s1 + $0x58] sm:$0xf]
  %v48 = vld [vmem:[%s1 + $0x5c] sm:$0xf]
  %v49 = vld [vmem:[%s1 + $0x60] sm:$0xf]
  %v50 = vld [vmem:[%s1 + $0x64] sm:$0xf]
  %v51 = vld [vmem:[%s1 + $0x68] sm:$0xf]
  %v52 = vld [vmem:[%s1 + $0x6c] sm:$0xf]
  %v53 = vld [vmem:[%s1 + $0x70] sm:$0xf]
  %v54 = vld [vmem:[%s1 + $0x74] sm:$0xf]
  %v55 = vld [vmem:[%s1 + $0x78] sm:$0xf]
  %v56 = vld [vmem:[%s1 + $0x7c] sm:$0xf]
  %v57 = vld [vmem:[%s2] sm:$0x1]
  %v59 = vlaneseq
  %v60 = vshrl.u32 %v59, 7
  %v61 = vsub.s32 0, %v60
  %v62 = vrot.slane %v57, %v61
  %v68 = vunpack.c.l.b16 %v21
  %v69 = vunpack.c.h.b16 %v21
  %v70 = vunpack.c.l.b16 %v22
  %v71 = vunpack.c.h.b16 %v22
  %v72 = vunpack.c.l.b16 %v23
  %v73 = vunpack.c.h.b16 %v23
  %v74 = vunpack.c.l.b16 %v24
  %v75 = vunpack.c.h.b16 %v24
  %v76 = vpack.c.b16 %v70, %v68
  %v77 = vpack.c.b16 %v71, %v69
  %v78 = vpack.c.b16 %v74, %v72
  %v79 = vpack.c.b16 %v75, %v73
  %v116 = vunpack.c.l.b16 %v25
  %v117 = vunpack.c.l.b16 %v26
  %v118 = vunpack.c.l.b16 %v27
  %v119 = vunpack.c.l.b16 %v28
  %v120 = vunpack.c.l.b16 %v29
  %v121 = vunpack.c.l.b16 %v30
  %v122 = vunpack.c.l.b16 %v31
  %v123 = vunpack.c.l.b16 %v32
  %v124 = vunpack.c.l.b16 %v33
  %v125 = vunpack.c.l.b16 %v34
  %v126 = vunpack.c.l.b16 %v35
  %v127 = vunpack.c.l.b16 %v36
  %v128 = vunpack.c.l.b16 %v37
  %v129 = vunpack.c.l.b16 %v38
  %v130 = vunpack.c.l.b16 %v39
  %v131 = vunpack.c.l.b16 %v40
  %v132 = vunpack.c.l.b16 %v41
  %v133 = vunpack.c.l.b16 %v42
  %v134 = vunpack.c.l.b16 %v43
  %v135 = vunpack.c.l.b16 %v44
  %v136 = vunpack.c.l.b16 %v45
  %v137 = vunpack.c.l.b16 %v46
  %v138 = vunpack.c.l.b16 %v47
  %v139 = vunpack.c.l.b16 %v48
  %v140 = vunpack.c.l.b16 %v49
  %v141 = vunpack.c.l.b16 %v50
  %v142 = vunpack.c.l.b16 %v51
  %v143 = vunpack.c.l.b16 %v52
  %v144 = vunpack.c.l.b16 %v53
  %v145 = vunpack.c.l.b16 %v54
  %v146 = vunpack.c.l.b16 %v55
  %v147 = vunpack.c.l.b16 %v56
  %v148 = vpack.c.b16 %v117, %v116
  %v149 = vpack.c.b16 %v119, %v118
  %v150 = vpack.c.b16 %v121, %v120
  %v151 = vpack.c.b16 %v123, %v122
  %v152 = vpack.c.b16 %v125, %v124
  %v153 = vpack.c.b16 %v127, %v126
  %v154 = vpack.c.b16 %v129, %v128
  %v155 = vpack.c.b16 %v131, %v130
  %v156 = vpack.c.b16 %v133, %v132
  %v157 = vpack.c.b16 %v135, %v134
  %v158 = vpack.c.b16 %v137, %v136
  %v159 = vpack.c.b16 %v139, %v138
  %v160 = vpack.c.b16 %v141, %v140
  %v161 = vpack.c.b16 %v143, %v142
  %v162 = vpack.c.b16 %v145, %v144
  %v163 = vpack.c.b16 %v147, %v146
  %180 = vmatprep.subr.bf16.mxu0 0
  %181 = vmatpush1.bf16.msra.mxu0 %v148
  %182 = vmatprep.subr.bf16.mxu0 0
  %183 = vmatpush1.bf16.msra.mxu0 %v149
  %184 = vmatprep.subr.bf16.mxu0 0
  %185 = vmatpush1.bf16.msra.mxu0 %v150
  %186 = vmatprep.subr.bf16.mxu0 0
  %187 = vmatpush1.bf16.msra.mxu0 %v151
  %188 = vmatprep.subr.bf16.mxu0 0
  %189 = vmatpush1.bf16.msra.mxu0 %v152
  %190 = vmatprep.subr.bf16.mxu0 0
  %191 = vmatpush1.bf16.msra.mxu0 %v153
  %192 = vmatprep.subr.bf16.mxu0 0
  %193 = vmatpush1.bf16.msra.mxu0 %v154
  %194 = vmatprep.subr.bf16.mxu0 0
  %195 = vmatpush1.bf16.msra.mxu0 %v155
  %196 = vmatprep.subr.bf16.mxu0 0
  %197 = vmatpush1.bf16.msra.mxu0 %v156
  %198 = vmatprep.subr.bf16.mxu0 0
  %199 = vmatpush1.bf16.msra.mxu0 %v157
  %200 = vmatprep.subr.bf16.mxu0 0
  %201 = vmatpush1.bf16.msra.mxu0 %v158
  %202 = vmatprep.subr.bf16.mxu0 0
  %203 = vmatpush1.bf16.msra.mxu0 %v159
  %204 = vmatprep.subr.bf16.mxu0 0
  %205 = vmatpush1.bf16.msra.mxu0 %v160
  %206 = vmatprep.subr.bf16.mxu0 0
  %207 = vmatpush1.bf16.msra.mxu0 %v161
  %208 = vmatprep.subr.bf16.mxu0 0
  %209 = vmatpush1.bf16.msra.mxu0 %v162
  %210 = vmatprep.subr.bf16.mxu0 0
  %211 = vmatpush1.bf16.msra.mxu0 %v163
  %212 = vmatprep.mubr.bf16.mxu0 %v77
  %213 = vmatmul.mubr.bf16.gmra.mrb[0].mxu0 %v76
  %v214 = vpop.f32.mrb[0].mxu0
  %v215 = vadd.f32 %v62, %v214
  %v216 = vpop.f32.mrb[0].mxu0
  %v217 = vpop.f32.mrb[0].mxu0
  %v218 = vadd.f32 %v62, %v217
  %v219 = vpop.f32.mrb[0].mxu0
  %220 = vmatprep.mubr.bf16.mxu0 %v79
  %221 = vmatmul.mubr.bf16.gmra.mrb[0].mxu0 %v78
  %v222 = vpop.f32.mrb[0].mxu0
  %v223 = vadd.f32 %v62, %v222
  %v224 = vpop.f32.mrb[0].mxu0
  %v225 = vpop.f32.mrb[0].mxu0
  %v226 = vadd.f32 %v62, %v225
  %v227 = vpop.f32.mrb[0].mxu0
  %228 = vdwg.mxu0
  %vm229 = vcmask 130048
  %v230 = vsel %vm229, %v215, 0.0
  %v231 = vsel %vm229, %v218, 0.0
  %v232 = vadd.f32 %v230, %v231
  %v233 = vsel %vm229, %v223, 0.0
  %v234 = vadd.f32 %v232, %v233
  %v235 = vsel %vm229, %v226, 0.0
  %v236 = vadd.f32 %v234, %v235
  %v237 = vrot.slane %v236, 4
  %v238 = vadd.f32 %v236, %v237
  %v239 = vrot.slane %v238, 2
  %v240 = vadd.f32 %v238, %v239
  %v241 = vrot.slane %v240, 1
  %v242 = vadd.f32 %v240, %v241
  %v243 = vrcp.pop 32.0
  %v244 = vmul.f32 %v242, %v243
  %v245 = vsub.f32 %v215, %v244
  %v246 = vsub.f32 %v218, %v244
  %v247 = vsub.f32 %v223, %v244
  %v248 = vsub.f32 %v226, %v244
  %v249 = vmul.f32 %v245, %v245
  %v250 = vmul.f32 %v246, %v246
  %v251 = vmul.f32 %v247, %v247
  %v252 = vmul.f32 %v248, %v248
  %v253 = vsel %vm229, %v249, 0.0
  %v254 = vsel %vm229, %v250, 0.0
  %v255 = vadd.f32 %v253, %v254
  %v256 = vsel %vm229, %v251, 0.0
  %v257 = vadd.f32 %v255, %v256
  %v258 = vsel %vm229, %v252, 0.0
  %v259 = vadd.f32 %v257, %v258
  %v260 = vrot.slane %v259, 4
  %v261 = vadd.f32 %v259, %v260
  %v262 = vrot.slane %v261, 2
  %v263 = vadd.f32 %v261, %v262
  %v264 = vrot.slane %v263, 1
  %v265 = vadd.f32 %v263, %v264
  %v266 = vmul.f32 %v265, %v243
  %v267 = vld [vmem:[%s3] sm:$0x1]
  %v268 = vadd.f32 %v266, 1e-05
  %v269 = vrsqrt.pop %v268
  %v270 = vmul.f32 %v267, %v269
  %v272 = vlaneseq
  %v273 = vshrl.u32 %v272, 7
  %v274 = vsub.s32 0, %v273
  %v275 = vrot.slane %v270, %v274
  %v277 = vmul.f32 %v245, %v275
  %v278 = vmul.f32 %v246, %v275
  %v279 = vmul.f32 %v247, %v275
  %v280 = vmul.f32 %v248, %v275
  %v281 = vld [vmem:[%s4] sm:$0x1]
  %v283 = vlaneseq
  %v284 = vshrl.u32 %v283, 7
  %v285 = vsub.s32 0, %v284
  %v286 = vrot.slane %v281, %v285
  %v288 = vadd.f32 %v277, %v286
  %v289 = vadd.f32 %v278, %v286
  %v290 = vadd.f32 %v279, %v286
  %v291 = vadd.f32 %v280, %v286
  %v292 = vmax.f32 %v288, 0.0
  %v293 = vmax.f32 %v289, 0.0
  %v294 = vmax.f32 %v290, 0.0
  %v295 = vmax.f32 %v291, 0.0
  %296 = vst.msk [vmem:[%s5] sm:$0xff] %vm229, %v292
  %297 = vst.msk [vmem:[%s5 + $0x8] sm:$0xff] %vm229, %v293
  %298 = vst.msk [vmem:[%s5 + $0x10] sm:$0xff] %vm229, %v294
  %299 = vst.msk [vmem:[%s5 + $0x18] sm:$0xff] %vm229, %v295
  // Predicated region
  $region22: #{vae_forward.17} parent=0 // pred_check
    _
  $region23: #{vae_forward.17} parent=0 // pred_check_branch
    %301 = sbr.rel (0) target = $region25
  $region24: #{vae_forward.17} parent=0 // pred_region
    _
  $region25: #{vae_forward.17} parent=0 // pred_fallthru
    _
  // Predicated region
  $region26: #{vae_forward.17} parent=0 // pred_check
    _
  $region27: #{vae_forward.17} parent=0 // pred_check_branch
    %303 = sbr.rel (0) target = $region29
  $region28: #{vae_forward.17} parent=0 // pred_region
    _
  $region29: #{vae_forward.17} parent=0 // pred_fallthru
    _

// kernel: vae_forward.18
$region0: #{vae_forward.18}
  #allocation0 [shape = 'u32[]', space=smem, size = 0x4, offset = 0x4, fixed_abs, tag = 'smem constant byte address 0x4 - core index']
  #allocation1 [shape = 'u32[144,128]{1,0:T(1,128)}', space=vmem, size = 0x12000, scoped, tag = 'internal scratch']
  %s0 = inlined_call_operand.vmem [shape: bf16[32,144], index: 0, kind: input, shape index: {}]
  %s1 = inlined_call_operand.vmem [shape: bf16[144,16], index: 1, kind: input, shape index: {}]
  %s2 = inlined_call_operand.vmem [shape: f32[1,16], index: 2, kind: input, shape index: {}]
  %s3 = inlined_call_operand.vmem [shape: f32[1,16], index: 3, kind: input, shape index: {}]
  %s4 = inlined_call_operand.vmem [shape: f32[1,16], index: 4, kind: input, shape index: {}]
  %s5 = inlined_call_operand.vmem [shape: f32[32,16], index: 5, kind: output, shape index: {}]
  %s6 = sld [smem:[#allocation0]]
  $region30: #{vae_forward.18} parent=0
    _
  %s8 = ssub.s32 1, %s6
  %s9 = scalar_select 0, %s8, %s6
  // Predicated region
  $region2: #{vae_forward.18} parent=0 // pred_check
    _
  $region3: #{vae_forward.18} parent=0 // pred_check_branch
    %11 = sbr.rel (0) target = $region5
  $region4: #{vae_forward.18} parent=0 // pred_region
    _
  $region5: #{vae_forward.18} parent=0 // pred_fallthru
    _
  // Predicated region
  $region6: #{vae_forward.18} parent=0 // pred_check
    _
  $region7: #{vae_forward.18} parent=0 // pred_check_branch
    %13 = sbr.rel (0) target = $region9
  $region8: #{vae_forward.18} parent=0 // pred_region
    _
  $region9: #{vae_forward.18} parent=0 // pred_fallthru
    _
  // Predicated region
  $region10: #{vae_forward.18} parent=0 // pred_check
    _
  $region11: #{vae_forward.18} parent=0 // pred_check_branch
    %15 = sbr.rel (0) target = $region13
  $region12: #{vae_forward.18} parent=0 // pred_region
    _
  $region13: #{vae_forward.18} parent=0 // pred_fallthru
    _
  // Predicated region
  $region14: #{vae_forward.18} parent=0 // pred_check
    _
  $region15: #{vae_forward.18} parent=0 // pred_check_branch
    %17 = sbr.rel (0) target = $region17
  $region16: #{vae_forward.18} parent=0 // pred_region
    _
  $region17: #{vae_forward.18} parent=0 // pred_fallthru
    _
  // Predicated region
  $region18: #{vae_forward.18} parent=0 // pred_check
    _
  $region19: #{vae_forward.18} parent=0 // pred_check_branch
    %19 = sbr.rel (0) target = $region21
  $region20: #{vae_forward.18} parent=0 // pred_region
    _
  $region21: #{vae_forward.18} parent=0 // pred_fallthru
    _
  %v21 = vld [vmem:[%s0] sm:$0xff]
  %v22 = vld [vmem:[%s0 + $0x8] sm:$0xff]
  %v23 = vld [vmem:[%s0 + $0x10] sm:$0xff]
  %v24 = vld [vmem:[%s0 + $0x18] sm:$0xff]
  %v25 = vld [vmem:[%s1] sm:$0xf]
  %v26 = vld [vmem:[%s1 + $0x4] sm:$0xf]
  %v27 = vld [vmem:[%s1 + $0x8] sm:$0xf]
  %v28 = vld [vmem:[%s1 + $0xc] sm:$0xf]
  %v29 = vld [vmem:[%s1 + $0x10] sm:$0xf]
  %v30 = vld [vmem:[%s1 + $0x14] sm:$0xf]
  %v31 = vld [vmem:[%s1 + $0x18] sm:$0xf]
  %v32 = vld [vmem:[%s1 + $0x1c] sm:$0xf]
  %v33 = vld [vmem:[%s1 + $0x20] sm:$0xf]
  %v34 = vld [vmem:[%s1 + $0x24] sm:$0xf]
  %v35 = vld [vmem:[%s1 + $0x28] sm:$0xf]
  %v36 = vld [vmem:[%s1 + $0x2c] sm:$0xf]
  %v37 = vld [vmem:[%s1 + $0x30] sm:$0xf]
  %v38 = vld [vmem:[%s1 + $0x34] sm:$0xf]
  %v39 = vld [vmem:[%s1 + $0x38] sm:$0xf]
  %v40 = vld [vmem:[%s1 + $0x3c] sm:$0xf]
  %v41 = vld [vmem:[%s1 + $0x40] sm:$0xf]
  %v42 = vld [vmem:[%s1 + $0x44] sm:$0xf]
  %v43 = vld [vmem:[%s2] sm:$0x1]
  %v45 = vlaneseq
  %v46 = vshrl.u32 %v45, 7
  %v47 = vsub.s32 0, %v46
  %v48 = vrot.slane %v43, %v47
  %v54 = vunpack.c.l.b16 %v21
  %v55 = vunpack.c.h.b16 %v21
  %v56 = vunpack.c.l.b16 %v22
  %v57 = vunpack.c.h.b16 %v22
  %v58 = vunpack.c.l.b16 %v23
  %v59 = vunpack.c.h.b16 %v23
  %v60 = vunpack.c.l.b16 %v24
  %v61 = vunpack.c.h.b16 %v24
  %v62 = vpack.c.b16 %v56, %v54
  %v63 = vpack.c.b16 %v57, %v55
  %v64 = vpack.c.b16 %v60, %v58
  %v65 = vpack.c.b16 %v61, %v59
  %v86 = vunpack.c.l.b16 %v25
  %v87 = vunpack.c.l.b16 %v26
  %v88 = vunpack.c.l.b16 %v27
  %v89 = vunpack.c.l.b16 %v28
  %v90 = vunpack.c.l.b16 %v29
  %v91 = vunpack.c.l.b16 %v30
  %v92 = vunpack.c.l.b16 %v31
  %v93 = vunpack.c.l.b16 %v32
  %v94 = vunpack.c.l.b16 %v33
  %v95 = vunpack.c.l.b16 %v34
  %v96 = vunpack.c.l.b16 %v35
  %v97 = vunpack.c.l.b16 %v36
  %v98 = vunpack.c.l.b16 %v37
  %v99 = vunpack.c.l.b16 %v38
  %v100 = vunpack.c.l.b16 %v39
  %v101 = vunpack.c.l.b16 %v40
  %v102 = vunpack.c.l.b16 %v41
  %v103 = vunpack.c.l.b16 %v42
  %v104 = vpack.c.b16 %v87, %v86
  %v105 = vpack.c.b16 %v89, %v88
  %v106 = vpack.c.b16 %v91, %v90
  %v107 = vpack.c.b16 %v93, %v92
  %v108 = vpack.c.b16 %v95, %v94
  %v109 = vpack.c.b16 %v97, %v96
  %v110 = vpack.c.b16 %v99, %v98
  %v111 = vpack.c.b16 %v101, %v100
  %v112 = vpack.c.b16 %v103, %v102
  %vm122 = vcmask 130048
  %v124 = vsel %vm122, %v63, 0
  %v127 = vsel %vm122, %v65, 0
  %129 = vmatprep.subr.bf16.mxu0 0
  %130 = vmatpush1.bf16.msra.mxu0 %v104
  %131 = vmatprep.subr.bf16.mxu0 0
  %132 = vmatpush1.bf16.msra.mxu0 %v105
  %133 = vmatprep.subr.bf16.mxu0 0
  %134 = vmatpush1.bf16.msra.mxu0 %v106
  %135 = vmatprep.subr.bf16.mxu0 0
  %136 = vmatpush1.bf16.msra.mxu0 %v107
  %137 = vmatprep.subr.bf16.mxu0 0
  %138 = vmatpush1.bf16.msra.mxu0 %v108
  %139 = vmatprep.subr.bf16.mxu0 0
  %140 = vmatpush1.bf16.msra.mxu0 %v109
  %141 = vmatprep.subr.bf16.mxu0 0
  %142 = vmatpush1.bf16.msra.mxu0 %v110
  %143 = vmatprep.subr.bf16.mxu0 0
  %144 = vmatpush1.bf16.msra.mxu0 %v111
  %145 = vmatprep.subr.bf16.mxu0 0
  %146 = vmatpush1.bf16.msra.mxu0 %v112
  %147 = vmatprep.subr.bf16.mxu0 0
  %148 = vmatpush1.bf16.msra.mxu0 0
  %149 = vmatprep.subr.bf16.mxu0 0
  %150 = vmatpush1.bf16.msra.mxu0 0
  %151 = vmatprep.subr.bf16.mxu0 0
  %152 = vmatpush1.bf16.msra.mxu0 0
  %153 = vmatprep.subr.bf16.mxu0 0
  %154 = vmatpush1.bf16.msra.mxu0 0
  %155 = vmatprep.subr.bf16.mxu0 0
  %156 = vmatpush1.bf16.msra.mxu0 0
  %157 = vmatprep.subr.bf16.mxu0 0
  %158 = vmatpush1.bf16.msra.mxu0 0
  %159 = vmatprep.subr.bf16.mxu0 0
  %160 = vmatpush1.bf16.msra.mxu0 0
  %161 = vmatprep.mubr.bf16.mxu0 %v124
  %162 = vmatmul.mubr.bf16.gmra.mrb[0].mxu0 %v62
  %v163 = vpop.f32.mrb[0].mxu0
  %v164 = vadd.f32 %v48, %v163
  %v165 = vpop.f32.mrb[0].mxu0
  %v166 = vpop.f32.mrb[0].mxu0
  %v167 = vadd.f32 %v48, %v166
  %v168 = vpop.f32.mrb[0].mxu0
  %169 = vmatprep.mubr.bf16.mxu0 %v127
  %170 = vmatmul.mubr.bf16.gmra.mrb[0].mxu0 %v64
  %v171 = vpop.f32.mrb[0].mxu0
  %v172 = vadd.f32 %v48, %v171
  %v173 = vpop.f32.mrb[0].mxu0
  %v174 = vpop.f32.mrb[0].mxu0
  %v175 = vadd.f32 %v48, %v174
  %v176 = vpop.f32.mrb[0].mxu0
  %177 = vdwg.mxu0
  %v178 = vsel %vm122, %v164, 0.0
  %v179 = vsel %vm122, %v167, 0.0
  %v180 = vadd.f32 %v178, %v179
  %v181 = vsel %vm122, %v172, 0.0
  %v182 = vadd.f32 %v180, %v181
  %v183 = vsel %vm122, %v175, 0.0
  %v184 = vadd.f32 %v182, %v183
  %v185 = vrot.slane %v184, 4
  %v186 = vadd.f32 %v184, %v185
  %v187 = vrot.slane %v186, 2
  %v188 = vadd.f32 %v186, %v187
  %v189 = vrot.slane %v188, 1
  %v190 = vadd.f32 %v188, %v189
  %v191 = vrcp.pop 32.0
  %v192 = vmul.f32 %v190, %v191
  %v193 = vsub.f32 %v164, %v192
  %v194 = vsub.f32 %v167, %v192
  %v195 = vsub.f32 %v172, %v192
  %v196 = vsub.f32 %v175, %v192
  %v197 = vmul.f32 %v193, %v193
  %v198 = vmul.f32 %v194, %v194
  %v199 = vmul.f32 %v195, %v195
  %v200 = vmul.f32 %v196, %v196
  %v201 = vsel %vm122, %v197, 0.0
  %v202 = vsel %vm122, %v198, 0.0
  %v203 = vadd.f32 %v201, %v202
  %v204 = vsel %vm122, %v199, 0.0
  %v205 = vadd.f32 %v203, %v204
  %v206 = vsel %vm122, %v200, 0.0
  %v207 = vadd.f32 %v205, %v206
  %v208 = vrot.slane %v207, 4
  %v209 = vadd.f32 %v207, %v208
  %v210 = vrot.slane %v209, 2
  %v211 = vadd.f32 %v209, %v210
  %v212 = vrot.slane %v211, 1
  %v213 = vadd.f32 %v211, %v212
  %v214 = vmul.f32 %v213, %v191
  %v215 = vld [vmem:[%s3] sm:$0x1]
  %v216 = vadd.f32 %v214, 1e-05
  %v217 = vrsqrt.pop %v216
  %v218 = vmul.f32 %v215, %v217
  %v220 = vlaneseq
  %v221 = vshrl.u32 %v220, 7
  %v222 = vsub.s32 0, %v221
  %v223 = vrot.slane %v218, %v222
  %v225 = vmul.f32 %v193, %v223
  %v226 = vmul.f32 %v194, %v223
  %v227 = vmul.f32 %v195, %v223
  %v228 = vmul.f32 %v196, %v223
  %v229 = vld [vmem:[%s4] sm:$0x1]
  %v231 = vlaneseq
  %v232 = vshrl.u32 %v231, 7
  %v233 = vsub.s32 0, %v232
  %v234 = vrot.slane %v229, %v233
  %v236 = vadd.f32 %v225, %v234
  %v237 = vadd.f32 %v226, %v234
  %v238 = vadd.f32 %v227, %v234
  %v239 = vadd.f32 %v228, %v234
  %240 = vst.msk [vmem:[%s5] sm:$0xff] %vm122, %v236
  %241 = vst.msk [vmem:[%s5 + $0x8] sm:$0xff] %vm122, %v237
  %242 = vst.msk [vmem:[%s5 + $0x10] sm:$0xff] %vm122, %v238
  %243 = vst.msk [vmem:[%s5 + $0x18] sm:$0xff] %vm122, %v239
  // Predicated region
  $region22: #{vae_forward.18} parent=0 // pred_check
    _
  $region23: #{vae_forward.18} parent=0 // pred_check_branch
    %245 = sbr.rel (0) target = $region25
  $region24: #{vae_forward.18} parent=0 // pred_region
    _
  $region25: #{vae_forward.18} parent=0 // pred_fallthru
    _
  // Predicated region
  $region26: #{vae_forward.18} parent=0 // pred_check
    _
  $region27: #{vae_forward.18} parent=0 // pred_check_branch
    %247 = sbr.rel (0) target = $region29
  $region28: #{vae_forward.18} parent=0 // pred_region
    _
  $region29: #{vae_forward.18} parent=0 // pred_fallthru
    _

// kernel: vae_forward.20
$region0: #{vae_forward.20}
  #allocation0 [shape = 'u32[]', space=smem, size = 0x4, offset = 0x4, fixed_abs, tag = 'smem constant byte address 0x4 - core index']
  #allocation1 [shape = 'u32[144,128]{1,0:T(1,128)}', space=vmem, size = 0x12000, scoped, tag = 'internal scratch']
  %s0 = inlined_call_operand.vmem [shape: bf16[32,32], index: 0, kind: input, shape index: {}]
  %s1 = inlined_call_operand.vmem [shape: bf16[32,16], index: 1, kind: input, shape index: {}]
  %s2 = inlined_call_operand.vmem [shape: f32[1,16], index: 2, kind: input, shape index: {}]
  %s3 = inlined_call_operand.vmem [shape: f32[1,16], index: 3, kind: input, shape index: {}]
  %s4 = inlined_call_operand.vmem [shape: f32[1,16], index: 4, kind: input, shape index: {}]
  %s5 = inlined_call_operand.vmem [shape: f32[32,16], index: 5, kind: input, shape index: {}]
  %s6 = inlined_call_operand.vmem [shape: f32[32,16], index: 6, kind: output, shape index: {}]
  %s7 = sld [smem:[#allocation0]]
  $region34: #{vae_forward.20} parent=0
    _
  %s9 = ssub.s32 1, %s7
  %s10 = scalar_select 0, %s9, %s7
  // Predicated region
  $region2: #{vae_forward.20} parent=0 // pred_check
    _
  $region3: #{vae_forward.20} parent=0 // pred_check_branch
    %12 = sbr.rel (0) target = $region5
  $region4: #{vae_forward.20} parent=0 // pred_region
    _
  $region5: #{vae_forward.20} parent=0 // pred_fallthru
    _
  // Predicated region
  $region6: #{vae_forward.20} parent=0 // pred_check
    _
  $region7: #{vae_forward.20} parent=0 // pred_check_branch
    %14 = sbr.rel (0) target = $region9
  $region8: #{vae_forward.20} parent=0 // pred_region
    _
  $region9: #{vae_forward.20} parent=0 // pred_fallthru
    _
  // Predicated region
  $region10: #{vae_forward.20} parent=0 // pred_check
    _
  $region11: #{vae_forward.20} parent=0 // pred_check_branch
    %16 = sbr.rel (0) target = $region13
  $region12: #{vae_forward.20} parent=0 // pred_region
    _
  $region13: #{vae_forward.20} parent=0 // pred_fallthru
    _
  // Predicated region
  $region14: #{vae_forward.20} parent=0 // pred_check
    _
  $region15: #{vae_forward.20} parent=0 // pred_check_branch
    %18 = sbr.rel (0) target = $region17
  $region16: #{vae_forward.20} parent=0 // pred_region
    _
  $region17: #{vae_forward.20} parent=0 // pred_fallthru
    _
  // Predicated region
  $region18: #{vae_forward.20} parent=0 // pred_check
    _
  $region19: #{vae_forward.20} parent=0 // pred_check_branch
    %20 = sbr.rel (0) target = $region21
  $region20: #{vae_forward.20} parent=0 // pred_region
    _
  $region21: #{vae_forward.20} parent=0 // pred_fallthru
    _
  // Predicated region
  $region22: #{vae_forward.20} parent=0 // pred_check
    _
  $region23: #{vae_forward.20} parent=0 // pred_check_branch
    %22 = sbr.rel (0) target = $region25
  $region24: #{vae_forward.20} parent=0 // pred_region
    _
  $region25: #{vae_forward.20} parent=0 // pred_fallthru
    _
  %v24 = vld [vmem:[%s0] sm:$0xf]
  %v25 = vld [vmem:[%s0 + $0x4] sm:$0xf]
  %v26 = vld [vmem:[%s0 + $0x8] sm:$0xf]
  %v27 = vld [vmem:[%s0 + $0xc] sm:$0xf]
  %v28 = vld [vmem:[%s1] sm:$0xf]
  %v29 = vld [vmem:[%s1 + $0x4] sm:$0xf]
  %v30 = vld [vmem:[%s1 + $0x8] sm:$0xf]
  %v31 = vld [vmem:[%s1 + $0xc] sm:$0xf]
  %v32 = vld [vmem:[%s2] sm:$0x1]
  %v34 = vlaneseq
  %v35 = vshrl.u32 %v34, 7
  %v36 = vsub.s32 0, %v35
  %v37 = vrot.slane %v32, %v36
  %v43 = vunpack.c.l.b16 %v24
  %v44 = vunpack.c.l.b16 %v25
  %v45 = vunpack.c.l.b16 %v26
  %v46 = vunpack.c.l.b16 %v27
  %v47 = vpack.c.b16 %v44, %v43
  %v48 = vpack.c.b16 %v46, %v45
  %v53 = vunpack.c.l.b16 %v28
  %v54 = vunpack.c.l.b16 %v29
  %v55 = vunpack.c.l.b16 %v30
  %v56 = vunpack.c.l.b16 %v31
  %v57 = vpack.c.b16 %v54, %v53
  %v58 = vpack.c.b16 %v56, %v55
  %vm61 = vcmask 261120
  %v63 = vsel %vm61, %v47, 0
  %v66 = vsel %vm61, %v48, 0
  %68 = vmatprep.subr.bf16.mxu0 0
  %69 = vmatpush1.bf16.msra.mxu0 %v57
  %70 = vmatprep.subr.bf16.mxu0 0
  %71 = vmatpush1.bf16.msra.mxu0 %v58
  %72 = vmatprep.subr.bf16.mxu0 0
  %73 = vmatpush1.bf16.msra.mxu0 0
  %74 = vmatprep.subr.bf16.mxu0 0
  %75 = vmatpush1.bf16.msra.mxu0 0
  %76 = vmatprep.subr.bf16.mxu0 0
  %77 = vmatpush1.bf16.msra.mxu0 0
  %78 = vmatprep.subr.bf16.mxu0 0
  %79 = vmatpush1.bf16.msra.mxu0 0
  %80 = vmatprep.subr.bf16.mxu0 0
  %81 = vmatpush1.bf16.msra.mxu0 0
  %82 = vmatprep.subr.bf16.mxu0 0
  %83 = vmatpush1.bf16.msra.mxu0 0
  %84 = vmatprep.subr.bf16.mxu0 0
  %85 = vmatpush1.bf16.msra.mxu0 0
  %86 = vmatprep.subr.bf16.mxu0 0
  %87 = vmatpush1.bf16.msra.mxu0 0
  %88 = vmatprep.subr.bf16.mxu0 0
  %89 = vmatpush1.bf16.msra.mxu0 0
  %90 = vmatprep.subr.bf16.mxu0 0
  %91 = vmatpush1.bf16.msra.mxu0 0
  %92 = vmatprep.subr.bf16.mxu0 0
  %93 = vmatpush1.bf16.msra.mxu0 0
  %94 = vmatprep.subr.bf16.mxu0 0
  %95 = vmatpush1.bf16.msra.mxu0 0
  %96 = vmatprep.subr.bf16.mxu0 0
  %97 = vmatpush1.bf16.msra.mxu0 0
  %98 = vmatprep.subr.bf16.mxu0 0
  %99 = vmatpush1.bf16.msra.mxu0 0
  %100 = vmatprep.mubr.bf16.mxu0 0
  %101 = vmatmul.mubr.bf16.gmra.mrb[0].mxu0 %v63
  %v102 = vpop.f32.mrb[0].mxu0
  %v103 = vadd.f32 %v37, %v102
  %v104 = vpop.f32.mrb[0].mxu0
  %v105 = vpop.f32.mrb[0].mxu0
  %v106 = vadd.f32 %v37, %v105
  %v107 = vpop.f32.mrb[0].mxu0
  %108 = vmatprep.mubr.bf16.mxu0 0
  %109 = vmatmul.mubr.bf16.gmra.mrb[0].mxu0 %v66
  %v110 = vpop.f32.mrb[0].mxu0
  %v111 = vadd.f32 %v37, %v110
  %v112 = vpop.f32.mrb[0].mxu0
  %v113 = vpop.f32.mrb[0].mxu0
  %v114 = vadd.f32 %v37, %v113
  %v115 = vpop.f32.mrb[0].mxu0
  %116 = vdwg.mxu0
  %vm117 = vcmask 130048
  %v118 = vsel %vm117, %v103, 0.0
  %v119 = vsel %vm117, %v106, 0.0
  %v120 = vadd.f32 %v118, %v119
  %v121 = vsel %vm117, %v111, 0.0
  %v122 = vadd.f32 %v120, %v121
  %v123 = vsel %vm117, %v114, 0.0
  %v124 = vadd.f32 %v122, %v123
  %v125 = vrot.slane %v124, 4
  %v126 = vadd.f32 %v124, %v125
  %v127 = vrot.slane %v126, 2
  %v128 = vadd.f32 %v126, %v127
  %v129 = vrot.slane %v128, 1
  %v130 = vadd.f32 %v128, %v129
  %v131 = vrcp.pop 32.0
  %v132 = vmul.f32 %v130, %v131
  %v133 = vsub.f32 %v103, %v132
  %v134 = vsub.f32 %v106, %v132
  %v135 = vsub.f32 %v111, %v132
  %v136 = vsub.f32 %v114, %v132
  %v137 = vmul.f32 %v133, %v133
  %v138 = vmul.f32 %v134, %v134
  %v139 = vmul.f32 %v135, %v135
  %v140 = vmul.f32 %v136, %v136
  %v141 = vsel %vm117, %v137, 0.0
  %v142 = vsel %vm117, %v138, 0.0
  %v143 = vadd.f32 %v141, %v142
  %v144 = vsel %vm117, %v139, 0.0
  %v145 = vadd.f32 %v143, %v144
  %v146 = vsel %vm117, %v140, 0.0
  %v147 = vadd.f32 %v145, %v146
  %v148 = vrot.slane %v147, 4
  %v149 = vadd.f32 %v147, %v148
  %v150 = vrot.slane %v149, 2
  %v151 = vadd.f32 %v149, %v150
  %v152 = vrot.slane %v151, 1
  %v153 = vadd.f32 %v151, %v152
  %v154 = vmul.f32 %v153, %v131
  %v155 = vld [vmem:[%s3] sm:$0x1]
  %v156 = vadd.f32 %v154, 1e-05
  %v157 = vrsqrt.pop %v156
  %v158 = vmul.f32 %v155, %v157
  %v160 = vlaneseq
  %v161 = vshrl.u32 %v160, 7
  %v162 = vsub.s32 0, %v161
  %v163 = vrot.slane %v158, %v162
  %v165 = vmul.f32 %v133, %v163
  %v166 = vmul.f32 %v134, %v163
  %v167 = vmul.f32 %v135, %v163
  %v168 = vmul.f32 %v136, %v163
  %v169 = vld [vmem:[%s4] sm:$0x1]
  %v171 = vlaneseq
  %v172 = vshrl.u32 %v171, 7
  %v173 = vsub.s32 0, %v172
  %v174 = vrot.slane %v169, %v173
  %v176 = vadd.f32 %v165, %v174
  %v177 = vadd.f32 %v166, %v174
  %v178 = vadd.f32 %v167, %v174
  %v179 = vadd.f32 %v168, %v174
  %v180 = vld [vmem:[%s5] sm:$0xff]
  %v181 = vld [vmem:[%s5 + $0x8] sm:$0xff]
  %v182 = vld [vmem:[%s5 + $0x10] sm:$0xff]
  %v183 = vld [vmem:[%s5 + $0x18] sm:$0xff]
  %v184 = vadd.f32 %v180, %v176
  %v185 = vadd.f32 %v181, %v177
  %v186 = vadd.f32 %v182, %v178
  %v187 = vadd.f32 %v183, %v179
  %188 = vst.msk [vmem:[%s6] sm:$0xff] %vm117, %v184
  %189 = vst.msk [vmem:[%s6 + $0x8] sm:$0xff] %vm117, %v185
  %190 = vst.msk [vmem:[%s6 + $0x10] sm:$0xff] %vm117, %v186
  %191 = vst.msk [vmem:[%s6 + $0x18] sm:$0xff] %vm117, %v187
  // Predicated region
  $region26: #{vae_forward.20} parent=0 // pred_check
    _
  $region27: #{vae_forward.20} parent=0 // pred_check_branch
    %193 = sbr.rel (0) target = $region29
  $region28: #{vae_forward.20} parent=0 // pred_region
    _
  $region29: #{vae_forward.20} parent=0 // pred_fallthru
    _
  // Predicated region
  $region30: #{vae_forward.20} parent=0 // pred_check
    _
  $region31: #{vae_forward.20} parent=0 // pred_check_branch
    %195 = sbr.rel (0) target = $region33
  $region32: #{vae_forward.20} parent=0 // pred_region
    _
  $region33: #{vae_forward.20} parent=0 // pred_fallthru
    _

// kernel: vae_forward.19
$region0: #{vae_forward.19}
  #allocation0 [shape = 'u32[]', space=smem, size = 0x4, offset = 0x4, fixed_abs, tag = 'smem constant byte address 0x4 - core index']
  #allocation1 [shape = 'u32[144,128]{1,0:T(1,128)}', space=vmem, size = 0x12000, scoped, tag = 'internal scratch']
  %s0 = inlined_call_operand.vmem [shape: bf16[32,144], index: 0, kind: input, shape index: {}]
  %s1 = inlined_call_operand.vmem [shape: bf16[144,32], index: 1, kind: input, shape index: {}]
  %s2 = inlined_call_operand.vmem [shape: f32[1,32], index: 2, kind: input, shape index: {}]
  %s3 = inlined_call_operand.vmem [shape: f32[1,32], index: 3, kind: input, shape index: {}]
  %s4 = inlined_call_operand.vmem [shape: f32[1,32], index: 4, kind: input, shape index: {}]
  %s5 = inlined_call_operand.vmem [shape: f32[32,32], index: 5, kind: output, shape index: {}]
  %s6 = sld [smem:[#allocation0]]
  $region30: #{vae_forward.19} parent=0
    _
  %s8 = ssub.s32 1, %s6
  %s9 = scalar_select 0, %s8, %s6
  // Predicated region
  $region2: #{vae_forward.19} parent=0 // pred_check
    _
  $region3: #{vae_forward.19} parent=0 // pred_check_branch
    %11 = sbr.rel (0) target = $region5
  $region4: #{vae_forward.19} parent=0 // pred_region
    _
  $region5: #{vae_forward.19} parent=0 // pred_fallthru
    _
  // Predicated region
  $region6: #{vae_forward.19} parent=0 // pred_check
    _
  $region7: #{vae_forward.19} parent=0 // pred_check_branch
    %13 = sbr.rel (0) target = $region9
  $region8: #{vae_forward.19} parent=0 // pred_region
    _
  $region9: #{vae_forward.19} parent=0 // pred_fallthru
    _
  // Predicated region
  $region10: #{vae_forward.19} parent=0 // pred_check
    _
  $region11: #{vae_forward.19} parent=0 // pred_check_branch
    %15 = sbr.rel (0) target = $region13
  $region12: #{vae_forward.19} parent=0 // pred_region
    _
  $region13: #{vae_forward.19} parent=0 // pred_fallthru
    _
  // Predicated region
  $region14: #{vae_forward.19} parent=0 // pred_check
    _
  $region15: #{vae_forward.19} parent=0 // pred_check_branch
    %17 = sbr.rel (0) target = $region17
  $region16: #{vae_forward.19} parent=0 // pred_region
    _
  $region17: #{vae_forward.19} parent=0 // pred_fallthru
    _
  // Predicated region
  $region18: #{vae_forward.19} parent=0 // pred_check
    _
  $region19: #{vae_forward.19} parent=0 // pred_check_branch
    %19 = sbr.rel (0) target = $region21
  $region20: #{vae_forward.19} parent=0 // pred_region
    _
  $region21: #{vae_forward.19} parent=0 // pred_fallthru
    _
  %v21 = vld [vmem:[%s0] sm:$0xff]
  %v22 = vld [vmem:[%s0 + $0x8] sm:$0xff]
  %v23 = vld [vmem:[%s0 + $0x10] sm:$0xff]
  %v24 = vld [vmem:[%s0 + $0x18] sm:$0xff]
  %v25 = vld [vmem:[%s1] sm:$0xf]
  %v26 = vld [vmem:[%s1 + $0x4] sm:$0xf]
  %v27 = vld [vmem:[%s1 + $0x8] sm:$0xf]
  %v28 = vld [vmem:[%s1 + $0xc] sm:$0xf]
  %v29 = vld [vmem:[%s1 + $0x10] sm:$0xf]
  %v30 = vld [vmem:[%s1 + $0x14] sm:$0xf]
  %v31 = vld [vmem:[%s1 + $0x18] sm:$0xf]
  %v32 = vld [vmem:[%s1 + $0x1c] sm:$0xf]
  %v33 = vld [vmem:[%s1 + $0x20] sm:$0xf]
  %v34 = vld [vmem:[%s1 + $0x24] sm:$0xf]
  %v35 = vld [vmem:[%s1 + $0x28] sm:$0xf]
  %v36 = vld [vmem:[%s1 + $0x2c] sm:$0xf]
  %v37 = vld [vmem:[%s1 + $0x30] sm:$0xf]
  %v38 = vld [vmem:[%s1 + $0x34] sm:$0xf]
  %v39 = vld [vmem:[%s1 + $0x38] sm:$0xf]
  %v40 = vld [vmem:[%s1 + $0x3c] sm:$0xf]
  %v41 = vld [vmem:[%s1 + $0x40] sm:$0xf]
  %v42 = vld [vmem:[%s1 + $0x44] sm:$0xf]
  %v43 = vld [vmem:[%s2] sm:$0x1]
  %v45 = vlaneseq
  %v46 = vshrl.u32 %v45, 7
  %v47 = vsub.s32 0, %v46
  %v48 = vrot.slane %v43, %v47
  %v54 = vunpack.c.l.b16 %v21
  %v55 = vunpack.c.h.b16 %v21
  %v56 = vunpack.c.l.b16 %v22
  %v57 = vunpack.c.h.b16 %v22
  %v58 = vunpack.c.l.b16 %v23
  %v59 = vunpack.c.h.b16 %v23
  %v60 = vunpack.c.l.b16 %v24
  %v61 = vunpack.c.h.b16 %v24
  %v62 = vpack.c.b16 %v56, %v54
  %v63 = vpack.c.b16 %v57, %v55
  %v64 = vpack.c.b16 %v60, %v58
  %v65 = vpack.c.b16 %v61, %v59
  %v86 = vunpack.c.l.b16 %v25
  %v87 = vunpack.c.l.b16 %v26
  %v88 = vunpack.c.l.b16 %v27
  %v89 = vunpack.c.l.b16 %v28
  %v90 = vunpack.c.l.b16 %v29
  %v91 = vunpack.c.l.b16 %v30
  %v92 = vunpack.c.l.b16 %v31
  %v93 = vunpack.c.l.b16 %v32
  %v94 = vunpack.c.l.b16 %v33
  %v95 = vunpack.c.l.b16 %v34
  %v96 = vunpack.c.l.b16 %v35
  %v97 = vunpack.c.l.b16 %v36
  %v98 = vunpack.c.l.b16 %v37
  %v99 = vunpack.c.l.b16 %v38
  %v100 = vunpack.c.l.b16 %v39
  %v101 = vunpack.c.l.b16 %v40
  %v102 = vunpack.c.l.b16 %v41
  %v103 = vunpack.c.l.b16 %v42
  %v104 = vpack.c.b16 %v87, %v86
  %v105 = vpack.c.b16 %v89, %v88
  %v106 = vpack.c.b16 %v91, %v90
  %v107 = vpack.c.b16 %v93, %v92
  %v108 = vpack.c.b16 %v95, %v94
  %v109 = vpack.c.b16 %v97, %v96
  %v110 = vpack.c.b16 %v99, %v98
  %v111 = vpack.c.b16 %v101, %v100
  %v112 = vpack.c.b16 %v103, %v102
  %vm122 = vcmask 130048
  %v124 = vsel %vm122, %v63, 0
  %v127 = vsel %vm122, %v65, 0
  %129 = vmatprep.subr.bf16.mxu0 0
  %130 = vmatpush1.bf16.msra.mxu0 %v104
  %131 = vmatprep.subr.bf16.mxu0 0
  %132 = vmatpush1.bf16.msra.mxu0 %v105
  %133 = vmatprep.subr.bf16.mxu0 0
  %134 = vmatpush1.bf16.msra.mxu0 %v106
  %135 = vmatprep.subr.bf16.mxu0 0
  %136 = vmatpush1.bf16.msra.mxu0 %v107
  %137 = vmatprep.subr.bf16.mxu0 0
  %138 = vmatpush1.bf16.msra.mxu0 %v108
  %139 = vmatprep.subr.bf16.mxu0 0
  %140 = vmatpush1.bf16.msra.mxu0 %v109
  %141 = vmatprep.subr.bf16.mxu0 0
  %142 = vmatpush1.bf16.msra.mxu0 %v110
  %143 = vmatprep.subr.bf16.mxu0 0
  %144 = vmatpush1.bf16.msra.mxu0 %v111
  %145 = vmatprep.subr.bf16.mxu0 0
  %146 = vmatpush1.bf16.msra.mxu0 %v112
  %147 = vmatprep.subr.bf16.mxu0 0
  %148 = vmatpush1.bf16.msra.mxu0 0
  %149 = vmatprep.subr.bf16.mxu0 0
  %150 = vmatpush1.bf16.msra.mxu0 0
  %151 = vmatprep.subr.bf16.mxu0 0
  %152 = vmatpush1.bf16.msra.mxu0 0
  %153 = vmatprep.subr.bf16.mxu0 0
  %154 = vmatpush1.bf16.msra.mxu0 0
  %155 = vmatprep.subr.bf16.mxu0 0
  %156 = vmatpush1.bf16.msra.mxu0 0
  %157 = vmatprep.subr.bf16.mxu0 0
  %158 = vmatpush1.bf16.msra.mxu0 0
  %159 = vmatprep.subr.bf16.mxu0 0
  %160 = vmatpush1.bf16.msra.mxu0 0
  %161 = vmatprep.mubr.bf16.mxu0 %v124
  %162 = vmatmul.mubr.bf16.gmra.mrb[0].mxu0 %v62
  %v163 = vpop.f32.mrb[0].mxu0
  %v164 = vadd.f32 %v48, %v163
  %v165 = vpop.f32.mrb[0].mxu0
  %v166 = vpop.f32.mrb[0].mxu0
  %v167 = vadd.f32 %v48, %v166
  %v168 = vpop.f32.mrb[0].mxu0
  %169 = vmatprep.mubr.bf16.mxu0 %v127
  %170 = vmatmul.mubr.bf16.gmra.mrb[0].mxu0 %v64
  %v171 = vpop.f32.mrb[0].mxu0
  %v172 = vadd.f32 %v48, %v171
  %v173 = vpop.f32.mrb[0].mxu0
  %v174 = vpop.f32.mrb[0].mxu0
  %v175 = vadd.f32 %v48, %v174
  %v176 = vpop.f32.mrb[0].mxu0
  %177 = vdwg.mxu0
  %vm178 = vcmask 261120
  %v179 = vsel %vm178, %v164, 0.0
  %v180 = vsel %vm178, %v167, 0.0
  %v181 = vadd.f32 %v179, %v180
  %v182 = vsel %vm178, %v172, 0.0
  %v183 = vadd.f32 %v181, %v182
  %v184 = vsel %vm178, %v175, 0.0
  %v185 = vadd.f32 %v183, %v184
  %v186 = vrot.slane %v185, 4
  %v187 = vadd.f32 %v185, %v186
  %v188 = vrot.slane %v187, 2
  %v189 = vadd.f32 %v187, %v188
  %v190 = vrot.slane %v189, 1
  %v191 = vadd.f32 %v189, %v190
  %v192 = vrcp.pop 32.0
  %v193 = vmul.f32 %v191, %v192
  %v194 = vsub.f32 %v164, %v193
  %v195 = vsub.f32 %v167, %v193
  %v196 = vsub.f32 %v172, %v193
  %v197 = vsub.f32 %v175, %v193
  %v198 = vmul.f32 %v194, %v194
  %v199 = vmul.f32 %v195, %v195
  %v200 = vmul.f32 %v196, %v196
  %v201 = vmul.f32 %v197, %v197
  %v202 = vsel %vm178, %v198, 0.0
  %v203 = vsel %vm178, %v199, 0.0
  %v204 = vadd.f32 %v202, %v203
  %v205 = vsel %vm178, %v200, 0.0
  %v206 = vadd.f32 %v204, %v205
  %v207 = vsel %vm178, %v201, 0.0
  %v208 = vadd.f32 %v206, %v207
  %v209 = vrot.slane %v208, 4
  %v210 = vadd.f32 %v208, %v209
  %v211 = vrot.slane %v210, 2
  %v212 = vadd.f32 %v210, %v211
  %v213 = vrot.slane %v212, 1
  %v214 = vadd.f32 %v212, %v213
  %v215 = vmul.f32 %v214, %v192
  %v216 = vld [vmem:[%s3] sm:$0x1]
  %v217 = vadd.f32 %v215, 1e-05
  %v218 = vrsqrt.pop %v217
  %v219 = vmul.f32 %v216, %v218
  %v221 = vlaneseq
  %v222 = vshrl.u32 %v221, 7
  %v223 = vsub.s32 0, %v222
  %v224 = vrot.slane %v219, %v223
  %v226 = vmul.f32 %v194, %v224
  %v227 = vmul.f32 %v195, %v224
  %v228 = vmul.f32 %v196, %v224
  %v229 = vmul.f32 %v197, %v224
  %v230 = vld [vmem:[%s4] sm:$0x1]
  %v232 = vlaneseq
  %v233 = vshrl.u32 %v232, 7
  %v234 = vsub.s32 0, %v233
  %v235 = vrot.slane %v230, %v234
  %v237 = vadd.f32 %v226, %v235
  %v238 = vadd.f32 %v227, %v235
  %v239 = vadd.f32 %v228, %v235
  %v240 = vadd.f32 %v229, %v235
  %v241 = vmax.f32 %v237, 0.0
  %v242 = vmax.f32 %v238, 0.0
  %v243 = vmax.f32 %v239, 0.0
  %v244 = vmax.f32 %v240, 0.0
  %245 = vst.msk [vmem:[%s5] sm:$0xff] %vm178, %v241
  %246 = vst.msk [vmem:[%s5 + $0x8] sm:$0xff] %vm178, %v242
  %247 = vst.msk [vmem:[%s5 + $0x10] sm:$0xff] %vm178, %v243
  %248 = vst.msk [vmem:[%s5 + $0x18] sm:$0xff] %vm178, %v244
  // Predicated region
  $region22: #{vae_forward.19} parent=0 // pred_check
    _
  $region23: #{vae_forward.19} parent=0 // pred_check_branch
    %250 = sbr.rel (0) target = $region25
  $region24: #{vae_forward.19} parent=0 // pred_region
    _
  $region25: #{vae_forward.19} parent=0 // pred_fallthru
    _
  // Predicated region
  $region26: #{vae_forward.19} parent=0 // pred_check
    _
  $region27: #{vae_forward.19} parent=0 // pred_check_branch
    %252 = sbr.rel (0) target = $region29
  $region28: #{vae_forward.19} parent=0 // pred_region
    _
  $region29: #{vae_forward.19} parent=0 // pred_fallthru
    _

// kernel: tile.18
$region0: #{tile.18}
  #allocation0 [shape = 's32[1]{0}', space=sflag, size = 0x4, scoped, tag = 'scoped memory for tile.18']
  %s0 = inlined_call_operand.vmem [shape: f32[8], index: 0, kind: input, shape index: {}]
  %s1 = inlined_call_operand.vmem [shape: f32[4,8], index: 1, kind: output, shape index: {}]
  // Predicated region
  $region2: #{tile.18} parent=0 // pred_check
    _
  $region3: #{tile.18} parent=0 // pred_check_branch
    %3 = sbr.rel (0) target = $region5
  $region4: #{tile.18} parent=0 // pred_region
    _
  $region5: #{tile.18} parent=0 // pred_fallthru
    _
  %v4 = vld [vmem:[%s0] ss:$0 sm:$0xff]
  %5 = vst [vmem:[%s1] sm:$0xf] %v4

// kernel: vae_forward.23
$region0: #{vae_forward.23}
  #allocation0 [shape = 'u32[]', space=smem, size = 0x4, offset = 0x4, fixed_abs, tag = 'smem constant byte address 0x4 - core index']
  #allocation1 [shape = 'u32[144,128]{1,0:T(1,128)}', space=vmem, size = 0x12000, scoped, tag = 'internal scratch']
  %s0 = inlined_call_operand.vmem [shape: bf16[32,16], index: 0, kind: input, shape index: {}]
  %s1 = inlined_call_operand.vmem [shape: bf16[16,32], index: 1, kind: input, shape index: {}]
  %s2 = inlined_call_operand.vmem [shape: f32[1,32], index: 2, kind: input, shape index: {}]
  %s3 = inlined_call_operand.vmem [shape: f32[32,16], index: 3, kind: input, shape index: {}]
  %s4 = inlined_call_operand.vmem [shape: f32[32,16], index: 4, kind: output, shape index: {0}]
  %s5 = inlined_call_operand.hbm [shape: f32[1,1], index: 5, kind: output, shape index: {1}]
  %6 = xla_tuple %s4, %s5
  %s7 = sld [smem:[#allocation0]]
  $region34: #{vae_forward.23} parent=0
    _
  %s9 = ssub.s32 1, %s7
  %s10 = scalar_select 0, %s9, %s7
  $region1: #{vae_forward.23} parent=0
    #allocation2 [shape = 'u8[512]{0}', space=vmem, size = 0x400, scoped, tag = 'output window, operand 1, single buffered']
    #allocation3 [shape = 's32[1]{0}', space=sflag, size = 0x4, scoped, tag = 'scoped memory for vae_forward.23']
    %11 = vsyncpa [#allocation3], 0
    // Predicated region
    $region2: #{vae_forward.23} parent=1 // pred_check
      _
    $region3: #{vae_forward.23} parent=1 // pred_check_branch
      %13 = sbr.rel (0) target = $region5
    $region4: #{vae_forward.23} parent=1 // pred_region
      _
    $region5: #{vae_forward.23} parent=1 // pred_fallthru
      _
    // Predicated region
    $region6: #{vae_forward.23} parent=1 // pred_check
      _
    $region7: #{vae_forward.23} parent=1 // pred_check_branch
      %15 = sbr.rel (0) target = $region9
    $region8: #{vae_forward.23} parent=1 // pred_region
      _
    $region9: #{vae_forward.23} parent=1 // pred_fallthru
      _
    // Predicated region
    $region10: #{vae_forward.23} parent=1 // pred_check
      _
    $region11: #{vae_forward.23} parent=1 // pred_check_branch
      %17 = sbr.rel (0) target = $region13
    $region12: #{vae_forward.23} parent=1 // pred_region
      _
    $region13: #{vae_forward.23} parent=1 // pred_fallthru
      _
    // Predicated region
    $region14: #{vae_forward.23} parent=1 // pred_check
      _
    $region15: #{vae_forward.23} parent=1 // pred_check_branch
      %19 = sbr.rel (0) target = $region17
    $region16: #{vae_forward.23} parent=1 // pred_region
      _
    $region17: #{vae_forward.23} parent=1 // pred_fallthru
      _
    %v21 = vld [vmem:[%s0] sm:$0xf]
    %v22 = vld [vmem:[%s0 + $0x4] sm:$0xf]
    %v23 = vld [vmem:[%s0 + $0x8] sm:$0xf]
    %v24 = vld [vmem:[%s0 + $0xc] sm:$0xf]
    %v25 = vld [vmem:[%s1] sm:$0xf]
    %v26 = vld [vmem:[%s1 + $0x4] sm:$0xf]
    %v27 = vld [vmem:[%s2] sm:$0x1]
    %v29 = vlaneseq
    %v30 = vshrl.u32 %v29, 7
    %v31 = vsub.s32 0, %v30
    %v32 = vrot.slane %v27, %v31
    %v38 = vunpack.c.l.b16 %v21
    %v39 = vunpack.c.l.b16 %v22
    %v40 = vunpack.c.l.b16 %v23
    %v41 = vunpack.c.l.b16 %v24
    %v42 = vpack.c.b16 %v39, %v38
    %v43 = vpack.c.b16 %v41, %v40
    %v46 = vunpack.c.l.b16 %v25
    %v47 = vunpack.c.l.b16 %v26
    %v48 = vpack.c.b16 %v47, %v46
    %vm50 = vcmask 130048
    %v52 = vsel %vm50, %v42, 0
    %v55 = vsel %vm50, %v43, 0
    %57 = vmatprep.subr.bf16.mxu0 0
    %58 = vmatpush1.bf16.msra.mxu0 %v48
    %59 = vmatprep.subr.bf16.mxu0 0
    %60 = vmatpush1.bf16.msra.mxu0 0
    %61 = vmatprep.subr.bf16.mxu0 0
    %62 = vmatpush1.bf16.msra.mxu0 0
    %63 = vmatprep.subr.bf16.mxu0 0
    %64 = vmatpush1.bf16.msra.mxu0 0
    %65 = vmatprep.subr.bf16.mxu0 0
    %66 = vmatpush1.bf16.msra.mxu0 0
    %67 = vmatprep.subr.bf16.mxu0 0
    %68 = vmatpush1.bf16.msra.mxu0 0
    %69 = vmatprep.subr.bf16.mxu0 0
    %70 = vmatpush1.bf16.msra.mxu0 0
    %71 = vmatprep.subr.bf16.mxu0 0
    %72 = vmatpush1.bf16.msra.mxu0 0
    %73 = vmatprep.subr.bf16.mxu0 0
    %74 = vmatpush1.bf16.msra.mxu0 0
    %75 = vmatprep.subr.bf16.mxu0 0
    %76 = vmatpush1.bf16.msra.mxu0 0
    %77 = vmatprep.subr.bf16.mxu0 0
    %78 = vmatpush1.bf16.msra.mxu0 0
    %79 = vmatprep.subr.bf16.mxu0 0
    %80 = vmatpush1.bf16.msra.mxu0 0
    %81 = vmatprep.subr.bf16.mxu0 0
    %82 = vmatpush1.bf16.msra.mxu0 0
    %83 = vmatprep.subr.bf16.mxu0 0
    %84 = vmatpush1.bf16.msra.mxu0 0
    %85 = vmatprep.subr.bf16.mxu0 0
    %86 = vmatpush1.bf16.msra.mxu0 0
    %87 = vmatprep.subr.bf16.mxu0 0
    %88 = vmatpush1.bf16.msra.mxu0 0
    %89 = vmatprep.mubr.bf16.mxu0 0
    %90 = vmatmul.mubr.bf16.gmra.mrb[0].mxu0 %v52
    %v91 = vpop.f32.mrb[0].mxu0
    %v92 = vadd.f32 %v32, %v91
    %v93 = vpop.f32.mrb[0].mxu0
    %v94 = vpop.f32.mrb[0].mxu0
    %v95 = vadd.f32 %v32, %v94
    %v96 = vpop.f32.mrb[0].mxu0
    %97 = vmatprep.mubr.bf16.mxu0 0
    %98 = vmatmul.mubr.bf16.gmra.mrb[0].mxu0 %v55
    %v99 = vpop.f32.mrb[0].mxu0
    %v100 = vadd.f32 %v32, %v99
    %v101 = vpop.f32.mrb[0].mxu0
    %v102 = vpop.f32.mrb[0].mxu0
    %v103 = vadd.f32 %v32, %v102
    %v104 = vpop.f32.mrb[0].mxu0
    %105 = vdwg.mxu0
    %v106 = vmul.f32 %v92, 0.5
    %v107 = vmul.f32 %v95, 0.5
    %v108 = vmul.f32 %v100, 0.5
    %v109 = vmul.f32 %v103, 0.5
    %v110 = vmul.f32 %v106, 1.442695
    %v111 = vpow.pop %v110
    %v112 = vmul.f32 %v107, 1.442695
    %v113 = vpow.pop %v112
    %v114 = vmul.f32 %v108, 1.442695
    %v115 = vpow.pop %v114
    %v116 = vmul.f32 %v109, 1.442695
    %v117 = vpow.pop %v116
    %v118 = vld [vmem:[%s3] sm:$0xff]
    %v119 = vld [vmem:[%s3 + $0x8] sm:$0xff]
    %v120 = vld [vmem:[%s3 + $0x10] sm:$0xff]
    %v121 = vld [vmem:[%s3 + $0x18] sm:$0xff]
    %126 = vrot.lane.b32.xlu0 %v118, 16
    %v127 = vpop.permute.xlu0 %126
    %128 = vrot.lane.b32.xlu0 %v119, 16
    %v129 = vpop.permute.xlu0 %128
    %130 = vrot.lane.b32.xlu0 %v120, 16
    %v131 = vpop.permute.xlu0 %130
    %132 = vrot.lane.b32.xlu0 %v121, 16
    %v133 = vpop.permute.xlu0 %132
    %v138 = vmul.f32 %v111, %v127
    %v139 = vmul.f32 %v113, %v129
    %v140 = vmul.f32 %v115, %v131
    %v141 = vmul.f32 %v117, %v133
    %146 = vrot.lane.b32.xlu0 %v138, 112
    %v147 = vpop.permute.xlu0 %146
    %148 = vrot.lane.b32.xlu0 %v139, 112
    %v149 = vpop.permute.xlu0 %148
    %150 = vrot.lane.b32.xlu0 %v140, 112
    %v151 = vpop.permute.xlu0 %150
    %152 = vrot.lane.b32.xlu0 %v141, 112
    %v153 = vpop.permute.xlu0 %152
    %v158 = vadd.f32 %v92, %v147
    %v159 = vadd.f32 %v95, %v149
    %v160 = vadd.f32 %v100, %v151
    %v161 = vadd.f32 %v103, %v153
    %162 = vst.msk [vmem:[%s4] sm:$0xff] %vm50, %v158
    %163 = vst.msk [vmem:[%s4 + $0x8] sm:$0xff] %vm50, %v159
    %164 = vst.msk [vmem:[%s4 + $0x10] sm:$0xff] %vm50, %v160
    %165 = vst.msk [vmem:[%s4 + $0x18] sm:$0xff] %vm50, %v161
    %v166 = vadd.f32 %v92, 1.0
    %v167 = vadd.f32 %v95, 1.0
    %v168 = vadd.f32 %v100, 1.0
    %v169 = vadd.f32 %v103, 1.0
    %v170 = vmul.f32 %v92, %v92
    %v171 = vmul.f32 %v95, %v95
    %v172 = vmul.f32 %v100, %v100
    %v173 = vmul.f32 %v103, %v103
    %178 = vrot.lane.b32.xlu0 %v170, 16
    %v179 = vpop.permute.xlu0 %178
    %180 = vrot.lane.b32.xlu0 %v171, 16
    %v181 = vpop.permute.xlu0 %180
    %182 = vrot.lane.b32.xlu0 %v172, 16
    %v183 = vpop.permute.xlu0 %182
    %184 = vrot.lane.b32.xlu0 %v173, 16
    %v185 = vpop.permute.xlu0 %184
    %v190 = vsub.f32 %v166, %v179
    %v191 = vsub.f32 %v167, %v181
    %v192 = vsub.f32 %v168, %v183
    %v193 = vsub.f32 %v169, %v185
    %v194 = vmul.f32 %v111, %v111
    %v195 = vmul.f32 %v113, %v113
    %v196 = vmul.f32 %v115, %v115
    %v197 = vmul.f32 %v117, %v117
    %v198 = vsub.f32 %v190, %v194
    %v199 = vsub.f32 %v191, %v195
    %v200 = vsub.f32 %v192, %v196
    %v201 = vsub.f32 %v193, %v197
    %206 = vrot.lane.b32.xlu0 %v198, 112
    %v207 = vpop.permute.xlu0 %206
    %208 = vrot.lane.b32.xlu0 %v199, 112
    %v209 = vpop.permute.xlu0 %208
    %210 = vrot.lane.b32.xlu0 %v200, 112
    %v211 = vpop.permute.xlu0 %210
    %212 = vrot.lane.b32.xlu0 %v201, 112
    %v213 = vpop.permute.xlu0 %212
    %v218 = vsel %vm50, %v207, 0.0
    %219 = vadd.xlane.f32.xlu0 %v218
    %v220 = vpop.xlane.xlu0 %219
    %v221 = vsel %vm50, %v209, 0.0
    %222 = vadd.xlane.f32.xlu0 %v221
    %v223 = vpop.xlane.xlu0 %222
    %v224 = vsel %vm50, %v211, 0.0
    %225 = vadd.xlane.f32.xlu0 %v224
    %v226 = vpop.xlane.xlu0 %225
    %v227 = vsel %vm50, %v213, 0.0
    %228 = vadd.xlane.f32.xlu0 %v227
    %v229 = vpop.xlane.xlu0 %228
    %v230 = vadd.f32 %v220, %v223
    %v231 = vadd.f32 %v230, %v226
    %v232 = vadd.f32 %v231, %v229
    %v233 = vrot.slane %v232, 4
    %v234 = vadd.f32 %v232, %v233
    %v235 = vrot.slane %v234, 2
    %v236 = vadd.f32 %v234, %v235
    %v237 = vrot.slane %v236, 1
    %v238 = vadd.f32 %v236, %v237
    %v239 = vmul.f32 %v238, -0.5
    %vm240 = vcmask 0
    %241 = vst.msk [vmem:[#allocation2] sm:$0x1] %vm240, %v239
    // Predicated region
    $region18: #{vae_forward.23} parent=1 // pred_check
      _
    $region19: #{vae_forward.23} parent=1 // pred_check_branch
      %243 = sbr.rel (0) target = $region21
    $region20: #{vae_forward.23} parent=1 // pred_region
      _
    $region21: #{vae_forward.23} parent=1 // pred_fallthru
      _
    // Predicated region
    $region22: #{vae_forward.23} parent=1 // pred_check
      _
    $region23: #{vae_forward.23} parent=1 // pred_check_branch
      %245 = sbr.rel (0) target = $region25
    $region24: #{vae_forward.23} parent=1 // pred_region
      %s247 = ssub.s32 16, 16
      %248 = vsyncadd [#allocation3], %s247
      %s250 = sshll.u32 [#allocation2], 4
      %s251 = int_to_ptr.vmem [resolvable:$true] %s250
      %253 = dma.vmem_to_hbm [thread:$0]  %s251, 16, %s5, [#allocation3]
    $region25: #{vae_forward.23} parent=1 // pred_fallthru
      _
    // Predicated region
    $region26: #{vae_forward.23} parent=1 // pred_check
      _
    $region27: #{vae_forward.23} parent=1 // pred_check_branch
      %255 = sbr.rel (0) target = $region29
    $region28: #{vae_forward.23} parent=1 // pred_region
      _
    $region29: #{vae_forward.23} parent=1 // pred_fallthru
      _
    // Predicated region
    $region30: #{vae_forward.23} parent=1 // pred_check
      _
    $region31: #{vae_forward.23} parent=1 // pred_check_branch
      %257 = sbr.rel (0) target = $region33
    $region32: #{vae_forward.23} parent=1 // pred_region
      %258 = dma.done [#allocation3], 16
    $region33: #{vae_forward.23} parent=1 // pred_fallthru
      _
    %259 = vsyncpa [#allocation3], 1

// kernel: tile.19
$region0: #{tile.19}
  %s0 = inlined_call_operand.vmem [shape: f32[4,8], index: 0, kind: input, shape index: {}]
  %s1 = inlined_call_operand.vmem [shape: f32[1,32], index: 1, kind: output, shape index: {}]
  $region1: #{tile.19} parent=0
    #allocation0 [shape = 'u8[4096]{0}', space=vmem, size = 0x1000, scoped, tag = 'scoped mem for output reshape']
    #allocation1 [shape = 'u8[4096]{0}', space=vmem, size = 0x1000, scoped, tag = 'scoped mem for input reshape']
    %s3 = sshllo.u32 0, 4
    %v4 = vld [vmem:[%s0] sm:%s3]
    %5 = vst [vmem:[#allocation1] sm:%s3] %v4
    %v6 = vld [vmem:[#allocation1] sm:$0x1]
    %vm7 = vcmask 64512
    %8 = vst.msk [vmem:[#allocation0] sm:$0x1] %vm7, %v6
    %s9 = scalar_lea.vmem [#allocation1], 3
    %v10 = vld [vmem:[%s9] sm:$0x1]
    %11 = vrot.lane.b32.xlu0 %v10, 24
    %v12 = vpop.permute.xlu0 %11
    %vm13 = vcmask 261312
    %14 = vst.msk [vmem:[#allocation0] sm:$0x1] %vm13, %v12
    %s15 = scalar_lea.vmem [#allocation1], 2
    %v16 = vld [vmem:[%s15] sm:$0x1]
    %17 = vrot.lane.b32.xlu0 %v16, 16
    %v18 = vpop.permute.xlu0 %17
    %vm19 = vcmask 195712
    %20 = vst.msk [vmem:[#allocation0] sm:$0x1] %vm19, %v18
    %s21 = scalar_lea.vmem [#allocation1], 1
    %v22 = vld [vmem:[%s21] sm:$0x1]
    %23 = vrot.lane.b32.xlu0 %v22, 8
    %v24 = vpop.permute.xlu0 %23
    %vm25 = vcmask 130112
    %26 = vst.msk [vmem:[#allocation0] sm:$0x1] %vm25, %v24
    %s28 = sshllo.u32 0, 1
    %v30 = vld [vmem:[#allocation0] sm:%s28]
    %s31 = sshllo.u32 0, 1
    %32 = vst [vmem:[%s1] sm:%s31] %v30

// kernel: vae_forward.24
$region0: #{vae_forward.24}
  #allocation0 [shape = 'u32[]', space=smem, size = 0x4, offset = 0x4, fixed_abs, tag = 'smem constant byte address 0x4 - core index']
  #allocation1 [shape = 'u32[144,128]{1,0:T(1,128)}', space=vmem, size = 0x12000, scoped, tag = 'internal scratch']
  %s0 = inlined_call_operand.vmem [shape: bf16[32,144], index: 0, kind: input, shape index: {}]
  %s1 = inlined_call_operand.vmem [shape: bf16[144,32], index: 1, kind: input, shape index: {}]
  %s2 = inlined_call_operand.vmem [shape: f32[1,32], index: 2, kind: input, shape index: {}]
  %s3 = inlined_call_operand.vmem [shape: f32[32,32], index: 3, kind: output, shape index: {}]
  %s4 = sld [smem:[#allocation0]]
  $region22: #{vae_forward.24} parent=0
    _
  %s6 = ssub.s32 1, %s4
  %s7 = scalar_select 0, %s6, %s4
  // Predicated region
  $region2: #{vae_forward.24} parent=0 // pred_check
    _
  $region3: #{vae_forward.24} parent=0 // pred_check_branch
    %9 = sbr.rel (0) target = $region5
  $region4: #{vae_forward.24} parent=0 // pred_region
    _
  $region5: #{vae_forward.24} parent=0 // pred_fallthru
    _
  // Predicated region
  $region6: #{vae_forward.24} parent=0 // pred_check
    _
  $region7: #{vae_forward.24} parent=0 // pred_check_branch
    %11 = sbr.rel (0) target = $region9
  $region8: #{vae_forward.24} parent=0 // pred_region
    _
  $region9: #{vae_forward.24} parent=0 // pred_fallthru
    _
  // Predicated region
  $region10: #{vae_forward.24} parent=0 // pred_check
    _
  $region11: #{vae_forward.24} parent=0 // pred_check_branch
    %13 = sbr.rel (0) target = $region13
  $region12: #{vae_forward.24} parent=0 // pred_region
    _
  $region13: #{vae_forward.24} parent=0 // pred_fallthru
    _
  %v15 = vld [vmem:[%s0] sm:$0xff]
  %v16 = vld [vmem:[%s0 + $0x8] sm:$0xff]
  %v17 = vld [vmem:[%s0 + $0x10] sm:$0xff]
  %v18 = vld [vmem:[%s0 + $0x18] sm:$0xff]
  %v19 = vld [vmem:[%s1] sm:$0xf]
  %v20 = vld [vmem:[%s1 + $0x4] sm:$0xf]
  %v21 = vld [vmem:[%s1 + $0x8] sm:$0xf]
  %v22 = vld [vmem:[%s1 + $0xc] sm:$0xf]
  %v23 = vld [vmem:[%s1 + $0x10] sm:$0xf]
  %v24 = vld [vmem:[%s1 + $0x14] sm:$0xf]
  %v25 = vld [vmem:[%s1 + $0x18] sm:$0xf]
  %v26 = vld [vmem:[%s1 + $0x1c] sm:$0xf]
  %v27 = vld [vmem:[%s1 + $0x20] sm:$0xf]
  %v28 = vld [vmem:[%s1 + $0x24] sm:$0xf]
  %v29 = vld [vmem:[%s1 + $0x28] sm:$0xf]
  %v30 = vld [vmem:[%s1 + $0x2c] sm:$0xf]
  %v31 = vld [vmem:[%s1 + $0x30] sm:$0xf]
  %v32 = vld [vmem:[%s1 + $0x34] sm:$0xf]
  %v33 = vld [vmem:[%s1 + $0x38] sm:$0xf]
  %v34 = vld [vmem:[%s1 + $0x3c] sm:$0xf]
  %v35 = vld [vmem:[%s1 + $0x40] sm:$0xf]
  %v36 = vld [vmem:[%s1 + $0x44] sm:$0xf]
  %v37 = vld [vmem:[%s2] sm:$0x1]
  %v39 = vlaneseq
  %v40 = vshrl.u32 %v39, 7
  %v41 = vsub.s32 0, %v40
  %v42 = vrot.slane %v37, %v41
  %v48 = vunpack.c.l.b16 %v15
  %v49 = vunpack.c.h.b16 %v15
  %v50 = vunpack.c.l.b16 %v16
  %v51 = vunpack.c.h.b16 %v16
  %v52 = vunpack.c.l.b16 %v17
  %v53 = vunpack.c.h.b16 %v17
  %v54 = vunpack.c.l.b16 %v18
  %v55 = vunpack.c.h.b16 %v18
  %v56 = vpack.c.b16 %v50, %v48
  %v57 = vpack.c.b16 %v51, %v49
  %v58 = vpack.c.b16 %v54, %v52
  %v59 = vpack.c.b16 %v55, %v53
  %v80 = vunpack.c.l.b16 %v19
  %v81 = vunpack.c.l.b16 %v20
  %v82 = vunpack.c.l.b16 %v21
  %v83 = vunpack.c.l.b16 %v22
  %v84 = vunpack.c.l.b16 %v23
  %v85 = vunpack.c.l.b16 %v24
  %v86 = vunpack.c.l.b16 %v25
  %v87 = vunpack.c.l.b16 %v26
  %v88 = vunpack.c.l.b16 %v27
  %v89 = vunpack.c.l.b16 %v28
  %v90 = vunpack.c.l.b16 %v29
  %v91 = vunpack.c.l.b16 %v30
  %v92 = vunpack.c.l.b16 %v31
  %v93 = vunpack.c.l.b16 %v32
  %v94 = vunpack.c.l.b16 %v33
  %v95 = vunpack.c.l.b16 %v34
  %v96 = vunpack.c.l.b16 %v35
  %v97 = vunpack.c.l.b16 %v36
  %v98 = vpack.c.b16 %v81, %v80
  %v99 = vpack.c.b16 %v83, %v82
  %v100 = vpack.c.b16 %v85, %v84
  %v101 = vpack.c.b16 %v87, %v86
  %v102 = vpack.c.b16 %v89, %v88
  %v103 = vpack.c.b16 %v91, %v90
  %v104 = vpack.c.b16 %v93, %v92
  %v105 = vpack.c.b16 %v95, %v94
  %v106 = vpack.c.b16 %v97, %v96
  %vm116 = vcmask 130048
  %v118 = vsel %vm116, %v57, 0
  %v121 = vsel %vm116, %v59, 0
  %123 = vmatprep.subr.bf16.mxu0 0
  %124 = vmatpush1.bf16.msra.mxu0 %v98
  %125 = vmatprep.subr.bf16.mxu0 0
  %126 = vmatpush1.bf16.msra.mxu0 %v99
  %127 = vmatprep.subr.bf16.mxu0 0
  %128 = vmatpush1.bf16.msra.mxu0 %v100
  %129 = vmatprep.subr.bf16.mxu0 0
  %130 = vmatpush1.bf16.msra.mxu0 %v101
  %131 = vmatprep.subr.bf16.mxu0 0
  %132 = vmatpush1.bf16.msra.mxu0 %v102
  %133 = vmatprep.subr.bf16.mxu0 0
  %134 = vmatpush1.bf16.msra.mxu0 %v103
  %135 = vmatprep.subr.bf16.mxu0 0
  %136 = vmatpush1.bf16.msra.mxu0 %v104
  %137 = vmatprep.subr.bf16.mxu0 0
  %138 = vmatpush1.bf16.msra.mxu0 %v105
  %139 = vmatprep.subr.bf16.mxu0 0
  %140 = vmatpush1.bf16.msra.mxu0 %v106
  %141 = vmatprep.subr.bf16.mxu0 0
  %142 = vmatpush1.bf16.msra.mxu0 0
  %143 = vmatprep.subr.bf16.mxu0 0
  %144 = vmatpush1.bf16.msra.mxu0 0
  %145 = vmatprep.subr.bf16.mxu0 0
  %146 = vmatpush1.bf16.msra.mxu0 0
  %147 = vmatprep.subr.bf16.mxu0 0
  %148 = vmatpush1.bf16.msra.mxu0 0
  %149 = vmatprep.subr.bf16.mxu0 0
  %150 = vmatpush1.bf16.msra.mxu0 0
  %151 = vmatprep.subr.bf16.mxu0 0
  %152 = vmatpush1.bf16.msra.mxu0 0
  %153 = vmatprep.subr.bf16.mxu0 0
  %154 = vmatpush1.bf16.msra.mxu0 0
  %155 = vmatprep.mubr.bf16.mxu0 %v118
  %156 = vmatmul.mubr.bf16.gmra.mrb[0].mxu0 %v56
  %v157 = vpop.f32.mrb[0].mxu0
  %v158 = vadd.f32 %v42, %v157
  %v159 = vpop.f32.mrb[0].mxu0
  %v160 = vpop.f32.mrb[0].mxu0
  %v161 = vadd.f32 %v42, %v160
  %v162 = vpop.f32.mrb[0].mxu0
  %163 = vmatprep.mubr.bf16.mxu0 %v121
  %164 = vmatmul.mubr.bf16.gmra.mrb[0].mxu0 %v58
  %v165 = vpop.f32.mrb[0].mxu0
  %v166 = vadd.f32 %v42, %v165
  %v167 = vpop.f32.mrb[0].mxu0
  %v168 = vpop.f32.mrb[0].mxu0
  %v169 = vadd.f32 %v42, %v168
  %v170 = vpop.f32.mrb[0].mxu0
  %171 = vdwg.mxu0
  %v172 = vmax.f32 %v158, 0.0
  %v173 = vmax.f32 %v161, 0.0
  %v174 = vmax.f32 %v166, 0.0
  %v175 = vmax.f32 %v169, 0.0
  %vm176 = vcmask 261120
  %177 = vst.msk [vmem:[%s3] sm:$0xff] %vm176, %v172
  %178 = vst.msk [vmem:[%s3 + $0x8] sm:$0xff] %vm176, %v173
  %179 = vst.msk [vmem:[%s3 + $0x10] sm:$0xff] %vm176, %v174
  %180 = vst.msk [vmem:[%s3 + $0x18] sm:$0xff] %vm176, %v175
  // Predicated region
  $region14: #{vae_forward.24} parent=0 // pred_check
    _
  $region15: #{vae_forward.24} parent=0 // pred_check_branch
    %182 = sbr.rel (0) target = $region17
  $region16: #{vae_forward.24} parent=0 // pred_region
    _
  $region17: #{vae_forward.24} parent=0 // pred_fallthru
    _
  // Predicated region
  $region18: #{vae_forward.24} parent=0 // pred_check
    _
  $region19: #{vae_forward.24} parent=0 // pred_check_branch
    %184 = sbr.rel (0) target = $region21
  $region20: #{vae_forward.24} parent=0 // pred_region
    _
  $region21: #{vae_forward.24} parent=0 // pred_fallthru
    _

// kernel: tile.23
$region0: #{tile.23}
  #allocation0 [shape = 's32[1]{0}', space=sflag, size = 0x4, scoped, tag = 'scoped memory for tile.23']
  %s0 = inlined_call_operand.vmem [shape: f32[4], index: 0, kind: input, shape index: {}]
  %s1 = inlined_call_operand.vmem [shape: f32[4,4], index: 1, kind: output, shape index: {}]
  // Predicated region
  $region2: #{tile.23} parent=0 // pred_check
    _
  $region3: #{tile.23} parent=0 // pred_check_branch
    %3 = sbr.rel (0) target = $region5
  $region4: #{tile.23} parent=0 // pred_region
    _
  $region5: #{tile.23} parent=0 // pred_fallthru
    _
  %v4 = vld [vmem:[%s0] ss:$0 sm:$0xff]
  %5 = vst [vmem:[%s1] sm:$0xf] %v4

// kernel: tile.24
$region0: #{tile.24}
  %s0 = inlined_call_operand.vmem [shape: f32[4,4], index: 0, kind: input, shape index: {}]
  %s1 = inlined_call_operand.vmem [shape: f32[1,16], index: 1, kind: output, shape index: {}]
  $region1: #{tile.24} parent=0
    #allocation0 [shape = 'u8[4096]{0}', space=vmem, size = 0x1000, scoped, tag = 'scoped mem for output reshape']
    #allocation1 [shape = 'u8[4096]{0}', space=vmem, size = 0x1000, scoped, tag = 'scoped mem for input reshape']
    %s3 = sshllo.u32 0, 4
    %v4 = vld [vmem:[%s0] sm:%s3]
    %5 = vst [vmem:[#allocation1] sm:%s3] %v4
    %v6 = vld [vmem:[#allocation1] sm:$0x1]
    %vm7 = vcmask 31744
    %8 = vst.msk [vmem:[#allocation0] sm:$0x1] %vm7, %v6
    %s9 = scalar_lea.vmem [#allocation1], 3
    %v10 = vld [vmem:[%s9] sm:$0x1]
    %11 = vrot.lane.b32.xlu0 %v10, 12
    %v12 = vpop.permute.xlu0 %11
    %vm13 = vcmask 130144
    %14 = vst.msk [vmem:[#allocation0] sm:$0x1] %vm13, %v12
    %s15 = scalar_lea.vmem [#allocation1], 2
    %v16 = vld [vmem:[%s15] sm:$0x1]
    %17 = vrot.lane.b32.xlu0 %v16, 8
    %v18 = vpop.permute.xlu0 %17
    %vm19 = vcmask 97344
    %20 = vst.msk [vmem:[#allocation0] sm:$0x1] %vm19, %v18
    %s21 = scalar_lea.vmem [#allocation1], 1
    %v22 = vld [vmem:[%s21] sm:$0x1]
    %23 = vrot.lane.b32.xlu0 %v22, 4
    %v24 = vpop.permute.xlu0 %23
    %vm25 = vcmask 64544
    %26 = vst.msk [vmem:[#allocation0] sm:$0x1] %vm25, %v24
    %s28 = sshllo.u32 0, 1
    %v30 = vld [vmem:[#allocation0] sm:%s28]
    %s31 = sshllo.u32 0, 1
    %32 = vst [vmem:[%s1] sm:%s31] %v30

// kernel: vae_forward.25
$region0: #{vae_forward.25}
  #allocation0 [shape = 'u32[]', space=smem, size = 0x4, offset = 0x4, fixed_abs, tag = 'smem constant byte address 0x4 - core index']
  #allocation1 [shape = 'u32[144,128]{1,0:T(1,128)}', space=vmem, size = 0x12000, scoped, tag = 'internal scratch']
  %s0 = inlined_call_operand.vmem [shape: bf16[128,72], index: 0, kind: input, shape index: {}]
  %s1 = inlined_call_operand.vmem [shape: bf16[72,16], index: 1, kind: input, shape index: {}]
  %s2 = inlined_call_operand.vmem [shape: f32[1,16], index: 2, kind: input, shape index: {}]
  %s3 = inlined_call_operand.vmem [shape: f32[128,16], index: 3, kind: output, shape index: {}]
  %s4 = sld [smem:[#allocation0]]
  $region22: #{vae_forward.25} parent=0
    _
  %s6 = ssub.s32 1, %s4
  %s7 = scalar_select 0, %s6, %s4
  // Predicated region
  $region2: #{vae_forward.25} parent=0 // pred_check
    _
  $region3: #{vae_forward.25} parent=0 // pred_check_branch
    %9 = sbr.rel (0) target = $region5
  $region4: #{vae_forward.25} parent=0 // pred_region
    _
  $region5: #{vae_forward.25} parent=0 // pred_fallthru
    _
  // Predicated region
  $region6: #{vae_forward.25} parent=0 // pred_check
    _
  $region7: #{vae_forward.25} parent=0 // pred_check_branch
    %11 = sbr.rel (0) target = $region9
  $region8: #{vae_forward.25} parent=0 // pred_region
    _
  $region9: #{vae_forward.25} parent=0 // pred_fallthru
    _
  // Predicated region
  $region10: #{vae_forward.25} parent=0 // pred_check
    _
  $region11: #{vae_forward.25} parent=0 // pred_check_branch
    %13 = sbr.rel (0) target = $region13
  $region12: #{vae_forward.25} parent=0 // pred_region
    _
  $region13: #{vae_forward.25} parent=0 // pred_fallthru
    _
  %v15 = vld [vmem:[%s0] sm:$0xf]
  %v16 = vld [vmem:[%s0 + $0x4] sm:$0xf]
  %v17 = vld [vmem:[%s0 + $0x8] sm:$0xf]
  %v18 = vld [vmem:[%s0 + $0xc] sm:$0xf]
  %v19 = vld [vmem:[%s0 + $0x10] sm:$0xf]
  %v20 = vld [vmem:[%s0 + $0x14] sm:$0xf]
  %v21 = vld [vmem:[%s0 + $0x18] sm:$0xf]
  %v22 = vld [vmem:[%s0 + $0x1c] sm:$0xf]
  %v23 = vld [vmem:[%s0 + $0x20] sm:$0xf]
  %v24 = vld [vmem:[%s0 + $0x24] sm:$0xf]
  %v25 = vld [vmem:[%s0 + $0x28] sm:$0xf]
  %v26 = vld [vmem:[%s0 + $0x2c] sm:$0xf]
  %v27 = vld [vmem:[%s0 + $0x30] sm:$0xf]
  %v28 = vld [vmem:[%s0 + $0x34] sm:$0xf]
  %v29 = vld [vmem:[%s0 + $0x38] sm:$0xf]
  %v30 = vld [vmem:[%s0 + $0x3c] sm:$0xf]
  %v31 = vld [vmem:[%s1] sm:$0xf]
  %v32 = vld [vmem:[%s1 + $0x4] sm:$0xf]
  %v33 = vld [vmem:[%s1 + $0x8] sm:$0xf]
  %v34 = vld [vmem:[%s1 + $0xc] sm:$0xf]
  %v35 = vld [vmem:[%s1 + $0x10] sm:$0xf]
  %v36 = vld [vmem:[%s1 + $0x14] sm:$0xf]
  %v37 = vld [vmem:[%s1 + $0x18] sm:$0xf]
  %v38 = vld [vmem:[%s1 + $0x1c] sm:$0xf]
  %v39 = vld [vmem:[%s1 + $0x20] sm:$0xf]
  %v40 = vld [vmem:[%s2] sm:$0x1]
  %v42 = vlaneseq
  %v43 = vshrl.u32 %v42, 7
  %v44 = vsub.s32 0, %v43
  %v45 = vrot.slane %v40, %v44
  %v63 = vunpack.c.l.b16 %v15
  %v64 = vunpack.c.l.b16 %v16
  %v65 = vunpack.c.l.b16 %v17
  %v66 = vunpack.c.l.b16 %v18
  %v67 = vunpack.c.l.b16 %v19
  %v68 = vunpack.c.l.b16 %v20
  %v69 = vunpack.c.l.b16 %v21
  %v70 = vunpack.c.l.b16 %v22
  %v71 = vunpack.c.l.b16 %v23
  %v72 = vunpack.c.l.b16 %v24
  %v73 = vunpack.c.l.b16 %v25
  %v74 = vunpack.c.l.b16 %v26
  %v75 = vunpack.c.l.b16 %v27
  %v76 = vunpack.c.l.b16 %v28
  %v77 = vunpack.c.l.b16 %v29
  %v78 = vunpack.c.l.b16 %v30
  %v79 = vpack.c.b16 %v64, %v63
  %v80 = vpack.c.b16 %v66, %v65
  %v81 = vpack.c.b16 %v68, %v67
  %v82 = vpack.c.b16 %v70, %v69
  %v83 = vpack.c.b16 %v72, %v71
  %v84 = vpack.c.b16 %v74, %v73
  %v85 = vpack.c.b16 %v76, %v75
  %v86 = vpack.c.b16 %v78, %v77
  %v96 = vunpack.c.l.b16 %v31
  %v97 = vunpack.c.l.b16 %v32
  %v98 = vunpack.c.l.b16 %v33
  %v99 = vunpack.c.l.b16 %v34
  %v100 = vunpack.c.l.b16 %v35
  %v101 = vunpack.c.l.b16 %v36
  %v102 = vunpack.c.l.b16 %v37
  %v103 = vunpack.c.l.b16 %v38
  %v104 = vunpack.c.l.b16 %v39
  %v105 = vpack.c.b16 %v97, %v96
  %v106 = vpack.c.b16 %v99, %v98
  %v107 = vpack.c.b16 %v101, %v100
  %v108 = vpack.c.b16 %v103, %v102
  %v109 = vpack.c.b16 %v104, %v104
  %vm114 = vcmask 588800
  %v116 = vsel %vm114, %v79, 0
  %v119 = vsel %vm114, %v80, 0
  %v122 = vsel %vm114, %v81, 0
  %v125 = vsel %vm114, %v82, 0
  %v128 = vsel %vm114, %v83, 0
  %v131 = vsel %vm114, %v84, 0
  %v134 = vsel %vm114, %v85, 0
  %v137 = vsel %vm114, %v86, 0
  %vm139 = vcmask 1043456
  %v141 = vsel %vm139, %v109, 0
  %143 = vmatprep.subr.bf16.mxu0 0
  %144 = vmatpush1.bf16.msra.mxu0 %v105
  %145 = vmatprep.subr.bf16.mxu0 0
  %146 = vmatpush1.bf16.msra.mxu0 %v106
  %147 = vmatprep.subr.bf16.mxu0 0
  %148 = vmatpush1.bf16.msra.mxu0 %v107
  %149 = vmatprep.subr.bf16.mxu0 0
  %150 = vmatpush1.bf16.msra.mxu0 %v108
  %151 = vmatprep.subr.bf16.mxu0 0
  %152 = vmatpush1.bf16.msra.mxu0 %v141
  %153 = vmatprep.subr.bf16.mxu0 0
  %154 = vmatpush1.bf16.msra.mxu0 0
  %155 = vmatprep.subr.bf16.mxu0 0
  %156 = vmatpush1.bf16.msra.mxu0 0
  %157 = vmatprep.subr.bf16.mxu0 0
  %158 = vmatpush1.bf16.msra.mxu0 0
  %159 = vmatprep.subr.bf16.mxu0 0
  %160 = vmatpush1.bf16.msra.mxu0 0
  %161 = vmatprep.subr.bf16.mxu0 0
  %162 = vmatpush1.bf16.msra.mxu0 0
  %163 = vmatprep.subr.bf16.mxu0 0
  %164 = vmatpush1.bf16.msra.mxu0 0
  %165 = vmatprep.subr.bf16.mxu0 0
  %166 = vmatpush1.bf16.msra.mxu0 0
  %167 = vmatprep.subr.bf16.mxu0 0
  %168 = vmatpush1.bf16.msra.mxu0 0
  %169 = vmatprep.subr.bf16.mxu0 0
  %170 = vmatpush1.bf16.msra.mxu0 0
  %171 = vmatprep.subr.bf16.mxu0 0
  %172 = vmatpush1.bf16.msra.mxu0 0
  %173 = vmatprep.subr.bf16.mxu0 0
  %174 = vmatpush1.bf16.msra.mxu0 0
  %175 = vmatprep.mubr.bf16.mxu0 0
  %176 = vmatmul.mubr.bf16.gmra.mrb[0].mxu0 %v116
  %v177 = vpop.f32.mrb[0].mxu0
  %v178 = vadd.f32 %v45, %v177
  %v179 = vpop.f32.mrb[0].mxu0
  %v180 = vpop.f32.mrb[0].mxu0
  %v181 = vadd.f32 %v45, %v180
  %v182 = vpop.f32.mrb[0].mxu0
  %183 = vmatprep.mubr.bf16.mxu0 0
  %184 = vmatmul.mubr.bf16.gmra.mrb[0].mxu0 %v119
  %v185 = vpop.f32.mrb[0].mxu0
  %v186 = vadd.f32 %v45, %v185
  %v187 = vpop.f32.mrb[0].mxu0
  %v188 = vpop.f32.mrb[0].mxu0
  %v189 = vadd.f32 %v45, %v188
  %v190 = vpop.f32.mrb[0].mxu0
  %191 = vmatprep.mubr.bf16.mxu0 0
  %192 = vmatmul.mubr.bf16.gmra.mrb[0].mxu0 %v122
  %v193 = vpop.f32.mrb[0].mxu0
  %v194 = vadd.f32 %v45, %v193
  %v195 = vpop.f32.mrb[0].mxu0
  %v196 = vpop.f32.mrb[0].mxu0
  %v197 = vadd.f32 %v45, %v196
  %v198 = vpop.f32.mrb[0].mxu0
  %199 = vmatprep.mubr.bf16.mxu0 0
  %200 = vmatmul.mubr.bf16.gmra.mrb[0].mxu0 %v125
  %v201 = vpop.f32.mrb[0].mxu0
  %v202 = vadd.f32 %v45, %v201
  %v203 = vpop.f32.mrb[0].mxu0
  %v204 = vpop.f32.mrb[0].mxu0
  %v205 = vadd.f32 %v45, %v204
  %v206 = vpop.f32.mrb[0].mxu0
  %207 = vmatprep.mubr.bf16.mxu0 0
  %208 = vmatmul.mubr.bf16.gmra.mrb[0].mxu0 %v128
  %v209 = vpop.f32.mrb[0].mxu0
  %v210 = vadd.f32 %v45, %v209
  %v211 = vpop.f32.mrb[0].mxu0
  %v212 = vpop.f32.mrb[0].mxu0
  %v213 = vadd.f32 %v45, %v212
  %v214 = vpop.f32.mrb[0].mxu0
  %215 = vmatprep.mubr.bf16.mxu0 0
  %216 = vmatmul.mubr.bf16.gmra.mrb[0].mxu0 %v131
  %v217 = vpop.f32.mrb[0].mxu0
  %v218 = vadd.f32 %v45, %v217
  %v219 = vpop.f32.mrb[0].mxu0
  %v220 = vpop.f32.mrb[0].mxu0
  %v221 = vadd.f32 %v45, %v220
  %v222 = vpop.f32.mrb[0].mxu0
  %223 = vmatprep.mubr.bf16.mxu0 0
  %224 = vmatmul.mubr.bf16.gmra.mrb[0].mxu0 %v134
  %v225 = vpop.f32.mrb[0].mxu0
  %v226 = vadd.f32 %v45, %v225
  %v227 = vpop.f32.mrb[0].mxu0
  %v228 = vpop.f32.mrb[0].mxu0
  %v229 = vadd.f32 %v45, %v228
  %v230 = vpop.f32.mrb[0].mxu0
  %231 = vmatprep.mubr.bf16.mxu0 0
  %232 = vmatmul.mubr.bf16.gmra.mrb[0].mxu0 %v137
  %v233 = vpop.f32.mrb[0].mxu0
  %v234 = vadd.f32 %v45, %v233
  %v235 = vpop.f32.mrb[0].mxu0
  %v236 = vpop.f32.mrb[0].mxu0
  %v237 = vadd.f32 %v45, %v236
  %v238 = vpop.f32.mrb[0].mxu0
  %239 = vdwg.mxu0
  %v240 = vmax.f32 %v178, 0.0
  %v241 = vmax.f32 %v181, 0.0
  %v242 = vmax.f32 %v186, 0.0
  %v243 = vmax.f32 %v189, 0.0
  %v244 = vmax.f32 %v194, 0.0
  %v245 = vmax.f32 %v197, 0.0
  %v246 = vmax.f32 %v202, 0.0
  %v247 = vmax.f32 %v205, 0.0
  %v248 = vmax.f32 %v210, 0.0
  %v249 = vmax.f32 %v213, 0.0
  %v250 = vmax.f32 %v218, 0.0
  %v251 = vmax.f32 %v221, 0.0
  %v252 = vmax.f32 %v226, 0.0
  %v253 = vmax.f32 %v229, 0.0
  %v254 = vmax.f32 %v234, 0.0
  %v255 = vmax.f32 %v237, 0.0
  %vm256 = vcmask 130048
  %257 = vst.msk [vmem:[%s3] sm:$0xff] %vm256, %v240
  %258 = vst.msk [vmem:[%s3 + $0x8] sm:$0xff] %vm256, %v241
  %259 = vst.msk [vmem:[%s3 + $0x10] sm:$0xff] %vm256, %v242
  %260 = vst.msk [vmem:[%s3 + $0x18] sm:$0xff] %vm256, %v243
  %261 = vst.msk [vmem:[%s3 + $0x20] sm:$0xff] %vm256, %v244
  %262 = vst.msk [vmem:[%s3 + $0x28] sm:$0xff] %vm256, %v245
  %263 = vst.msk [vmem:[%s3 + $0x30] sm:$0xff] %vm256, %v246
  %264 = vst.msk [vmem:[%s3 + $0x38] sm:$0xff] %vm256, %v247
  %265 = vst.msk [vmem:[%s3 + $0x40] sm:$0xff] %vm256, %v248
  %266 = vst.msk [vmem:[%s3 + $0x48] sm:$0xff] %vm256, %v249
  %267 = vst.msk [vmem:[%s3 + $0x50] sm:$0xff] %vm256, %v250
  %268 = vst.msk [vmem:[%s3 + $0x58] sm:$0xff] %vm256, %v251
  %269 = vst.msk [vmem:[%s3 + $0x60] sm:$0xff] %vm256, %v252
  %270 = vst.msk [vmem:[%s3 + $0x68] sm:$0xff] %vm256, %v253
  %271 = vst.msk [vmem:[%s3 + $0x70] sm:$0xff] %vm256, %v254
  %272 = vst.msk [vmem:[%s3 + $0x78] sm:$0xff] %vm256, %v255
  // Predicated region
  $region14: #{vae_forward.25} parent=0 // pred_check
    _
  $region15: #{vae_forward.25} parent=0 // pred_check_branch
    %274 = sbr.rel (0) target = $region17
  $region16: #{vae_forward.25} parent=0 // pred_region
    _
  $region17: #{vae_forward.25} parent=0 // pred_fallthru
    _
  // Predicated region
  $region18: #{vae_forward.25} parent=0 // pred_check
    _
  $region19: #{vae_forward.25} parent=0 // pred_check_branch
    %276 = sbr.rel (0) target = $region21
  $region20: #{vae_forward.25} parent=0 // pred_region
    _
  $region21: #{vae_forward.25} parent=0 // pred_fallthru
    _

// kernel: vae_forward.26
$region0: #{vae_forward.26}
  #allocation0 [shape = 'u32[]', space=smem, size = 0x4, offset = 0x4, fixed_abs, tag = 'smem constant byte address 0x4 - core index']
  #allocation1 [shape = 'u32[144,128]{1,0:T(1,128)}', space=vmem, size = 0x12000, scoped, tag = 'internal scratch']
  %s0 = inlined_call_operand.vmem [shape: bf16[512,36], index: 0, kind: input, shape index: {}]
  %s1 = inlined_call_operand.vmem [shape: bf16[36,16], index: 1, kind: input, shape index: {}]
  %s2 = inlined_call_operand.vmem [shape: f32[1,16], index: 2, kind: input, shape index: {}]
  %s3 = inlined_call_operand.vmem [shape: f32[512,16], index: 3, kind: output, shape index: {}]
  %s4 = sld [smem:[#allocation0]]
  $region22: #{vae_forward.26} parent=0
    _
  %s6 = ssub.s32 1, %s4
  %s7 = scalar_select 0, %s6, %s4
  // Predicated region
  $region2: #{vae_forward.26} parent=0 // pred_check
    _
  $region3: #{vae_forward.26} parent=0 // pred_check_branch
    %9 = sbr.rel (0) target = $region5
  $region4: #{vae_forward.26} parent=0 // pred_region
    _
  $region5: #{vae_forward.26} parent=0 // pred_fallthru
    _
  // Predicated region
  $region6: #{vae_forward.26} parent=0 // pred_check
    _
  $region7: #{vae_forward.26} parent=0 // pred_check_branch
    %11 = sbr.rel (0) target = $region9
  $region8: #{vae_forward.26} parent=0 // pred_region
    _
  $region9: #{vae_forward.26} parent=0 // pred_fallthru
    _
  // Predicated region
  $region10: #{vae_forward.26} parent=0 // pred_check
    _
  $region11: #{vae_forward.26} parent=0 // pred_check_branch
    %13 = sbr.rel (0) target = $region13
  $region12: #{vae_forward.26} parent=0 // pred_region
    _
  $region13: #{vae_forward.26} parent=0 // pred_fallthru
    _
  %v15 = vld [vmem:[%s0] sm:$0xf]
  %v16 = vld [vmem:[%s0 + $0x4] sm:$0xf]
  %v17 = vld [vmem:[%s0 + $0x8] sm:$0xf]
  %v18 = vld [vmem:[%s0 + $0xc] sm:$0xf]
  %v19 = vld [vmem:[%s0 + $0x10] sm:$0xf]
  %v20 = vld [vmem:[%s0 + $0x14] sm:$0xf]
  %v21 = vld [vmem:[%s0 + $0x18] sm:$0xf]
  %v22 = vld [vmem:[%s0 + $0x1c] sm:$0xf]
  %v23 = vld [vmem:[%s0 + $0x20] sm:$0xf]
  %v24 = vld [vmem:[%s0 + $0x24] sm:$0xf]
  %v25 = vld [vmem:[%s0 + $0x28] sm:$0xf]
  %v26 = vld [vmem:[%s0 + $0x2c] sm:$0xf]
  %v27 = vld [vmem:[%s0 + $0x30] sm:$0xf]
  %v28 = vld [vmem:[%s0 + $0x34] sm:$0xf]
  %v29 = vld [vmem:[%s0 + $0x38] sm:$0xf]
  %v30 = vld [vmem:[%s0 + $0x3c] sm:$0xf]
  %v31 = vld [vmem:[%s0 + $0x40] sm:$0xf]
  %v32 = vld [vmem:[%s0 + $0x44] sm:$0xf]
  %v33 = vld [vmem:[%s0 + $0x48] sm:$0xf]
  %v34 = vld [vmem:[%s0 + $0x4c] sm:$0xf]
  %v35 = vld [vmem:[%s0 + $0x50] sm:$0xf]
  %v36 = vld [vmem:[%s0 + $0x54] sm:$0xf]
  %v37 = vld [vmem:[%s0 + $0x58] sm:$0xf]
  %v38 = vld [vmem:[%s0 + $0x5c] sm:$0xf]
  %v39 = vld [vmem:[%s0 + $0x60] sm:$0xf]
  %v40 = vld [vmem:[%s0 + $0x64] sm:$0xf]
  %v41 = vld [vmem:[%s0 + $0x68] sm:$0xf]
  %v42 = vld [vmem:[%s0 + $0x6c] sm:$0xf]
  %v43 = vld [vmem:[%s0 + $0x70] sm:$0xf]
  %v44 = vld [vmem:[%s0 + $0x74] sm:$0xf]
  %v45 = vld [vmem:[%s0 + $0x78] sm:$0xf]
  %v46 = vld [vmem:[%s0 + $0x7c] sm:$0xf]
  %v47 = vld [vmem:[%s0 + $0x80] sm:$0xf]
  %v48 = vld [vmem:[%s0 + $0x84] sm:$0xf]
  %v49 = vld [vmem:[%s0 + $0x88] sm:$0xf]
  %v50 = vld [vmem:[%s0 + $0x8c] sm:$0xf]
  %v51 = vld [vmem:[%s0 + $0x90] sm:$0xf]
  %v52 = vld [vmem:[%s0 + $0x94] sm:$0xf]
  %v53 = vld [vmem:[%s0 + $0x98] sm:$0xf]
  %v54 = vld [vmem:[%s0 + $0x9c] sm:$0xf]
  %v55 = vld [vmem:[%s0 + $0xa0] sm:$0xf]
  %v56 = vld [vmem:[%s0 + $0xa4] sm:$0xf]
  %v57 = vld [vmem:[%s0 + $0xa8] sm:$0xf]
  %v58 = vld [vmem:[%s0 + $0xac] sm:$0xf]
  %v59 = vld [vmem:[%s0 + $0xb0] sm:$0xf]
  %v60 = vld [vmem:[%s0 + $0xb4] sm:$0xf]
  %v61 = vld [vmem:[%s0 + $0xb8] sm:$0xf]
  %v62 = vld [vmem:[%s0 + $0xbc] sm:$0xf]
  %v63 = vld [vmem:[%s0 + $0xc0] sm:$0xf]
  %v64 = vld [vmem:[%s0 + $0xc4] sm:$0xf]
  %v65 = vld [vmem:[%s0 + $0xc8] sm:$0xf]
  %v66 = vld [vmem:[%s0 + $0xcc] sm:$0xf]
  %v67 = vld [vmem:[%s0 + $0xd0] sm:$0xf]
  %v68 = vld [vmem:[%s0 + $0xd4] sm:$0xf]
  %v69 = vld [vmem:[%s0 + $0xd8] sm:$0xf]
  %v70 = vld [vmem:[%s0 + $0xdc] sm:$0xf]
  %v71 = vld [vmem:[%s0 + $0xe0] sm:$0xf]
  %v72 = vld [vmem:[%s0 + $0xe4] sm:$0xf]
  %v73 = vld [vmem:[%s0 + $0xe8] sm:$0xf]
  %v74 = vld [vmem:[%s0 + $0xec] sm:$0xf]
  %v75 = vld [vmem:[%s0 + $0xf0] sm:$0xf]
  %v76 = vld [vmem:[%s0 + $0xf4] sm:$0xf]
  %v77 = vld [vmem:[%s0 + $0xf8] sm:$0xf]
  %v78 = vld [vmem:[%s0 + $0xfc] sm:$0xf]
  %v79 = vld [vmem:[%s1] sm:$0xf]
  %v80 = vld [vmem:[%s1 + $0x4] sm:$0xf]
  %v81 = vld [vmem:[%s1 + $0x8] sm:$0xf]
  %v82 = vld [vmem:[%s1 + $0xc] sm:$0xf]
  %v83 = vld [vmem:[%s1 + $0x10] sm:$0x3]
  %v84 = vld [vmem:[%s2] sm:$0x1]
  %v86 = vlaneseq
  %v87 = vshrl.u32 %v86, 7
  %v88 = vsub.s32 0, %v87
  %v89 = vrot.slane %v84, %v88
  %v155 = vunpack.c.l.b16 %v15
  %v156 = vunpack.c.l.b16 %v16
  %v157 = vunpack.c.l.b16 %v17
  %v158 = vunpack.c.l.b16 %v18
  %v159 = vunpack.c.l.b16 %v19
  %v160 = vunpack.c.l.b16 %v20
  %v161 = vunpack.c.l.b16 %v21
  %v162 = vunpack.c.l.b16 %v22
  %v163 = vunpack.c.l.b16 %v23
  %v164 = vunpack.c.l.b16 %v24
  %v165 = vunpack.c.l.b16 %v25
  %v166 = vunpack.c.l.b16 %v26
  %v167 = vunpack.c.l.b16 %v27
  %v168 = vunpack.c.l.b16 %v28
  %v169 = vunpack.c.l.b16 %v29
  %v170 = vunpack.c.l.b16 %v30
  %v171 = vunpack.c.l.b16 %v31
  %v172 = vunpack.c.l.b16 %v32
  %v173 = vunpack.c.l.b16 %v33
  %v174 = vunpack.c.l.b16 %v34
  %v175 = vunpack.c.l.b16 %v35
  %v176 = vunpack.c.l.b16 %v36
  %v177 = vunpack.c.l.b16 %v37
  %v178 = vunpack.c.l.b16 %v38
  %v179 = vunpack.c.l.b16 %v39
  %v180 = vunpack.c.l.b16 %v40
  %v181 = vunpack.c.l.b16 %v41
  %v182 = vunpack.c.l.b16 %v42
  %v183 = vunpack.c.l.b16 %v43
  %v184 = vunpack.c.l.b16 %v44
  %v185 = vunpack.c.l.b16 %v45
  %v186 = vunpack.c.l.b16 %v46
  %v187 = vunpack.c.l.b16 %v47
  %v188 = vunpack.c.l.b16 %v48
  %v189 = vunpack.c.l.b16 %v49
  %v190 = vunpack.c.l.b16 %v50
  %v191 = vunpack.c.l.b16 %v51
  %v192 = vunpack.c.l.b16 %v52
  %v193 = vunpack.c.l.b16 %v53
  %v194 = vunpack.c.l.b16 %v54
  %v195 = vunpack.c.l.b16 %v55
  %v196 = vunpack.c.l.b16 %v56
  %v197 = vunpack.c.l.b16 %v57
  %v198 = vunpack.c.l.b16 %v58
  %v199 = vunpack.c.l.b16 %v59
  %v200 = vunpack.c.l.b16 %v60
  %v201 = vunpack.c.l.b16 %v61
  %v202 = vunpack.c.l.b16 %v62
  %v203 = vunpack.c.l.b16 %v63
  %v204 = vunpack.c.l.b16 %v64
  %v205 = vunpack.c.l.b16 %v65
  %v206 = vunpack.c.l.b16 %v66
  %v207 = vunpack.c.l.b16 %v67
  %v208 = vunpack.c.l.b16 %v68
  %v209 = vunpack.c.l.b16 %v69
  %v210 = vunpack.c.l.b16 %v70
  %v211 = vunpack.c.l.b16 %v71
  %v212 = vunpack.c.l.b16 %v72
  %v213 = vunpack.c.l.b16 %v73
  %v214 = vunpack.c.l.b16 %v74
  %v215 = vunpack.c.l.b16 %v75
  %v216 = vunpack.c.l.b16 %v76
  %v217 = vunpack.c.l.b16 %v77
  %v218 = vunpack.c.l.b16 %v78
  %v219 = vpack.c.b16 %v156, %v155
  %v220 = vpack.c.b16 %v158, %v157
  %v221 = vpack.c.b16 %v160, %v159
  %v222 = vpack.c.b16 %v162, %v161
  %v223 = vpack.c.b16 %v164, %v163
  %v224 = vpack.c.b16 %v166, %v165
  %v225 = vpack.c.b16 %v168, %v167
  %v226 = vpack.c.b16 %v170, %v169
  %v227 = vpack.c.b16 %v172, %v171
  %v228 = vpack.c.b16 %v174, %v173
  %v229 = vpack.c.b16 %v176, %v175
  %v230 = vpack.c.b16 %v178, %v177
  %v231 = vpack.c.b16 %v180, %v179
  %v232 = vpack.c.b16 %v182, %v181
  %v233 = vpack.c.b16 %v184, %v183
  %v234 = vpack.c.b16 %v186, %v185
  %v235 = vpack.c.b16 %v188, %v187
  %v236 = vpack.c.b16 %v190, %v189
  %v237 = vpack.c.b16 %v192, %v191
  %v238 = vpack.c.b16 %v194, %v193
  %v239 = vpack.c.b16 %v196, %v195
  %v240 = vpack.c.b16 %v198, %v197
  %v241 = vpack.c.b16 %v200, %v199
  %v242 = vpack.c.b16 %v202, %v201
  %v243 = vpack.c.b16 %v204, %v203
  %v244 = vpack.c.b16 %v206, %v205
  %v245 = vpack.c.b16 %v208, %v207
  %v246 = vpack.c.b16 %v210, %v209
  %v247 = vpack.c.b16 %v212, %v211
  %v248 = vpack.c.b16 %v214, %v213
  %v249 = vpack.c.b16 %v216, %v215
  %v250 = vpack.c.b16 %v218, %v217
  %v256 = vunpack.c.l.b16 %v79
  %v257 = vunpack.c.l.b16 %v80
  %v258 = vunpack.c.l.b16 %v81
  %v259 = vunpack.c.l.b16 %v82
  %v260 = vunpack.c.l.b16 %v83
  %v261 = vpack.c.b16 %v257, %v256
  %v262 = vpack.c.b16 %v259, %v258
  %v263 = vpack.c.b16 %v260, %v260
  %vm266 = vcmask 293888
  %v268 = vsel %vm266, %v219, 0
  %v271 = vsel %vm266, %v220, 0
  %v274 = vsel %vm266, %v221, 0
  %v277 = vsel %vm266, %v222, 0
  %v280 = vsel %vm266, %v223, 0
  %v283 = vsel %vm266, %v224, 0
  %v286 = vsel %vm266, %v225, 0
  %v289 = vsel %vm266, %v226, 0
  %v292 = vsel %vm266, %v227, 0
  %v295 = vsel %vm266, %v228, 0
  %v298 = vsel %vm266, %v229, 0
  %v301 = vsel %vm266, %v230, 0
  %v304 = vsel %vm266, %v231, 0
  %v307 = vsel %vm266, %v232, 0
  %v310 = vsel %vm266, %v233, 0
  %v313 = vsel %vm266, %v234, 0
  %v316 = vsel %vm266, %v235, 0
  %v319 = vsel %vm266, %v236, 0
  %v322 = vsel %vm266, %v237, 0
  %v325 = vsel %vm266, %v238, 0
  %v328 = vsel %vm266, %v239, 0
  %v331 = vsel %vm266, %v240, 0
  %v334 = vsel %vm266, %v241, 0
  %v337 = vsel %vm266, %v242, 0
  %v340 = vsel %vm266, %v243, 0
  %v343 = vsel %vm266, %v244, 0
  %v346 = vsel %vm266, %v245, 0
  %v349 = vsel %vm266, %v246, 0
  %v352 = vsel %vm266, %v247, 0
  %v355 = vsel %vm266, %v248, 0
  %v358 = vsel %vm266, %v249, 0
  %v361 = vsel %vm266, %v250, 0
  %vm363 = vcmask 1041408
  %v365 = vsel %vm363, %v263, 0
  %367 = vmatprep.subr.bf16.mxu0 0
  %368 = vmatpush1.bf16.msra.mxu0 %v261
  %369 = vmatprep.subr.bf16.mxu0 0
  %370 = vmatpush1.bf16.msra.mxu0 %v262
  %371 = vmatprep.subr.bf16.mxu0 0
  %372 = vmatpush1.bf16.msra.mxu0 %v365
  %373 = vmatprep.subr.bf16.mxu0 0
  %374 = vmatpush1.bf16.msra.mxu0 0
  %375 = vmatprep.subr.bf16.mxu0 0
  %376 = vmatpush1.bf16.msra.mxu0 0
  %377 = vmatprep.subr.bf16.mxu0 0
  %378 = vmatpush1.bf16.msra.mxu0 0
  %379 = vmatprep.subr.bf16.mxu0 0
  %380 = vmatpush1.bf16.msra.mxu0 0
  %381 = vmatprep.subr.bf16.mxu0 0
  %382 = vmatpush1.bf16.msra.mxu0 0
  %383 = vmatprep.subr.bf16.mxu0 0
  %384 = vmatpush1.bf16.msra.mxu0 0
  %385 = vmatprep.subr.bf16.mxu0 0
  %386 = vmatpush1.bf16.msra.mxu0 0
  %387 = vmatprep.subr.bf16.mxu0 0
  %388 = vmatpush1.bf16.msra.mxu0 0
  %389 = vmatprep.subr.bf16.mxu0 0
  %390 = vmatpush1.bf16.msra.mxu0 0
  %391 = vmatprep.subr.bf16.mxu0 0
  %392 = vmatpush1.bf16.msra.mxu0 0
  %393 = vmatprep.subr.bf16.mxu0 0
  %394 = vmatpush1.bf16.msra.mxu0 0
  %395 = vmatprep.subr.bf16.mxu0 0
  %396 = vmatpush1.bf16.msra.mxu0 0
  %397 = vmatprep.subr.bf16.mxu0 0
  %398 = vmatpush1.bf16.msra.mxu0 0
  %399 = vmatprep.mubr.bf16.mxu0 0
  %400 = vmatmul.mubr.bf16.gmra.mrb[0].mxu0 %v268
  %v401 = vpop.f32.mrb[0].mxu0
  %v402 = vadd.f32 %v89, %v401
  %v403 = vpop.f32.mrb[0].mxu0
  %v404 = vpop.f32.mrb[0].mxu0
  %v405 = vadd.f32 %v89, %v404
  %v406 = vpop.f32.mrb[0].mxu0
  %407 = vmatprep.mubr.bf16.mxu0 0
  %408 = vmatmul.mubr.bf16.gmra.mrb[0].mxu0 %v271
  %v409 = vpop.f32.mrb[0].mxu0
  %v410 = vadd.f32 %v89, %v409
  %v411 = vpop.f32.mrb[0].mxu0
  %v412 = vpop.f32.mrb[0].mxu0
  %v413 = vadd.f32 %v89, %v412
  %v414 = vpop.f32.mrb[0].mxu0
  %415 = vmatprep.mubr.bf16.mxu0 0
  %416 = vmatmul.mubr.bf16.gmra.mrb[0].mxu0 %v274
  %v417 = vpop.f32.mrb[0].mxu0
  %v418 = vadd.f32 %v89, %v417
  %v419 = vpop.f32.mrb[0].mxu0
  %v420 = vpop.f32.mrb[0].mxu0
  %v421 = vadd.f32 %v89, %v420
  %v422 = vpop.f32.mrb[0].mxu0
  %423 = vmatprep.mubr.bf16.mxu0 0
  %424 = vmatmul.mubr.bf16.gmra.mrb[0].mxu0 %v277
  %v425 = vpop.f32.mrb[0].mxu0
  %v426 = vadd.f32 %v89, %v425
  %v427 = vpop.f32.mrb[0].mxu0
  %v428 = vpop.f32.mrb[0].mxu0
  %v429 = vadd.f32 %v89, %v428
  %v430 = vpop.f32.mrb[0].mxu0
  %431 = vmatprep.mubr.bf16.mxu0 0
  %432 = vmatmul.mubr.bf16.gmra.mrb[0].mxu0 %v280
  %v433 = vpop.f32.mrb[0].mxu0
  %v434 = vadd.f32 %v89, %v433
  %v435 = vpop.f32.mrb[0].mxu0
  %v436 = vpop.f32.mrb[0].mxu0
  %v437 = vadd.f32 %v89, %v436
  %v438 = vpop.f32.mrb[0].mxu0
  %439 = vmatprep.mubr.bf16.mxu0 0
  %440 = vmatmul.mubr.bf16.gmra.mrb[0].mxu0 %v283
  %v441 = vpop.f32.mrb[0].mxu0
  %v442 = vadd.f32 %v89, %v441
  %v443 = vpop.f32.mrb[0].mxu0
  %v444 = vpop.f32.mrb[0].mxu0
  %v445 = vadd.f32 %v89, %v444
  %v446 = vpop.f32.mrb[0].mxu0
  %447 = vmatprep.mubr.bf16.mxu0 0
  %448 = vmatmul.mubr.bf16.gmra.mrb[0].mxu0 %v286
  %v449 = vpop.f32.mrb[0].mxu0
  %v450 = vadd.f32 %v89, %v449
  %v451 = vpop.f32.mrb[0].mxu0
  %v452 = vpop.f32.mrb[0].mxu0
  %v453 = vadd.f32 %v89, %v452
  %v454 = vpop.f32.mrb[0].mxu0
  %455 = vmatprep.mubr.bf16.mxu0 0
  %456 = vmatmul.mubr.bf16.gmra.mrb[0].mxu0 %v289
  %v457 = vpop.f32.mrb[0].mxu0
  %v458 = vadd.f32 %v89, %v457
  %v459 = vpop.f32.mrb[0].mxu0
  %v460 = vpop.f32.mrb[0].mxu0
  %v461 = vadd.f32 %v89, %v460
  %v462 = vpop.f32.mrb[0].mxu0
  %463 = vmatprep.mubr.bf16.mxu0 0
  %464 = vmatmul.mubr.bf16.gmra.mrb[0].mxu0 %v292
  %v465 = vpop.f32.mrb[0].mxu0
  %v466 = vadd.f32 %v89, %v465
  %v467 = vpop.f32.mrb[0].mxu0
  %v468 = vpop.f32.mrb[0].mxu0
  %v469 = vadd.f32 %v89, %v468
  %v470 = vpop.f32.mrb[0].mxu0
  %471 = vmatprep.mubr.bf16.mxu0 0
  %472 = vmatmul.mubr.bf16.gmra.mrb[0].mxu0 %v295
  %v473 = vpop.f32.mrb[0].mxu0
  %v474 = vadd.f32 %v89, %v473
  %v475 = vpop.f32.mrb[0].mxu0
  %v476 = vpop.f32.mrb[0].mxu0
  %v477 = vadd.f32 %v89, %v476
  %v478 = vpop.f32.mrb[0].mxu0
  %479 = vmatprep.mubr.bf16.mxu0 0
  %480 = vmatmul.mubr.bf16.gmra.mrb[0].mxu0 %v298
  %v481 = vpop.f32.mrb[0].mxu0
  %v482 = vadd.f32 %v89, %v481
  %v483 = vpop.f32.mrb[0].mxu0
  %v484 = vpop.f32.mrb[0].mxu0
  %v485 = vadd.f32 %v89, %v484
  %v486 = vpop.f32.mrb[0].mxu0
  %487 = vmatprep.mubr.bf16.mxu0 0
  %488 = vmatmul.mubr.bf16.gmra.mrb[0].mxu0 %v301
  %v489 = vpop.f32.mrb[0].mxu0
  %v490 = vadd.f32 %v89, %v489
  %v491 = vpop.f32.mrb[0].mxu0
  %v492 = vpop.f32.mrb[0].mxu0
  %v493 = vadd.f32 %v89, %v492
  %v494 = vpop.f32.mrb[0].mxu0
  %495 = vmatprep.mubr.bf16.mxu0 0
  %496 = vmatmul.mubr.bf16.gmra.mrb[0].mxu0 %v304
  %v497 = vpop.f32.mrb[0].mxu0
  %v498 = vadd.f32 %v89, %v497
  %v499 = vpop.f32.mrb[0].mxu0
  %v500 = vpop.f32.mrb[0].mxu0
  %v501 = vadd.f32 %v89, %v500
  %v502 = vpop.f32.mrb[0].mxu0
  %503 = vmatprep.mubr.bf16.mxu0 0
  %504 = vmatmul.mubr.bf16.gmra.mrb[0].mxu0 %v307
  %v505 = vpop.f32.mrb[0].mxu0
  %v506 = vadd.f32 %v89, %v505
  %v507 = vpop.f32.mrb[0].mxu0
  %v508 = vpop.f32.mrb[0].mxu0
  %v509 = vadd.f32 %v89, %v508
  %v510 = vpop.f32.mrb[0].mxu0
  %511 = vmatprep.mubr.bf16.mxu0 0
  %512 = vmatmul.mubr.bf16.gmra.mrb[0].mxu0 %v310
  %v513 = vpop.f32.mrb[0].mxu0
  %v514 = vadd.f32 %v89, %v513
  %v515 = vpop.f32.mrb[0].mxu0
  %v516 = vpop.f32.mrb[0].mxu0
  %v517 = vadd.f32 %v89, %v516
  %v518 = vpop.f32.mrb[0].mxu0
  %519 = vmatprep.mubr.bf16.mxu0 0
  %520 = vmatmul.mubr.bf16.gmra.mrb[0].mxu0 %v313
  %v521 = vpop.f32.mrb[0].mxu0
  %v522 = vadd.f32 %v89, %v521
  %v523 = vpop.f32.mrb[0].mxu0
  %v524 = vpop.f32.mrb[0].mxu0
  %v525 = vadd.f32 %v89, %v524
  %v526 = vpop.f32.mrb[0].mxu0
  %527 = vmatprep.mubr.bf16.mxu0 0
  %528 = vmatmul.mubr.bf16.gmra.mrb[0].mxu0 %v316
  %v529 = vpop.f32.mrb[0].mxu0
  %v530 = vadd.f32 %v89, %v529
  %v531 = vpop.f32.mrb[0].mxu0
  %v532 = vpop.f32.mrb[0].mxu0
  %v533 = vadd.f32 %v89, %v532
  %v534 = vpop.f32.mrb[0].mxu0
  %535 = vmatprep.mubr.bf16.mxu0 0
  %536 = vmatmul.mubr.bf16.gmra.mrb[0].mxu0 %v319
  %v537 = vpop.f32.mrb[0].mxu0
  %v538 = vadd.f32 %v89, %v537
  %v539 = vpop.f32.mrb[0].mxu0
  %v540 = vpop.f32.mrb[0].mxu0
  %v541 = vadd.f32 %v89, %v540
  %v542 = vpop.f32.mrb[0].mxu0
  %543 = vmatprep.mubr.bf16.mxu0 0
  %544 = vmatmul.mubr.bf16.gmra.mrb[0].mxu0 %v322
  %v545 = vpop.f32.mrb[0].mxu0
  %v546 = vadd.f32 %v89, %v545
  %v547 = vpop.f32.mrb[0].mxu0
  %v548 = vpop.f32.mrb[0].mxu0
  %v549 = vadd.f32 %v89, %v548
  %v550 = vpop.f32.mrb[0].mxu0
  %551 = vmatprep.mubr.bf16.mxu0 0
  %552 = vmatmul.mubr.bf16.gmra.mrb[0].mxu0 %v325
  %v553 = vpop.f32.mrb[0].mxu0
  %v554 = vadd.f32 %v89, %v553
  %v555 = vpop.f32.mrb[0].mxu0
  %v556 = vpop.f32.mrb[0].mxu0
  %v557 = vadd.f32 %v89, %v556
  %v558 = vpop.f32.mrb[0].mxu0
  %559 = vmatprep.mubr.bf16.mxu0 0
  %560 = vmatmul.mubr.bf16.gmra.mrb[0].mxu0 %v328
  %v561 = vpop.f32.mrb[0].mxu0
  %v562 = vadd.f32 %v89, %v561
  %v563 = vpop.f32.mrb[0].mxu0
  %v564 = vpop.f32.mrb[0].mxu0
  %v565 = vadd.f32 %v89, %v564
  %v566 = vpop.f32.mrb[0].mxu0
  %567 = vmatprep.mubr.bf16.mxu0 0
  %568 = vmatmul.mubr.bf16.gmra.mrb[0].mxu0 %v331
  %v569 = vpop.f32.mrb[0].mxu0
  %v570 = vadd.f32 %v89, %v569
  %v571 = vpop.f32.mrb[0].mxu0
  %v572 = vpop.f32.mrb[0].mxu0
  %v573 = vadd.f32 %v89, %v572
  %v574 = vpop.f32.mrb[0].mxu0
  %575 = vmatprep.mubr.bf16.mxu0 0
  %576 = vmatmul.mubr.bf16.gmra.mrb[0].mxu0 %v334
  %v577 = vpop.f32.mrb[0].mxu0
  %v578 = vadd.f32 %v89, %v577
  %v579 = vpop.f32.mrb[0].mxu0
  %v580 = vpop.f32.mrb[0].mxu0
  %v581 = vadd.f32 %v89, %v580
  %v582 = vpop.f32.mrb[0].mxu0
  %583 = vmatprep.mubr.bf16.mxu0 0
  %584 = vmatmul.mubr.bf16.gmra.mrb[0].mxu0 %v337
  %v585 = vpop.f32.mrb[0].mxu0
  %v586 = vadd.f32 %v89, %v585
  %v587 = vpop.f32.mrb[0].mxu0
  %v588 = vpop.f32.mrb[0].mxu0
  %v589 = vadd.f32 %v89, %v588
  %v590 = vpop.f32.mrb[0].mxu0
  %591 = vmatprep.mubr.bf16.mxu0 0
  %592 = vmatmul.mubr.bf16.gmra.mrb[0].mxu0 %v340
  %v593 = vpop.f32.mrb[0].mxu0
  %v594 = vadd.f32 %v89, %v593
  %v595 = vpop.f32.mrb[0].mxu0
  %v596 = vpop.f32.mrb[0].mxu0
  %v597 = vadd.f32 %v89, %v596
  %v598 = vpop.f32.mrb[0].mxu0
  %599 = vmatprep.mubr.bf16.mxu0 0
  %600 = vmatmul.mubr.bf16.gmra.mrb[0].mxu0 %v343
  %v601 = vpop.f32.mrb[0].mxu0
  %v602 = vadd.f32 %v89, %v601
  %v603 = vpop.f32.mrb[0].mxu0
  %v604 = vpop.f32.mrb[0].mxu0
  %v605 = vadd.f32 %v89, %v604
  %v606 = vpop.f32.mrb[0].mxu0
  %607 = vmatprep.mubr.bf16.mxu0 0
  %608 = vmatmul.mubr.bf16.gmra.mrb[0].mxu0 %v346
  %v609 = vpop.f32.mrb[0].mxu0
  %v610 = vadd.f32 %v89, %v609
  %v611 = vpop.f32.mrb[0].mxu0
  %v612 = vpop.f32.mrb[0].mxu0
  %v613 = vadd.f32 %v89, %v612
  %v614 = vpop.f32.mrb[0].mxu0
  %615 = vmatprep.mubr.bf16.mxu0 0
  %616 = vmatmul.mubr.bf16.gmra.mrb[0].mxu0 %v349
  %v617 = vpop.f32.mrb[0].mxu0
  %v618 = vadd.f32 %v89, %v617
  %v619 = vpop.f32.mrb[0].mxu0
  %v620 = vpop.f32.mrb[0].mxu0
  %v621 = vadd.f32 %v89, %v620
  %v622 = vpop.f32.mrb[0].mxu0
  %623 = vmatprep.mubr.bf16.mxu0 0
  %624 = vmatmul.mubr.bf16.gmra.mrb[0].mxu0 %v352
  %v625 = vpop.f32.mrb[0].mxu0
  %v626 = vadd.f32 %v89, %v625
  %v627 = vpop.f32.mrb[0].mxu0
  %v628 = vpop.f32.mrb[0].mxu0
  %v629 = vadd.f32 %v89, %v628
  %v630 = vpop.f32.mrb[0].mxu0
  %631 = vmatprep.mubr.bf16.mxu0 0
  %632 = vmatmul.mubr.bf16.gmra.mrb[0].mxu0 %v355
  %v633 = vpop.f32.mrb[0].mxu0
  %v634 = vadd.f32 %v89, %v633
  %v635 = vpop.f32.mrb[0].mxu0
  %v636 = vpop.f32.mrb[0].mxu0
  %v637 = vadd.f32 %v89, %v636
  %v638 = vpop.f32.mrb[0].mxu0
  %639 = vmatprep.mubr.bf16.mxu0 0
  %640 = vmatmul.mubr.bf16.gmra.mrb[0].mxu0 %v358
  %v641 = vpop.f32.mrb[0].mxu0
  %v642 = vadd.f32 %v89, %v641
  %v643 = vpop.f32.mrb[0].mxu0
  %v644 = vpop.f32.mrb[0].mxu0
  %v645 = vadd.f32 %v89, %v644
  %v646 = vpop.f32.mrb[0].mxu0
  %647 = vmatprep.mubr.bf16.mxu0 0
  %648 = vmatmul.mubr.bf16.gmra.mrb[0].mxu0 %v361
  %v649 = vpop.f32.mrb[0].mxu0
  %v650 = vadd.f32 %v89, %v649
  %v651 = vpop.f32.mrb[0].mxu0
  %v652 = vpop.f32.mrb[0].mxu0
  %v653 = vadd.f32 %v89, %v652
  %v654 = vpop.f32.mrb[0].mxu0
  %655 = vdwg.mxu0
  %v656 = vmax.f32 %v402, 0.0
  %v657 = vmax.f32 %v405, 0.0
  %v658 = vmax.f32 %v410, 0.0
  %v659 = vmax.f32 %v413, 0.0
  %v660 = vmax.f32 %v418, 0.0
  %v661 = vmax.f32 %v421, 0.0
  %v662 = vmax.f32 %v426, 0.0
  %v663 = vmax.f32 %v429, 0.0
  %v664 = vmax.f32 %v434, 0.0
  %v665 = vmax.f32 %v437, 0.0
  %v666 = vmax.f32 %v442, 0.0
  %v667 = vmax.f32 %v445, 0.0
  %v668 = vmax.f32 %v450, 0.0
  %v669 = vmax.f32 %v453, 0.0
  %v670 = vmax.f32 %v458, 0.0
  %v671 = vmax.f32 %v461, 0.0
  %v672 = vmax.f32 %v466, 0.0
  %v673 = vmax.f32 %v469, 0.0
  %v674 = vmax.f32 %v474, 0.0
  %v675 = vmax.f32 %v477, 0.0
  %v676 = vmax.f32 %v482, 0.0
  %v677 = vmax.f32 %v485, 0.0
  %v678 = vmax.f32 %v490, 0.0
  %v679 = vmax.f32 %v493, 0.0
  %v680 = vmax.f32 %v498, 0.0
  %v681 = vmax.f32 %v501, 0.0
  %v682 = vmax.f32 %v506, 0.0
  %v683 = vmax.f32 %v509, 0.0
  %v684 = vmax.f32 %v514, 0.0
  %v685 = vmax.f32 %v517, 0.0
  %v686 = vmax.f32 %v522, 0.0
  %v687 = vmax.f32 %v525, 0.0
  %v688 = vmax.f32 %v530, 0.0
  %v689 = vmax.f32 %v533, 0.0
  %v690 = vmax.f32 %v538, 0.0
  %v691 = vmax.f32 %v541, 0.0
  %v692 = vmax.f32 %v546, 0.0
  %v693 = vmax.f32 %v549, 0.0
  %v694 = vmax.f32 %v554, 0.0
  %v695 = vmax.f32 %v557, 0.0
  %v696 = vmax.f32 %v562, 0.0
  %v697 = vmax.f32 %v565, 0.0
  %v698 = vmax.f32 %v570, 0.0
  %v699 = vmax.f32 %v573, 0.0
  %v700 = vmax.f32 %v578, 0.0
  %v701 = vmax.f32 %v581, 0.0
  %v702 = vmax.f32 %v586, 0.0
  %v703 = vmax.f32 %v589, 0.0
  %v704 = vmax.f32 %v594, 0.0
  %v705 = vmax.f32 %v597, 0.0
  %v706 = vmax.f32 %v602, 0.0
  %v707 = vmax.f32 %v605, 0.0
  %v708 = vmax.f32 %v610, 0.0
  %v709 = vmax.f32 %v613, 0.0
  %v710 = vmax.f32 %v618, 0.0
  %v711 = vmax.f32 %v621, 0.0
  %v712 = vmax.f32 %v626, 0.0
  %v713 = vmax.f32 %v629, 0.0
  %v714 = vmax.f32 %v634, 0.0
  %v715 = vmax.f32 %v637, 0.0
  %v716 = vmax.f32 %v642, 0.0
  %v717 = vmax.f32 %v645, 0.0
  %v718 = vmax.f32 %v650, 0.0
  %v719 = vmax.f32 %v653, 0.0
  %vm720 = vcmask 130048
  %721 = vst.msk [vmem:[%s3] sm:$0xff] %vm720, %v656
  %722 = vst.msk [vmem:[%s3 + $0x8] sm:$0xff] %vm720, %v657
  %723 = vst.msk [vmem:[%s3 + $0x10] sm:$0xff] %vm720, %v658
  %724 = vst.msk [vmem:[%s3 + $0x18] sm:$0xff] %vm720, %v659
  %725 = vst.msk [vmem:[%s3 + $0x20] sm:$0xff] %vm720, %v660
  %726 = vst.msk [vmem:[%s3 + $0x28] sm:$0xff] %vm720, %v661
  %727 = vst.msk [vmem:[%s3 + $0x30] sm:$0xff] %vm720, %v662
  %728 = vst.msk [vmem:[%s3 + $0x38] sm:$0xff] %vm720, %v663
  %729 = vst.msk [vmem:[%s3 + $0x40] sm:$0xff] %vm720, %v664
  %730 = vst.msk [vmem:[%s3 + $0x48] sm:$0xff] %vm720, %v665
  %731 = vst.msk [vmem:[%s3 + $0x50] sm:$0xff] %vm720, %v666
  %732 = vst.msk [vmem:[%s3 + $0x58] sm:$0xff] %vm720, %v667
  %733 = vst.msk [vmem:[%s3 + $0x60] sm:$0xff] %vm720, %v668
  %734 = vst.msk [vmem:[%s3 + $0x68] sm:$0xff] %vm720, %v669
  %735 = vst.msk [vmem:[%s3 + $0x70] sm:$0xff] %vm720, %v670
  %736 = vst.msk [vmem:[%s3 + $0x78] sm:$0xff] %vm720, %v671
  %737 = vst.msk [vmem:[%s3 + $0x80] sm:$0xff] %vm720, %v672
  %738 = vst.msk [vmem:[%s3 + $0x88] sm:$0xff] %vm720, %v673
  %739 = vst.msk [vmem:[%s3 + $0x90] sm:$0xff] %vm720, %v674
  %740 = vst.msk [vmem:[%s3 + $0x98] sm:$0xff] %vm720, %v675
  %741 = vst.msk [vmem:[%s3 + $0xa0] sm:$0xff] %vm720, %v676
  %742 = vst.msk [vmem:[%s3 + $0xa8] sm:$0xff] %vm720, %v677
  %743 = vst.msk [vmem:[%s3 + $0xb0] sm:$0xff] %vm720, %v678
  %744 = vst.msk [vmem:[%s3 + $0xb8] sm:$0xff] %vm720, %v679
  %745 = vst.msk [vmem:[%s3 + $0xc0] sm:$0xff] %vm720, %v680
  %746 = vst.msk [vmem:[%s3 + $0xc8] sm:$0xff] %vm720, %v681
  %747 = vst.msk [vmem:[%s3 + $0xd0] sm:$0xff] %vm720, %v682
  %748 = vst.msk [vmem:[%s3 + $0xd8] sm:$0xff] %vm720, %v683
  %749 = vst.msk [vmem:[%s3 + $0xe0] sm:$0xff] %vm720, %v684
  %750 = vst.msk [vmem:[%s3 + $0xe8] sm:$0xff] %vm720, %v685
  %751 = vst.msk [vmem:[%s3 + $0xf0] sm:$0xff] %vm720, %v686
  %752 = vst.msk [vmem:[%s3 + $0xf8] sm:$0xff] %vm720, %v687
  %753 = vst.msk [vmem:[%s3 + $0x100] sm:$0xff] %vm720, %v688
  %754 = vst.msk [vmem:[%s3 + $0x108] sm:$0xff] %vm720, %v689
  %755 = vst.msk [vmem:[%s3 + $0x110] sm:$0xff] %vm720, %v690
  %756 = vst.msk [vmem:[%s3 + $0x118] sm:$0xff] %vm720, %v691
  %757 = vst.msk [vmem:[%s3 + $0x120] sm:$0xff] %vm720, %v692
  %758 = vst.msk [vmem:[%s3 + $0x128] sm:$0xff] %vm720, %v693
  %759 = vst.msk [vmem:[%s3 + $0x130] sm:$0xff] %vm720, %v694
  %760 = vst.msk [vmem:[%s3 + $0x138] sm:$0xff] %vm720, %v695
  %761 = vst.msk [vmem:[%s3 + $0x140] sm:$0xff] %vm720, %v696
  %762 = vst.msk [vmem:[%s3 + $0x148] sm:$0xff] %vm720, %v697
  %763 = vst.msk [vmem:[%s3 + $0x150] sm:$0xff] %vm720, %v698
  %764 = vst.msk [vmem:[%s3 + $0x158] sm:$0xff] %vm720, %v699
  %765 = vst.msk [vmem:[%s3 + $0x160] sm:$0xff] %vm720, %v700
  %766 = vst.msk [vmem:[%s3 + $0x168] sm:$0xff] %vm720, %v701
  %767 = vst.msk [vmem:[%s3 + $0x170] sm:$0xff] %vm720, %v702
  %768 = vst.msk [vmem:[%s3 + $0x178] sm:$0xff] %vm720, %v703
  %769 = vst.msk [vmem:[%s3 + $0x180] sm:$0xff] %vm720, %v704
  %770 = vst.msk [vmem:[%s3 + $0x188] sm:$0xff] %vm720, %v705
  %771 = vst.msk [vmem:[%s3 + $0x190] sm:$0xff] %vm720, %v706
  %772 = vst.msk [vmem:[%s3 + $0x198] sm:$0xff] %vm720, %v707
  %773 = vst.msk [vmem:[%s3 + $0x1a0] sm:$0xff] %vm720, %v708
  %774 = vst.msk [vmem:[%s3 + $0x1a8] sm:$0xff] %vm720, %v709
  %775 = vst.msk [vmem:[%s3 + $0x1b0] sm:$0xff] %vm720, %v710
  %776 = vst.msk [vmem:[%s3 + $0x1b8] sm:$0xff] %vm720, %v711
  %777 = vst.msk [vmem:[%s3 + $0x1c0] sm:$0xff] %vm720, %v712
  %778 = vst.msk [vmem:[%s3 + $0x1c8] sm:$0xff] %vm720, %v713
  %779 = vst.msk [vmem:[%s3 + $0x1d0] sm:$0xff] %vm720, %v714
  %780 = vst.msk [vmem:[%s3 + $0x1d8] sm:$0xff] %vm720, %v715
  %781 = vst.msk [vmem:[%s3 + $0x1e0] sm:$0xff] %vm720, %v716
  %782 = vst.msk [vmem:[%s3 + $0x1e8] sm:$0xff] %vm720, %v717
  %783 = vst.msk [vmem:[%s3 + $0x1f0] sm:$0xff] %vm720, %v718
  %784 = vst.msk [vmem:[%s3 + $0x1f8] sm:$0xff] %vm720, %v719
  // Predicated region
  $region14: #{vae_forward.26} parent=0 // pred_check
    _
  $region15: #{vae_forward.26} parent=0 // pred_check_branch
    %786 = sbr.rel (0) target = $region17
  $region16: #{vae_forward.26} parent=0 // pred_region
    _
  $region17: #{vae_forward.26} parent=0 // pred_fallthru
    _
  // Predicated region
  $region18: #{vae_forward.26} parent=0 // pred_check
    _
  $region19: #{vae_forward.26} parent=0 // pred_check_branch
    %788 = sbr.rel (0) target = $region21
  $region20: #{vae_forward.26} parent=0 // pred_region
    _
  $region21: #{vae_forward.26} parent=0 // pred_fallthru
    _

// kernel: vae_forward.27
$region0: #{vae_forward.27}
  #allocation0 [shape = 'u32[]', space=smem, size = 0x4, offset = 0x4, fixed_abs, tag = 'smem constant byte address 0x4 - core index']
  #allocation1 [shape = 'u32[144,128]{1,0:T(1,128)}', space=vmem, size = 0x12000, scoped, tag = 'internal scratch']
  %s0 = inlined_call_operand.vmem [shape: bf16[2048,4], index: 0, kind: input, shape index: {}]
  %s1 = inlined_call_operand.vmem [shape: bf16[4,2], index: 1, kind: input, shape index: {}]
  %s2 = inlined_call_operand.vmem [shape: f32[1,2], index: 2, kind: input, shape index: {}]
  %s3 = inlined_call_operand.vmem [shape: f32[2048,2], index: 3, kind: input, shape index: {}]
  %s4 = inlined_call_operand.vmem [shape: f32[1,2], index: 4, kind: input, shape index: {}]
  %s5 = inlined_call_operand.vmem [shape: f32[2048,2], index: 5, kind: output, shape index: {0}]
  %s6 = inlined_call_operand.hbm [shape: f32[1,1], index: 6, kind: output, shape index: {1}]
  %7 = xla_tuple %s5, %s6
  %s8 = sld [smem:[#allocation0]]
  $region38: #{vae_forward.27} parent=0
    _
  %s10 = ssub.s32 1, %s8
  %s11 = scalar_select 0, %s10, %s8
  $region1: #{vae_forward.27} parent=0
    #allocation2 [shape = 'u8[512]{0}', space=vmem, size = 0x400, scoped, tag = 'output window, operand 1, single buffered']
    #allocation3 [shape = 's32[1]{0}', space=sflag, size = 0x4, scoped, tag = 'scoped memory for vae_forward.27']
    %12 = vsyncpa [#allocation3], 0
    // Predicated region
    $region2: #{vae_forward.27} parent=1 // pred_check
      _
    $region3: #{vae_forward.27} parent=1 // pred_check_branch
      %14 = sbr.rel (0) target = $region5
    $region4: #{vae_forward.27} parent=1 // pred_region
      _
    $region5: #{vae_forward.27} parent=1 // pred_fallthru
      _
    // Predicated region
    $region6: #{vae_forward.27} parent=1 // pred_check
      _
    $region7: #{vae_forward.27} parent=1 // pred_check_branch
      %16 = sbr.rel (0) target = $region9
    $region8: #{vae_forward.27} parent=1 // pred_region
      _
    $region9: #{vae_forward.27} parent=1 // pred_fallthru
      _
    // Predicated region
    $region10: #{vae_forward.27} parent=1 // pred_check
      _
    $region11: #{vae_forward.27} parent=1 // pred_check_branch
      %18 = sbr.rel (0) target = $region13
    $region12: #{vae_forward.27} parent=1 // pred_region
      _
    $region13: #{vae_forward.27} parent=1 // pred_fallthru
      _
    // Predicated region
    $region14: #{vae_forward.27} parent=1 // pred_check
      _
    $region15: #{vae_forward.27} parent=1 // pred_check_branch
      %20 = sbr.rel (0) target = $region17
    $region16: #{vae_forward.27} parent=1 // pred_region
      _
    $region17: #{vae_forward.27} parent=1 // pred_fallthru
      _
    // Predicated region
    $region18: #{vae_forward.27} parent=1 // pred_check
      _
    $region19: #{vae_forward.27} parent=1 // pred_check_branch
      %22 = sbr.rel (0) target = $region21
    $region20: #{vae_forward.27} parent=1 // pred_region
      _
    $region21: #{vae_forward.27} parent=1 // pred_fallthru
      _
    %v24 = vld [vmem:[%s0] sm:$0xf]
    %v25 = vld [vmem:[%s0 + $0x4] sm:$0xf]
    %v26 = vld [vmem:[%s0 + $0x8] sm:$0xf]
    %v27 = vld [vmem:[%s0 + $0xc] sm:$0xf]
    %v28 = vld [vmem:[%s0 + $0x10] sm:$0xf]
    %v29 = vld [vmem:[%s0 + $0x14] sm:$0xf]
    %v30 = vld [vmem:[%s0 + $0x18] sm:$0xf]
    %v31 = vld [vmem:[%s0 + $0x1c] sm:$0xf]
    %v32 = vld [vmem:[%s0 + $0x20] sm:$0xf]
    %v33 = vld [vmem:[%s0 + $0x24] sm:$0xf]
    %v34 = vld [vmem:[%s0 + $0x28] sm:$0xf]
    %v35 = vld [vmem:[%s0 + $0x2c] sm:$0xf]
    %v36 = vld [vmem:[%s0 + $0x30] sm:$0xf]
    %v37 = vld [vmem:[%s0 + $0x34] sm:$0xf]
    %v38 = vld [vmem:[%s0 + $0x38] sm:$0xf]
    %v39 = vld [vmem:[%s0 + $0x3c] sm:$0xf]
    %v40 = vld [vmem:[%s0 + $0x40] sm:$0xf]
    %v41 = vld [vmem:[%s0 + $0x44] sm:$0xf]
    %v42 = vld [vmem:[%s0 + $0x48] sm:$0xf]
    %v43 = vld [vmem:[%s0 + $0x4c] sm:$0xf]
    %v44 = vld [vmem:[%s0 + $0x50] sm:$0xf]
    %v45 = vld [vmem:[%s0 + $0x54] sm:$0xf]
    %v46 = vld [vmem:[%s0 + $0x58] sm:$0xf]
    %v47 = vld [vmem:[%s0 + $0x5c] sm:$0xf]
    %v48 = vld [vmem:[%s0 + $0x60] sm:$0xf]
    %v49 = vld [vmem:[%s0 + $0x64] sm:$0xf]
    %v50 = vld [vmem:[%s0 + $0x68] sm:$0xf]
    %v51 = vld [vmem:[%s0 + $0x6c] sm:$0xf]
    %v52 = vld [vmem:[%s0 + $0x70] sm:$0xf]
    %v53 = vld [vmem:[%s0 + $0x74] sm:$0xf]
    %v54 = vld [vmem:[%s0 + $0x78] sm:$0xf]
    %v55 = vld [vmem:[%s0 + $0x7c] sm:$0xf]
    %v56 = vld [vmem:[%s0 + $0x80] sm:$0xf]
    %v57 = vld [vmem:[%s0 + $0x84] sm:$0xf]
    %v58 = vld [vmem:[%s0 + $0x88] sm:$0xf]
    %v59 = vld [vmem:[%s0 + $0x8c] sm:$0xf]
    %v60 = vld [vmem:[%s0 + $0x90] sm:$0xf]
    %v61 = vld [vmem:[%s0 + $0x94] sm:$0xf]
    %v62 = vld [vmem:[%s0 + $0x98] sm:$0xf]
    %v63 = vld [vmem:[%s0 + $0x9c] sm:$0xf]
    %v64 = vld [vmem:[%s0 + $0xa0] sm:$0xf]
    %v65 = vld [vmem:[%s0 + $0xa4] sm:$0xf]
    %v66 = vld [vmem:[%s0 + $0xa8] sm:$0xf]
    %v67 = vld [vmem:[%s0 + $0xac] sm:$0xf]
    %v68 = vld [vmem:[%s0 + $0xb0] sm:$0xf]
    %v69 = vld [vmem:[%s0 + $0xb4] sm:$0xf]
    %v70 = vld [vmem:[%s0 + $0xb8] sm:$0xf]
    %v71 = vld [vmem:[%s0 + $0xbc] sm:$0xf]
    %v72 = vld [vmem:[%s0 + $0xc0] sm:$0xf]
    %v73 = vld [vmem:[%s0 + $0xc4] sm:$0xf]
    %v74 = vld [vmem:[%s0 + $0xc8] sm:$0xf]
    %v75 = vld [vmem:[%s0 + $0xcc] sm:$0xf]
    %v76 = vld [vmem:[%s0 + $0xd0] sm:$0xf]
    %v77 = vld [vmem:[%s0 + $0xd4] sm:$0xf]
    %v78 = vld [vmem:[%s0 + $0xd8] sm:$0xf]
    %v79 = vld [vmem:[%s0 + $0xdc] sm:$0xf]
    %v80 = vld [vmem:[%s0 + $0xe0] sm:$0xf]
    %v81 = vld [vmem:[%s0 + $0xe4] sm:$0xf]
    %v82 = vld [vmem:[%s0 + $0xe8] sm:$0xf]
    %v83 = vld [vmem:[%s0 + $0xec] sm:$0xf]
    %v84 = vld [vmem:[%s0 + $0xf0] sm:$0xf]
    %v85 = vld [vmem:[%s0 + $0xf4] sm:$0xf]
    %v86 = vld [vmem:[%s0 + $0xf8] sm:$0xf]
    %v87 = vld [vmem:[%s0 + $0xfc] sm:$0xf]
    %v88 = vld [vmem:[%s0 + $0x100] sm:$0xf]
    %v89 = vld [vmem:[%s0 + $0x104] sm:$0xf]
    %v90 = vld [vmem:[%s0 + $0x108] sm:$0xf]
    %v91 = vld [vmem:[%s0 + $0x10c] sm:$0xf]
    %v92 = vld [vmem:[%s0 + $0x110] sm:$0xf]
    %v93 = vld [vmem:[%s0 + $0x114] sm:$0xf]
    %v94 = vld [vmem:[%s0 + $0x118] sm:$0xf]
    %v95 = vld [vmem:[%s0 + $0x11c] sm:$0xf]
    %v96 = vld [vmem:[%s0 + $0x120] sm:$0xf]
    %v97 = vld [vmem:[%s0 + $0x124] sm:$0xf]
    %v98 = vld [vmem:[%s0 + $0x128] sm:$0xf]
    %v99 = vld [vmem:[%s0 + $0x12c] sm:$0xf]
    %v100 = vld [vmem:[%s0 + $0x130] sm:$0xf]
    %v101 = vld [vmem:[%s0 + $0x134] sm:$0xf]
    %v102 = vld [vmem:[%s0 + $0x138] sm:$0xf]
    %v103 = vld [vmem:[%s0 + $0x13c] sm:$0xf]
    %v104 = vld [vmem:[%s0 + $0x140] sm:$0xf]
    %v105 = vld [vmem:[%s0 + $0x144] sm:$0xf]
    %v106 = vld [vmem:[%s0 + $0x148] sm:$0xf]
    %v107 = vld [vmem:[%s0 + $0x14c] sm:$0xf]
    %v108 = vld [vmem:[%s0 + $0x150] sm:$0xf]
    %v109 = vld [vmem:[%s0 + $0x154] sm:$0xf]
    %v110 = vld [vmem:[%s0 + $0x158] sm:$0xf]
    %v111 = vld [vmem:[%s0 + $0x15c] sm:$0xf]
    %v112 = vld [vmem:[%s0 + $0x160] sm:$0xf]
    %v113 = vld [vmem:[%s0 + $0x164] sm:$0xf]
    %v114 = vld [vmem:[%s0 + $0x168] sm:$0xf]
    %v115 = vld [vmem:[%s0 + $0x16c] sm:$0xf]
    %v116 = vld [vmem:[%s0 + $0x170] sm:$0xf]
    %v117 = vld [vmem:[%s0 + $0x174] sm:$0xf]
    %v118 = vld [vmem:[%s0 + $0x178] sm:$0xf]
    %v119 = vld [vmem:[%s0 + $0x17c] sm:$0xf]
    %v120 = vld [vmem:[%s0 + $0x180] sm:$0xf]
    %v121 = vld [vmem:[%s0 + $0x184] sm:$0xf]
    %v122 = vld [vmem:[%s0 + $0x188] sm:$0xf]
    %v123 = vld [vmem:[%s0 + $0x18c] sm:$0xf]
    %v124 = vld [vmem:[%s0 + $0x190] sm:$0xf]
    %v125 = vld [vmem:[%s0 + $0x194] sm:$0xf]
    %v126 = vld [vmem:[%s0 + $0x198] sm:$0xf]
    %v127 = vld [vmem:[%s0 + $0x19c] sm:$0xf]
    %v128 = vld [vmem:[%s0 + $0x1a0] sm:$0xf]
    %v129 = vld [vmem:[%s0 + $0x1a4] sm:$0xf]
    %v130 = vld [vmem:[%s0 + $0x1a8] sm:$0xf]
    %v131 = vld [vmem:[%s0 + $0x1ac] sm:$0xf]
    %v132 = vld [vmem:[%s0 + $0x1b0] sm:$0xf]
    %v133 = vld [vmem:[%s0 + $0x1b4] sm:$0xf]
    %v134 = vld [vmem:[%s0 + $0x1b8] sm:$0xf]
    %v135 = vld [vmem:[%s0 + $0x1bc] sm:$0xf]
    %v136 = vld [vmem:[%s0 + $0x1c0] sm:$0xf]
    %v137 = vld [vmem:[%s0 + $0x1c4] sm:$0xf]
    %v138 = vld [vmem:[%s0 + $0x1c8] sm:$0xf]
    %v139 = vld [vmem:[%s0 + $0x1cc] sm:$0xf]
    %v140 = vld [vmem:[%s0 + $0x1d0] sm:$0xf]
    %v141 = vld [vmem:[%s0 + $0x1d4] sm:$0xf]
    %v142 = vld [vmem:[%s0 + $0x1d8] sm:$0xf]
    %v143 = vld [vmem:[%s0 + $0x1dc] sm:$0xf]
    %v144 = vld [vmem:[%s0 + $0x1e0] sm:$0xf]
    %v145 = vld [vmem:[%s0 + $0x1e4] sm:$0xf]
    %v146 = vld [vmem:[%s0 + $0x1e8] sm:$0xf]
    %v147 = vld [vmem:[%s0 + $0x1ec] sm:$0xf]
    %v148 = vld [vmem:[%s0 + $0x1f0] sm:$0xf]
    %v149 = vld [vmem:[%s0 + $0x1f4] sm:$0xf]
    %v150 = vld [vmem:[%s0 + $0x1f8] sm:$0xf]
    %v151 = vld [vmem:[%s0 + $0x1fc] sm:$0xf]
    %v152 = vld [vmem:[%s0 + $0x200] sm:$0xf]
    %v153 = vld [vmem:[%s0 + $0x204] sm:$0xf]
    %v154 = vld [vmem:[%s0 + $0x208] sm:$0xf]
    %v155 = vld [vmem:[%s0 + $0x20c] sm:$0xf]
    %v156 = vld [vmem:[%s0 + $0x210] sm:$0xf]
    %v157 = vld [vmem:[%s0 + $0x214] sm:$0xf]
    %v158 = vld [vmem:[%s0 + $0x218] sm:$0xf]
    %v159 = vld [vmem:[%s0 + $0x21c] sm:$0xf]
    %v160 = vld [vmem:[%s0 + $0x220] sm:$0xf]
    %v161 = vld [vmem:[%s0 + $0x224] sm:$0xf]
    %v162 = vld [vmem:[%s0 + $0x228] sm:$0xf]
    %v163 = vld [vmem:[%s0 + $0x22c] sm:$0xf]
    %v164 = vld [vmem:[%s0 + $0x230] sm:$0xf]
    %v165 = vld [vmem:[%s0 + $0x234] sm:$0xf]
    %v166 = vld [vmem:[%s0 + $0x238] sm:$0xf]
    %v167 = vld [vmem:[%s0 + $0x23c] sm:$0xf]
    %v168 = vld [vmem:[%s0 + $0x240] sm:$0xf]
    %v169 = vld [vmem:[%s0 + $0x244] sm:$0xf]
    %v170 = vld [vmem:[%s0 + $0x248] sm:$0xf]
    %v171 = vld [vmem:[%s0 + $0x24c] sm:$0xf]
    %v172 = vld [vmem:[%s0 + $0x250] sm:$0xf]
    %v173 = vld [vmem:[%s0 + $0x254] sm:$0xf]
    %v174 = vld [vmem:[%s0 + $0x258] sm:$0xf]
    %v175 = vld [vmem:[%s0 + $0x25c] sm:$0xf]
    %v176 = vld [vmem:[%s0 + $0x260] sm:$0xf]
    %v177 = vld [vmem:[%s0 + $0x264] sm:$0xf]
    %v178 = vld [vmem:[%s0 + $0x268] sm:$0xf]
    %v179 = vld [vmem:[%s0 + $0x26c] sm:$0xf]
    %v180 = vld [vmem:[%s0 + $0x270] sm:$0xf]
    %v181 = vld [vmem:[%s0 + $0x274] sm:$0xf]
    %v182 = vld [vmem:[%s0 + $0x278] sm:$0xf]
    %v183 = vld [vmem:[%s0 + $0x27c] sm:$0xf]
    %v184 = vld [vmem:[%s0 + $0x280] sm:$0xf]
    %v185 = vld [vmem:[%s0 + $0x284] sm:$0xf]
    %v186 = vld [vmem:[%s0 + $0x288] sm:$0xf]
    %v187 = vld [vmem:[%s0 + $0x28c] sm:$0xf]
    %v188 = vld [vmem:[%s0 + $0x290] sm:$0xf]
    %v189 = vld [vmem:[%s0 + $0x294] sm:$0xf]
    %v190 = vld [vmem:[%s0 + $0x298] sm:$0xf]
    %v191 = vld [vmem:[%s0 + $0x29c] sm:$0xf]
    %v192 = vld [vmem:[%s0 + $0x2a0] sm:$0xf]
    %v193 = vld [vmem:[%s0 + $0x2a4] sm:$0xf]
    %v194 = vld [vmem:[%s0 + $0x2a8] sm:$0xf]
    %v195 = vld [vmem:[%s0 + $0x2ac] sm:$0xf]
    %v196 = vld [vmem:[%s0 + $0x2b0] sm:$0xf]
    %v197 = vld [vmem:[%s0 + $0x2b4] sm:$0xf]
    %v198 = vld [vmem:[%s0 + $0x2b8] sm:$0xf]
    %v199 = vld [vmem:[%s0 + $0x2bc] sm:$0xf]
    %v200 = vld [vmem:[%s0 + $0x2c0] sm:$0xf]
    %v201 = vld [vmem:[%s0 + $0x2c4] sm:$0xf]
    %v202 = vld [vmem:[%s0 + $0x2c8] sm:$0xf]
    %v203 = vld [vmem:[%s0 + $0x2cc] sm:$0xf]
    %v204 = vld [vmem:[%s0 + $0x2d0] sm:$0xf]
    %v205 = vld [vmem:[%s0 + $0x2d4] sm:$0xf]
    %v206 = vld [vmem:[%s0 + $0x2d8] sm:$0xf]
    %v207 = vld [vmem:[%s0 + $0x2dc] sm:$0xf]
    %v208 = vld [vmem:[%s0 + $0x2e0] sm:$0xf]
    %v209 = vld [vmem:[%s0 + $0x2e4] sm:$0xf]
    %v210 = vld [vmem:[%s0 + $0x2e8] sm:$0xf]
    %v211 = vld [vmem:[%s0 + $0x2ec] sm:$0xf]
    %v212 = vld [vmem:[%s0 + $0x2f0] sm:$0xf]
    %v213 = vld [vmem:[%s0 + $0x2f4] sm:$0xf]
    %v214 = vld [vmem:[%s0 + $0x2f8] sm:$0xf]
    %v215 = vld [vmem:[%s0 + $0x2fc] sm:$0xf]
    %v216 = vld [vmem:[%s0 + $0x300] sm:$0xf]
    %v217 = vld [vmem:[%s0 + $0x304] sm:$0xf]
    %v218 = vld [vmem:[%s0 + $0x308] sm:$0xf]
    %v219 = vld [vmem:[%s0 + $0x30c] sm:$0xf]
    %v220 = vld [vmem:[%s0 + $0x310] sm:$0xf]
    %v221 = vld [vmem:[%s0 + $0x314] sm:$0xf]
    %v222 = vld [vmem:[%s0 + $0x318] sm:$0xf]
    %v223 = vld [vmem:[%s0 + $0x31c] sm:$0xf]
    %v224 = vld [vmem:[%s0 + $0x320] sm:$0xf]
    %v225 = vld [vmem:[%s0 + $0x324] sm:$0xf]
    %v226 = vld [vmem:[%s0 + $0x328] sm:$0xf]
    %v227 = vld [vmem:[%s0 + $0x32c] sm:$0xf]
    %v228 = vld [vmem:[%s0 + $0x330] sm:$0xf]
    %v229 = vld [vmem:[%s0 + $0x334] sm:$0xf]
    %v230 = vld [vmem:[%s0 + $0x338] sm:$0xf]
    %v231 = vld [vmem:[%s0 + $0x33c] sm:$0xf]
    %v232 = vld [vmem:[%s0 + $0x340] sm:$0xf]
    %v233 = vld [vmem:[%s0 + $0x344] sm:$0xf]
    %v234 = vld [vmem:[%s0 + $0x348] sm:$0xf]
    %v235 = vld [vmem:[%s0 + $0x34c] sm:$0xf]
    %v236 = vld [vmem:[%s0 + $0x350] sm:$0xf]
    %v237 = vld [vmem:[%s0 + $0x354] sm:$0xf]
    %v238 = vld [vmem:[%s0 + $0x358] sm:$0xf]
    %v239 = vld [vmem:[%s0 + $0x35c] sm:$0xf]
    %v240 = vld [vmem:[%s0 + $0x360] sm:$0xf]
    %v241 = vld [vmem:[%s0 + $0x364] sm:$0xf]
    %v242 = vld [vmem:[%s0 + $0x368] sm:$0xf]
    %v243 = vld [vmem:[%s0 + $0x36c] sm:$0xf]
    %v244 = vld [vmem:[%s0 + $0x370] sm:$0xf]
    %v245 = vld [vmem:[%s0 + $0x374] sm:$0xf]
    %v246 = vld [vmem:[%s0 + $0x378] sm:$0xf]
    %v247 = vld [vmem:[%s0 + $0x37c] sm:$0xf]
    %v248 = vld [vmem:[%s0 + $0x380] sm:$0xf]
    %v249 = vld [vmem:[%s0 + $0x384] sm:$0xf]
    %v250 = vld [vmem:[%s0 + $0x388] sm:$0xf]
    %v251 = vld [vmem:[%s0 + $0x38c] sm:$0xf]
    %v252 = vld [vmem:[%s0 + $0x390] sm:$0xf]
    %v253 = vld [vmem:[%s0 + $0x394] sm:$0xf]
    %v254 = vld [vmem:[%s0 + $0x398] sm:$0xf]
    %v255 = vld [vmem:[%s0 + $0x39c] sm:$0xf]
    %v256 = vld [vmem:[%s0 + $0x3a0] sm:$0xf]
    %v257 = vld [vmem:[%s0 + $0x3a4] sm:$0xf]
    %v258 = vld [vmem:[%s0 + $0x3a8] sm:$0xf]
    %v259 = vld [vmem:[%s0 + $0x3ac] sm:$0xf]
    %v260 = vld [vmem:[%s0 + $0x3b0] sm:$0xf]
    %v261 = vld [vmem:[%s0 + $0x3b4] sm:$0xf]
    %v262 = vld [vmem:[%s0 + $0x3b8] sm:$0xf]
    %v263 = vld [vmem:[%s0 + $0x3bc] sm:$0xf]
    %v264 = vld [vmem:[%s0 + $0x3c0] sm:$0xf]
    %v265 = vld [vmem:[%s0 + $0x3c4] sm:$0xf]
    %v266 = vld [vmem:[%s0 + $0x3c8] sm:$0xf]
    %v267 = vld [vmem:[%s0 + $0x3cc] sm:$0xf]
    %v268 = vld [vmem:[%s0 + $0x3d0] sm:$0xf]
    %v269 = vld [vmem:[%s0 + $0x3d4] sm:$0xf]
    %v270 = vld [vmem:[%s0 + $0x3d8] sm:$0xf]
    %v271 = vld [vmem:[%s0 + $0x3dc] sm:$0xf]
    %v272 = vld [vmem:[%s0 + $0x3e0] sm:$0xf]
    %v273 = vld [vmem:[%s0 + $0x3e4] sm:$0xf]
    %v274 = vld [vmem:[%s0 + $0x3e8] sm:$0xf]
    %v275 = vld [vmem:[%s0 + $0x3ec] sm:$0xf]
    %v276 = vld [vmem:[%s0 + $0x3f0] sm:$0xf]
    %v277 = vld [vmem:[%s0 + $0x3f4] sm:$0xf]
    %v278 = vld [vmem:[%s0 + $0x3f8] sm:$0xf]
    %v279 = vld [vmem:[%s0 + $0x3fc] sm:$0xf]
    %v280 = vld [vmem:[%s1] sm:$0x3]
    %v281 = vld [vmem:[%s2] sm:$0x1]
    %v283 = vlaneseq
    %v284 = vshrl.u32 %v283, 7
    %v285 = vsub.s32 0, %v284
    %v286 = vrot.slane %v281, %v285
    %v544 = vunpack.c.l.b16 %v24
    %v545 = vunpack.c.l.b16 %v25
    %v546 = vunpack.c.l.b16 %v26
    %v547 = vunpack.c.l.b16 %v27
    %v548 = vunpack.c.l.b16 %v28
    %v549 = vunpack.c.l.b16 %v29
    %v550 = vunpack.c.l.b16 %v30
    %v551 = vunpack.c.l.b16 %v31
    %v552 = vunpack.c.l.b16 %v32
    %v553 = vunpack.c.l.b16 %v33
    %v554 = vunpack.c.l.b16 %v34
    %v555 = vunpack.c.l.b16 %v35
    %v556 = vunpack.c.l.b16 %v36
    %v557 = vunpack.c.l.b16 %v37
    %v558 = vunpack.c.l.b16 %v38
    %v559 = vunpack.c.l.b16 %v39
    %v560 = vunpack.c.l.b16 %v40
    %v561 = vunpack.c.l.b16 %v41
    %v562 = vunpack.c.l.b16 %v42
    %v563 = vunpack.c.l.b16 %v43
    %v564 = vunpack.c.l.b16 %v44
    %v565 = vunpack.c.l.b16 %v45
    %v566 = vunpack.c.l.b16 %v46
    %v567 = vunpack.c.l.b16 %v47
    %v568 = vunpack.c.l.b16 %v48
    %v569 = vunpack.c.l.b16 %v49
    %v570 = vunpack.c.l.b16 %v50
    %v571 = vunpack.c.l.b16 %v51
    %v572 = vunpack.c.l.b16 %v52
    %v573 = vunpack.c.l.b16 %v53
    %v574 = vunpack.c.l.b16 %v54
    %v575 = vunpack.c.l.b16 %v55
    %v576 = vunpack.c.l.b16 %v56
    %v577 = vunpack.c.l.b16 %v57
    %v578 = vunpack.c.l.b16 %v58
    %v579 = vunpack.c.l.b16 %v59
    %v580 = vunpack.c.l.b16 %v60
    %v581 = vunpack.c.l.b16 %v61
    %v582 = vunpack.c.l.b16 %v62
    %v583 = vunpack.c.l.b16 %v63
    %v584 = vunpack.c.l.b16 %v64
    %v585 = vunpack.c.l.b16 %v65
    %v586 = vunpack.c.l.b16 %v66
    %v587 = vunpack.c.l.b16 %v67
    %v588 = vunpack.c.l.b16 %v68
    %v589 = vunpack.c.l.b16 %v69
    %v590 = vunpack.c.l.b16 %v70
    %v591 = vunpack.c.l.b16 %v71
    %v592 = vunpack.c.l.b16 %v72
    %v593 = vunpack.c.l.b16 %v73
    %v594 = vunpack.c.l.b16 %v74
    %v595 = vunpack.c.l.b16 %v75
    %v596 = vunpack.c.l.b16 %v76
    %v597 = vunpack.c.l.b16 %v77
    %v598 = vunpack.c.l.b16 %v78
    %v599 = vunpack.c.l.b16 %v79
    %v600 = vunpack.c.l.b16 %v80
    %v601 = vunpack.c.l.b16 %v81
    %v602 = vunpack.c.l.b16 %v82
    %v603 = vunpack.c.l.b16 %v83
    %v604 = vunpack.c.l.b16 %v84
    %v605 = vunpack.c.l.b16 %v85
    %v606 = vunpack.c.l.b16 %v86
    %v607 = vunpack.c.l.b16 %v87
    %v608 = vunpack.c.l.b16 %v88
    %v609 = vunpack.c.l.b16 %v89
    %v610 = vunpack.c.l.b16 %v90
    %v611 = vunpack.c.l.b16 %v91
    %v612 = vunpack.c.l.b16 %v92
    %v613 = vunpack.c.l.b16 %v93
    %v614 = vunpack.c.l.b16 %v94
    %v615 = vunpack.c.l.b16 %v95
    %v616 = vunpack.c.l.b16 %v96
    %v617 = vunpack.c.l.b16 %v97
    %v618 = vunpack.c.l.b16 %v98
    %v619 = vunpack.c.l.b16 %v99
    %v620 = vunpack.c.l.b16 %v100
    %v621 = vunpack.c.l.b16 %v101
    %v622 = vunpack.c.l.b16 %v102
    %v623 = vunpack.c.l.b16 %v103
    %v624 = vunpack.c.l.b16 %v104
    %v625 = vunpack.c.l.b16 %v105
    %v626 = vunpack.c.l.b16 %v106
    %v627 = vunpack.c.l.b16 %v107
    %v628 = vunpack.c.l.b16 %v108
    %v629 = vunpack.c.l.b16 %v109
    %v630 = vunpack.c.l.b16 %v110
    %v631 = vunpack.c.l.b16 %v111
    %v632 = vunpack.c.l.b16 %v112
    %v633 = vunpack.c.l.b16 %v113
    %v634 = vunpack.c.l.b16 %v114
    %v635 = vunpack.c.l.b16 %v115
    %v636 = vunpack.c.l.b16 %v116
    %v637 = vunpack.c.l.b16 %v117
    %v638 = vunpack.c.l.b16 %v118
    %v639 = vunpack.c.l.b16 %v119
    %v640 = vunpack.c.l.b16 %v120
    %v641 = vunpack.c.l.b16 %v121
    %v642 = vunpack.c.l.b16 %v122
    %v643 = vunpack.c.l.b16 %v123
    %v644 = vunpack.c.l.b16 %v124
    %v645 = vunpack.c.l.b16 %v125
    %v646 = vunpack.c.l.b16 %v126
    %v647 = vunpack.c.l.b16 %v127
    %v648 = vunpack.c.l.b16 %v128
    %v649 = vunpack.c.l.b16 %v129
    %v650 = vunpack.c.l.b16 %v130
    %v651 = vunpack.c.l.b16 %v131
    %v652 = vunpack.c.l.b16 %v132
    %v653 = vunpack.c.l.b16 %v133
    %v654 = vunpack.c.l.b16 %v134
    %v655 = vunpack.c.l.b16 %v135
    %v656 = vunpack.c.l.b16 %v136
    %v657 = vunpack.c.l.b16 %v137
    %v658 = vunpack.c.l.b16 %v138
    %v659 = vunpack.c.l.b16 %v139
    %v660 = vunpack.c.l.b16 %v140
    %v661 = vunpack.c.l.b16 %v141
    %v662 = vunpack.c.l.b16 %v142
    %v663 = vunpack.c.l.b16 %v143
    %v664 = vunpack.c.l.b16 %v144
    %v665 = vunpack.c.l.b16 %v145
    %v666 = vunpack.c.l.b16 %v146
    %v667 = vunpack.c.l.b16 %v147
    %v668 = vunpack.c.l.b16 %v148
    %v669 = vunpack.c.l.b16 %v149
    %v670 = vunpack.c.l.b16 %v150
    %v671 = vunpack.c.l.b16 %v151
    %v672 = vunpack.c.l.b16 %v152
    %v673 = vunpack.c.l.b16 %v153
    %v674 = vunpack.c.l.b16 %v154
    %v675 = vunpack.c.l.b16 %v155
    %v676 = vunpack.c.l.b16 %v156
    %v677 = vunpack.c.l.b16 %v157
    %v678 = vunpack.c.l.b16 %v158
    %v679 = vunpack.c.l.b16 %v159
    %v680 = vunpack.c.l.b16 %v160
    %v681 = vunpack.c.l.b16 %v161
    %v682 = vunpack.c.l.b16 %v162
    %v683 = vunpack.c.l.b16 %v163
    %v684 = vunpack.c.l.b16 %v164
    %v685 = vunpack.c.l.b16 %v165
    %v686 = vunpack.c.l.b16 %v166
    %v687 = vunpack.c.l.b16 %v167
    %v688 = vunpack.c.l.b16 %v168
    %v689 = vunpack.c.l.b16 %v169
    %v690 = vunpack.c.l.b16 %v170
    %v691 = vunpack.c.l.b16 %v171
    %v692 = vunpack.c.l.b16 %v172
    %v693 = vunpack.c.l.b16 %v173
    %v694 = vunpack.c.l.b16 %v174
    %v695 = vunpack.c.l.b16 %v175
    %v696 = vunpack.c.l.b16 %v176
    %v697 = vunpack.c.l.b16 %v177
    %v698 = vunpack.c.l.b16 %v178
    %v699 = vunpack.c.l.b16 %v179
    %v700 = vunpack.c.l.b16 %v180
    %v701 = vunpack.c.l.b16 %v181
    %v702 = vunpack.c.l.b16 %v182
    %v703 = vunpack.c.l.b16 %v183
    %v704 = vunpack.c.l.b16 %v184
    %v705 = vunpack.c.l.b16 %v185
    %v706 = vunpack.c.l.b16 %v186
    %v707 = vunpack.c.l.b16 %v187
    %v708 = vunpack.c.l.b16 %v188
    %v709 = vunpack.c.l.b16 %v189
    %v710 = vunpack.c.l.b16 %v190
    %v711 = vunpack.c.l.b16 %v191
    %v712 = vunpack.c.l.b16 %v192
    %v713 = vunpack.c.l.b16 %v193
    %v714 = vunpack.c.l.b16 %v194
    %v715 = vunpack.c.l.b16 %v195
    %v716 = vunpack.c.l.b16 %v196
    %v717 = vunpack.c.l.b16 %v197
    %v718 = vunpack.c.l.b16 %v198
    %v719 = vunpack.c.l.b16 %v199
    %v720 = vunpack.c.l.b16 %v200
    %v721 = vunpack.c.l.b16 %v201
    %v722 = vunpack.c.l.b16 %v202
    %v723 = vunpack.c.l.b16 %v203
    %v724 = vunpack.c.l.b16 %v204
    %v725 = vunpack.c.l.b16 %v205
    %v726 = vunpack.c.l.b16 %v206
    %v727 = vunpack.c.l.b16 %v207
    %v728 = vunpack.c.l.b16 %v208
    %v729 = vunpack.c.l.b16 %v209
    %v730 = vunpack.c.l.b16 %v210
    %v731 = vunpack.c.l.b16 %v211
    %v732 = vunpack.c.l.b16 %v212
    %v733 = vunpack.c.l.b16 %v213
    %v734 = vunpack.c.l.b16 %v214
    %v735 = vunpack.c.l.b16 %v215
    %v736 = vunpack.c.l.b16 %v216
    %v737 = vunpack.c.l.b16 %v217
    %v738 = vunpack.c.l.b16 %v218
    %v739 = vunpack.c.l.b16 %v219
    %v740 = vunpack.c.l.b16 %v220
    %v741 = vunpack.c.l.b16 %v221
    %v742 = vunpack.c.l.b16 %v222
    %v743 = vunpack.c.l.b16 %v223
    %v744 = vunpack.c.l.b16 %v224
    %v745 = vunpack.c.l.b16 %v225
    %v746 = vunpack.c.l.b16 %v226
    %v747 = vunpack.c.l.b16 %v227
    %v748 = vunpack.c.l.b16 %v228
    %v749 = vunpack.c.l.b16 %v229
    %v750 = vunpack.c.l.b16 %v230
    %v751 = vunpack.c.l.b16 %v231
    %v752 = vunpack.c.l.b16 %v232
    %v753 = vunpack.c.l.b16 %v233
    %v754 = vunpack.c.l.b16 %v234
    %v755 = vunpack.c.l.b16 %v235
    %v756 = vunpack.c.l.b16 %v236
    %v757 = vunpack.c.l.b16 %v237
    %v758 = vunpack.c.l.b16 %v238
    %v759 = vunpack.c.l.b16 %v239
    %v760 = vunpack.c.l.b16 %v240
    %v761 = vunpack.c.l.b16 %v241
    %v762 = vunpack.c.l.b16 %v242
    %v763 = vunpack.c.l.b16 %v243
    %v764 = vunpack.c.l.b16 %v244
    %v765 = vunpack.c.l.b16 %v245
    %v766 = vunpack.c.l.b16 %v246
    %v767 = vunpack.c.l.b16 %v247
    %v768 = vunpack.c.l.b16 %v248
    %v769 = vunpack.c.l.b16 %v249
    %v770 = vunpack.c.l.b16 %v250
    %v771 = vunpack.c.l.b16 %v251
    %v772 = vunpack.c.l.b16 %v252
    %v773 = vunpack.c.l.b16 %v253
    %v774 = vunpack.c.l.b16 %v254
    %v775 = vunpack.c.l.b16 %v255
    %v776 = vunpack.c.l.b16 %v256
    %v777 = vunpack.c.l.b16 %v257
    %v778 = vunpack.c.l.b16 %v258
    %v779 = vunpack.c.l.b16 %v259
    %v780 = vunpack.c.l.b16 %v260
    %v781 = vunpack.c.l.b16 %v261
    %v782 = vunpack.c.l.b16 %v262
    %v783 = vunpack.c.l.b16 %v263
    %v784 = vunpack.c.l.b16 %v264
    %v785 = vunpack.c.l.b16 %v265
    %v786 = vunpack.c.l.b16 %v266
    %v787 = vunpack.c.l.b16 %v267
    %v788 = vunpack.c.l.b16 %v268
    %v789 = vunpack.c.l.b16 %v269
    %v790 = vunpack.c.l.b16 %v270
    %v791 = vunpack.c.l.b16 %v271
    %v792 = vunpack.c.l.b16 %v272
    %v793 = vunpack.c.l.b16 %v273
    %v794 = vunpack.c.l.b16 %v274
    %v795 = vunpack.c.l.b16 %v275
    %v796 = vunpack.c.l.b16 %v276
    %v797 = vunpack.c.l.b16 %v277
    %v798 = vunpack.c.l.b16 %v278
    %v799 = vunpack.c.l.b16 %v279
    %v800 = vpack.c.b16 %v545, %v544
    %v801 = vpack.c.b16 %v547, %v546
    %v802 = vpack.c.b16 %v549, %v548
    %v803 = vpack.c.b16 %v551, %v550
    %v804 = vpack.c.b16 %v553, %v552
    %v805 = vpack.c.b16 %v555, %v554
    %v806 = vpack.c.b16 %v557, %v556
    %v807 = vpack.c.b16 %v559, %v558
    %v808 = vpack.c.b16 %v561, %v560
    %v809 = vpack.c.b16 %v563, %v562
    %v810 = vpack.c.b16 %v565, %v564
    %v811 = vpack.c.b16 %v567, %v566
    %v812 = vpack.c.b16 %v569, %v568
    %v813 = vpack.c.b16 %v571, %v570
    %v814 = vpack.c.b16 %v573, %v572
    %v815 = vpack.c.b16 %v575, %v574
    %v816 = vpack.c.b16 %v577, %v576
    %v817 = vpack.c.b16 %v579, %v578
    %v818 = vpack.c.b16 %v581, %v580
    %v819 = vpack.c.b16 %v583, %v582
    %v820 = vpack.c.b16 %v585, %v584
    %v821 = vpack.c.b16 %v587, %v586
    %v822 = vpack.c.b16 %v589, %v588
    %v823 = vpack.c.b16 %v591, %v590
    %v824 = vpack.c.b16 %v593, %v592
    %v825 = vpack.c.b16 %v595, %v594
    %v826 = vpack.c.b16 %v597, %v596
    %v827 = vpack.c.b16 %v599, %v598
    %v828 = vpack.c.b16 %v601, %v600
    %v829 = vpack.c.b16 %v603, %v602
    %v830 = vpack.c.b16 %v605, %v604
    %v831 = vpack.c.b16 %v607, %v606
    %v832 = vpack.c.b16 %v609, %v608
    %v833 = vpack.c.b16 %v611, %v610
    %v834 = vpack.c.b16 %v613, %v612
    %v835 = vpack.c.b16 %v615, %v614
    %v836 = vpack.c.b16 %v617, %v616
    %v837 = vpack.c.b16 %v619, %v618
    %v838 = vpack.c.b16 %v621, %v620
    %v839 = vpack.c.b16 %v623, %v622
    %v840 = vpack.c.b16 %v625, %v624
    %v841 = vpack.c.b16 %v627, %v626
    %v842 = vpack.c.b16 %v629, %v628
    %v843 = vpack.c.b16 %v631, %v630
    %v844 = vpack.c.b16 %v633, %v632
    %v845 = vpack.c.b16 %v635, %v634
    %v846 = vpack.c.b16 %v637, %v636
    %v847 = vpack.c.b16 %v639, %v638
    %v848 = vpack.c.b16 %v641, %v640
    %v849 = vpack.c.b16 %v643, %v642
    %v850 = vpack.c.b16 %v645, %v644
    %v851 = vpack.c.b16 %v647, %v646
    %v852 = vpack.c.b16 %v649, %v648
    %v853 = vpack.c.b16 %v651, %v650
    %v854 = vpack.c.b16 %v653, %v652
    %v855 = vpack.c.b16 %v655, %v654
    %v856 = vpack.c.b16 %v657, %v656
    %v857 = vpack.c.b16 %v659, %v658
    %v858 = vpack.c.b16 %v661, %v660
    %v859 = vpack.c.b16 %v663, %v662
    %v860 = vpack.c.b16 %v665, %v664
    %v861 = vpack.c.b16 %v667, %v666
    %v862 = vpack.c.b16 %v669, %v668
    %v863 = vpack.c.b16 %v671, %v670
    %v864 = vpack.c.b16 %v673, %v672
    %v865 = vpack.c.b16 %v675, %v674
    %v866 = vpack.c.b16 %v677, %v676
    %v867 = vpack.c.b16 %v679, %v678
    %v868 = vpack.c.b16 %v681, %v680
    %v869 = vpack.c.b16 %v683, %v682
    %v870 = vpack.c.b16 %v685, %v684
    %v871 = vpack.c.b16 %v687, %v686
    %v872 = vpack.c.b16 %v689, %v688
    %v873 = vpack.c.b16 %v691, %v690
    %v874 = vpack.c.b16 %v693, %v692
    %v875 = vpack.c.b16 %v695, %v694
    %v876 = vpack.c.b16 %v697, %v696
    %v877 = vpack.c.b16 %v699, %v698
    %v878 = vpack.c.b16 %v701, %v700
    %v879 = vpack.c.b16 %v703, %v702
    %v880 = vpack.c.b16 %v705, %v704
    %v881 = vpack.c.b16 %v707, %v706
    %v882 = vpack.c.b16 %v709, %v708
    %v883 = vpack.c.b16 %v711, %v710
    %v884 = vpack.c.b16 %v713, %v712
    %v885 = vpack.c.b16 %v715, %v714
    %v886 = vpack.c.b16 %v717, %v716
    %v887 = vpack.c.b16 %v719, %v718
    %v888 = vpack.c.b16 %v721, %v720
    %v889 = vpack.c.b16 %v723, %v722
    %v890 = vpack.c.b16 %v725, %v724
    %v891 = vpack.c.b16 %v727, %v726
    %v892 = vpack.c.b16 %v729, %v728
    %v893 = vpack.c.b16 %v731, %v730
    %v894 = vpack.c.b16 %v733, %v732
    %v895 = vpack.c.b16 %v735, %v734
    %v896 = vpack.c.b16 %v737, %v736
    %v897 = vpack.c.b16 %v739, %v738
    %v898 = vpack.c.b16 %v741, %v740
    %v899 = vpack.c.b16 %v743, %v742
    %v900 = vpack.c.b16 %v745, %v744
    %v901 = vpack.c.b16 %v747, %v746
    %v902 = vpack.c.b16 %v749, %v748
    %v903 = vpack.c.b16 %v751, %v750
    %v904 = vpack.c.b16 %v753, %v752
    %v905 = vpack.c.b16 %v755, %v754
    %v906 = vpack.c.b16 %v757, %v756
    %v907 = vpack.c.b16 %v759, %v758
    %v908 = vpack.c.b16 %v761, %v760
    %v909 = vpack.c.b16 %v763, %v762
    %v910 = vpack.c.b16 %v765, %v764
    %v911 = vpack.c.b16 %v767, %v766
    %v912 = vpack.c.b16 %v769, %v768
    %v913 = vpack.c.b16 %v771, %v770
    %v914 = vpack.c.b16 %v773, %v772
    %v915 = vpack.c.b16 %v775, %v774
    %v916 = vpack.c.b16 %v777, %v776
    %v917 = vpack.c.b16 %v779, %v778
    %v918 = vpack.c.b16 %v781, %v780
    %v919 = vpack.c.b16 %v783, %v782
    %v920 = vpack.c.b16 %v785, %v784
    %v921 = vpack.c.b16 %v787, %v786
    %v922 = vpack.c.b16 %v789, %v788
    %v923 = vpack.c.b16 %v791, %v790
    %v924 = vpack.c.b16 %v793, %v792
    %v925 = vpack.c.b16 %v795, %v794
    %v926 = vpack.c.b16 %v797, %v796
    %v927 = vpack.c.b16 %v799, %v798
    %vm928 = vcmask 31744
    %v930 = vsel %vm928, %v800, 0
    %v933 = vsel %vm928, %v801, 0
    %v936 = vsel %vm928, %v802, 0
    %v939 = vsel %vm928, %v803, 0
    %v942 = vsel %vm928, %v804, 0
    %v945 = vsel %vm928, %v805, 0
    %v948 = vsel %vm928, %v806, 0
    %v951 = vsel %vm928, %v807, 0
    %v954 = vsel %vm928, %v808, 0
    %v957 = vsel %vm928, %v809, 0
    %v960 = vsel %vm928, %v810, 0
    %v963 = vsel %vm928, %v811, 0
    %v966 = vsel %vm928, %v812, 0
    %v969 = vsel %vm928, %v813, 0
    %v972 = vsel %vm928, %v814, 0
    %v975 = vsel %vm928, %v815, 0
    %v978 = vsel %vm928, %v816, 0
    %v981 = vsel %vm928, %v817, 0
    %v984 = vsel %vm928, %v818, 0
    %v987 = vsel %vm928, %v819, 0
    %v990 = vsel %vm928, %v820, 0
    %v993 = vsel %vm928, %v821, 0
    %v996 = vsel %vm928, %v822, 0
    %v999 = vsel %vm928, %v823, 0
    %v1002 = vsel %vm928, %v824, 0
    %v1005 = vsel %vm928, %v825, 0
    %v1008 = vsel %vm928, %v826, 0
    %v1011 = vsel %vm928, %v827, 0
    %v1014 = vsel %vm928, %v828, 0
    %v1017 = vsel %vm928, %v829, 0
    %v1020 = vsel %vm928, %v830, 0
    %v1023 = vsel %vm928, %v831, 0
    %v1026 = vsel %vm928, %v832, 0
    %v1029 = vsel %vm928, %v833, 0
    %v1032 = vsel %vm928, %v834, 0
    %v1035 = vsel %vm928, %v835, 0
    %v1038 = vsel %vm928, %v836, 0
    %v1041 = vsel %vm928, %v837, 0
    %v1044 = vsel %vm928, %v838, 0
    %v1047 = vsel %vm928, %v839, 0
    %v1050 = vsel %vm928, %v840, 0
    %v1053 = vsel %vm928, %v841, 0
    %v1056 = vsel %vm928, %v842, 0
    %v1059 = vsel %vm928, %v843, 0
    %v1062 = vsel %vm928, %v844, 0
    %v1065 = vsel %vm928, %v845, 0
    %v1068 = vsel %vm928, %v846, 0
    %v1071 = vsel %vm928, %v847, 0
    %v1074 = vsel %vm928, %v848, 0
    %v1077 = vsel %vm928, %v849, 0
    %v1080 = vsel %vm928, %v850, 0
    %v1083 = vsel %vm928, %v851, 0
    %v1086 = vsel %vm928, %v852, 0
    %v1089 = vsel %vm928, %v853, 0
    %v1092 = vsel %vm928, %v854, 0
    %v1095 = vsel %vm928, %v855, 0
    %v1098 = vsel %vm928, %v856, 0
    %v1101 = vsel %vm928, %v857, 0
    %v1104 = vsel %vm928, %v858, 0
    %v1107 = vsel %vm928, %v859, 0
    %v1110 = vsel %vm928, %v860, 0
    %v1113 = vsel %vm928, %v861, 0
    %v1116 = vsel %vm928, %v862, 0
    %v1119 = vsel %vm928, %v863, 0
    %v1122 = vsel %vm928, %v864, 0
    %v1125 = vsel %vm928, %v865, 0
    %v1128 = vsel %vm928, %v866, 0
    %v1131 = vsel %vm928, %v867, 0
    %v1134 = vsel %vm928, %v868, 0
    %v1137 = vsel %vm928, %v869, 0
    %v1140 = vsel %vm928, %v870, 0
    %v1143 = vsel %vm928, %v871, 0
    %v1146 = vsel %vm928, %v872, 0
    %v1149 = vsel %vm928, %v873, 0
    %v1152 = vsel %vm928, %v874, 0
    %v1155 = vsel %vm928, %v875, 0
    %v1158 = vsel %vm928, %v876, 0
    %v1161 = vsel %vm928, %v877, 0
    %v1164 = vsel %vm928, %v878, 0
    %v1167 = vsel %vm928, %v879, 0
    %v1170 = vsel %vm928, %v880, 0
    %v1173 = vsel %vm928, %v881, 0
    %v1176 = vsel %vm928, %v882, 0
    %v1179 = vsel %vm928, %v883, 0
    %v1182 = vsel %vm928, %v884, 0
    %v1185 = vsel %vm928, %v885, 0
    %v1188 = vsel %vm928, %v886, 0
    %v1191 = vsel %vm928, %v887, 0
    %v1194 = vsel %vm928, %v888, 0
    %v1197 = vsel %vm928, %v889, 0
    %v1200 = vsel %vm928, %v890, 0
    %v1203 = vsel %vm928, %v891, 0
    %v1206 = vsel %vm928, %v892, 0
    %v1209 = vsel %vm928, %v893, 0
    %v1212 = vsel %vm928, %v894, 0
    %v1215 = vsel %vm928, %v895, 0
    %v1218 = vsel %vm928, %v896, 0
    %v1221 = vsel %vm928, %v897, 0
    %v1224 = vsel %vm928, %v898, 0
    %v1227 = vsel %vm928, %v899, 0
    %v1230 = vsel %vm928, %v900, 0
    %v1233 = vsel %vm928, %v901, 0
    %v1236 = vsel %vm928, %v902, 0
    %v1239 = vsel %vm928, %v903, 0
    %v1242 = vsel %vm928, %v904, 0
    %v1245 = vsel %vm928, %v905, 0
    %v1248 = vsel %vm928, %v906, 0
    %v1251 = vsel %vm928, %v907, 0
    %v1254 = vsel %vm928, %v908, 0
    %v1257 = vsel %vm928, %v909, 0
    %v1260 = vsel %vm928, %v910, 0
    %v1263 = vsel %vm928, %v911, 0
    %v1266 = vsel %vm928, %v912, 0
    %v1269 = vsel %vm928, %v913, 0
    %v1272 = vsel %vm928, %v914, 0
    %v1275 = vsel %vm928, %v915, 0
    %v1278 = vsel %vm928, %v916, 0
    %v1281 = vsel %vm928, %v917, 0
    %v1284 = vsel %vm928, %v918, 0
    %v1287 = vsel %vm928, %v919, 0
    %v1290 = vsel %vm928, %v920, 0
    %v1293 = vsel %vm928, %v921, 0
    %v1296 = vsel %vm928, %v922, 0
    %v1299 = vsel %vm928, %v923, 0
    %v1302 = vsel %vm928, %v924, 0
    %v1305 = vsel %vm928, %v925, 0
    %v1308 = vsel %vm928, %v926, 0
    %v1311 = vsel %vm928, %v927, 0
    %vm1313 = vcmask 1041408
    %v1315 = vsel %vm1313, %v280, 0
    %1317 = vmatprep.subr.bf16.mxu0 0
    %1318 = vmatpush1.bf16.msra.mxu0 %v1315
    %1319 = vmatprep.subr.bf16.mxu0 0
    %1320 = vmatpush1.bf16.msra.mxu0 0
    %1321 = vmatprep.subr.bf16.mxu0 0
    %1322 = vmatpush1.bf16.msra.mxu0 0
    %1323 = vmatprep.subr.bf16.mxu0 0
    %1324 = vmatpush1.bf16.msra.mxu0 0
    %1325 = vmatprep.subr.bf16.mxu0 0
    %1326 = vmatpush1.bf16.msra.mxu0 0
    %1327 = vmatprep.subr.bf16.mxu0 0
    %1328 = vmatpush1.bf16.msra.mxu0 0
    %1329 = vmatprep.subr.bf16.mxu0 0
    %1330 = vmatpush1.bf16.msra.mxu0 0
    %1331 = vmatprep.subr.bf16.mxu0 0
    %1332 = vmatpush1.bf16.msra.mxu0 0
    %1333 = vmatprep.subr.bf16.mxu0 0
    %1334 = vmatpush1.bf16.msra.mxu0 0
    %1335 = vmatprep.subr.bf16.mxu0 0
    %1336 = vmatpush1.bf16.msra.mxu0 0
    %1337 = vmatprep.subr.bf16.mxu0 0
    %1338 = vmatpush1.bf16.msra.mxu0 0
    %1339 = vmatprep.subr.bf16.mxu0 0
    %1340 = vmatpush1.bf16.msra.mxu0 0
    %1341 = vmatprep.subr.bf16.mxu0 0
    %1342 = vmatpush1.bf16.msra.mxu0 0
    %1343 = vmatprep.subr.bf16.mxu0 0
    %1344 = vmatpush1.bf16.msra.mxu0 0
    %1345 = vmatprep.subr.bf16.mxu0 0
    %1346 = vmatpush1.bf16.msra.mxu0 0
    %1347 = vmatprep.subr.bf16.mxu0 0
    %1348 = vmatpush1.bf16.msra.mxu0 0
    %1349 = vmatprep.mubr.bf16.mxu0 0
    %1350 = vmatmul.mubr.bf16.gmra.mrb[0].mxu0 %v930
    %v1351 = vpop.f32.mrb[0].mxu0
    %v1352 = vadd.f32 %v286, %v1351
    %v1353 = vpop.f32.mrb[0].mxu0
    %v1354 = vpop.f32.mrb[0].mxu0
    %v1355 = vadd.f32 %v286, %v1354
    %v1356 = vpop.f32.mrb[0].mxu0
    %1357 = vmatprep.mubr.bf16.mxu0 0
    %1358 = vmatmul.mubr.bf16.gmra.mrb[0].mxu0 %v933
    %v1359 = vpop.f32.mrb[0].mxu0
    %v1360 = vadd.f32 %v286, %v1359
    %v1361 = vpop.f32.mrb[0].mxu0
    %v1362 = vpop.f32.mrb[0].mxu0
    %v1363 = vadd.f32 %v286, %v1362
    %v1364 = vpop.f32.mrb[0].mxu0
    %1365 = vmatprep.mubr.bf16.mxu0 0
    %1366 = vmatmul.mubr.bf16.gmra.mrb[0].mxu0 %v936
    %v1367 = vpop.f32.mrb[0].mxu0
    %v1368 = vadd.f32 %v286, %v1367
    %v1369 = vpop.f32.mrb[0].mxu0
    %v1370 = vpop.f32.mrb[0].mxu0
    %v1371 = vadd.f32 %v286, %v1370
    %v1372 = vpop.f32.mrb[0].mxu0
    %1373 = vmatprep.mubr.bf16.mxu0 0
    %1374 = vmatmul.mubr.bf16.gmra.mrb[0].mxu0 %v939
    %v1375 = vpop.f32.mrb[0].mxu0
    %v1376 = vadd.f32 %v286, %v1375
    %v1377 = vpop.f32.mrb[0].mxu0
    %v1378 = vpop.f32.mrb[0].mxu0
    %v1379 = vadd.f32 %v286, %v1378
    %v1380 = vpop.f32.mrb[0].mxu0
    %1381 = vmatprep.mubr.bf16.mxu0 0
    %1382 = vmatmul.mubr.bf16.gmra.mrb[0].mxu0 %v942
    %v1383 = vpop.f32.mrb[0].mxu0
    %v1384 = vadd.f32 %v286, %v1383
    %v1385 = vpop.f32.mrb[0].mxu0
    %v1386 = vpop.f32.mrb[0].mxu0
    %v1387 = vadd.f32 %v286, %v1386
    %v1388 = vpop.f32.mrb[0].mxu0
    %1389 = vmatprep.mubr.bf16.mxu0 0
    %1390 = vmatmul.mubr.bf16.gmra.mrb[0].mxu0 %v945
    %v1391 = vpop.f32.mrb[0].mxu0
    %v1392 = vadd.f32 %v286, %v1391
    %v1393 = vpop.f32.mrb[0].mxu0
    %v1394 = vpop.f32.mrb[0].mxu0
    %v1395 = vadd.f32 %v286, %v1394
    %v1396 = vpop.f32.mrb[0].mxu0
    %1397 = vmatprep.mubr.bf16.mxu0 0
    %1398 = vmatmul.mubr.bf16.gmra.mrb[0].mxu0 %v948
    %v1399 = vpop.f32.mrb[0].mxu0
    %v1400 = vadd.f32 %v286, %v1399
    %v1401 = vpop.f32.mrb[0].mxu0
    %v1402 = vpop.f32.mrb[0].mxu0
    %v1403 = vadd.f32 %v286, %v1402
    %v1404 = vpop.f32.mrb[0].mxu0
    %1405 = vmatprep.mubr.bf16.mxu0 0
    %1406 = vmatmul.mubr.bf16.gmra.mrb[0].mxu0 %v951
    %v1407 = vpop.f32.mrb[0].mxu0
    %v1408 = vadd.f32 %v286, %v1407
    %v1409 = vpop.f32.mrb[0].mxu0
    %v1410 = vpop.f32.mrb[0].mxu0
    %v1411 = vadd.f32 %v286, %v1410
    %v1412 = vpop.f32.mrb[0].mxu0
    %1413 = vmatprep.mubr.bf16.mxu0 0
    %1414 = vmatmul.mubr.bf16.gmra.mrb[0].mxu0 %v954
    %v1415 = vpop.f32.mrb[0].mxu0
    %v1416 = vadd.f32 %v286, %v1415
    %v1417 = vpop.f32.mrb[0].mxu0
    %v1418 = vpop.f32.mrb[0].mxu0
    %v1419 = vadd.f32 %v286, %v1418
    %v1420 = vpop.f32.mrb[0].mxu0
    %1421 = vmatprep.mubr.bf16.mxu0 0
    %1422 = vmatmul.mubr.bf16.gmra.mrb[0].mxu0 %v957
    %v1423 = vpop.f32.mrb[0].mxu0
    %v1424 = vadd.f32 %v286, %v1423
    %v1425 = vpop.f32.mrb[0].mxu0
    %v1426 = vpop.f32.mrb[0].mxu0
    %v1427 = vadd.f32 %v286, %v1426
    %v1428 = vpop.f32.mrb[0].mxu0
    %1429 = vmatprep.mubr.bf16.mxu0 0
    %1430 = vmatmul.mubr.bf16.gmra.mrb[0].mxu0 %v960
    %v1431 = vpop.f32.mrb[0].mxu0
    %v1432 = vadd.f32 %v286, %v1431
    %v1433 = vpop.f32.mrb[0].mxu0
    %v1434 = vpop.f32.mrb[0].mxu0
    %v1435 = vadd.f32 %v286, %v1434
    %v1436 = vpop.f32.mrb[0].mxu0
    %1437 = vmatprep.mubr.bf16.mxu0 0
    %1438 = vmatmul.mubr.bf16.gmra.mrb[0].mxu0 %v963
    %v1439 = vpop.f32.mrb[0].mxu0
    %v1440 = vadd.f32 %v286, %v1439
    %v1441 = vpop.f32.mrb[0].mxu0
    %v1442 = vpop.f32.mrb[0].mxu0
    %v1443 = vadd.f32 %v286, %v1442
    %v1444 = vpop.f32.mrb[0].mxu0
    %1445 = vmatprep.mubr.bf16.mxu0 0
    %1446 = vmatmul.mubr.bf16.gmra.mrb[0].mxu0 %v966
    %v1447 = vpop.f32.mrb[0].mxu0
    %v1448 = vadd.f32 %v286, %v1447
    %v1449 = vpop.f32.mrb[0].mxu0
    %v1450 = vpop.f32.mrb[0].mxu0
    %v1451 = vadd.f32 %v286, %v1450
    %v1452 = vpop.f32.mrb[0].mxu0
    %1453 = vmatprep.mubr.bf16.mxu0 0
    %1454 = vmatmul.mubr.bf16.gmra.mrb[0].mxu0 %v969
    %v1455 = vpop.f32.mrb[0].mxu0
    %v1456 = vadd.f32 %v286, %v1455
    %v1457 = vpop.f32.mrb[0].mxu0
    %v1458 = vpop.f32.mrb[0].mxu0
    %v1459 = vadd.f32 %v286, %v1458
    %v1460 = vpop.f32.mrb[0].mxu0
    %1461 = vmatprep.mubr.bf16.mxu0 0
    %1462 = vmatmul.mubr.bf16.gmra.mrb[0].mxu0 %v972
    %v1463 = vpop.f32.mrb[0].mxu0
    %v1464 = vadd.f32 %v286, %v1463
    %v1465 = vpop.f32.mrb[0].mxu0
    %v1466 = vpop.f32.mrb[0].mxu0
    %v1467 = vadd.f32 %v286, %v1466
    %v1468 = vpop.f32.mrb[0].mxu0
    %1469 = vmatprep.mubr.bf16.mxu0 0
    %1470 = vmatmul.mubr.bf16.gmra.mrb[0].mxu0 %v975
    %v1471 = vpop.f32.mrb[0].mxu0
    %v1472 = vadd.f32 %v286, %v1471
    %v1473 = vpop.f32.mrb[0].mxu0
    %v1474 = vpop.f32.mrb[0].mxu0
    %v1475 = vadd.f32 %v286, %v1474
    %v1476 = vpop.f32.mrb[0].mxu0
    %1477 = vmatprep.mubr.bf16.mxu0 0
    %1478 = vmatmul.mubr.bf16.gmra.mrb[0].mxu0 %v978
    %v1479 = vpop.f32.mrb[0].mxu0
    %v1480 = vadd.f32 %v286, %v1479
    %v1481 = vpop.f32.mrb[0].mxu0
    %v1482 = vpop.f32.mrb[0].mxu0
    %v1483 = vadd.f32 %v286, %v1482
    %v1484 = vpop.f32.mrb[0].mxu0
    %1485 = vmatprep.mubr.bf16.mxu0 0
    %1486 = vmatmul.mubr.bf16.gmra.mrb[0].mxu0 %v981
    %v1487 = vpop.f32.mrb[0].mxu0
    %v1488 = vadd.f32 %v286, %v1487
    %v1489 = vpop.f32.mrb[0].mxu0
    %v1490 = vpop.f32.mrb[0].mxu0
    %v1491 = vadd.f32 %v286, %v1490
    %v1492 = vpop.f32.mrb[0].mxu0
    %1493 = vmatprep.mubr.bf16.mxu0 0
    %1494 = vmatmul.mubr.bf16.gmra.mrb[0].mxu0 %v984
    %v1495 = vpop.f32.mrb[0].mxu0
    %v1496 = vadd.f32 %v286, %v1495
    %v1497 = vpop.f32.mrb[0].mxu0
    %v1498 = vpop.f32.mrb[0].mxu0
    %v1499 = vadd.f32 %v286, %v1498
    %v1500 = vpop.f32.mrb[0].mxu0
    %1501 = vmatprep.mubr.bf16.mxu0 0
    %1502 = vmatmul.mubr.bf16.gmra.mrb[0].mxu0 %v987
    %v1503 = vpop.f32.mrb[0].mxu0
    %v1504 = vadd.f32 %v286, %v1503
    %v1505 = vpop.f32.mrb[0].mxu0
    %v1506 = vpop.f32.mrb[0].mxu0
    %v1507 = vadd.f32 %v286, %v1506
    %v1508 = vpop.f32.mrb[0].mxu0
    %1509 = vmatprep.mubr.bf16.mxu0 0
    %1510 = vmatmul.mubr.bf16.gmra.mrb[0].mxu0 %v990
    %v1511 = vpop.f32.mrb[0].mxu0
    %v1512 = vadd.f32 %v286, %v1511
    %v1513 = vpop.f32.mrb[0].mxu0
    %v1514 = vpop.f32.mrb[0].mxu0
    %v1515 = vadd.f32 %v286, %v1514
    %v1516 = vpop.f32.mrb[0].mxu0
    %1517 = vmatprep.mubr.bf16.mxu0 0
    %1518 = vmatmul.mubr.bf16.gmra.mrb[0].mxu0 %v993
    %v1519 = vpop.f32.mrb[0].mxu0
    %v1520 = vadd.f32 %v286, %v1519
    %v1521 = vpop.f32.mrb[0].mxu0
    %v1522 = vpop.f32.mrb[0].mxu0
    %v1523 = vadd.f32 %v286, %v1522
    %v1524 = vpop.f32.mrb[0].mxu0
    %1525 = vmatprep.mubr.bf16.mxu0 0
    %1526 = vmatmul.mubr.bf16.gmra.mrb[0].mxu0 %v996
    %v1527 = vpop.f32.mrb[0].mxu0
    %v1528 = vadd.f32 %v286, %v1527
    %v1529 = vpop.f32.mrb[0].mxu0
    %v1530 = vpop.f32.mrb[0].mxu0
    %v1531 = vadd.f32 %v286, %v1530
    %v1532 = vpop.f32.mrb[0].mxu0
    %1533 = vmatprep.mubr.bf16.mxu0 0
    %1534 = vmatmul.mubr.bf16.gmra.mrb[0].mxu0 %v999
    %v1535 = vpop.f32.mrb[0].mxu0
    %v1536 = vadd.f32 %v286, %v1535
    %v1537 = vpop.f32.mrb[0].mxu0
    %v1538 = vpop.f32.mrb[0].mxu0
    %v1539 = vadd.f32 %v286, %v1538
    %v1540 = vpop.f32.mrb[0].mxu0
    %1541 = vmatprep.mubr.bf16.mxu0 0
    %1542 = vmatmul.mubr.bf16.gmra.mrb[0].mxu0 %v1002
    %v1543 = vpop.f32.mrb[0].mxu0
    %v1544 = vadd.f32 %v286, %v1543
    %v1545 = vpop.f32.mrb[0].mxu0
    %v1546 = vpop.f32.mrb[0].mxu0
    %v1547 = vadd.f32 %v286, %v1546
    %v1548 = vpop.f32.mrb[0].mxu0
    %1549 = vmatprep.mubr.bf16.mxu0 0
    %1550 = vmatmul.mubr.bf16.gmra.mrb[0].mxu0 %v1005
    %v1551 = vpop.f32.mrb[0].mxu0
    %v1552 = vadd.f32 %v286, %v1551
    %v1553 = vpop.f32.mrb[0].mxu0
    %v1554 = vpop.f32.mrb[0].mxu0
    %v1555 = vadd.f32 %v286, %v1554
    %v1556 = vpop.f32.mrb[0].mxu0
    %1557 = vmatprep.mubr.bf16.mxu0 0
    %1558 = vmatmul.mubr.bf16.gmra.mrb[0].mxu0 %v1008
    %v1559 = vpop.f32.mrb[0].mxu0
    %v1560 = vadd.f32 %v286, %v1559
    %v1561 = vpop.f32.mrb[0].mxu0
    %v1562 = vpop.f32.mrb[0].mxu0
    %v1563 = vadd.f32 %v286, %v1562
    %v1564 = vpop.f32.mrb[0].mxu0
    %1565 = vmatprep.mubr.bf16.mxu0 0
    %1566 = vmatmul.mubr.bf16.gmra.mrb[0].mxu0 %v1011
    %v1567 = vpop.f32.mrb[0].mxu0
    %v1568 = vadd.f32 %v286, %v1567
    %v1569 = vpop.f32.mrb[0].mxu0
    %v1570 = vpop.f32.mrb[0].mxu0
    %v1571 = vadd.f32 %v286, %v1570
    %v1572 = vpop.f32.mrb[0].mxu0
    %1573 = vmatprep.mubr.bf16.mxu0 0
    %1574 = vmatmul.mubr.bf16.gmra.mrb[0].mxu0 %v1014
    %v1575 = vpop.f32.mrb[0].mxu0
    %v1576 = vadd.f32 %v286, %v1575
    %v1577 = vpop.f32.mrb[0].mxu0
    %v1578 = vpop.f32.mrb[0].mxu0
    %v1579 = vadd.f32 %v286, %v1578
    %v1580 = vpop.f32.mrb[0].mxu0
    %1581 = vmatprep.mubr.bf16.mxu0 0
    %1582 = vmatmul.mubr.bf16.gmra.mrb[0].mxu0 %v1017
    %v1583 = vpop.f32.mrb[0].mxu0
    %v1584 = vadd.f32 %v286, %v1583
    %v1585 = vpop.f32.mrb[0].mxu0
    %v1586 = vpop.f32.mrb[0].mxu0
    %v1587 = vadd.f32 %v286, %v1586
    %v1588 = vpop.f32.mrb[0].mxu0
    %1589 = vmatprep.mubr.bf16.mxu0 0
    %1590 = vmatmul.mubr.bf16.gmra.mrb[0].mxu0 %v1020
    %v1591 = vpop.f32.mrb[0].mxu0
    %v1592 = vadd.f32 %v286, %v1591
    %v1593 = vpop.f32.mrb[0].mxu0
    %v1594 = vpop.f32.mrb[0].mxu0
    %v1595 = vadd.f32 %v286, %v1594
    %v1596 = vpop.f32.mrb[0].mxu0
    %1597 = vmatprep.mubr.bf16.mxu0 0
    %1598 = vmatmul.mubr.bf16.gmra.mrb[0].mxu0 %v1023
    %v1599 = vpop.f32.mrb[0].mxu0
    %v1600 = vadd.f32 %v286, %v1599
    %v1601 = vpop.f32.mrb[0].mxu0
    %v1602 = vpop.f32.mrb[0].mxu0
    %v1603 = vadd.f32 %v286, %v1602
    %v1604 = vpop.f32.mrb[0].mxu0
    %1605 = vmatprep.mubr.bf16.mxu0 0
    %1606 = vmatmul.mubr.bf16.gmra.mrb[0].mxu0 %v1026
    %v1607 = vpop.f32.mrb[0].mxu0
    %v1608 = vadd.f32 %v286, %v1607
    %v1609 = vpop.f32.mrb[0].mxu0
    %v1610 = vpop.f32.mrb[0].mxu0
    %v1611 = vadd.f32 %v286, %v1610
    %v1612 = vpop.f32.mrb[0].mxu0
    %1613 = vmatprep.mubr.bf16.mxu0 0
    %1614 = vmatmul.mubr.bf16.gmra.mrb[0].mxu0 %v1029
    %v1615 = vpop.f32.mrb[0].mxu0
    %v1616 = vadd.f32 %v286, %v1615
    %v1617 = vpop.f32.mrb[0].mxu0
    %v1618 = vpop.f32.mrb[0].mxu0
    %v1619 = vadd.f32 %v286, %v1618
    %v1620 = vpop.f32.mrb[0].mxu0
    %1621 = vmatprep.mubr.bf16.mxu0 0
    %1622 = vmatmul.mubr.bf16.gmra.mrb[0].mxu0 %v1032
    %v1623 = vpop.f32.mrb[0].mxu0
    %v1624 = vadd.f32 %v286, %v1623
    %v1625 = vpop.f32.mrb[0].mxu0
    %v1626 = vpop.f32.mrb[0].mxu0
    %v1627 = vadd.f32 %v286, %v1626
    %v1628 = vpop.f32.mrb[0].mxu0
    %1629 = vmatprep.mubr.bf16.mxu0 0
    %1630 = vmatmul.mubr.bf16.gmra.mrb[0].mxu0 %v1035
    %v1631 = vpop.f32.mrb[0].mxu0
    %v1632 = vadd.f32 %v286, %v1631
    %v1633 = vpop.f32.mrb[0].mxu0
    %v1634 = vpop.f32.mrb[0].mxu0
    %v1635 = vadd.f32 %v286, %v1634
    %v1636 = vpop.f32.mrb[0].mxu0
    %1637 = vmatprep.mubr.bf16.mxu0 0
    %1638 = vmatmul.mubr.bf16.gmra.mrb[0].mxu0 %v1038
    %v1639 = vpop.f32.mrb[0].mxu0
    %v1640 = vadd.f32 %v286, %v1639
    %v1641 = vpop.f32.mrb[0].mxu0
    %v1642 = vpop.f32.mrb[0].mxu0
    %v1643 = vadd.f32 %v286, %v1642
    %v1644 = vpop.f32.mrb[0].mxu0
    %1645 = vmatprep.mubr.bf16.mxu0 0
    %1646 = vmatmul.mubr.bf16.gmra.mrb[0].mxu0 %v1041
    %v1647 = vpop.f32.mrb[0].mxu0
    %v1648 = vadd.f32 %v286, %v1647
    %v1649 = vpop.f32.mrb[0].mxu0
    %v1650 = vpop.f32.mrb[0].mxu0
    %v1651 = vadd.f32 %v286, %v1650
    %v1652 = vpop.f32.mrb[0].mxu0
    %1653 = vmatprep.mubr.bf16.mxu0 0
    %1654 = vmatmul.mubr.bf16.gmra.mrb[0].mxu0 %v1044
    %v1655 = vpop.f32.mrb[0].mxu0
    %v1656 = vadd.f32 %v286, %v1655
    %v1657 = vpop.f32.mrb[0].mxu0
    %v1658 = vpop.f32.mrb[0].mxu0
    %v1659 = vadd.f32 %v286, %v1658
    %v1660 = vpop.f32.mrb[0].mxu0
    %1661 = vmatprep.mubr.bf16.mxu0 0
    %1662 = vmatmul.mubr.bf16.gmra.mrb[0].mxu0 %v1047
    %v1663 = vpop.f32.mrb[0].mxu0
    %v1664 = vadd.f32 %v286, %v1663
    %v1665 = vpop.f32.mrb[0].mxu0
    %v1666 = vpop.f32.mrb[0].mxu0
    %v1667 = vadd.f32 %v286, %v1666
    %v1668 = vpop.f32.mrb[0].mxu0
    %1669 = vmatprep.mubr.bf16.mxu0 0
    %1670 = vmatmul.mubr.bf16.gmra.mrb[0].mxu0 %v1050
    %v1671 = vpop.f32.mrb[0].mxu0
    %v1672 = vadd.f32 %v286, %v1671
    %v1673 = vpop.f32.mrb[0].mxu0
    %v1674 = vpop.f32.mrb[0].mxu0
    %v1675 = vadd.f32 %v286, %v1674
    %v1676 = vpop.f32.mrb[0].mxu0
    %1677 = vmatprep.mubr.bf16.mxu0 0
    %1678 = vmatmul.mubr.bf16.gmra.mrb[0].mxu0 %v1053
    %v1679 = vpop.f32.mrb[0].mxu0
    %v1680 = vadd.f32 %v286, %v1679
    %v1681 = vpop.f32.mrb[0].mxu0
    %v1682 = vpop.f32.mrb[0].mxu0
    %v1683 = vadd.f32 %v286, %v1682
    %v1684 = vpop.f32.mrb[0].mxu0
    %1685 = vmatprep.mubr.bf16.mxu0 0
    %1686 = vmatmul.mubr.bf16.gmra.mrb[0].mxu0 %v1056
    %v1687 = vpop.f32.mrb[0].mxu0
    %v1688 = vadd.f32 %v286, %v1687
    %v1689 = vpop.f32.mrb[0].mxu0
    %v1690 = vpop.f32.mrb[0].mxu0
    %v1691 = vadd.f32 %v286, %v1690
    %v1692 = vpop.f32.mrb[0].mxu0
    %1693 = vmatprep.mubr.bf16.mxu0 0
    %1694 = vmatmul.mubr.bf16.gmra.mrb[0].mxu0 %v1059
    %v1695 = vpop.f32.mrb[0].mxu0
    %v1696 = vadd.f32 %v286, %v1695
    %v1697 = vpop.f32.mrb[0].mxu0
    %v1698 = vpop.f32.mrb[0].mxu0
    %v1699 = vadd.f32 %v286, %v1698
    %v1700 = vpop.f32.mrb[0].mxu0
    %1701 = vmatprep.mubr.bf16.mxu0 0
    %1702 = vmatmul.mubr.bf16.gmra.mrb[0].mxu0 %v1062
    %v1703 = vpop.f32.mrb[0].mxu0
    %v1704 = vadd.f32 %v286, %v1703
    %v1705 = vpop.f32.mrb[0].mxu0
    %v1706 = vpop.f32.mrb[0].mxu0
    %v1707 = vadd.f32 %v286, %v1706
    %v1708 = vpop.f32.mrb[0].mxu0
    %1709 = vmatprep.mubr.bf16.mxu0 0
    %1710 = vmatmul.mubr.bf16.gmra.mrb[0].mxu0 %v1065
    %v1711 = vpop.f32.mrb[0].mxu0
    %v1712 = vadd.f32 %v286, %v1711
    %v1713 = vpop.f32.mrb[0].mxu0
    %v1714 = vpop.f32.mrb[0].mxu0
    %v1715 = vadd.f32 %v286, %v1714
    %v1716 = vpop.f32.mrb[0].mxu0
    %1717 = vmatprep.mubr.bf16.mxu0 0
    %1718 = vmatmul.mubr.bf16.gmra.mrb[0].mxu0 %v1068
    %v1719 = vpop.f32.mrb[0].mxu0
    %v1720 = vadd.f32 %v286, %v1719
    %v1721 = vpop.f32.mrb[0].mxu0
    %v1722 = vpop.f32.mrb[0].mxu0
    %v1723 = vadd.f32 %v286, %v1722
    %v1724 = vpop.f32.mrb[0].mxu0
    %1725 = vmatprep.mubr.bf16.mxu0 0
    %1726 = vmatmul.mubr.bf16.gmra.mrb[0].mxu0 %v1071
    %v1727 = vpop.f32.mrb[0].mxu0
    %v1728 = vadd.f32 %v286, %v1727
    %v1729 = vpop.f32.mrb[0].mxu0
    %v1730 = vpop.f32.mrb[0].mxu0
    %v1731 = vadd.f32 %v286, %v1730
    %v1732 = vpop.f32.mrb[0].mxu0
    %1733 = vmatprep.mubr.bf16.mxu0 0
    %1734 = vmatmul.mubr.bf16.gmra.mrb[0].mxu0 %v1074
    %v1735 = vpop.f32.mrb[0].mxu0
    %v1736 = vadd.f32 %v286, %v1735
    %v1737 = vpop.f32.mrb[0].mxu0
    %v1738 = vpop.f32.mrb[0].mxu0
    %v1739 = vadd.f32 %v286, %v1738
    %v1740 = vpop.f32.mrb[0].mxu0
    %1741 = vmatprep.mubr.bf16.mxu0 0
    %1742 = vmatmul.mubr.bf16.gmra.mrb[0].mxu0 %v1077
    %v1743 = vpop.f32.mrb[0].mxu0
    %v1744 = vadd.f32 %v286, %v1743
    %v1745 = vpop.f32.mrb[0].mxu0
    %v1746 = vpop.f32.mrb[0].mxu0
    %v1747 = vadd.f32 %v286, %v1746
    %v1748 = vpop.f32.mrb[0].mxu0
    %1749 = vmatprep.mubr.bf16.mxu0 0
    %1750 = vmatmul.mubr.bf16.gmra.mrb[0].mxu0 %v1080
    %v1751 = vpop.f32.mrb[0].mxu0
    %v1752 = vadd.f32 %v286, %v1751
    %v1753 = vpop.f32.mrb[0].mxu0
    %v1754 = vpop.f32.mrb[0].mxu0
    %v1755 = vadd.f32 %v286, %v1754
    %v1756 = vpop.f32.mrb[0].mxu0
    %1757 = vmatprep.mubr.bf16.mxu0 0
    %1758 = vmatmul.mubr.bf16.gmra.mrb[0].mxu0 %v1083
    %v1759 = vpop.f32.mrb[0].mxu0
    %v1760 = vadd.f32 %v286, %v1759
    %v1761 = vpop.f32.mrb[0].mxu0
    %v1762 = vpop.f32.mrb[0].mxu0
    %v1763 = vadd.f32 %v286, %v1762
    %v1764 = vpop.f32.mrb[0].mxu0
    %1765 = vmatprep.mubr.bf16.mxu0 0
    %1766 = vmatmul.mubr.bf16.gmra.mrb[0].mxu0 %v1086
    %v1767 = vpop.f32.mrb[0].mxu0
    %v1768 = vadd.f32 %v286, %v1767
    %v1769 = vpop.f32.mrb[0].mxu0
    %v1770 = vpop.f32.mrb[0].mxu0
    %v1771 = vadd.f32 %v286, %v1770
    %v1772 = vpop.f32.mrb[0].mxu0
    %1773 = vmatprep.mubr.bf16.mxu0 0
    %1774 = vmatmul.mubr.bf16.gmra.mrb[0].mxu0 %v1089
    %v1775 = vpop.f32.mrb[0].mxu0
    %v1776 = vadd.f32 %v286, %v1775
    %v1777 = vpop.f32.mrb[0].mxu0
    %v1778 = vpop.f32.mrb[0].mxu0
    %v1779 = vadd.f32 %v286, %v1778
    %v1780 = vpop.f32.mrb[0].mxu0
    %1781 = vmatprep.mubr.bf16.mxu0 0
    %1782 = vmatmul.mubr.bf16.gmra.mrb[0].mxu0 %v1092
    %v1783 = vpop.f32.mrb[0].mxu0
    %v1784 = vadd.f32 %v286, %v1783
    %v1785 = vpop.f32.mrb[0].mxu0
    %v1786 = vpop.f32.mrb[0].mxu0
    %v1787 = vadd.f32 %v286, %v1786
    %v1788 = vpop.f32.mrb[0].mxu0
    %1789 = vmatprep.mubr.bf16.mxu0 0
    %1790 = vmatmul.mubr.bf16.gmra.mrb[0].mxu0 %v1095
    %v1791 = vpop.f32.mrb[0].mxu0
    %v1792 = vadd.f32 %v286, %v1791
    %v1793 = vpop.f32.mrb[0].mxu0
    %v1794 = vpop.f32.mrb[0].mxu0
    %v1795 = vadd.f32 %v286, %v1794
    %v1796 = vpop.f32.mrb[0].mxu0
    %1797 = vmatprep.mubr.bf16.mxu0 0
    %1798 = vmatmul.mubr.bf16.gmra.mrb[0].mxu0 %v1098
    %v1799 = vpop.f32.mrb[0].mxu0
    %v1800 = vadd.f32 %v286, %v1799
    %v1801 = vpop.f32.mrb[0].mxu0
    %v1802 = vpop.f32.mrb[0].mxu0
    %v1803 = vadd.f32 %v286, %v1802
    %v1804 = vpop.f32.mrb[0].mxu0
    %1805 = vmatprep.mubr.bf16.mxu0 0
    %1806 = vmatmul.mubr.bf16.gmra.mrb[0].mxu0 %v1101
    %v1807 = vpop.f32.mrb[0].mxu0
    %v1808 = vadd.f32 %v286, %v1807
    %v1809 = vpop.f32.mrb[0].mxu0
    %v1810 = vpop.f32.mrb[0].mxu0
    %v1811 = vadd.f32 %v286, %v1810
    %v1812 = vpop.f32.mrb[0].mxu0
    %1813 = vmatprep.mubr.bf16.mxu0 0
    %1814 = vmatmul.mubr.bf16.gmra.mrb[0].mxu0 %v1104
    %v1815 = vpop.f32.mrb[0].mxu0
    %v1816 = vadd.f32 %v286, %v1815
    %v1817 = vpop.f32.mrb[0].mxu0
    %v1818 = vpop.f32.mrb[0].mxu0
    %v1819 = vadd.f32 %v286, %v1818
    %v1820 = vpop.f32.mrb[0].mxu0
    %1821 = vmatprep.mubr.bf16.mxu0 0
    %1822 = vmatmul.mubr.bf16.gmra.mrb[0].mxu0 %v1107
    %v1823 = vpop.f32.mrb[0].mxu0
    %v1824 = vadd.f32 %v286, %v1823
    %v1825 = vpop.f32.mrb[0].mxu0
    %v1826 = vpop.f32.mrb[0].mxu0
    %v1827 = vadd.f32 %v286, %v1826
    %v1828 = vpop.f32.mrb[0].mxu0
    %1829 = vmatprep.mubr.bf16.mxu0 0
    %1830 = vmatmul.mubr.bf16.gmra.mrb[0].mxu0 %v1110
    %v1831 = vpop.f32.mrb[0].mxu0
    %v1832 = vadd.f32 %v286, %v1831
    %v1833 = vpop.f32.mrb[0].mxu0
    %v1834 = vpop.f32.mrb[0].mxu0
    %v1835 = vadd.f32 %v286, %v1834
    %v1836 = vpop.f32.mrb[0].mxu0
    %1837 = vmatprep.mubr.bf16.mxu0 0
    %1838 = vmatmul.mubr.bf16.gmra.mrb[0].mxu0 %v1113
    %v1839 = vpop.f32.mrb[0].mxu0
    %v1840 = vadd.f32 %v286, %v1839
    %v1841 = vpop.f32.mrb[0].mxu0
    %v1842 = vpop.f32.mrb[0].mxu0
    %v1843 = vadd.f32 %v286, %v1842
    %v1844 = vpop.f32.mrb[0].mxu0
    %1845 = vmatprep.mubr.bf16.mxu0 0
    %1846 = vmatmul.mubr.bf16.gmra.mrb[0].mxu0 %v1116
    %v1847 = vpop.f32.mrb[0].mxu0
    %v1848 = vadd.f32 %v286, %v1847
    %v1849 = vpop.f32.mrb[0].mxu0
    %v1850 = vpop.f32.mrb[0].mxu0
    %v1851 = vadd.f32 %v286, %v1850
    %v1852 = vpop.f32.mrb[0].mxu0
    %1853 = vmatprep.mubr.bf16.mxu0 0
    %1854 = vmatmul.mubr.bf16.gmra.mrb[0].mxu0 %v1119
    %v1855 = vpop.f32.mrb[0].mxu0
    %v1856 = vadd.f32 %v286, %v1855
    %v1857 = vpop.f32.mrb[0].mxu0
    %v1858 = vpop.f32.mrb[0].mxu0
    %v1859 = vadd.f32 %v286, %v1858
    %v1860 = vpop.f32.mrb[0].mxu0
    %1861 = vmatprep.mubr.bf16.mxu0 0
    %1862 = vmatmul.mubr.bf16.gmra.mrb[0].mxu0 %v1122
    %v1863 = vpop.f32.mrb[0].mxu0
    %v1864 = vadd.f32 %v286, %v1863
    %v1865 = vpop.f32.mrb[0].mxu0
    %v1866 = vpop.f32.mrb[0].mxu0
    %v1867 = vadd.f32 %v286, %v1866
    %v1868 = vpop.f32.mrb[0].mxu0
    %1869 = vmatprep.mubr.bf16.mxu0 0
    %1870 = vmatmul.mubr.bf16.gmra.mrb[0].mxu0 %v1125
    %v1871 = vpop.f32.mrb[0].mxu0
    %v1872 = vadd.f32 %v286, %v1871
    %v1873 = vpop.f32.mrb[0].mxu0
    %v1874 = vpop.f32.mrb[0].mxu0
    %v1875 = vadd.f32 %v286, %v1874
    %v1876 = vpop.f32.mrb[0].mxu0
    %1877 = vmatprep.mubr.bf16.mxu0 0
    %1878 = vmatmul.mubr.bf16.gmra.mrb[0].mxu0 %v1128
    %v1879 = vpop.f32.mrb[0].mxu0
    %v1880 = vadd.f32 %v286, %v1879
    %v1881 = vpop.f32.mrb[0].mxu0
    %v1882 = vpop.f32.mrb[0].mxu0
    %v1883 = vadd.f32 %v286, %v1882
    %v1884 = vpop.f32.mrb[0].mxu0
    %1885 = vmatprep.mubr.bf16.mxu0 0
    %1886 = vmatmul.mubr.bf16.gmra.mrb[0].mxu0 %v1131
    %v1887 = vpop.f32.mrb[0].mxu0
    %v1888 = vadd.f32 %v286, %v1887
    %v1889 = vpop.f32.mrb[0].mxu0
    %v1890 = vpop.f32.mrb[0].mxu0
    %v1891 = vadd.f32 %v286, %v1890
    %v1892 = vpop.f32.mrb[0].mxu0
    %1893 = vmatprep.mubr.bf16.mxu0 0
    %1894 = vmatmul.mubr.bf16.gmra.mrb[0].mxu0 %v1134
    %v1895 = vpop.f32.mrb[0].mxu0
    %v1896 = vadd.f32 %v286, %v1895
    %v1897 = vpop.f32.mrb[0].mxu0
    %v1898 = vpop.f32.mrb[0].mxu0
    %v1899 = vadd.f32 %v286, %v1898
    %v1900 = vpop.f32.mrb[0].mxu0
    %1901 = vmatprep.mubr.bf16.mxu0 0
    %1902 = vmatmul.mubr.bf16.gmra.mrb[0].mxu0 %v1137
    %v1903 = vpop.f32.mrb[0].mxu0
    %v1904 = vadd.f32 %v286, %v1903
    %v1905 = vpop.f32.mrb[0].mxu0
    %v1906 = vpop.f32.mrb[0].mxu0
    %v1907 = vadd.f32 %v286, %v1906
    %v1908 = vpop.f32.mrb[0].mxu0
    %1909 = vmatprep.mubr.bf16.mxu0 0
    %1910 = vmatmul.mubr.bf16.gmra.mrb[0].mxu0 %v1140
    %v1911 = vpop.f32.mrb[0].mxu0
    %v1912 = vadd.f32 %v286, %v1911
    %v1913 = vpop.f32.mrb[0].mxu0
    %v1914 = vpop.f32.mrb[0].mxu0
    %v1915 = vadd.f32 %v286, %v1914
    %v1916 = vpop.f32.mrb[0].mxu0
    %1917 = vmatprep.mubr.bf16.mxu0 0
    %1918 = vmatmul.mubr.bf16.gmra.mrb[0].mxu0 %v1143
    %v1919 = vpop.f32.mrb[0].mxu0
    %v1920 = vadd.f32 %v286, %v1919
    %v1921 = vpop.f32.mrb[0].mxu0
    %v1922 = vpop.f32.mrb[0].mxu0
    %v1923 = vadd.f32 %v286, %v1922
    %v1924 = vpop.f32.mrb[0].mxu0
    %1925 = vmatprep.mubr.bf16.mxu0 0
    %1926 = vmatmul.mubr.bf16.gmra.mrb[0].mxu0 %v1146
    %v1927 = vpop.f32.mrb[0].mxu0
    %v1928 = vadd.f32 %v286, %v1927
    %v1929 = vpop.f32.mrb[0].mxu0
    %v1930 = vpop.f32.mrb[0].mxu0
    %v1931 = vadd.f32 %v286, %v1930
    %v1932 = vpop.f32.mrb[0].mxu0
    %1933 = vmatprep.mubr.bf16.mxu0 0
    %1934 = vmatmul.mubr.bf16.gmra.mrb[0].mxu0 %v1149
    %v1935 = vpop.f32.mrb[0].mxu0
    %v1936 = vadd.f32 %v286, %v1935
    %v1937 = vpop.f32.mrb[0].mxu0
    %v1938 = vpop.f32.mrb[0].mxu0
    %v1939 = vadd.f32 %v286, %v1938
    %v1940 = vpop.f32.mrb[0].mxu0
    %1941 = vmatprep.mubr.bf16.mxu0 0
    %1942 = vmatmul.mubr.bf16.gmra.mrb[0].mxu0 %v1152
    %v1943 = vpop.f32.mrb[0].mxu0
    %v1944 = vadd.f32 %v286, %v1943
    %v1945 = vpop.f32.mrb[0].mxu0
    %v1946 = vpop.f32.mrb[0].mxu0
    %v1947 = vadd.f32 %v286, %v1946
    %v1948 = vpop.f32.mrb[0].mxu0
    %1949 = vmatprep.mubr.bf16.mxu0 0
    %1950 = vmatmul.mubr.bf16.gmra.mrb[0].mxu0 %v1155
    %v1951 = vpop.f32.mrb[0].mxu0
    %v1952 = vadd.f32 %v286, %v1951
    %v1953 = vpop.f32.mrb[0].mxu0
    %v1954 = vpop.f32.mrb[0].mxu0
    %v1955 = vadd.f32 %v286, %v1954
    %v1956 = vpop.f32.mrb[0].mxu0
    %1957 = vmatprep.mubr.bf16.mxu0 0
    %1958 = vmatmul.mubr.bf16.gmra.mrb[0].mxu0 %v1158
    %v1959 = vpop.f32.mrb[0].mxu0
    %v1960 = vadd.f32 %v286, %v1959
    %v1961 = vpop.f32.mrb[0].mxu0
    %v1962 = vpop.f32.mrb[0].mxu0
    %v1963 = vadd.f32 %v286, %v1962
    %v1964 = vpop.f32.mrb[0].mxu0
    %1965 = vmatprep.mubr.bf16.mxu0 0
    %1966 = vmatmul.mubr.bf16.gmra.mrb[0].mxu0 %v1161
    %v1967 = vpop.f32.mrb[0].mxu0
    %v1968 = vadd.f32 %v286, %v1967
    %v1969 = vpop.f32.mrb[0].mxu0
    %v1970 = vpop.f32.mrb[0].mxu0
    %v1971 = vadd.f32 %v286, %v1970
    %v1972 = vpop.f32.mrb[0].mxu0
    %1973 = vmatprep.mubr.bf16.mxu0 0
    %1974 = vmatmul.mubr.bf16.gmra.mrb[0].mxu0 %v1164
    %v1975 = vpop.f32.mrb[0].mxu0
    %v1976 = vadd.f32 %v286, %v1975
    %v1977 = vpop.f32.mrb[0].mxu0
    %v1978 = vpop.f32.mrb[0].mxu0
    %v1979 = vadd.f32 %v286, %v1978
    %v1980 = vpop.f32.mrb[0].mxu0
    %1981 = vmatprep.mubr.bf16.mxu0 0
    %1982 = vmatmul.mubr.bf16.gmra.mrb[0].mxu0 %v1167
    %v1983 = vpop.f32.mrb[0].mxu0
    %v1984 = vadd.f32 %v286, %v1983
    %v1985 = vpop.f32.mrb[0].mxu0
    %v1986 = vpop.f32.mrb[0].mxu0
    %v1987 = vadd.f32 %v286, %v1986
    %v1988 = vpop.f32.mrb[0].mxu0
    %1989 = vmatprep.mubr.bf16.mxu0 0
    %1990 = vmatmul.mubr.bf16.gmra.mrb[0].mxu0 %v1170
    %v1991 = vpop.f32.mrb[0].mxu0
    %v1992 = vadd.f32 %v286, %v1991
    %v1993 = vpop.f32.mrb[0].mxu0
    %v1994 = vpop.f32.mrb[0].mxu0
    %v1995 = vadd.f32 %v286, %v1994
    %v1996 = vpop.f32.mrb[0].mxu0
    %1997 = vmatprep.mubr.bf16.mxu0 0
    %1998 = vmatmul.mubr.bf16.gmra.mrb[0].mxu0 %v1173
    %v1999 = vpop.f32.mrb[0].mxu0
    %v2000 = vadd.f32 %v286, %v1999
    %v2001 = vpop.f32.mrb[0].mxu0
    %v2002 = vpop.f32.mrb[0].mxu0
    %v2003 = vadd.f32 %v286, %v2002
    %v2004 = vpop.f32.mrb[0].mxu0
    %2005 = vmatprep.mubr.bf16.mxu0 0
    %2006 = vmatmul.mubr.bf16.gmra.mrb[0].mxu0 %v1176
    %v2007 = vpop.f32.mrb[0].mxu0
    %v2008 = vadd.f32 %v286, %v2007
    %v2009 = vpop.f32.mrb[0].mxu0
    %v2010 = vpop.f32.mrb[0].mxu0
    %v2011 = vadd.f32 %v286, %v2010
    %v2012 = vpop.f32.mrb[0].mxu0
    %2013 = vmatprep.mubr.bf16.mxu0 0
    %2014 = vmatmul.mubr.bf16.gmra.mrb[0].mxu0 %v1179
    %v2015 = vpop.f32.mrb[0].mxu0
    %v2016 = vadd.f32 %v286, %v2015
    %v2017 = vpop.f32.mrb[0].mxu0
    %v2018 = vpop.f32.mrb[0].mxu0
    %v2019 = vadd.f32 %v286, %v2018
    %v2020 = vpop.f32.mrb[0].mxu0
    %2021 = vmatprep.mubr.bf16.mxu0 0
    %2022 = vmatmul.mubr.bf16.gmra.mrb[0].mxu0 %v1182
    %v2023 = vpop.f32.mrb[0].mxu0
    %v2024 = vadd.f32 %v286, %v2023
    %v2025 = vpop.f32.mrb[0].mxu0
    %v2026 = vpop.f32.mrb[0].mxu0
    %v2027 = vadd.f32 %v286, %v2026
    %v2028 = vpop.f32.mrb[0].mxu0
    %2029 = vmatprep.mubr.bf16.mxu0 0
    %2030 = vmatmul.mubr.bf16.gmra.mrb[0].mxu0 %v1185
    %v2031 = vpop.f32.mrb[0].mxu0
    %v2032 = vadd.f32 %v286, %v2031
    %v2033 = vpop.f32.mrb[0].mxu0
    %v2034 = vpop.f32.mrb[0].mxu0
    %v2035 = vadd.f32 %v286, %v2034
    %v2036 = vpop.f32.mrb[0].mxu0
    %2037 = vmatprep.mubr.bf16.mxu0 0
    %2038 = vmatmul.mubr.bf16.gmra.mrb[0].mxu0 %v1188
    %v2039 = vpop.f32.mrb[0].mxu0
    %v2040 = vadd.f32 %v286, %v2039
    %v2041 = vpop.f32.mrb[0].mxu0
    %v2042 = vpop.f32.mrb[0].mxu0
    %v2043 = vadd.f32 %v286, %v2042
    %v2044 = vpop.f32.mrb[0].mxu0
    %2045 = vmatprep.mubr.bf16.mxu0 0
    %2046 = vmatmul.mubr.bf16.gmra.mrb[0].mxu0 %v1191
    %v2047 = vpop.f32.mrb[0].mxu0
    %v2048 = vadd.f32 %v286, %v2047
    %v2049 = vpop.f32.mrb[0].mxu0
    %v2050 = vpop.f32.mrb[0].mxu0
    %v2051 = vadd.f32 %v286, %v2050
    %v2052 = vpop.f32.mrb[0].mxu0
    %2053 = vmatprep.mubr.bf16.mxu0 0
    %2054 = vmatmul.mubr.bf16.gmra.mrb[0].mxu0 %v1194
    %v2055 = vpop.f32.mrb[0].mxu0
    %v2056 = vadd.f32 %v286, %v2055
    %v2057 = vpop.f32.mrb[0].mxu0
    %v2058 = vpop.f32.mrb[0].mxu0
    %v2059 = vadd.f32 %v286, %v2058
    %v2060 = vpop.f32.mrb[0].mxu0
    %2061 = vmatprep.mubr.bf16.mxu0 0
    %2062 = vmatmul.mubr.bf16.gmra.mrb[0].mxu0 %v1197
    %v2063 = vpop.f32.mrb[0].mxu0
    %v2064 = vadd.f32 %v286, %v2063
    %v2065 = vpop.f32.mrb[0].mxu0
    %v2066 = vpop.f32.mrb[0].mxu0
    %v2067 = vadd.f32 %v286, %v2066
    %v2068 = vpop.f32.mrb[0].mxu0
    %2069 = vmatprep.mubr.bf16.mxu0 0
    %2070 = vmatmul.mubr.bf16.gmra.mrb[0].mxu0 %v1200
    %v2071 = vpop.f32.mrb[0].mxu0
    %v2072 = vadd.f32 %v286, %v2071
    %v2073 = vpop.f32.mrb[0].mxu0
    %v2074 = vpop.f32.mrb[0].mxu0
    %v2075 = vadd.f32 %v286, %v2074
    %v2076 = vpop.f32.mrb[0].mxu0
    %2077 = vmatprep.mubr.bf16.mxu0 0
    %2078 = vmatmul.mubr.bf16.gmra.mrb[0].mxu0 %v1203
    %v2079 = vpop.f32.mrb[0].mxu0
    %v2080 = vadd.f32 %v286, %v2079
    %v2081 = vpop.f32.mrb[0].mxu0
    %v2082 = vpop.f32.mrb[0].mxu0
    %v2083 = vadd.f32 %v286, %v2082
    %v2084 = vpop.f32.mrb[0].mxu0
    %2085 = vmatprep.mubr.bf16.mxu0 0
    %2086 = vmatmul.mubr.bf16.gmra.mrb[0].mxu0 %v1206
    %v2087 = vpop.f32.mrb[0].mxu0
    %v2088 = vadd.f32 %v286, %v2087
    %v2089 = vpop.f32.mrb[0].mxu0
    %v2090 = vpop.f32.mrb[0].mxu0
    %v2091 = vadd.f32 %v286, %v2090
    %v2092 = vpop.f32.mrb[0].mxu0
    %2093 = vmatprep.mubr.bf16.mxu0 0
    %2094 = vmatmul.mubr.bf16.gmra.mrb[0].mxu0 %v1209
    %v2095 = vpop.f32.mrb[0].mxu0
    %v2096 = vadd.f32 %v286, %v2095
    %v2097 = vpop.f32.mrb[0].mxu0
    %v2098 = vpop.f32.mrb[0].mxu0
    %v2099 = vadd.f32 %v286, %v2098
    %v2100 = vpop.f32.mrb[0].mxu0
    %2101 = vmatprep.mubr.bf16.mxu0 0
    %2102 = vmatmul.mubr.bf16.gmra.mrb[0].mxu0 %v1212
    %v2103 = vpop.f32.mrb[0].mxu0
    %v2104 = vadd.f32 %v286, %v2103
    %v2105 = vpop.f32.mrb[0].mxu0
    %v2106 = vpop.f32.mrb[0].mxu0
    %v2107 = vadd.f32 %v286, %v2106
    %v2108 = vpop.f32.mrb[0].mxu0
    %2109 = vmatprep.mubr.bf16.mxu0 0
    %2110 = vmatmul.mubr.bf16.gmra.mrb[0].mxu0 %v1215
    %v2111 = vpop.f32.mrb[0].mxu0
    %v2112 = vadd.f32 %v286, %v2111
    %v2113 = vpop.f32.mrb[0].mxu0
    %v2114 = vpop.f32.mrb[0].mxu0
    %v2115 = vadd.f32 %v286, %v2114
    %v2116 = vpop.f32.mrb[0].mxu0
    %2117 = vmatprep.mubr.bf16.mxu0 0
    %2118 = vmatmul.mubr.bf16.gmra.mrb[0].mxu0 %v1218
    %v2119 = vpop.f32.mrb[0].mxu0
    %v2120 = vadd.f32 %v286, %v2119
    %v2121 = vpop.f32.mrb[0].mxu0
    %v2122 = vpop.f32.mrb[0].mxu0
    %v2123 = vadd.f32 %v286, %v2122
    %v2124 = vpop.f32.mrb[0].mxu0
    %2125 = vmatprep.mubr.bf16.mxu0 0
    %2126 = vmatmul.mubr.bf16.gmra.mrb[0].mxu0 %v1221
    %v2127 = vpop.f32.mrb[0].mxu0
    %v2128 = vadd.f32 %v286, %v2127
    %v2129 = vpop.f32.mrb[0].mxu0
    %v2130 = vpop.f32.mrb[0].mxu0
    %v2131 = vadd.f32 %v286, %v2130
    %v2132 = vpop.f32.mrb[0].mxu0
    %2133 = vmatprep.mubr.bf16.mxu0 0
    %2134 = vmatmul.mubr.bf16.gmra.mrb[0].mxu0 %v1224
    %v2135 = vpop.f32.mrb[0].mxu0
    %v2136 = vadd.f32 %v286, %v2135
    %v2137 = vpop.f32.mrb[0].mxu0
    %v2138 = vpop.f32.mrb[0].mxu0
    %v2139 = vadd.f32 %v286, %v2138
    %v2140 = vpop.f32.mrb[0].mxu0
    %2141 = vmatprep.mubr.bf16.mxu0 0
    %2142 = vmatmul.mubr.bf16.gmra.mrb[0].mxu0 %v1227
    %v2143 = vpop.f32.mrb[0].mxu0
    %v2144 = vadd.f32 %v286, %v2143
    %v2145 = vpop.f32.mrb[0].mxu0
    %v2146 = vpop.f32.mrb[0].mxu0
    %v2147 = vadd.f32 %v286, %v2146
    %v2148 = vpop.f32.mrb[0].mxu0
    %2149 = vmatprep.mubr.bf16.mxu0 0
    %2150 = vmatmul.mubr.bf16.gmra.mrb[0].mxu0 %v1230
    %v2151 = vpop.f32.mrb[0].mxu0
    %v2152 = vadd.f32 %v286, %v2151
    %v2153 = vpop.f32.mrb[0].mxu0
    %v2154 = vpop.f32.mrb[0].mxu0
    %v2155 = vadd.f32 %v286, %v2154
    %v2156 = vpop.f32.mrb[0].mxu0
    %2157 = vmatprep.mubr.bf16.mxu0 0
    %2158 = vmatmul.mubr.bf16.gmra.mrb[0].mxu0 %v1233
    %v2159 = vpop.f32.mrb[0].mxu0
    %v2160 = vadd.f32 %v286, %v2159
    %v2161 = vpop.f32.mrb[0].mxu0
    %v2162 = vpop.f32.mrb[0].mxu0
    %v2163 = vadd.f32 %v286, %v2162
    %v2164 = vpop.f32.mrb[0].mxu0
    %2165 = vmatprep.mubr.bf16.mxu0 0
    %2166 = vmatmul.mubr.bf16.gmra.mrb[0].mxu0 %v1236
    %v2167 = vpop.f32.mrb[0].mxu0
    %v2168 = vadd.f32 %v286, %v2167
    %v2169 = vpop.f32.mrb[0].mxu0
    %v2170 = vpop.f32.mrb[0].mxu0
    %v2171 = vadd.f32 %v286, %v2170
    %v2172 = vpop.f32.mrb[0].mxu0
    %2173 = vmatprep.mubr.bf16.mxu0 0
    %2174 = vmatmul.mubr.bf16.gmra.mrb[0].mxu0 %v1239
    %v2175 = vpop.f32.mrb[0].mxu0
    %v2176 = vadd.f32 %v286, %v2175
    %v2177 = vpop.f32.mrb[0].mxu0
    %v2178 = vpop.f32.mrb[0].mxu0
    %v2179 = vadd.f32 %v286, %v2178
    %v2180 = vpop.f32.mrb[0].mxu0
    %2181 = vmatprep.mubr.bf16.mxu0 0
    %2182 = vmatmul.mubr.bf16.gmra.mrb[0].mxu0 %v1242
    %v2183 = vpop.f32.mrb[0].mxu0
    %v2184 = vadd.f32 %v286, %v2183
    %v2185 = vpop.f32.mrb[0].mxu0
    %v2186 = vpop.f32.mrb[0].mxu0
    %v2187 = vadd.f32 %v286, %v2186
    %v2188 = vpop.f32.mrb[0].mxu0
    %2189 = vmatprep.mubr.bf16.mxu0 0
    %2190 = vmatmul.mubr.bf16.gmra.mrb[0].mxu0 %v1245
    %v2191 = vpop.f32.mrb[0].mxu0
    %v2192 = vadd.f32 %v286, %v2191
    %v2193 = vpop.f32.mrb[0].mxu0
    %v2194 = vpop.f32.mrb[0].mxu0
    %v2195 = vadd.f32 %v286, %v2194
    %v2196 = vpop.f32.mrb[0].mxu0
    %2197 = vmatprep.mubr.bf16.mxu0 0
    %2198 = vmatmul.mubr.bf16.gmra.mrb[0].mxu0 %v1248
    %v2199 = vpop.f32.mrb[0].mxu0
    %v2200 = vadd.f32 %v286, %v2199
    %v2201 = vpop.f32.mrb[0].mxu0
    %v2202 = vpop.f32.mrb[0].mxu0
    %v2203 = vadd.f32 %v286, %v2202
    %v2204 = vpop.f32.mrb[0].mxu0
    %2205 = vmatprep.mubr.bf16.mxu0 0
    %2206 = vmatmul.mubr.bf16.gmra.mrb[0].mxu0 %v1251
    %v2207 = vpop.f32.mrb[0].mxu0
    %v2208 = vadd.f32 %v286, %v2207
    %v2209 = vpop.f32.mrb[0].mxu0
    %v2210 = vpop.f32.mrb[0].mxu0
    %v2211 = vadd.f32 %v286, %v2210
    %v2212 = vpop.f32.mrb[0].mxu0
    %2213 = vmatprep.mubr.bf16.mxu0 0
    %2214 = vmatmul.mubr.bf16.gmra.mrb[0].mxu0 %v1254
    %v2215 = vpop.f32.mrb[0].mxu0
    %v2216 = vadd.f32 %v286, %v2215
    %v2217 = vpop.f32.mrb[0].mxu0
    %v2218 = vpop.f32.mrb[0].mxu0
    %v2219 = vadd.f32 %v286, %v2218
    %v2220 = vpop.f32.mrb[0].mxu0
    %2221 = vmatprep.mubr.bf16.mxu0 0
    %2222 = vmatmul.mubr.bf16.gmra.mrb[0].mxu0 %v1257
    %v2223 = vpop.f32.mrb[0].mxu0
    %v2224 = vadd.f32 %v286, %v2223
    %v2225 = vpop.f32.mrb[0].mxu0
    %v2226 = vpop.f32.mrb[0].mxu0
    %v2227 = vadd.f32 %v286, %v2226
    %v2228 = vpop.f32.mrb[0].mxu0
    %2229 = vmatprep.mubr.bf16.mxu0 0
    %2230 = vmatmul.mubr.bf16.gmra.mrb[0].mxu0 %v1260
    %v2231 = vpop.f32.mrb[0].mxu0
    %v2232 = vadd.f32 %v286, %v2231
    %v2233 = vpop.f32.mrb[0].mxu0
    %v2234 = vpop.f32.mrb[0].mxu0
    %v2235 = vadd.f32 %v286, %v2234
    %v2236 = vpop.f32.mrb[0].mxu0
    %2237 = vmatprep.mubr.bf16.mxu0 0
    %2238 = vmatmul.mubr.bf16.gmra.mrb[0].mxu0 %v1263
    %v2239 = vpop.f32.mrb[0].mxu0
    %v2240 = vadd.f32 %v286, %v2239
    %v2241 = vpop.f32.mrb[0].mxu0
    %v2242 = vpop.f32.mrb[0].mxu0
    %v2243 = vadd.f32 %v286, %v2242
    %v2244 = vpop.f32.mrb[0].mxu0
    %2245 = vmatprep.mubr.bf16.mxu0 0
    %2246 = vmatmul.mubr.bf16.gmra.mrb[0].mxu0 %v1266
    %v2247 = vpop.f32.mrb[0].mxu0
    %v2248 = vadd.f32 %v286, %v2247
    %v2249 = vpop.f32.mrb[0].mxu0
    %v2250 = vpop.f32.mrb[0].mxu0
    %v2251 = vadd.f32 %v286, %v2250
    %v2252 = vpop.f32.mrb[0].mxu0
    %2253 = vmatprep.mubr.bf16.mxu0 0
    %2254 = vmatmul.mubr.bf16.gmra.mrb[0].mxu0 %v1269
    %v2255 = vpop.f32.mrb[0].mxu0
    %v2256 = vadd.f32 %v286, %v2255
    %v2257 = vpop.f32.mrb[0].mxu0
    %v2258 = vpop.f32.mrb[0].mxu0
    %v2259 = vadd.f32 %v286, %v2258
    %v2260 = vpop.f32.mrb[0].mxu0
    %2261 = vmatprep.mubr.bf16.mxu0 0
    %2262 = vmatmul.mubr.bf16.gmra.mrb[0].mxu0 %v1272
    %v2263 = vpop.f32.mrb[0].mxu0
    %v2264 = vadd.f32 %v286, %v2263
    %v2265 = vpop.f32.mrb[0].mxu0
    %v2266 = vpop.f32.mrb[0].mxu0
    %v2267 = vadd.f32 %v286, %v2266
    %v2268 = vpop.f32.mrb[0].mxu0
    %2269 = vmatprep.mubr.bf16.mxu0 0
    %2270 = vmatmul.mubr.bf16.gmra.mrb[0].mxu0 %v1275
    %v2271 = vpop.f32.mrb[0].mxu0
    %v2272 = vadd.f32 %v286, %v2271
    %v2273 = vpop.f32.mrb[0].mxu0
    %v2274 = vpop.f32.mrb[0].mxu0
    %v2275 = vadd.f32 %v286, %v2274
    %v2276 = vpop.f32.mrb[0].mxu0
    %2277 = vmatprep.mubr.bf16.mxu0 0
    %2278 = vmatmul.mubr.bf16.gmra.mrb[0].mxu0 %v1278
    %v2279 = vpop.f32.mrb[0].mxu0
    %v2280 = vadd.f32 %v286, %v2279
    %v2281 = vpop.f32.mrb[0].mxu0
    %v2282 = vpop.f32.mrb[0].mxu0
    %v2283 = vadd.f32 %v286, %v2282
    %v2284 = vpop.f32.mrb[0].mxu0
    %2285 = vmatprep.mubr.bf16.mxu0 0
    %2286 = vmatmul.mubr.bf16.gmra.mrb[0].mxu0 %v1281
    %v2287 = vpop.f32.mrb[0].mxu0
    %v2288 = vadd.f32 %v286, %v2287
    %v2289 = vpop.f32.mrb[0].mxu0
    %v2290 = vpop.f32.mrb[0].mxu0
    %v2291 = vadd.f32 %v286, %v2290
    %v2292 = vpop.f32.mrb[0].mxu0
    %2293 = vmatprep.mubr.bf16.mxu0 0
    %2294 = vmatmul.mubr.bf16.gmra.mrb[0].mxu0 %v1284
    %v2295 = vpop.f32.mrb[0].mxu0
    %v2296 = vadd.f32 %v286, %v2295
    %v2297 = vpop.f32.mrb[0].mxu0
    %v2298 = vpop.f32.mrb[0].mxu0
    %v2299 = vadd.f32 %v286, %v2298
    %v2300 = vpop.f32.mrb[0].mxu0
    %2301 = vmatprep.mubr.bf16.mxu0 0
    %2302 = vmatmul.mubr.bf16.gmra.mrb[0].mxu0 %v1287
    %v2303 = vpop.f32.mrb[0].mxu0
    %v2304 = vadd.f32 %v286, %v2303
    %v2305 = vpop.f32.mrb[0].mxu0
    %v2306 = vpop.f32.mrb[0].mxu0
    %v2307 = vadd.f32 %v286, %v2306
    %v2308 = vpop.f32.mrb[0].mxu0
    %2309 = vmatprep.mubr.bf16.mxu0 0
    %2310 = vmatmul.mubr.bf16.gmra.mrb[0].mxu0 %v1290
    %v2311 = vpop.f32.mrb[0].mxu0
    %v2312 = vadd.f32 %v286, %v2311
    %v2313 = vpop.f32.mrb[0].mxu0
    %v2314 = vpop.f32.mrb[0].mxu0
    %v2315 = vadd.f32 %v286, %v2314
    %v2316 = vpop.f32.mrb[0].mxu0
    %2317 = vmatprep.mubr.bf16.mxu0 0
    %2318 = vmatmul.mubr.bf16.gmra.mrb[0].mxu0 %v1293
    %v2319 = vpop.f32.mrb[0].mxu0
    %v2320 = vadd.f32 %v286, %v2319
    %v2321 = vpop.f32.mrb[0].mxu0
    %v2322 = vpop.f32.mrb[0].mxu0
    %v2323 = vadd.f32 %v286, %v2322
    %v2324 = vpop.f32.mrb[0].mxu0
    %2325 = vmatprep.mubr.bf16.mxu0 0
    %2326 = vmatmul.mubr.bf16.gmra.mrb[0].mxu0 %v1296
    %v2327 = vpop.f32.mrb[0].mxu0
    %v2328 = vadd.f32 %v286, %v2327
    %v2329 = vpop.f32.mrb[0].mxu0
    %v2330 = vpop.f32.mrb[0].mxu0
    %v2331 = vadd.f32 %v286, %v2330
    %v2332 = vpop.f32.mrb[0].mxu0
    %2333 = vmatprep.mubr.bf16.mxu0 0
    %2334 = vmatmul.mubr.bf16.gmra.mrb[0].mxu0 %v1299
    %v2335 = vpop.f32.mrb[0].mxu0
    %v2336 = vadd.f32 %v286, %v2335
    %v2337 = vpop.f32.mrb[0].mxu0
    %v2338 = vpop.f32.mrb[0].mxu0
    %v2339 = vadd.f32 %v286, %v2338
    %v2340 = vpop.f32.mrb[0].mxu0
    %2341 = vmatprep.mubr.bf16.mxu0 0
    %2342 = vmatmul.mubr.bf16.gmra.mrb[0].mxu0 %v1302
    %v2343 = vpop.f32.mrb[0].mxu0
    %v2344 = vadd.f32 %v286, %v2343
    %v2345 = vpop.f32.mrb[0].mxu0
    %v2346 = vpop.f32.mrb[0].mxu0
    %v2347 = vadd.f32 %v286, %v2346
    %v2348 = vpop.f32.mrb[0].mxu0
    %2349 = vmatprep.mubr.bf16.mxu0 0
    %2350 = vmatmul.mubr.bf16.gmra.mrb[0].mxu0 %v1305
    %v2351 = vpop.f32.mrb[0].mxu0
    %v2352 = vadd.f32 %v286, %v2351
    %v2353 = vpop.f32.mrb[0].mxu0
    %v2354 = vpop.f32.mrb[0].mxu0
    %v2355 = vadd.f32 %v286, %v2354
    %v2356 = vpop.f32.mrb[0].mxu0
    %2357 = vmatprep.mubr.bf16.mxu0 0
    %2358 = vmatmul.mubr.bf16.gmra.mrb[0].mxu0 %v1308
    %v2359 = vpop.f32.mrb[0].mxu0
    %v2360 = vadd.f32 %v286, %v2359
    %v2361 = vpop.f32.mrb[0].mxu0
    %v2362 = vpop.f32.mrb[0].mxu0
    %v2363 = vadd.f32 %v286, %v2362
    %v2364 = vpop.f32.mrb[0].mxu0
    %2365 = vmatprep.mubr.bf16.mxu0 0
    %2366 = vmatmul.mubr.bf16.gmra.mrb[0].mxu0 %v1311
    %v2367 = vpop.f32.mrb[0].mxu0
    %v2368 = vadd.f32 %v286, %v2367
    %v2369 = vpop.f32.mrb[0].mxu0
    %v2370 = vpop.f32.mrb[0].mxu0
    %v2371 = vadd.f32 %v286, %v2370
    %v2372 = vpop.f32.mrb[0].mxu0
    %2373 = vdwg.mxu0
    %vm2374 = vcmask 15360
    %2375 = vst.msk [vmem:[%s5] sm:$0xff] %vm2374, %v1352
    %2376 = vst.msk [vmem:[%s5 + $0x8] sm:$0xff] %vm2374, %v1355
    %2377 = vst.msk [vmem:[%s5 + $0x10] sm:$0xff] %vm2374, %v1360
    %2378 = vst.msk [vmem:[%s5 + $0x18] sm:$0xff] %vm2374, %v1363
    %2379 = vst.msk [vmem:[%s5 + $0x20] sm:$0xff] %vm2374, %v1368
    %2380 = vst.msk [vmem:[%s5 + $0x28] sm:$0xff] %vm2374, %v1371
    %2381 = vst.msk [vmem:[%s5 + $0x30] sm:$0xff] %vm2374, %v1376
    %2382 = vst.msk [vmem:[%s5 + $0x38] sm:$0xff] %vm2374, %v1379
    %2383 = vst.msk [vmem:[%s5 + $0x40] sm:$0xff] %vm2374, %v1384
    %2384 = vst.msk [vmem:[%s5 + $0x48] sm:$0xff] %vm2374, %v1387
    %2385 = vst.msk [vmem:[%s5 + $0x50] sm:$0xff] %vm2374, %v1392
    %2386 = vst.msk [vmem:[%s5 + $0x58] sm:$0xff] %vm2374, %v1395
    %2387 = vst.msk [vmem:[%s5 + $0x60] sm:$0xff] %vm2374, %v1400
    %2388 = vst.msk [vmem:[%s5 + $0x68] sm:$0xff] %vm2374, %v1403
    %2389 = vst.msk [vmem:[%s5 + $0x70] sm:$0xff] %vm2374, %v1408
    %2390 = vst.msk [vmem:[%s5 + $0x78] sm:$0xff] %vm2374, %v1411
    %2391 = vst.msk [vmem:[%s5 + $0x80] sm:$0xff] %vm2374, %v1416
    %2392 = vst.msk [vmem:[%s5 + $0x88] sm:$0xff] %vm2374, %v1419
    %2393 = vst.msk [vmem:[%s5 + $0x90] sm:$0xff] %vm2374, %v1424
    %2394 = vst.msk [vmem:[%s5 + $0x98] sm:$0xff] %vm2374, %v1427
    %2395 = vst.msk [vmem:[%s5 + $0xa0] sm:$0xff] %vm2374, %v1432
    %2396 = vst.msk [vmem:[%s5 + $0xa8] sm:$0xff] %vm2374, %v1435
    %2397 = vst.msk [vmem:[%s5 + $0xb0] sm:$0xff] %vm2374, %v1440
    %2398 = vst.msk [vmem:[%s5 + $0xb8] sm:$0xff] %vm2374, %v1443
    %2399 = vst.msk [vmem:[%s5 + $0xc0] sm:$0xff] %vm2374, %v1448
    %2400 = vst.msk [vmem:[%s5 + $0xc8] sm:$0xff] %vm2374, %v1451
    %2401 = vst.msk [vmem:[%s5 + $0xd0] sm:$0xff] %vm2374, %v1456
    %2402 = vst.msk [vmem:[%s5 + $0xd8] sm:$0xff] %vm2374, %v1459
    %2403 = vst.msk [vmem:[%s5 + $0xe0] sm:$0xff] %vm2374, %v1464
    %2404 = vst.msk [vmem:[%s5 + $0xe8] sm:$0xff] %vm2374, %v1467
    %2405 = vst.msk [vmem:[%s5 + $0xf0] sm:$0xff] %vm2374, %v1472
    %2406 = vst.msk [vmem:[%s5 + $0xf8] sm:$0xff] %vm2374, %v1475
    %2407 = vst.msk [vmem:[%s5 + $0x100] sm:$0xff] %vm2374, %v1480
    %2408 = vst.msk [vmem:[%s5 + $0x108] sm:$0xff] %vm2374, %v1483
    %2409 = vst.msk [vmem:[%s5 + $0x110] sm:$0xff] %vm2374, %v1488
    %2410 = vst.msk [vmem:[%s5 + $0x118] sm:$0xff] %vm2374, %v1491
    %2411 = vst.msk [vmem:[%s5 + $0x120] sm:$0xff] %vm2374, %v1496
    %2412 = vst.msk [vmem:[%s5 + $0x128] sm:$0xff] %vm2374, %v1499
    %2413 = vst.msk [vmem:[%s5 + $0x130] sm:$0xff] %vm2374, %v1504
    %2414 = vst.msk [vmem:[%s5 + $0x138] sm:$0xff] %vm2374, %v1507
    %2415 = vst.msk [vmem:[%s5 + $0x140] sm:$0xff] %vm2374, %v1512
    %2416 = vst.msk [vmem:[%s5 + $0x148] sm:$0xff] %vm2374, %v1515
    %2417 = vst.msk [vmem:[%s5 + $0x150] sm:$0xff] %vm2374, %v1520
    %2418 = vst.msk [vmem:[%s5 + $0x158] sm:$0xff] %vm2374, %v1523
    %2419 = vst.msk [vmem:[%s5 + $0x160] sm:$0xff] %vm2374, %v1528
    %2420 = vst.msk [vmem:[%s5 + $0x168] sm:$0xff] %vm2374, %v1531
    %2421 = vst.msk [vmem:[%s5 + $0x170] sm:$0xff] %vm2374, %v1536
    %2422 = vst.msk [vmem:[%s5 + $0x178] sm:$0xff] %vm2374, %v1539
    %2423 = vst.msk [vmem:[%s5 + $0x180] sm:$0xff] %vm2374, %v1544
    %2424 = vst.msk [vmem:[%s5 + $0x188] sm:$0xff] %vm2374, %v1547
    %2425 = vst.msk [vmem:[%s5 + $0x190] sm:$0xff] %vm2374, %v1552
    %2426 = vst.msk [vmem:[%s5 + $0x198] sm:$0xff] %vm2374, %v1555
    %2427 = vst.msk [vmem:[%s5 + $0x1a0] sm:$0xff] %vm2374, %v1560
    %2428 = vst.msk [vmem:[%s5 + $0x1a8] sm:$0xff] %vm2374, %v1563
    %2429 = vst.msk [vmem:[%s5 + $0x1b0] sm:$0xff] %vm2374, %v1568
    %2430 = vst.msk [vmem:[%s5 + $0x1b8] sm:$0xff] %vm2374, %v1571
    %2431 = vst.msk [vmem:[%s5 + $0x1c0] sm:$0xff] %vm2374, %v1576
    %2432 = vst.msk [vmem:[%s5 + $0x1c8] sm:$0xff] %vm2374, %v1579
    %2433 = vst.msk [vmem:[%s5 + $0x1d0] sm:$0xff] %vm2374, %v1584
    %2434 = vst.msk [vmem:[%s5 + $0x1d8] sm:$0xff] %vm2374, %v1587
    %2435 = vst.msk [vmem:[%s5 + $0x1e0] sm:$0xff] %vm2374, %v1592
    %2436 = vst.msk [vmem:[%s5 + $0x1e8] sm:$0xff] %vm2374, %v1595
    %2437 = vst.msk [vmem:[%s5 + $0x1f0] sm:$0xff] %vm2374, %v1600
    %2438 = vst.msk [vmem:[%s5 + $0x1f8] sm:$0xff] %vm2374, %v1603
    %2439 = vst.msk [vmem:[%s5 + $0x200] sm:$0xff] %vm2374, %v1608
    %2440 = vst.msk [vmem:[%s5 + $0x208] sm:$0xff] %vm2374, %v1611
    %2441 = vst.msk [vmem:[%s5 + $0x210] sm:$0xff] %vm2374, %v1616
    %2442 = vst.msk [vmem:[%s5 + $0x218] sm:$0xff] %vm2374, %v1619
    %2443 = vst.msk [vmem:[%s5 + $0x220] sm:$0xff] %vm2374, %v1624
    %2444 = vst.msk [vmem:[%s5 + $0x228] sm:$0xff] %vm2374, %v1627
    %2445 = vst.msk [vmem:[%s5 + $0x230] sm:$0xff] %vm2374, %v1632
    %2446 = vst.msk [vmem:[%s5 + $0x238] sm:$0xff] %vm2374, %v1635
    %2447 = vst.msk [vmem:[%s5 + $0x240] sm:$0xff] %vm2374, %v1640
    %2448 = vst.msk [vmem:[%s5 + $0x248] sm:$0xff] %vm2374, %v1643
    %2449 = vst.msk [vmem:[%s5 + $0x250] sm:$0xff] %vm2374, %v1648
    %2450 = vst.msk [vmem:[%s5 + $0x258] sm:$0xff] %vm2374, %v1651
    %2451 = vst.msk [vmem:[%s5 + $0x260] sm:$0xff] %vm2374, %v1656
    %2452 = vst.msk [vmem:[%s5 + $0x268] sm:$0xff] %vm2374, %v1659
    %2453 = vst.msk [vmem:[%s5 + $0x270] sm:$0xff] %vm2374, %v1664
    %2454 = vst.msk [vmem:[%s5 + $0x278] sm:$0xff] %vm2374, %v1667
    %2455 = vst.msk [vmem:[%s5 + $0x280] sm:$0xff] %vm2374, %v1672
    %2456 = vst.msk [vmem:[%s5 + $0x288] sm:$0xff] %vm2374, %v1675
    %2457 = vst.msk [vmem:[%s5 + $0x290] sm:$0xff] %vm2374, %v1680
    %2458 = vst.msk [vmem:[%s5 + $0x298] sm:$0xff] %vm2374, %v1683
    %2459 = vst.msk [vmem:[%s5 + $0x2a0] sm:$0xff] %vm2374, %v1688
    %2460 = vst.msk [vmem:[%s5 + $0x2a8] sm:$0xff] %vm2374, %v1691
    %2461 = vst.msk [vmem:[%s5 + $0x2b0] sm:$0xff] %vm2374, %v1696
    %2462 = vst.msk [vmem:[%s5 + $0x2b8] sm:$0xff] %vm2374, %v1699
    %2463 = vst.msk [vmem:[%s5 + $0x2c0] sm:$0xff] %vm2374, %v1704
    %2464 = vst.msk [vmem:[%s5 + $0x2c8] sm:$0xff] %vm2374, %v1707
    %2465 = vst.msk [vmem:[%s5 + $0x2d0] sm:$0xff] %vm2374, %v1712
    %2466 = vst.msk [vmem:[%s5 + $0x2d8] sm:$0xff] %vm2374, %v1715
    %2467 = vst.msk [vmem:[%s5 + $0x2e0] sm:$0xff] %vm2374, %v1720
    %2468 = vst.msk [vmem:[%s5 + $0x2e8] sm:$0xff] %vm2374, %v1723
    %2469 = vst.msk [vmem:[%s5 + $0x2f0] sm:$0xff] %vm2374, %v1728
    %2470 = vst.msk [vmem:[%s5 + $0x2f8] sm:$0xff] %vm2374, %v1731
    %2471 = vst.msk [vmem:[%s5 + $0x300] sm:$0xff] %vm2374, %v1736
    %2472 = vst.msk [vmem:[%s5 + $0x308] sm:$0xff] %vm2374, %v1739
    %2473 = vst.msk [vmem:[%s5 + $0x310] sm:$0xff] %vm2374, %v1744
    %2474 = vst.msk [vmem:[%s5 + $0x318] sm:$0xff] %vm2374, %v1747
    %2475 = vst.msk [vmem:[%s5 + $0x320] sm:$0xff] %vm2374, %v1752
    %2476 = vst.msk [vmem:[%s5 + $0x328] sm:$0xff] %vm2374, %v1755
    %2477 = vst.msk [vmem:[%s5 + $0x330] sm:$0xff] %vm2374, %v1760
    %2478 = vst.msk [vmem:[%s5 + $0x338] sm:$0xff] %vm2374, %v1763
    %2479 = vst.msk [vmem:[%s5 + $0x340] sm:$0xff] %vm2374, %v1768
    %2480 = vst.msk [vmem:[%s5 + $0x348] sm:$0xff] %vm2374, %v1771
    %2481 = vst.msk [vmem:[%s5 + $0x350] sm:$0xff] %vm2374, %v1776
    %2482 = vst.msk [vmem:[%s5 + $0x358] sm:$0xff] %vm2374, %v1779
    %2483 = vst.msk [vmem:[%s5 + $0x360] sm:$0xff] %vm2374, %v1784
    %2484 = vst.msk [vmem:[%s5 + $0x368] sm:$0xff] %vm2374, %v1787
    %2485 = vst.msk [vmem:[%s5 + $0x370] sm:$0xff] %vm2374, %v1792
    %2486 = vst.msk [vmem:[%s5 + $0x378] sm:$0xff] %vm2374, %v1795
    %2487 = vst.msk [vmem:[%s5 + $0x380] sm:$0xff] %vm2374, %v1800
    %2488 = vst.msk [vmem:[%s5 + $0x388] sm:$0xff] %vm2374, %v1803
    %2489 = vst.msk [vmem:[%s5 + $0x390] sm:$0xff] %vm2374, %v1808
    %2490 = vst.msk [vmem:[%s5 + $0x398] sm:$0xff] %vm2374, %v1811
    %2491 = vst.msk [vmem:[%s5 + $0x3a0] sm:$0xff] %vm2374, %v1816
    %2492 = vst.msk [vmem:[%s5 + $0x3a8] sm:$0xff] %vm2374, %v1819
    %2493 = vst.msk [vmem:[%s5 + $0x3b0] sm:$0xff] %vm2374, %v1824
    %2494 = vst.msk [vmem:[%s5 + $0x3b8] sm:$0xff] %vm2374, %v1827
    %2495 = vst.msk [vmem:[%s5 + $0x3c0] sm:$0xff] %vm2374, %v1832
    %2496 = vst.msk [vmem:[%s5 + $0x3c8] sm:$0xff] %vm2374, %v1835
    %2497 = vst.msk [vmem:[%s5 + $0x3d0] sm:$0xff] %vm2374, %v1840
    %2498 = vst.msk [vmem:[%s5 + $0x3d8] sm:$0xff] %vm2374, %v1843
    %2499 = vst.msk [vmem:[%s5 + $0x3e0] sm:$0xff] %vm2374, %v1848
    %2500 = vst.msk [vmem:[%s5 + $0x3e8] sm:$0xff] %vm2374, %v1851
    %2501 = vst.msk [vmem:[%s5 + $0x3f0] sm:$0xff] %vm2374, %v1856
    %2502 = vst.msk [vmem:[%s5 + $0x3f8] sm:$0xff] %vm2374, %v1859
    %2503 = vst.msk [vmem:[%s5 + $0x400] sm:$0xff] %vm2374, %v1864
    %2504 = vst.msk [vmem:[%s5 + $0x408] sm:$0xff] %vm2374, %v1867
    %2505 = vst.msk [vmem:[%s5 + $0x410] sm:$0xff] %vm2374, %v1872
    %2506 = vst.msk [vmem:[%s5 + $0x418] sm:$0xff] %vm2374, %v1875
    %2507 = vst.msk [vmem:[%s5 + $0x420] sm:$0xff] %vm2374, %v1880
    %2508 = vst.msk [vmem:[%s5 + $0x428] sm:$0xff] %vm2374, %v1883
    %2509 = vst.msk [vmem:[%s5 + $0x430] sm:$0xff] %vm2374, %v1888
    %2510 = vst.msk [vmem:[%s5 + $0x438] sm:$0xff] %vm2374, %v1891
    %2511 = vst.msk [vmem:[%s5 + $0x440] sm:$0xff] %vm2374, %v1896
    %2512 = vst.msk [vmem:[%s5 + $0x448] sm:$0xff] %vm2374, %v1899
    %2513 = vst.msk [vmem:[%s5 + $0x450] sm:$0xff] %vm2374, %v1904
    %2514 = vst.msk [vmem:[%s5 + $0x458] sm:$0xff] %vm2374, %v1907
    %2515 = vst.msk [vmem:[%s5 + $0x460] sm:$0xff] %vm2374, %v1912
    %2516 = vst.msk [vmem:[%s5 + $0x468] sm:$0xff] %vm2374, %v1915
    %2517 = vst.msk [vmem:[%s5 + $0x470] sm:$0xff] %vm2374, %v1920
    %2518 = vst.msk [vmem:[%s5 + $0x478] sm:$0xff] %vm2374, %v1923
    %2519 = vst.msk [vmem:[%s5 + $0x480] sm:$0xff] %vm2374, %v1928
    %2520 = vst.msk [vmem:[%s5 + $0x488] sm:$0xff] %vm2374, %v1931
    %2521 = vst.msk [vmem:[%s5 + $0x490] sm:$0xff] %vm2374, %v1936
    %2522 = vst.msk [vmem:[%s5 + $0x498] sm:$0xff] %vm2374, %v1939
    %2523 = vst.msk [vmem:[%s5 + $0x4a0] sm:$0xff] %vm2374, %v1944
    %2524 = vst.msk [vmem:[%s5 + $0x4a8] sm:$0xff] %vm2374, %v1947
    %2525 = vst.msk [vmem:[%s5 + $0x4b0] sm:$0xff] %vm2374, %v1952
    %2526 = vst.msk [vmem:[%s5 + $0x4b8] sm:$0xff] %vm2374, %v1955
    %2527 = vst.msk [vmem:[%s5 + $0x4c0] sm:$0xff] %vm2374, %v1960
    %2528 = vst.msk [vmem:[%s5 + $0x4c8] sm:$0xff] %vm2374, %v1963
    %2529 = vst.msk [vmem:[%s5 + $0x4d0] sm:$0xff] %vm2374, %v1968
    %2530 = vst.msk [vmem:[%s5 + $0x4d8] sm:$0xff] %vm2374, %v1971
    %2531 = vst.msk [vmem:[%s5 + $0x4e0] sm:$0xff] %vm2374, %v1976
    %2532 = vst.msk [vmem:[%s5 + $0x4e8] sm:$0xff] %vm2374, %v1979
    %2533 = vst.msk [vmem:[%s5 + $0x4f0] sm:$0xff] %vm2374, %v1984
    %2534 = vst.msk [vmem:[%s5 + $0x4f8] sm:$0xff] %vm2374, %v1987
    %2535 = vst.msk [vmem:[%s5 + $0x500] sm:$0xff] %vm2374, %v1992
    %2536 = vst.msk [vmem:[%s5 + $0x508] sm:$0xff] %vm2374, %v1995
    %2537 = vst.msk [vmem:[%s5 + $0x510] sm:$0xff] %vm2374, %v2000
    %2538 = vst.msk [vmem:[%s5 + $0x518] sm:$0xff] %vm2374, %v2003
    %2539 = vst.msk [vmem:[%s5 + $0x520] sm:$0xff] %vm2374, %v2008
    %2540 = vst.msk [vmem:[%s5 + $0x528] sm:$0xff] %vm2374, %v2011
    %2541 = vst.msk [vmem:[%s5 + $0x530] sm:$0xff] %vm2374, %v2016
    %2542 = vst.msk [vmem:[%s5 + $0x538] sm:$0xff] %vm2374, %v2019
    %2543 = vst.msk [vmem:[%s5 + $0x540] sm:$0xff] %vm2374, %v2024
    %2544 = vst.msk [vmem:[%s5 + $0x548] sm:$0xff] %vm2374, %v2027
    %2545 = vst.msk [vmem:[%s5 + $0x550] sm:$0xff] %vm2374, %v2032
    %2546 = vst.msk [vmem:[%s5 + $0x558] sm:$0xff] %vm2374, %v2035
    %2547 = vst.msk [vmem:[%s5 + $0x560] sm:$0xff] %vm2374, %v2040
    %2548 = vst.msk [vmem:[%s5 + $0x568] sm:$0xff] %vm2374, %v2043
    %2549 = vst.msk [vmem:[%s5 + $0x570] sm:$0xff] %vm2374, %v2048
    %2550 = vst.msk [vmem:[%s5 + $0x578] sm:$0xff] %vm2374, %v2051
    %2551 = vst.msk [vmem:[%s5 + $0x580] sm:$0xff] %vm2374, %v2056
    %2552 = vst.msk [vmem:[%s5 + $0x588] sm:$0xff] %vm2374, %v2059
    %2553 = vst.msk [vmem:[%s5 + $0x590] sm:$0xff] %vm2374, %v2064
    %2554 = vst.msk [vmem:[%s5 + $0x598] sm:$0xff] %vm2374, %v2067
    %2555 = vst.msk [vmem:[%s5 + $0x5a0] sm:$0xff] %vm2374, %v2072
    %2556 = vst.msk [vmem:[%s5 + $0x5a8] sm:$0xff] %vm2374, %v2075
    %2557 = vst.msk [vmem:[%s5 + $0x5b0] sm:$0xff] %vm2374, %v2080
    %2558 = vst.msk [vmem:[%s5 + $0x5b8] sm:$0xff] %vm2374, %v2083
    %2559 = vst.msk [vmem:[%s5 + $0x5c0] sm:$0xff] %vm2374, %v2088
    %2560 = vst.msk [vmem:[%s5 + $0x5c8] sm:$0xff] %vm2374, %v2091
    %2561 = vst.msk [vmem:[%s5 + $0x5d0] sm:$0xff] %vm2374, %v2096
    %2562 = vst.msk [vmem:[%s5 + $0x5d8] sm:$0xff] %vm2374, %v2099
    %2563 = vst.msk [vmem:[%s5 + $0x5e0] sm:$0xff] %vm2374, %v2104
    %2564 = vst.msk [vmem:[%s5 + $0x5e8] sm:$0xff] %vm2374, %v2107
    %2565 = vst.msk [vmem:[%s5 + $0x5f0] sm:$0xff] %vm2374, %v2112
    %2566 = vst.msk [vmem:[%s5 + $0x5f8] sm:$0xff] %vm2374, %v2115
    %2567 = vst.msk [vmem:[%s5 + $0x600] sm:$0xff] %vm2374, %v2120
    %2568 = vst.msk [vmem:[%s5 + $0x608] sm:$0xff] %vm2374, %v2123
    %2569 = vst.msk [vmem:[%s5 + $0x610] sm:$0xff] %vm2374, %v2128
    %2570 = vst.msk [vmem:[%s5 + $0x618] sm:$0xff] %vm2374, %v2131
    %2571 = vst.msk [vmem:[%s5 + $0x620] sm:$0xff] %vm2374, %v2136
    %2572 = vst.msk [vmem:[%s5 + $0x628] sm:$0xff] %vm2374, %v2139
    %2573 = vst.msk [vmem:[%s5 + $0x630] sm:$0xff] %vm2374, %v2144
    %2574 = vst.msk [vmem:[%s5 + $0x638] sm:$0xff] %vm2374, %v2147
    %2575 = vst.msk [vmem:[%s5 + $0x640] sm:$0xff] %vm2374, %v2152
    %2576 = vst.msk [vmem:[%s5 + $0x648] sm:$0xff] %vm2374, %v2155
    %2577 = vst.msk [vmem:[%s5 + $0x650] sm:$0xff] %vm2374, %v2160
    %2578 = vst.msk [vmem:[%s5 + $0x658] sm:$0xff] %vm2374, %v2163
    %2579 = vst.msk [vmem:[%s5 + $0x660] sm:$0xff] %vm2374, %v2168
    %2580 = vst.msk [vmem:[%s5 + $0x668] sm:$0xff] %vm2374, %v2171
    %2581 = vst.msk [vmem:[%s5 + $0x670] sm:$0xff] %vm2374, %v2176
    %2582 = vst.msk [vmem:[%s5 + $0x678] sm:$0xff] %vm2374, %v2179
    %2583 = vst.msk [vmem:[%s5 + $0x680] sm:$0xff] %vm2374, %v2184
    %2584 = vst.msk [vmem:[%s5 + $0x688] sm:$0xff] %vm2374, %v2187
    %2585 = vst.msk [vmem:[%s5 + $0x690] sm:$0xff] %vm2374, %v2192
    %2586 = vst.msk [vmem:[%s5 + $0x698] sm:$0xff] %vm2374, %v2195
    %2587 = vst.msk [vmem:[%s5 + $0x6a0] sm:$0xff] %vm2374, %v2200
    %2588 = vst.msk [vmem:[%s5 + $0x6a8] sm:$0xff] %vm2374, %v2203
    %2589 = vst.msk [vmem:[%s5 + $0x6b0] sm:$0xff] %vm2374, %v2208
    %2590 = vst.msk [vmem:[%s5 + $0x6b8] sm:$0xff] %vm2374, %v2211
    %2591 = vst.msk [vmem:[%s5 + $0x6c0] sm:$0xff] %vm2374, %v2216
    %2592 = vst.msk [vmem:[%s5 + $0x6c8] sm:$0xff] %vm2374, %v2219
    %2593 = vst.msk [vmem:[%s5 + $0x6d0] sm:$0xff] %vm2374, %v2224
    %2594 = vst.msk [vmem:[%s5 + $0x6d8] sm:$0xff] %vm2374, %v2227
    %2595 = vst.msk [vmem:[%s5 + $0x6e0] sm:$0xff] %vm2374, %v2232
    %2596 = vst.msk [vmem:[%s5 + $0x6e8] sm:$0xff] %vm2374, %v2235
    %2597 = vst.msk [vmem:[%s5 + $0x6f0] sm:$0xff] %vm2374, %v2240
    %2598 = vst.msk [vmem:[%s5 + $0x6f8] sm:$0xff] %vm2374, %v2243
    %2599 = vst.msk [vmem:[%s5 + $0x700] sm:$0xff] %vm2374, %v2248
    %2600 = vst.msk [vmem:[%s5 + $0x708] sm:$0xff] %vm2374, %v2251
    %2601 = vst.msk [vmem:[%s5 + $0x710] sm:$0xff] %vm2374, %v2256
    %2602 = vst.msk [vmem:[%s5 + $0x718] sm:$0xff] %vm2374, %v2259
    %2603 = vst.msk [vmem:[%s5 + $0x720] sm:$0xff] %vm2374, %v2264
    %2604 = vst.msk [vmem:[%s5 + $0x728] sm:$0xff] %vm2374, %v2267
    %2605 = vst.msk [vmem:[%s5 + $0x730] sm:$0xff] %vm2374, %v2272
    %2606 = vst.msk [vmem:[%s5 + $0x738] sm:$0xff] %vm2374, %v2275
    %2607 = vst.msk [vmem:[%s5 + $0x740] sm:$0xff] %vm2374, %v2280
    %2608 = vst.msk [vmem:[%s5 + $0x748] sm:$0xff] %vm2374, %v2283
    %2609 = vst.msk [vmem:[%s5 + $0x750] sm:$0xff] %vm2374, %v2288
    %2610 = vst.msk [vmem:[%s5 + $0x758] sm:$0xff] %vm2374, %v2291
    %2611 = vst.msk [vmem:[%s5 + $0x760] sm:$0xff] %vm2374, %v2296
    %2612 = vst.msk [vmem:[%s5 + $0x768] sm:$0xff] %vm2374, %v2299
    %2613 = vst.msk [vmem:[%s5 + $0x770] sm:$0xff] %vm2374, %v2304
    %2614 = vst.msk [vmem:[%s5 + $0x778] sm:$0xff] %vm2374, %v2307
    %2615 = vst.msk [vmem:[%s5 + $0x780] sm:$0xff] %vm2374, %v2312
    %2616 = vst.msk [vmem:[%s5 + $0x788] sm:$0xff] %vm2374, %v2315
    %2617 = vst.msk [vmem:[%s5 + $0x790] sm:$0xff] %vm2374, %v2320
    %2618 = vst.msk [vmem:[%s5 + $0x798] sm:$0xff] %vm2374, %v2323
    %2619 = vst.msk [vmem:[%s5 + $0x7a0] sm:$0xff] %vm2374, %v2328
    %2620 = vst.msk [vmem:[%s5 + $0x7a8] sm:$0xff] %vm2374, %v2331
    %2621 = vst.msk [vmem:[%s5 + $0x7b0] sm:$0xff] %vm2374, %v2336
    %2622 = vst.msk [vmem:[%s5 + $0x7b8] sm:$0xff] %vm2374, %v2339
    %2623 = vst.msk [vmem:[%s5 + $0x7c0] sm:$0xff] %vm2374, %v2344
    %2624 = vst.msk [vmem:[%s5 + $0x7c8] sm:$0xff] %vm2374, %v2347
    %2625 = vst.msk [vmem:[%s5 + $0x7d0] sm:$0xff] %vm2374, %v2352
    %2626 = vst.msk [vmem:[%s5 + $0x7d8] sm:$0xff] %vm2374, %v2355
    %2627 = vst.msk [vmem:[%s5 + $0x7e0] sm:$0xff] %vm2374, %v2360
    %2628 = vst.msk [vmem:[%s5 + $0x7e8] sm:$0xff] %vm2374, %v2363
    %2629 = vst.msk [vmem:[%s5 + $0x7f0] sm:$0xff] %vm2374, %v2368
    %2630 = vst.msk [vmem:[%s5 + $0x7f8] sm:$0xff] %vm2374, %v2371
    %v2631 = vld [vmem:[%s3] sm:$0xff]
    %v2632 = vld [vmem:[%s3 + $0x8] sm:$0xff]
    %v2633 = vld [vmem:[%s3 + $0x10] sm:$0xff]
    %v2634 = vld [vmem:[%s3 + $0x18] sm:$0xff]
    %v2635 = vld [vmem:[%s3 + $0x20] sm:$0xff]
    %v2636 = vld [vmem:[%s3 + $0x28] sm:$0xff]
    %v2637 = vld [vmem:[%s3 + $0x30] sm:$0xff]
    %v2638 = vld [vmem:[%s3 + $0x38] sm:$0xff]
    %v2639 = vld [vmem:[%s3 + $0x40] sm:$0xff]
    %v2640 = vld [vmem:[%s3 + $0x48] sm:$0xff]
    %v2641 = vld [vmem:[%s3 + $0x50] sm:$0xff]
    %v2642 = vld [vmem:[%s3 + $0x58] sm:$0xff]
    %v2643 = vld [vmem:[%s3 + $0x60] sm:$0xff]
    %v2644 = vld [vmem:[%s3 + $0x68] sm:$0xff]
    %v2645 = vld [vmem:[%s3 + $0x70] sm:$0xff]
    %v2646 = vld [vmem:[%s3 + $0x78] sm:$0xff]
    %v2647 = vld [vmem:[%s3 + $0x80] sm:$0xff]
    %v2648 = vld [vmem:[%s3 + $0x88] sm:$0xff]
    %v2649 = vld [vmem:[%s3 + $0x90] sm:$0xff]
    %v2650 = vld [vmem:[%s3 + $0x98] sm:$0xff]
    %v2651 = vld [vmem:[%s3 + $0xa0] sm:$0xff]
    %v2652 = vld [vmem:[%s3 + $0xa8] sm:$0xff]
    %v2653 = vld [vmem:[%s3 + $0xb0] sm:$0xff]
    %v2654 = vld [vmem:[%s3 + $0xb8] sm:$0xff]
    %v2655 = vld [vmem:[%s3 + $0xc0] sm:$0xff]
    %v2656 = vld [vmem:[%s3 + $0xc8] sm:$0xff]
    %v2657 = vld [vmem:[%s3 + $0xd0] sm:$0xff]
    %v2658 = vld [vmem:[%s3 + $0xd8] sm:$0xff]
    %v2659 = vld [vmem:[%s3 + $0xe0] sm:$0xff]
    %v2660 = vld [vmem:[%s3 + $0xe8] sm:$0xff]
    %v2661 = vld [vmem:[%s3 + $0xf0] sm:$0xff]
    %v2662 = vld [vmem:[%s3 + $0xf8] sm:$0xff]
    %v2663 = vld [vmem:[%s3 + $0x100] sm:$0xff]
    %v2664 = vld [vmem:[%s3 + $0x108] sm:$0xff]
    %v2665 = vld [vmem:[%s3 + $0x110] sm:$0xff]
    %v2666 = vld [vmem:[%s3 + $0x118] sm:$0xff]
    %v2667 = vld [vmem:[%s3 + $0x120] sm:$0xff]
    %v2668 = vld [vmem:[%s3 + $0x128] sm:$0xff]
    %v2669 = vld [vmem:[%s3 + $0x130] sm:$0xff]
    %v2670 = vld [vmem:[%s3 + $0x138] sm:$0xff]
    %v2671 = vld [vmem:[%s3 + $0x140] sm:$0xff]
    %v2672 = vld [vmem:[%s3 + $0x148] sm:$0xff]
    %v2673 = vld [vmem:[%s3 + $0x150] sm:$0xff]
    %v2674 = vld [vmem:[%s3 + $0x158] sm:$0xff]
    %v2675 = vld [vmem:[%s3 + $0x160] sm:$0xff]
    %v2676 = vld [vmem:[%s3 + $0x168] sm:$0xff]
    %v2677 = vld [vmem:[%s3 + $0x170] sm:$0xff]
    %v2678 = vld [vmem:[%s3 + $0x178] sm:$0xff]
    %v2679 = vld [vmem:[%s3 + $0x180] sm:$0xff]
    %v2680 = vld [vmem:[%s3 + $0x188] sm:$0xff]
    %v2681 = vld [vmem:[%s3 + $0x190] sm:$0xff]
    %v2682 = vld [vmem:[%s3 + $0x198] sm:$0xff]
    %v2683 = vld [vmem:[%s3 + $0x1a0] sm:$0xff]
    %v2684 = vld [vmem:[%s3 + $0x1a8] sm:$0xff]
    %v2685 = vld [vmem:[%s3 + $0x1b0] sm:$0xff]
    %v2686 = vld [vmem:[%s3 + $0x1b8] sm:$0xff]
    %v2687 = vld [vmem:[%s3 + $0x1c0] sm:$0xff]
    %v2688 = vld [vmem:[%s3 + $0x1c8] sm:$0xff]
    %v2689 = vld [vmem:[%s3 + $0x1d0] sm:$0xff]
    %v2690 = vld [vmem:[%s3 + $0x1d8] sm:$0xff]
    %v2691 = vld [vmem:[%s3 + $0x1e0] sm:$0xff]
    %v2692 = vld [vmem:[%s3 + $0x1e8] sm:$0xff]
    %v2693 = vld [vmem:[%s3 + $0x1f0] sm:$0xff]
    %v2694 = vld [vmem:[%s3 + $0x1f8] sm:$0xff]
    %v2695 = vld [vmem:[%s3 + $0x200] sm:$0xff]
    %v2696 = vld [vmem:[%s3 + $0x208] sm:$0xff]
    %v2697 = vld [vmem:[%s3 + $0x210] sm:$0xff]
    %v2698 = vld [vmem:[%s3 + $0x218] sm:$0xff]
    %v2699 = vld [vmem:[%s3 + $0x220] sm:$0xff]
    %v2700 = vld [vmem:[%s3 + $0x228] sm:$0xff]
    %v2701 = vld [vmem:[%s3 + $0x230] sm:$0xff]
    %v2702 = vld [vmem:[%s3 + $0x238] sm:$0xff]
    %v2703 = vld [vmem:[%s3 + $0x240] sm:$0xff]
    %v2704 = vld [vmem:[%s3 + $0x248] sm:$0xff]
    %v2705 = vld [vmem:[%s3 + $0x250] sm:$0xff]
    %v2706 = vld [vmem:[%s3 + $0x258] sm:$0xff]
    %v2707 = vld [vmem:[%s3 + $0x260] sm:$0xff]
    %v2708 = vld [vmem:[%s3 + $0x268] sm:$0xff]
    %v2709 = vld [vmem:[%s3 + $0x270] sm:$0xff]
    %v2710 = vld [vmem:[%s3 + $0x278] sm:$0xff]
    %v2711 = vld [vmem:[%s3 + $0x280] sm:$0xff]
    %v2712 = vld [vmem:[%s3 + $0x288] sm:$0xff]
    %v2713 = vld [vmem:[%s3 + $0x290] sm:$0xff]
    %v2714 = vld [vmem:[%s3 + $0x298] sm:$0xff]
    %v2715 = vld [vmem:[%s3 + $0x2a0] sm:$0xff]
    %v2716 = vld [vmem:[%s3 + $0x2a8] sm:$0xff]
    %v2717 = vld [vmem:[%s3 + $0x2b0] sm:$0xff]
    %v2718 = vld [vmem:[%s3 + $0x2b8] sm:$0xff]
    %v2719 = vld [vmem:[%s3 + $0x2c0] sm:$0xff]
    %v2720 = vld [vmem:[%s3 + $0x2c8] sm:$0xff]
    %v2721 = vld [vmem:[%s3 + $0x2d0] sm:$0xff]
    %v2722 = vld [vmem:[%s3 + $0x2d8] sm:$0xff]
    %v2723 = vld [vmem:[%s3 + $0x2e0] sm:$0xff]
    %v2724 = vld [vmem:[%s3 + $0x2e8] sm:$0xff]
    %v2725 = vld [vmem:[%s3 + $0x2f0] sm:$0xff]
    %v2726 = vld [vmem:[%s3 + $0x2f8] sm:$0xff]
    %v2727 = vld [vmem:[%s3 + $0x300] sm:$0xff]
    %v2728 = vld [vmem:[%s3 + $0x308] sm:$0xff]
    %v2729 = vld [vmem:[%s3 + $0x310] sm:$0xff]
    %v2730 = vld [vmem:[%s3 + $0x318] sm:$0xff]
    %v2731 = vld [vmem:[%s3 + $0x320] sm:$0xff]
    %v2732 = vld [vmem:[%s3 + $0x328] sm:$0xff]
    %v2733 = vld [vmem:[%s3 + $0x330] sm:$0xff]
    %v2734 = vld [vmem:[%s3 + $0x338] sm:$0xff]
    %v2735 = vld [vmem:[%s3 + $0x340] sm:$0xff]
    %v2736 = vld [vmem:[%s3 + $0x348] sm:$0xff]
    %v2737 = vld [vmem:[%s3 + $0x350] sm:$0xff]
    %v2738 = vld [vmem:[%s3 + $0x358] sm:$0xff]
    %v2739 = vld [vmem:[%s3 + $0x360] sm:$0xff]
    %v2740 = vld [vmem:[%s3 + $0x368] sm:$0xff]
    %v2741 = vld [vmem:[%s3 + $0x370] sm:$0xff]
    %v2742 = vld [vmem:[%s3 + $0x378] sm:$0xff]
    %v2743 = vld [vmem:[%s3 + $0x380] sm:$0xff]
    %v2744 = vld [vmem:[%s3 + $0x388] sm:$0xff]
    %v2745 = vld [vmem:[%s3 + $0x390] sm:$0xff]
    %v2746 = vld [vmem:[%s3 + $0x398] sm:$0xff]
    %v2747 = vld [vmem:[%s3 + $0x3a0] sm:$0xff]
    %v2748 = vld [vmem:[%s3 + $0x3a8] sm:$0xff]
    %v2749 = vld [vmem:[%s3 + $0x3b0] sm:$0xff]
    %v2750 = vld [vmem:[%s3 + $0x3b8] sm:$0xff]
    %v2751 = vld [vmem:[%s3 + $0x3c0] sm:$0xff]
    %v2752 = vld [vmem:[%s3 + $0x3c8] sm:$0xff]
    %v2753 = vld [vmem:[%s3 + $0x3d0] sm:$0xff]
    %v2754 = vld [vmem:[%s3 + $0x3d8] sm:$0xff]
    %v2755 = vld [vmem:[%s3 + $0x3e0] sm:$0xff]
    %v2756 = vld [vmem:[%s3 + $0x3e8] sm:$0xff]
    %v2757 = vld [vmem:[%s3 + $0x3f0] sm:$0xff]
    %v2758 = vld [vmem:[%s3 + $0x3f8] sm:$0xff]
    %v2759 = vld [vmem:[%s3 + $0x400] sm:$0xff]
    %v2760 = vld [vmem:[%s3 + $0x408] sm:$0xff]
    %v2761 = vld [vmem:[%s3 + $0x410] sm:$0xff]
    %v2762 = vld [vmem:[%s3 + $0x418] sm:$0xff]
    %v2763 = vld [vmem:[%s3 + $0x420] sm:$0xff]
    %v2764 = vld [vmem:[%s3 + $0x428] sm:$0xff]
    %v2765 = vld [vmem:[%s3 + $0x430] sm:$0xff]
    %v2766 = vld [vmem:[%s3 + $0x438] sm:$0xff]
    %v2767 = vld [vmem:[%s3 + $0x440] sm:$0xff]
    %v2768 = vld [vmem:[%s3 + $0x448] sm:$0xff]
    %v2769 = vld [vmem:[%s3 + $0x450] sm:$0xff]
    %v2770 = vld [vmem:[%s3 + $0x458] sm:$0xff]
    %v2771 = vld [vmem:[%s3 + $0x460] sm:$0xff]
    %v2772 = vld [vmem:[%s3 + $0x468] sm:$0xff]
    %v2773 = vld [vmem:[%s3 + $0x470] sm:$0xff]
    %v2774 = vld [vmem:[%s3 + $0x478] sm:$0xff]
    %v2775 = vld [vmem:[%s3 + $0x480] sm:$0xff]
    %v2776 = vld [vmem:[%s3 + $0x488] sm:$0xff]
    %v2777 = vld [vmem:[%s3 + $0x490] sm:$0xff]
    %v2778 = vld [vmem:[%s3 + $0x498] sm:$0xff]
    %v2779 = vld [vmem:[%s3 + $0x4a0] sm:$0xff]
    %v2780 = vld [vmem:[%s3 + $0x4a8] sm:$0xff]
    %v2781 = vld [vmem:[%s3 + $0x4b0] sm:$0xff]
    %v2782 = vld [vmem:[%s3 + $0x4b8] sm:$0xff]
    %v2783 = vld [vmem:[%s3 + $0x4c0] sm:$0xff]
    %v2784 = vld [vmem:[%s3 + $0x4c8] sm:$0xff]
    %v2785 = vld [vmem:[%s3 + $0x4d0] sm:$0xff]
    %v2786 = vld [vmem:[%s3 + $0x4d8] sm:$0xff]
    %v2787 = vld [vmem:[%s3 + $0x4e0] sm:$0xff]
    %v2788 = vld [vmem:[%s3 + $0x4e8] sm:$0xff]
    %v2789 = vld [vmem:[%s3 + $0x4f0] sm:$0xff]
    %v2790 = vld [vmem:[%s3 + $0x4f8] sm:$0xff]
    %v2791 = vld [vmem:[%s3 + $0x500] sm:$0xff]
    %v2792 = vld [vmem:[%s3 + $0x508] sm:$0xff]
    %v2793 = vld [vmem:[%s3 + $0x510] sm:$0xff]
    %v2794 = vld [vmem:[%s3 + $0x518] sm:$0xff]
    %v2795 = vld [vmem:[%s3 + $0x520] sm:$0xff]
    %v2796 = vld [vmem:[%s3 + $0x528] sm:$0xff]
    %v2797 = vld [vmem:[%s3 + $0x530] sm:$0xff]
    %v2798 = vld [vmem:[%s3 + $0x538] sm:$0xff]
    %v2799 = vld [vmem:[%s3 + $0x540] sm:$0xff]
    %v2800 = vld [vmem:[%s3 + $0x548] sm:$0xff]
    %v2801 = vld [vmem:[%s3 + $0x550] sm:$0xff]
    %v2802 = vld [vmem:[%s3 + $0x558] sm:$0xff]
    %v2803 = vld [vmem:[%s3 + $0x560] sm:$0xff]
    %v2804 = vld [vmem:[%s3 + $0x568] sm:$0xff]
    %v2805 = vld [vmem:[%s3 + $0x570] sm:$0xff]
    %v2806 = vld [vmem:[%s3 + $0x578] sm:$0xff]
    %v2807 = vld [vmem:[%s3 + $0x580] sm:$0xff]
    %v2808 = vld [vmem:[%s3 + $0x588] sm:$0xff]
    %v2809 = vld [vmem:[%s3 + $0x590] sm:$0xff]
    %v2810 = vld [vmem:[%s3 + $0x598] sm:$0xff]
    %v2811 = vld [vmem:[%s3 + $0x5a0] sm:$0xff]
    %v2812 = vld [vmem:[%s3 + $0x5a8] sm:$0xff]
    %v2813 = vld [vmem:[%s3 + $0x5b0] sm:$0xff]
    %v2814 = vld [vmem:[%s3 + $0x5b8] sm:$0xff]
    %v2815 = vld [vmem:[%s3 + $0x5c0] sm:$0xff]
    %v2816 = vld [vmem:[%s3 + $0x5c8] sm:$0xff]
    %v2817 = vld [vmem:[%s3 + $0x5d0] sm:$0xff]
    %v2818 = vld [vmem:[%s3 + $0x5d8] sm:$0xff]
    %v2819 = vld [vmem:[%s3 + $0x5e0] sm:$0xff]
    %v2820 = vld [vmem:[%s3 + $0x5e8] sm:$0xff]
    %v2821 = vld [vmem:[%s3 + $0x5f0] sm:$0xff]
    %v2822 = vld [vmem:[%s3 + $0x5f8] sm:$0xff]
    %v2823 = vld [vmem:[%s3 + $0x600] sm:$0xff]
    %v2824 = vld [vmem:[%s3 + $0x608] sm:$0xff]
    %v2825 = vld [vmem:[%s3 + $0x610] sm:$0xff]
    %v2826 = vld [vmem:[%s3 + $0x618] sm:$0xff]
    %v2827 = vld [vmem:[%s3 + $0x620] sm:$0xff]
    %v2828 = vld [vmem:[%s3 + $0x628] sm:$0xff]
    %v2829 = vld [vmem:[%s3 + $0x630] sm:$0xff]
    %v2830 = vld [vmem:[%s3 + $0x638] sm:$0xff]
    %v2831 = vld [vmem:[%s3 + $0x640] sm:$0xff]
    %v2832 = vld [vmem:[%s3 + $0x648] sm:$0xff]
    %v2833 = vld [vmem:[%s3 + $0x650] sm:$0xff]
    %v2834 = vld [vmem:[%s3 + $0x658] sm:$0xff]
    %v2835 = vld [vmem:[%s3 + $0x660] sm:$0xff]
    %v2836 = vld [vmem:[%s3 + $0x668] sm:$0xff]
    %v2837 = vld [vmem:[%s3 + $0x670] sm:$0xff]
    %v2838 = vld [vmem:[%s3 + $0x678] sm:$0xff]
    %v2839 = vld [vmem:[%s3 + $0x680] sm:$0xff]
    %v2840 = vld [vmem:[%s3 + $0x688] sm:$0xff]
    %v2841 = vld [vmem:[%s3 + $0x690] sm:$0xff]
    %v2842 = vld [vmem:[%s3 + $0x698] sm:$0xff]
    %v2843 = vld [vmem:[%s3 + $0x6a0] sm:$0xff]
    %v2844 = vld [vmem:[%s3 + $0x6a8] sm:$0xff]
    %v2845 = vld [vmem:[%s3 + $0x6b0] sm:$0xff]
    %v2846 = vld [vmem:[%s3 + $0x6b8] sm:$0xff]
    %v2847 = vld [vmem:[%s3 + $0x6c0] sm:$0xff]
    %v2848 = vld [vmem:[%s3 + $0x6c8] sm:$0xff]
    %v2849 = vld [vmem:[%s3 + $0x6d0] sm:$0xff]
    %v2850 = vld [vmem:[%s3 + $0x6d8] sm:$0xff]
    %v2851 = vld [vmem:[%s3 + $0x6e0] sm:$0xff]
    %v2852 = vld [vmem:[%s3 + $0x6e8] sm:$0xff]
    %v2853 = vld [vmem:[%s3 + $0x6f0] sm:$0xff]
    %v2854 = vld [vmem:[%s3 + $0x6f8] sm:$0xff]
    %v2855 = vld [vmem:[%s3 + $0x700] sm:$0xff]
    %v2856 = vld [vmem:[%s3 + $0x708] sm:$0xff]
    %v2857 = vld [vmem:[%s3 + $0x710] sm:$0xff]
    %v2858 = vld [vmem:[%s3 + $0x718] sm:$0xff]
    %v2859 = vld [vmem:[%s3 + $0x720] sm:$0xff]
    %v2860 = vld [vmem:[%s3 + $0x728] sm:$0xff]
    %v2861 = vld [vmem:[%s3 + $0x730] sm:$0xff]
    %v2862 = vld [vmem:[%s3 + $0x738] sm:$0xff]
    %v2863 = vld [vmem:[%s3 + $0x740] sm:$0xff]
    %v2864 = vld [vmem:[%s3 + $0x748] sm:$0xff]
    %v2865 = vld [vmem:[%s3 + $0x750] sm:$0xff]
    %v2866 = vld [vmem:[%s3 + $0x758] sm:$0xff]
    %v2867 = vld [vmem:[%s3 + $0x760] sm:$0xff]
    %v2868 = vld [vmem:[%s3 + $0x768] sm:$0xff]
    %v2869 = vld [vmem:[%s3 + $0x770] sm:$0xff]
    %v2870 = vld [vmem:[%s3 + $0x778] sm:$0xff]
    %v2871 = vld [vmem:[%s3 + $0x780] sm:$0xff]
    %v2872 = vld [vmem:[%s3 + $0x788] sm:$0xff]
    %v2873 = vld [vmem:[%s3 + $0x790] sm:$0xff]
    %v2874 = vld [vmem:[%s3 + $0x798] sm:$0xff]
    %v2875 = vld [vmem:[%s3 + $0x7a0] sm:$0xff]
    %v2876 = vld [vmem:[%s3 + $0x7a8] sm:$0xff]
    %v2877 = vld [vmem:[%s3 + $0x7b0] sm:$0xff]
    %v2878 = vld [vmem:[%s3 + $0x7b8] sm:$0xff]
    %v2879 = vld [vmem:[%s3 + $0x7c0] sm:$0xff]
    %v2880 = vld [vmem:[%s3 + $0x7c8] sm:$0xff]
    %v2881 = vld [vmem:[%s3 + $0x7d0] sm:$0xff]
    %v2882 = vld [vmem:[%s3 + $0x7d8] sm:$0xff]
    %v2883 = vld [vmem:[%s3 + $0x7e0] sm:$0xff]
    %v2884 = vld [vmem:[%s3 + $0x7e8] sm:$0xff]
    %v2885 = vld [vmem:[%s3 + $0x7f0] sm:$0xff]
    %v2886 = vld [vmem:[%s3 + $0x7f8] sm:$0xff]
    %v2887 = vsub.f32 %v1352, %v2631
    %v2888 = vsub.f32 %v1355, %v2632
    %v2889 = vsub.f32 %v1360, %v2633
    %v2890 = vsub.f32 %v1363, %v2634
    %v2891 = vsub.f32 %v1368, %v2635
    %v2892 = vsub.f32 %v1371, %v2636
    %v2893 = vsub.f32 %v1376, %v2637
    %v2894 = vsub.f32 %v1379, %v2638
    %v2895 = vsub.f32 %v1384, %v2639
    %v2896 = vsub.f32 %v1387, %v2640
    %v2897 = vsub.f32 %v1392, %v2641
    %v2898 = vsub.f32 %v1395, %v2642
    %v2899 = vsub.f32 %v1400, %v2643
    %v2900 = vsub.f32 %v1403, %v2644
    %v2901 = vsub.f32 %v1408, %v2645
    %v2902 = vsub.f32 %v1411, %v2646
    %v2903 = vsub.f32 %v1416, %v2647
    %v2904 = vsub.f32 %v1419, %v2648
    %v2905 = vsub.f32 %v1424, %v2649
    %v2906 = vsub.f32 %v1427, %v2650
    %v2907 = vsub.f32 %v1432, %v2651
    %v2908 = vsub.f32 %v1435, %v2652
    %v2909 = vsub.f32 %v1440, %v2653
    %v2910 = vsub.f32 %v1443, %v2654
    %v2911 = vsub.f32 %v1448, %v2655
    %v2912 = vsub.f32 %v1451, %v2656
    %v2913 = vsub.f32 %v1456, %v2657
    %v2914 = vsub.f32 %v1459, %v2658
    %v2915 = vsub.f32 %v1464, %v2659
    %v2916 = vsub.f32 %v1467, %v2660
    %v2917 = vsub.f32 %v1472, %v2661
    %v2918 = vsub.f32 %v1475, %v2662
    %v2919 = vsub.f32 %v1480, %v2663
    %v2920 = vsub.f32 %v1483, %v2664
    %v2921 = vsub.f32 %v1488, %v2665
    %v2922 = vsub.f32 %v1491, %v2666
    %v2923 = vsub.f32 %v1496, %v2667
    %v2924 = vsub.f32 %v1499, %v2668
    %v2925 = vsub.f32 %v1504, %v2669
    %v2926 = vsub.f32 %v1507, %v2670
    %v2927 = vsub.f32 %v1512, %v2671
    %v2928 = vsub.f32 %v1515, %v2672
    %v2929 = vsub.f32 %v1520, %v2673
    %v2930 = vsub.f32 %v1523, %v2674
    %v2931 = vsub.f32 %v1528, %v2675
    %v2932 = vsub.f32 %v1531, %v2676
    %v2933 = vsub.f32 %v1536, %v2677
    %v2934 = vsub.f32 %v1539, %v2678
    %v2935 = vsub.f32 %v1544, %v2679
    %v2936 = vsub.f32 %v1547, %v2680
    %v2937 = vsub.f32 %v1552, %v2681
    %v2938 = vsub.f32 %v1555, %v2682
    %v2939 = vsub.f32 %v1560, %v2683
    %v2940 = vsub.f32 %v1563, %v2684
    %v2941 = vsub.f32 %v1568, %v2685
    %v2942 = vsub.f32 %v1571, %v2686
    %v2943 = vsub.f32 %v1576, %v2687
    %v2944 = vsub.f32 %v1579, %v2688
    %v2945 = vsub.f32 %v1584, %v2689
    %v2946 = vsub.f32 %v1587, %v2690
    %v2947 = vsub.f32 %v1592, %v2691
    %v2948 = vsub.f32 %v1595, %v2692
    %v2949 = vsub.f32 %v1600, %v2693
    %v2950 = vsub.f32 %v1603, %v2694
    %v2951 = vsub.f32 %v1608, %v2695
    %v2952 = vsub.f32 %v1611, %v2696
    %v2953 = vsub.f32 %v1616, %v2697
    %v2954 = vsub.f32 %v1619, %v2698
    %v2955 = vsub.f32 %v1624, %v2699
    %v2956 = vsub.f32 %v1627, %v2700
    %v2957 = vsub.f32 %v1632, %v2701
    %v2958 = vsub.f32 %v1635, %v2702
    %v2959 = vsub.f32 %v1640, %v2703
    %v2960 = vsub.f32 %v1643, %v2704
    %v2961 = vsub.f32 %v1648, %v2705
    %v2962 = vsub.f32 %v1651, %v2706
    %v2963 = vsub.f32 %v1656, %v2707
    %v2964 = vsub.f32 %v1659, %v2708
    %v2965 = vsub.f32 %v1664, %v2709
    %v2966 = vsub.f32 %v1667, %v2710
    %v2967 = vsub.f32 %v1672, %v2711
    %v2968 = vsub.f32 %v1675, %v2712
    %v2969 = vsub.f32 %v1680, %v2713
    %v2970 = vsub.f32 %v1683, %v2714
    %v2971 = vsub.f32 %v1688, %v2715
    %v2972 = vsub.f32 %v1691, %v2716
    %v2973 = vsub.f32 %v1696, %v2717
    %v2974 = vsub.f32 %v1699, %v2718
    %v2975 = vsub.f32 %v1704, %v2719
    %v2976 = vsub.f32 %v1707, %v2720
    %v2977 = vsub.f32 %v1712, %v2721
    %v2978 = vsub.f32 %v1715, %v2722
    %v2979 = vsub.f32 %v1720, %v2723
    %v2980 = vsub.f32 %v1723, %v2724
    %v2981 = vsub.f32 %v1728, %v2725
    %v2982 = vsub.f32 %v1731, %v2726
    %v2983 = vsub.f32 %v1736, %v2727
    %v2984 = vsub.f32 %v1739, %v2728
    %v2985 = vsub.f32 %v1744, %v2729
    %v2986 = vsub.f32 %v1747, %v2730
    %v2987 = vsub.f32 %v1752, %v2731
    %v2988 = vsub.f32 %v1755, %v2732
    %v2989 = vsub.f32 %v1760, %v2733
    %v2990 = vsub.f32 %v1763, %v2734
    %v2991 = vsub.f32 %v1768, %v2735
    %v2992 = vsub.f32 %v1771, %v2736
    %v2993 = vsub.f32 %v1776, %v2737
    %v2994 = vsub.f32 %v1779, %v2738
    %v2995 = vsub.f32 %v1784, %v2739
    %v2996 = vsub.f32 %v1787, %v2740
    %v2997 = vsub.f32 %v1792, %v2741
    %v2998 = vsub.f32 %v1795, %v2742
    %v2999 = vsub.f32 %v1800, %v2743
    %v3000 = vsub.f32 %v1803, %v2744
    %v3001 = vsub.f32 %v1808, %v2745
    %v3002 = vsub.f32 %v1811, %v2746
    %v3003 = vsub.f32 %v1816, %v2747
    %v3004 = vsub.f32 %v1819, %v2748
    %v3005 = vsub.f32 %v1824, %v2749
    %v3006 = vsub.f32 %v1827, %v2750
    %v3007 = vsub.f32 %v1832, %v2751
    %v3008 = vsub.f32 %v1835, %v2752
    %v3009 = vsub.f32 %v1840, %v2753
    %v3010 = vsub.f32 %v1843, %v2754
    %v3011 = vsub.f32 %v1848, %v2755
    %v3012 = vsub.f32 %v1851, %v2756
    %v3013 = vsub.f32 %v1856, %v2757
    %v3014 = vsub.f32 %v1859, %v2758
    %v3015 = vsub.f32 %v1864, %v2759
    %v3016 = vsub.f32 %v1867, %v2760
    %v3017 = vsub.f32 %v1872, %v2761
    %v3018 = vsub.f32 %v1875, %v2762
    %v3019 = vsub.f32 %v1880, %v2763
    %v3020 = vsub.f32 %v1883, %v2764
    %v3021 = vsub.f32 %v1888, %v2765
    %v3022 = vsub.f32 %v1891, %v2766
    %v3023 = vsub.f32 %v1896, %v2767
    %v3024 = vsub.f32 %v1899, %v2768
    %v3025 = vsub.f32 %v1904, %v2769
    %v3026 = vsub.f32 %v1907, %v2770
    %v3027 = vsub.f32 %v1912, %v2771
    %v3028 = vsub.f32 %v1915, %v2772
    %v3029 = vsub.f32 %v1920, %v2773
    %v3030 = vsub.f32 %v1923, %v2774
    %v3031 = vsub.f32 %v1928, %v2775
    %v3032 = vsub.f32 %v1931, %v2776
    %v3033 = vsub.f32 %v1936, %v2777
    %v3034 = vsub.f32 %v1939, %v2778
    %v3035 = vsub.f32 %v1944, %v2779
    %v3036 = vsub.f32 %v1947, %v2780
    %v3037 = vsub.f32 %v1952, %v2781
    %v3038 = vsub.f32 %v1955, %v2782
    %v3039 = vsub.f32 %v1960, %v2783
    %v3040 = vsub.f32 %v1963, %v2784
    %v3041 = vsub.f32 %v1968, %v2785
    %v3042 = vsub.f32 %v1971, %v2786
    %v3043 = vsub.f32 %v1976, %v2787
    %v3044 = vsub.f32 %v1979, %v2788
    %v3045 = vsub.f32 %v1984, %v2789
    %v3046 = vsub.f32 %v1987, %v2790
    %v3047 = vsub.f32 %v1992, %v2791
    %v3048 = vsub.f32 %v1995, %v2792
    %v3049 = vsub.f32 %v2000, %v2793
    %v3050 = vsub.f32 %v2003, %v2794
    %v3051 = vsub.f32 %v2008, %v2795
    %v3052 = vsub.f32 %v2011, %v2796
    %v3053 = vsub.f32 %v2016, %v2797
    %v3054 = vsub.f32 %v2019, %v2798
    %v3055 = vsub.f32 %v2024, %v2799
    %v3056 = vsub.f32 %v2027, %v2800
    %v3057 = vsub.f32 %v2032, %v2801
    %v3058 = vsub.f32 %v2035, %v2802
    %v3059 = vsub.f32 %v2040, %v2803
    %v3060 = vsub.f32 %v2043, %v2804
    %v3061 = vsub.f32 %v2048, %v2805
    %v3062 = vsub.f32 %v2051, %v2806
    %v3063 = vsub.f32 %v2056, %v2807
    %v3064 = vsub.f32 %v2059, %v2808
    %v3065 = vsub.f32 %v2064, %v2809
    %v3066 = vsub.f32 %v2067, %v2810
    %v3067 = vsub.f32 %v2072, %v2811
    %v3068 = vsub.f32 %v2075, %v2812
    %v3069 = vsub.f32 %v2080, %v2813
    %v3070 = vsub.f32 %v2083, %v2814
    %v3071 = vsub.f32 %v2088, %v2815
    %v3072 = vsub.f32 %v2091, %v2816
    %v3073 = vsub.f32 %v2096, %v2817
    %v3074 = vsub.f32 %v2099, %v2818
    %v3075 = vsub.f32 %v2104, %v2819
    %v3076 = vsub.f32 %v2107, %v2820
    %v3077 = vsub.f32 %v2112, %v2821
    %v3078 = vsub.f32 %v2115, %v2822
    %v3079 = vsub.f32 %v2120, %v2823
    %v3080 = vsub.f32 %v2123, %v2824
    %v3081 = vsub.f32 %v2128, %v2825
    %v3082 = vsub.f32 %v2131, %v2826
    %v3083 = vsub.f32 %v2136, %v2827
    %v3084 = vsub.f32 %v2139, %v2828
    %v3085 = vsub.f32 %v2144, %v2829
    %v3086 = vsub.f32 %v2147, %v2830
    %v3087 = vsub.f32 %v2152, %v2831
    %v3088 = vsub.f32 %v2155, %v2832
    %v3089 = vsub.f32 %v2160, %v2833
    %v3090 = vsub.f32 %v2163, %v2834
    %v3091 = vsub.f32 %v2168, %v2835
    %v3092 = vsub.f32 %v2171, %v2836
    %v3093 = vsub.f32 %v2176, %v2837
    %v3094 = vsub.f32 %v2179, %v2838
    %v3095 = vsub.f32 %v2184, %v2839
    %v3096 = vsub.f32 %v2187, %v2840
    %v3097 = vsub.f32 %v2192, %v2841
    %v3098 = vsub.f32 %v2195, %v2842
    %v3099 = vsub.f32 %v2200, %v2843
    %v3100 = vsub.f32 %v2203, %v2844
    %v3101 = vsub.f32 %v2208, %v2845
    %v3102 = vsub.f32 %v2211, %v2846
    %v3103 = vsub.f32 %v2216, %v2847
    %v3104 = vsub.f32 %v2219, %v2848
    %v3105 = vsub.f32 %v2224, %v2849
    %v3106 = vsub.f32 %v2227, %v2850
    %v3107 = vsub.f32 %v2232, %v2851
    %v3108 = vsub.f32 %v2235, %v2852
    %v3109 = vsub.f32 %v2240, %v2853
    %v3110 = vsub.f32 %v2243, %v2854
    %v3111 = vsub.f32 %v2248, %v2855
    %v3112 = vsub.f32 %v2251, %v2856
    %v3113 = vsub.f32 %v2256, %v2857
    %v3114 = vsub.f32 %v2259, %v2858
    %v3115 = vsub.f32 %v2264, %v2859
    %v3116 = vsub.f32 %v2267, %v2860
    %v3117 = vsub.f32 %v2272, %v2861
    %v3118 = vsub.f32 %v2275, %v2862
    %v3119 = vsub.f32 %v2280, %v2863
    %v3120 = vsub.f32 %v2283, %v2864
    %v3121 = vsub.f32 %v2288, %v2865
    %v3122 = vsub.f32 %v2291, %v2866
    %v3123 = vsub.f32 %v2296, %v2867
    %v3124 = vsub.f32 %v2299, %v2868
    %v3125 = vsub.f32 %v2304, %v2869
    %v3126 = vsub.f32 %v2307, %v2870
    %v3127 = vsub.f32 %v2312, %v2871
    %v3128 = vsub.f32 %v2315, %v2872
    %v3129 = vsub.f32 %v2320, %v2873
    %v3130 = vsub.f32 %v2323, %v2874
    %v3131 = vsub.f32 %v2328, %v2875
    %v3132 = vsub.f32 %v2331, %v2876
    %v3133 = vsub.f32 %v2336, %v2877
    %v3134 = vsub.f32 %v2339, %v2878
    %v3135 = vsub.f32 %v2344, %v2879
    %v3136 = vsub.f32 %v2347, %v2880
    %v3137 = vsub.f32 %v2352, %v2881
    %v3138 = vsub.f32 %v2355, %v2882
    %v3139 = vsub.f32 %v2360, %v2883
    %v3140 = vsub.f32 %v2363, %v2884
    %v3141 = vsub.f32 %v2368, %v2885
    %v3142 = vsub.f32 %v2371, %v2886
    %v3143 = vmul.f32 %v2887, %v2887
    %v3144 = vmul.f32 %v2888, %v2888
    %v3145 = vmul.f32 %v2889, %v2889
    %v3146 = vmul.f32 %v2890, %v2890
    %v3147 = vmul.f32 %v2891, %v2891
    %v3148 = vmul.f32 %v2892, %v2892
    %v3149 = vmul.f32 %v2893, %v2893
    %v3150 = vmul.f32 %v2894, %v2894
    %v3151 = vmul.f32 %v2895, %v2895
    %v3152 = vmul.f32 %v2896, %v2896
    %v3153 = vmul.f32 %v2897, %v2897
    %v3154 = vmul.f32 %v2898, %v2898
    %v3155 = vmul.f32 %v2899, %v2899
    %v3156 = vmul.f32 %v2900, %v2900
    %v3157 = vmul.f32 %v2901, %v2901
    %v3158 = vmul.f32 %v2902, %v2902
    %v3159 = vmul.f32 %v2903, %v2903
    %v3160 = vmul.f32 %v2904, %v2904
    %v3161 = vmul.f32 %v2905, %v2905
    %v3162 = vmul.f32 %v2906, %v2906
    %v3163 = vmul.f32 %v2907, %v2907
    %v3164 = vmul.f32 %v2908, %v2908
    %v3165 = vmul.f32 %v2909, %v2909
    %v3166 = vmul.f32 %v2910, %v2910
    %v3167 = vmul.f32 %v2911, %v2911
    %v3168 = vmul.f32 %v2912, %v2912
    %v3169 = vmul.f32 %v2913, %v2913
    %v3170 = vmul.f32 %v2914, %v2914
    %v3171 = vmul.f32 %v2915, %v2915
    %v3172 = vmul.f32 %v2916, %v2916
    %v3173 = vmul.f32 %v2917, %v2917
    %v3174 = vmul.f32 %v2918, %v2918
    %v3175 = vmul.f32 %v2919, %v2919
    %v3176 = vmul.f32 %v2920, %v2920
    %v3177 = vmul.f32 %v2921, %v2921
    %v3178 = vmul.f32 %v2922, %v2922
    %v3179 = vmul.f32 %v2923, %v2923
    %v3180 = vmul.f32 %v2924, %v2924
    %v3181 = vmul.f32 %v2925, %v2925
    %v3182 = vmul.f32 %v2926, %v2926
    %v3183 = vmul.f32 %v2927, %v2927
    %v3184 = vmul.f32 %v2928, %v2928
    %v3185 = vmul.f32 %v2929, %v2929
    %v3186 = vmul.f32 %v2930, %v2930
    %v3187 = vmul.f32 %v2931, %v2931
    %v3188 = vmul.f32 %v2932, %v2932
    %v3189 = vmul.f32 %v2933, %v2933
    %v3190 = vmul.f32 %v2934, %v2934
    %v3191 = vmul.f32 %v2935, %v2935
    %v3192 = vmul.f32 %v2936, %v2936
    %v3193 = vmul.f32 %v2937, %v2937
    %v3194 = vmul.f32 %v2938, %v2938
    %v3195 = vmul.f32 %v2939, %v2939
    %v3196 = vmul.f32 %v2940, %v2940
    %v3197 = vmul.f32 %v2941, %v2941
    %v3198 = vmul.f32 %v2942, %v2942
    %v3199 = vmul.f32 %v2943, %v2943
    %v3200 = vmul.f32 %v2944, %v2944
    %v3201 = vmul.f32 %v2945, %v2945
    %v3202 = vmul.f32 %v2946, %v2946
    %v3203 = vmul.f32 %v2947, %v2947
    %v3204 = vmul.f32 %v2948, %v2948
    %v3205 = vmul.f32 %v2949, %v2949
    %v3206 = vmul.f32 %v2950, %v2950
    %v3207 = vmul.f32 %v2951, %v2951
    %v3208 = vmul.f32 %v2952, %v2952
    %v3209 = vmul.f32 %v2953, %v2953
    %v3210 = vmul.f32 %v2954, %v2954
    %v3211 = vmul.f32 %v2955, %v2955
    %v3212 = vmul.f32 %v2956, %v2956
    %v3213 = vmul.f32 %v2957, %v2957
    %v3214 = vmul.f32 %v2958, %v2958
    %v3215 = vmul.f32 %v2959, %v2959
    %v3216 = vmul.f32 %v2960, %v2960
    %v3217 = vmul.f32 %v2961, %v2961
    %v3218 = vmul.f32 %v2962, %v2962
    %v3219 = vmul.f32 %v2963, %v2963
    %v3220 = vmul.f32 %v2964, %v2964
    %v3221 = vmul.f32 %v2965, %v2965
    %v3222 = vmul.f32 %v2966, %v2966
    %v3223 = vmul.f32 %v2967, %v2967
    %v3224 = vmul.f32 %v2968, %v2968
    %v3225 = vmul.f32 %v2969, %v2969
    %v3226 = vmul.f32 %v2970, %v2970
    %v3227 = vmul.f32 %v2971, %v2971
    %v3228 = vmul.f32 %v2972, %v2972
    %v3229 = vmul.f32 %v2973, %v2973
    %v3230 = vmul.f32 %v2974, %v2974
    %v3231 = vmul.f32 %v2975, %v2975
    %v3232 = vmul.f32 %v2976, %v2976
    %v3233 = vmul.f32 %v2977, %v2977
    %v3234 = vmul.f32 %v2978, %v2978
    %v3235 = vmul.f32 %v2979, %v2979
    %v3236 = vmul.f32 %v2980, %v2980
    %v3237 = vmul.f32 %v2981, %v2981
    %v3238 = vmul.f32 %v2982, %v2982
    %v3239 = vmul.f32 %v2983, %v2983
    %v3240 = vmul.f32 %v2984, %v2984
    %v3241 = vmul.f32 %v2985, %v2985
    %v3242 = vmul.f32 %v2986, %v2986
    %v3243 = vmul.f32 %v2987, %v2987
    %v3244 = vmul.f32 %v2988, %v2988
    %v3245 = vmul.f32 %v2989, %v2989
    %v3246 = vmul.f32 %v2990, %v2990
    %v3247 = vmul.f32 %v2991, %v2991
    %v3248 = vmul.f32 %v2992, %v2992
    %v3249 = vmul.f32 %v2993, %v2993
    %v3250 = vmul.f32 %v2994, %v2994
    %v3251 = vmul.f32 %v2995, %v2995
    %v3252 = vmul.f32 %v2996, %v2996
    %v3253 = vmul.f32 %v2997, %v2997
    %v3254 = vmul.f32 %v2998, %v2998
    %v3255 = vmul.f32 %v2999, %v2999
    %v3256 = vmul.f32 %v3000, %v3000
    %v3257 = vmul.f32 %v3001, %v3001
    %v3258 = vmul.f32 %v3002, %v3002
    %v3259 = vmul.f32 %v3003, %v3003
    %v3260 = vmul.f32 %v3004, %v3004
    %v3261 = vmul.f32 %v3005, %v3005
    %v3262 = vmul.f32 %v3006, %v3006
    %v3263 = vmul.f32 %v3007, %v3007
    %v3264 = vmul.f32 %v3008, %v3008
    %v3265 = vmul.f32 %v3009, %v3009
    %v3266 = vmul.f32 %v3010, %v3010
    %v3267 = vmul.f32 %v3011, %v3011
    %v3268 = vmul.f32 %v3012, %v3012
    %v3269 = vmul.f32 %v3013, %v3013
    %v3270 = vmul.f32 %v3014, %v3014
    %v3271 = vmul.f32 %v3015, %v3015
    %v3272 = vmul.f32 %v3016, %v3016
    %v3273 = vmul.f32 %v3017, %v3017
    %v3274 = vmul.f32 %v3018, %v3018
    %v3275 = vmul.f32 %v3019, %v3019
    %v3276 = vmul.f32 %v3020, %v3020
    %v3277 = vmul.f32 %v3021, %v3021
    %v3278 = vmul.f32 %v3022, %v3022
    %v3279 = vmul.f32 %v3023, %v3023
    %v3280 = vmul.f32 %v3024, %v3024
    %v3281 = vmul.f32 %v3025, %v3025
    %v3282 = vmul.f32 %v3026, %v3026
    %v3283 = vmul.f32 %v3027, %v3027
    %v3284 = vmul.f32 %v3028, %v3028
    %v3285 = vmul.f32 %v3029, %v3029
    %v3286 = vmul.f32 %v3030, %v3030
    %v3287 = vmul.f32 %v3031, %v3031
    %v3288 = vmul.f32 %v3032, %v3032
    %v3289 = vmul.f32 %v3033, %v3033
    %v3290 = vmul.f32 %v3034, %v3034
    %v3291 = vmul.f32 %v3035, %v3035
    %v3292 = vmul.f32 %v3036, %v3036
    %v3293 = vmul.f32 %v3037, %v3037
    %v3294 = vmul.f32 %v3038, %v3038
    %v3295 = vmul.f32 %v3039, %v3039
    %v3296 = vmul.f32 %v3040, %v3040
    %v3297 = vmul.f32 %v3041, %v3041
    %v3298 = vmul.f32 %v3042, %v3042
    %v3299 = vmul.f32 %v3043, %v3043
    %v3300 = vmul.f32 %v3044, %v3044
    %v3301 = vmul.f32 %v3045, %v3045
    %v3302 = vmul.f32 %v3046, %v3046
    %v3303 = vmul.f32 %v3047, %v3047
    %v3304 = vmul.f32 %v3048, %v3048
    %v3305 = vmul.f32 %v3049, %v3049
    %v3306 = vmul.f32 %v3050, %v3050
    %v3307 = vmul.f32 %v3051, %v3051
    %v3308 = vmul.f32 %v3052, %v3052
    %v3309 = vmul.f32 %v3053, %v3053
    %v3310 = vmul.f32 %v3054, %v3054
    %v3311 = vmul.f32 %v3055, %v3055
    %v3312 = vmul.f32 %v3056, %v3056
    %v3313 = vmul.f32 %v3057, %v3057
    %v3314 = vmul.f32 %v3058, %v3058
    %v3315 = vmul.f32 %v3059, %v3059
    %v3316 = vmul.f32 %v3060, %v3060
    %v3317 = vmul.f32 %v3061, %v3061
    %v3318 = vmul.f32 %v3062, %v3062
    %v3319 = vmul.f32 %v3063, %v3063
    %v3320 = vmul.f32 %v3064, %v3064
    %v3321 = vmul.f32 %v3065, %v3065
    %v3322 = vmul.f32 %v3066, %v3066
    %v3323 = vmul.f32 %v3067, %v3067
    %v3324 = vmul.f32 %v3068, %v3068
    %v3325 = vmul.f32 %v3069, %v3069
    %v3326 = vmul.f32 %v3070, %v3070
    %v3327 = vmul.f32 %v3071, %v3071
    %v3328 = vmul.f32 %v3072, %v3072
    %v3329 = vmul.f32 %v3073, %v3073
    %v3330 = vmul.f32 %v3074, %v3074
    %v3331 = vmul.f32 %v3075, %v3075
    %v3332 = vmul.f32 %v3076, %v3076
    %v3333 = vmul.f32 %v3077, %v3077
    %v3334 = vmul.f32 %v3078, %v3078
    %v3335 = vmul.f32 %v3079, %v3079
    %v3336 = vmul.f32 %v3080, %v3080
    %v3337 = vmul.f32 %v3081, %v3081
    %v3338 = vmul.f32 %v3082, %v3082
    %v3339 = vmul.f32 %v3083, %v3083
    %v3340 = vmul.f32 %v3084, %v3084
    %v3341 = vmul.f32 %v3085, %v3085
    %v3342 = vmul.f32 %v3086, %v3086
    %v3343 = vmul.f32 %v3087, %v3087
    %v3344 = vmul.f32 %v3088, %v3088
    %v3345 = vmul.f32 %v3089, %v3089
    %v3346 = vmul.f32 %v3090, %v3090
    %v3347 = vmul.f32 %v3091, %v3091
    %v3348 = vmul.f32 %v3092, %v3092
    %v3349 = vmul.f32 %v3093, %v3093
    %v3350 = vmul.f32 %v3094, %v3094
    %v3351 = vmul.f32 %v3095, %v3095
    %v3352 = vmul.f32 %v3096, %v3096
    %v3353 = vmul.f32 %v3097, %v3097
    %v3354 = vmul.f32 %v3098, %v3098
    %v3355 = vmul.f32 %v3099, %v3099
    %v3356 = vmul.f32 %v3100, %v3100
    %v3357 = vmul.f32 %v3101, %v3101
    %v3358 = vmul.f32 %v3102, %v3102
    %v3359 = vmul.f32 %v3103, %v3103
    %v3360 = vmul.f32 %v3104, %v3104
    %v3361 = vmul.f32 %v3105, %v3105
    %v3362 = vmul.f32 %v3106, %v3106
    %v3363 = vmul.f32 %v3107, %v3107
    %v3364 = vmul.f32 %v3108, %v3108
    %v3365 = vmul.f32 %v3109, %v3109
    %v3366 = vmul.f32 %v3110, %v3110
    %v3367 = vmul.f32 %v3111, %v3111
    %v3368 = vmul.f32 %v3112, %v3112
    %v3369 = vmul.f32 %v3113, %v3113
    %v3370 = vmul.f32 %v3114, %v3114
    %v3371 = vmul.f32 %v3115, %v3115
    %v3372 = vmul.f32 %v3116, %v3116
    %v3373 = vmul.f32 %v3117, %v3117
    %v3374 = vmul.f32 %v3118, %v3118
    %v3375 = vmul.f32 %v3119, %v3119
    %v3376 = vmul.f32 %v3120, %v3120
    %v3377 = vmul.f32 %v3121, %v3121
    %v3378 = vmul.f32 %v3122, %v3122
    %v3379 = vmul.f32 %v3123, %v3123
    %v3380 = vmul.f32 %v3124, %v3124
    %v3381 = vmul.f32 %v3125, %v3125
    %v3382 = vmul.f32 %v3126, %v3126
    %v3383 = vmul.f32 %v3127, %v3127
    %v3384 = vmul.f32 %v3128, %v3128
    %v3385 = vmul.f32 %v3129, %v3129
    %v3386 = vmul.f32 %v3130, %v3130
    %v3387 = vmul.f32 %v3131, %v3131
    %v3388 = vmul.f32 %v3132, %v3132
    %v3389 = vmul.f32 %v3133, %v3133
    %v3390 = vmul.f32 %v3134, %v3134
    %v3391 = vmul.f32 %v3135, %v3135
    %v3392 = vmul.f32 %v3136, %v3136
    %v3393 = vmul.f32 %v3137, %v3137
    %v3394 = vmul.f32 %v3138, %v3138
    %v3395 = vmul.f32 %v3139, %v3139
    %v3396 = vmul.f32 %v3140, %v3140
    %v3397 = vmul.f32 %v3141, %v3141
    %v3398 = vmul.f32 %v3142, %v3142
    %v3399 = vld [vmem:[%s4] sm:$0x1]
    %v3401 = vlaneseq
    %v3402 = vshrl.u32 %v3401, 7
    %v3403 = vsub.s32 0, %v3402
    %v3404 = vrot.slane %v3399, %v3403
    %v3406 = vmul.f32 %v3143, %v3404
    %v3407 = vmul.f32 %v3144, %v3404
    %v3408 = vmul.f32 %v3145, %v3404
    %v3409 = vmul.f32 %v3146, %v3404
    %v3410 = vmul.f32 %v3147, %v3404
    %v3411 = vmul.f32 %v3148, %v3404
    %v3412 = vmul.f32 %v3149, %v3404
    %v3413 = vmul.f32 %v3150, %v3404
    %v3414 = vmul.f32 %v3151, %v3404
    %v3415 = vmul.f32 %v3152, %v3404
    %v3416 = vmul.f32 %v3153, %v3404
    %v3417 = vmul.f32 %v3154, %v3404
    %v3418 = vmul.f32 %v3155, %v3404
    %v3419 = vmul.f32 %v3156, %v3404
    %v3420 = vmul.f32 %v3157, %v3404
    %v3421 = vmul.f32 %v3158, %v3404
    %v3422 = vmul.f32 %v3159, %v3404
    %v3423 = vmul.f32 %v3160, %v3404
    %v3424 = vmul.f32 %v3161, %v3404
    %v3425 = vmul.f32 %v3162, %v3404
    %v3426 = vmul.f32 %v3163, %v3404
    %v3427 = vmul.f32 %v3164, %v3404
    %v3428 = vmul.f32 %v3165, %v3404
    %v3429 = vmul.f32 %v3166, %v3404
    %v3430 = vmul.f32 %v3167, %v3404
    %v3431 = vmul.f32 %v3168, %v3404
    %v3432 = vmul.f32 %v3169, %v3404
    %v3433 = vmul.f32 %v3170, %v3404
    %v3434 = vmul.f32 %v3171, %v3404
    %v3435 = vmul.f32 %v3172, %v3404
    %v3436 = vmul.f32 %v3173, %v3404
    %v3437 = vmul.f32 %v3174, %v3404
    %v3438 = vmul.f32 %v3175, %v3404
    %v3439 = vmul.f32 %v3176, %v3404
    %v3440 = vmul.f32 %v3177, %v3404
    %v3441 = vmul.f32 %v3178, %v3404
    %v3442 = vmul.f32 %v3179, %v3404
    %v3443 = vmul.f32 %v3180, %v3404
    %v3444 = vmul.f32 %v3181, %v3404
    %v3445 = vmul.f32 %v3182, %v3404
    %v3446 = vmul.f32 %v3183, %v3404
    %v3447 = vmul.f32 %v3184, %v3404
    %v3448 = vmul.f32 %v3185, %v3404
    %v3449 = vmul.f32 %v3186, %v3404
    %v3450 = vmul.f32 %v3187, %v3404
    %v3451 = vmul.f32 %v3188, %v3404
    %v3452 = vmul.f32 %v3189, %v3404
    %v3453 = vmul.f32 %v3190, %v3404
    %v3454 = vmul.f32 %v3191, %v3404
    %v3455 = vmul.f32 %v3192, %v3404
    %v3456 = vmul.f32 %v3193, %v3404
    %v3457 = vmul.f32 %v3194, %v3404
    %v3458 = vmul.f32 %v3195, %v3404
    %v3459 = vmul.f32 %v3196, %v3404
    %v3460 = vmul.f32 %v3197, %v3404
    %v3461 = vmul.f32 %v3198, %v3404
    %v3462 = vmul.f32 %v3199, %v3404
    %v3463 = vmul.f32 %v3200, %v3404
    %v3464 = vmul.f32 %v3201, %v3404
    %v3465 = vmul.f32 %v3202, %v3404
    %v3466 = vmul.f32 %v3203, %v3404
    %v3467 = vmul.f32 %v3204, %v3404
    %v3468 = vmul.f32 %v3205, %v3404
    %v3469 = vmul.f32 %v3206, %v3404
    %v3470 = vmul.f32 %v3207, %v3404
    %v3471 = vmul.f32 %v3208, %v3404
    %v3472 = vmul.f32 %v3209, %v3404
    %v3473 = vmul.f32 %v3210, %v3404
    %v3474 = vmul.f32 %v3211, %v3404
    %v3475 = vmul.f32 %v3212, %v3404
    %v3476 = vmul.f32 %v3213, %v3404
    %v3477 = vmul.f32 %v3214, %v3404
    %v3478 = vmul.f32 %v3215, %v3404
    %v3479 = vmul.f32 %v3216, %v3404
    %v3480 = vmul.f32 %v3217, %v3404
    %v3481 = vmul.f32 %v3218, %v3404
    %v3482 = vmul.f32 %v3219, %v3404
    %v3483 = vmul.f32 %v3220, %v3404
    %v3484 = vmul.f32 %v3221, %v3404
    %v3485 = vmul.f32 %v3222, %v3404
    %v3486 = vmul.f32 %v3223, %v3404
    %v3487 = vmul.f32 %v3224, %v3404
    %v3488 = vmul.f32 %v3225, %v3404
    %v3489 = vmul.f32 %v3226, %v3404
    %v3490 = vmul.f32 %v3227, %v3404
    %v3491 = vmul.f32 %v3228, %v3404
    %v3492 = vmul.f32 %v3229, %v3404
    %v3493 = vmul.f32 %v3230, %v3404
    %v3494 = vmul.f32 %v3231, %v3404
    %v3495 = vmul.f32 %v3232, %v3404
    %v3496 = vmul.f32 %v3233, %v3404
    %v3497 = vmul.f32 %v3234, %v3404
    %v3498 = vmul.f32 %v3235, %v3404
    %v3499 = vmul.f32 %v3236, %v3404
    %v3500 = vmul.f32 %v3237, %v3404
    %v3501 = vmul.f32 %v3238, %v3404
    %v3502 = vmul.f32 %v3239, %v3404
    %v3503 = vmul.f32 %v3240, %v3404
    %v3504 = vmul.f32 %v3241, %v3404
    %v3505 = vmul.f32 %v3242, %v3404
    %v3506 = vmul.f32 %v3243, %v3404
    %v3507 = vmul.f32 %v3244, %v3404
    %v3508 = vmul.f32 %v3245, %v3404
    %v3509 = vmul.f32 %v3246, %v3404
    %v3510 = vmul.f32 %v3247, %v3404
    %v3511 = vmul.f32 %v3248, %v3404
    %v3512 = vmul.f32 %v3249, %v3404
    %v3513 = vmul.f32 %v3250, %v3404
    %v3514 = vmul.f32 %v3251, %v3404
    %v3515 = vmul.f32 %v3252, %v3404
    %v3516 = vmul.f32 %v3253, %v3404
    %v3517 = vmul.f32 %v3254, %v3404
    %v3518 = vmul.f32 %v3255, %v3404
    %v3519 = vmul.f32 %v3256, %v3404
    %v3520 = vmul.f32 %v3257, %v3404
    %v3521 = vmul.f32 %v3258, %v3404
    %v3522 = vmul.f32 %v3259, %v3404
    %v3523 = vmul.f32 %v3260, %v3404
    %v3524 = vmul.f32 %v3261, %v3404
    %v3525 = vmul.f32 %v3262, %v3404
    %v3526 = vmul.f32 %v3263, %v3404
    %v3527 = vmul.f32 %v3264, %v3404
    %v3528 = vmul.f32 %v3265, %v3404
    %v3529 = vmul.f32 %v3266, %v3404
    %v3530 = vmul.f32 %v3267, %v3404
    %v3531 = vmul.f32 %v3268, %v3404
    %v3532 = vmul.f32 %v3269, %v3404
    %v3533 = vmul.f32 %v3270, %v3404
    %v3534 = vmul.f32 %v3271, %v3404
    %v3535 = vmul.f32 %v3272, %v3404
    %v3536 = vmul.f32 %v3273, %v3404
    %v3537 = vmul.f32 %v3274, %v3404
    %v3538 = vmul.f32 %v3275, %v3404
    %v3539 = vmul.f32 %v3276, %v3404
    %v3540 = vmul.f32 %v3277, %v3404
    %v3541 = vmul.f32 %v3278, %v3404
    %v3542 = vmul.f32 %v3279, %v3404
    %v3543 = vmul.f32 %v3280, %v3404
    %v3544 = vmul.f32 %v3281, %v3404
    %v3545 = vmul.f32 %v3282, %v3404
    %v3546 = vmul.f32 %v3283, %v3404
    %v3547 = vmul.f32 %v3284, %v3404
    %v3548 = vmul.f32 %v3285, %v3404
    %v3549 = vmul.f32 %v3286, %v3404
    %v3550 = vmul.f32 %v3287, %v3404
    %v3551 = vmul.f32 %v3288, %v3404
    %v3552 = vmul.f32 %v3289, %v3404
    %v3553 = vmul.f32 %v3290, %v3404
    %v3554 = vmul.f32 %v3291, %v3404
    %v3555 = vmul.f32 %v3292, %v3404
    %v3556 = vmul.f32 %v3293, %v3404
    %v3557 = vmul.f32 %v3294, %v3404
    %v3558 = vmul.f32 %v3295, %v3404
    %v3559 = vmul.f32 %v3296, %v3404
    %v3560 = vmul.f32 %v3297, %v3404
    %v3561 = vmul.f32 %v3298, %v3404
    %v3562 = vmul.f32 %v3299, %v3404
    %v3563 = vmul.f32 %v3300, %v3404
    %v3564 = vmul.f32 %v3301, %v3404
    %v3565 = vmul.f32 %v3302, %v3404
    %v3566 = vmul.f32 %v3303, %v3404
    %v3567 = vmul.f32 %v3304, %v3404
    %v3568 = vmul.f32 %v3305, %v3404
    %v3569 = vmul.f32 %v3306, %v3404
    %v3570 = vmul.f32 %v3307, %v3404
    %v3571 = vmul.f32 %v3308, %v3404
    %v3572 = vmul.f32 %v3309, %v3404
    %v3573 = vmul.f32 %v3310, %v3404
    %v3574 = vmul.f32 %v3311, %v3404
    %v3575 = vmul.f32 %v3312, %v3404
    %v3576 = vmul.f32 %v3313, %v3404
    %v3577 = vmul.f32 %v3314, %v3404
    %v3578 = vmul.f32 %v3315, %v3404
    %v3579 = vmul.f32 %v3316, %v3404
    %v3580 = vmul.f32 %v3317, %v3404
    %v3581 = vmul.f32 %v3318, %v3404
    %v3582 = vmul.f32 %v3319, %v3404
    %v3583 = vmul.f32 %v3320, %v3404
    %v3584 = vmul.f32 %v3321, %v3404
    %v3585 = vmul.f32 %v3322, %v3404
    %v3586 = vmul.f32 %v3323, %v3404
    %v3587 = vmul.f32 %v3324, %v3404
    %v3588 = vmul.f32 %v3325, %v3404
    %v3589 = vmul.f32 %v3326, %v3404
    %v3590 = vmul.f32 %v3327, %v3404
    %v3591 = vmul.f32 %v3328, %v3404
    %v3592 = vmul.f32 %v3329, %v3404
    %v3593 = vmul.f32 %v3330, %v3404
    %v3594 = vmul.f32 %v3331, %v3404
    %v3595 = vmul.f32 %v3332, %v3404
    %v3596 = vmul.f32 %v3333, %v3404
    %v3597 = vmul.f32 %v3334, %v3404
    %v3598 = vmul.f32 %v3335, %v3404
    %v3599 = vmul.f32 %v3336, %v3404
    %v3600 = vmul.f32 %v3337, %v3404
    %v3601 = vmul.f32 %v3338, %v3404
    %v3602 = vmul.f32 %v3339, %v3404
    %v3603 = vmul.f32 %v3340, %v3404
    %v3604 = vmul.f32 %v3341, %v3404
    %v3605 = vmul.f32 %v3342, %v3404
    %v3606 = vmul.f32 %v3343, %v3404
    %v3607 = vmul.f32 %v3344, %v3404
    %v3608 = vmul.f32 %v3345, %v3404
    %v3609 = vmul.f32 %v3346, %v3404
    %v3610 = vmul.f32 %v3347, %v3404
    %v3611 = vmul.f32 %v3348, %v3404
    %v3612 = vmul.f32 %v3349, %v3404
    %v3613 = vmul.f32 %v3350, %v3404
    %v3614 = vmul.f32 %v3351, %v3404
    %v3615 = vmul.f32 %v3352, %v3404
    %v3616 = vmul.f32 %v3353, %v3404
    %v3617 = vmul.f32 %v3354, %v3404
    %v3618 = vmul.f32 %v3355, %v3404
    %v3619 = vmul.f32 %v3356, %v3404
    %v3620 = vmul.f32 %v3357, %v3404
    %v3621 = vmul.f32 %v3358, %v3404
    %v3622 = vmul.f32 %v3359, %v3404
    %v3623 = vmul.f32 %v3360, %v3404
    %v3624 = vmul.f32 %v3361, %v3404
    %v3625 = vmul.f32 %v3362, %v3404
    %v3626 = vmul.f32 %v3363, %v3404
    %v3627 = vmul.f32 %v3364, %v3404
    %v3628 = vmul.f32 %v3365, %v3404
    %v3629 = vmul.f32 %v3366, %v3404
    %v3630 = vmul.f32 %v3367, %v3404
    %v3631 = vmul.f32 %v3368, %v3404
    %v3632 = vmul.f32 %v3369, %v3404
    %v3633 = vmul.f32 %v3370, %v3404
    %v3634 = vmul.f32 %v3371, %v3404
    %v3635 = vmul.f32 %v3372, %v3404
    %v3636 = vmul.f32 %v3373, %v3404
    %v3637 = vmul.f32 %v3374, %v3404
    %v3638 = vmul.f32 %v3375, %v3404
    %v3639 = vmul.f32 %v3376, %v3404
    %v3640 = vmul.f32 %v3377, %v3404
    %v3641 = vmul.f32 %v3378, %v3404
    %v3642 = vmul.f32 %v3379, %v3404
    %v3643 = vmul.f32 %v3380, %v3404
    %v3644 = vmul.f32 %v3381, %v3404
    %v3645 = vmul.f32 %v3382, %v3404
    %v3646 = vmul.f32 %v3383, %v3404
    %v3647 = vmul.f32 %v3384, %v3404
    %v3648 = vmul.f32 %v3385, %v3404
    %v3649 = vmul.f32 %v3386, %v3404
    %v3650 = vmul.f32 %v3387, %v3404
    %v3651 = vmul.f32 %v3388, %v3404
    %v3652 = vmul.f32 %v3389, %v3404
    %v3653 = vmul.f32 %v3390, %v3404
    %v3654 = vmul.f32 %v3391, %v3404
    %v3655 = vmul.f32 %v3392, %v3404
    %v3656 = vmul.f32 %v3393, %v3404
    %v3657 = vmul.f32 %v3394, %v3404
    %v3658 = vmul.f32 %v3395, %v3404
    %v3659 = vmul.f32 %v3396, %v3404
    %v3660 = vmul.f32 %v3397, %v3404
    %v3661 = vmul.f32 %v3398, %v3404
    %v3662 = vsel %vm2374, %v3406, 0.0
    %3663 = vadd.xlane.f32.xlu0 %v3662
    %v3664 = vpop.xlane.xlu0 %3663
    %v3665 = vsel %vm2374, %v3407, 0.0
    %3666 = vadd.xlane.f32.xlu0 %v3665
    %v3667 = vpop.xlane.xlu0 %3666
    %v3668 = vsel %vm2374, %v3408, 0.0
    %3669 = vadd.xlane.f32.xlu0 %v3668
    %v3670 = vpop.xlane.xlu0 %3669
    %v3671 = vsel %vm2374, %v3409, 0.0
    %3672 = vadd.xlane.f32.xlu0 %v3671
    %v3673 = vpop.xlane.xlu0 %3672
    %v3674 = vsel %vm2374, %v3410, 0.0
    %3675 = vadd.xlane.f32.xlu0 %v3674
    %v3676 = vpop.xlane.xlu0 %3675
    %v3677 = vsel %vm2374, %v3411, 0.0
    %3678 = vadd.xlane.f32.xlu0 %v3677
    %v3679 = vpop.xlane.xlu0 %3678
    %v3680 = vsel %vm2374, %v3412, 0.0
    %3681 = vadd.xlane.f32.xlu0 %v3680
    %v3682 = vpop.xlane.xlu0 %3681
    %v3683 = vsel %vm2374, %v3413, 0.0
    %3684 = vadd.xlane.f32.xlu0 %v3683
    %v3685 = vpop.xlane.xlu0 %3684
    %v3686 = vsel %vm2374, %v3414, 0.0
    %3687 = vadd.xlane.f32.xlu0 %v3686
    %v3688 = vpop.xlane.xlu0 %3687
    %v3689 = vsel %vm2374, %v3415, 0.0
    %3690 = vadd.xlane.f32.xlu0 %v3689
    %v3691 = vpop.xlane.xlu0 %3690
    %v3692 = vsel %vm2374, %v3416, 0.0
    %3693 = vadd.xlane.f32.xlu0 %v3692
    %v3694 = vpop.xlane.xlu0 %3693
    %v3695 = vsel %vm2374, %v3417, 0.0
    %3696 = vadd.xlane.f32.xlu0 %v3695
    %v3697 = vpop.xlane.xlu0 %3696
    %v3698 = vsel %vm2374, %v3418, 0.0
    %3699 = vadd.xlane.f32.xlu0 %v3698
    %v3700 = vpop.xlane.xlu0 %3699
    %v3701 = vsel %vm2374, %v3419, 0.0
    %3702 = vadd.xlane.f32.xlu0 %v3701
    %v3703 = vpop.xlane.xlu0 %3702
    %v3704 = vsel %vm2374, %v3420, 0.0
    %3705 = vadd.xlane.f32.xlu0 %v3704
    %v3706 = vpop.xlane.xlu0 %3705
    %v3707 = vsel %vm2374, %v3421, 0.0
    %3708 = vadd.xlane.f32.xlu0 %v3707
    %v3709 = vpop.xlane.xlu0 %3708
    %v3710 = vsel %vm2374, %v3422, 0.0
    %3711 = vadd.xlane.f32.xlu0 %v3710
    %v3712 = vpop.xlane.xlu0 %3711
    %v3713 = vsel %vm2374, %v3423, 0.0
    %3714 = vadd.xlane.f32.xlu0 %v3713
    %v3715 = vpop.xlane.xlu0 %3714
    %v3716 = vsel %vm2374, %v3424, 0.0
    %3717 = vadd.xlane.f32.xlu0 %v3716
    %v3718 = vpop.xlane.xlu0 %3717
    %v3719 = vsel %vm2374, %v3425, 0.0
    %3720 = vadd.xlane.f32.xlu0 %v3719
    %v3721 = vpop.xlane.xlu0 %3720
    %v3722 = vsel %vm2374, %v3426, 0.0
    %3723 = vadd.xlane.f32.xlu0 %v3722
    %v3724 = vpop.xlane.xlu0 %3723
    %v3725 = vsel %vm2374, %v3427, 0.0
    %3726 = vadd.xlane.f32.xlu0 %v3725
    %v3727 = vpop.xlane.xlu0 %3726
    %v3728 = vsel %vm2374, %v3428, 0.0
    %3729 = vadd.xlane.f32.xlu0 %v3728
    %v3730 = vpop.xlane.xlu0 %3729
    %v3731 = vsel %vm2374, %v3429, 0.0
    %3732 = vadd.xlane.f32.xlu0 %v3731
    %v3733 = vpop.xlane.xlu0 %3732
    %v3734 = vsel %vm2374, %v3430, 0.0
    %3735 = vadd.xlane.f32.xlu0 %v3734
    %v3736 = vpop.xlane.xlu0 %3735
    %v3737 = vsel %vm2374, %v3431, 0.0
    %3738 = vadd.xlane.f32.xlu0 %v3737
    %v3739 = vpop.xlane.xlu0 %3738
    %v3740 = vsel %vm2374, %v3432, 0.0
    %3741 = vadd.xlane.f32.xlu0 %v3740
    %v3742 = vpop.xlane.xlu0 %3741
    %v3743 = vsel %vm2374, %v3433, 0.0
    %3744 = vadd.xlane.f32.xlu0 %v3743
    %v3745 = vpop.xlane.xlu0 %3744
    %v3746 = vsel %vm2374, %v3434, 0.0
    %3747 = vadd.xlane.f32.xlu0 %v3746
    %v3748 = vpop.xlane.xlu0 %3747
    %v3749 = vsel %vm2374, %v3435, 0.0
    %3750 = vadd.xlane.f32.xlu0 %v3749
    %v3751 = vpop.xlane.xlu0 %3750
    %v3752 = vsel %vm2374, %v3436, 0.0
    %3753 = vadd.xlane.f32.xlu0 %v3752
    %v3754 = vpop.xlane.xlu0 %3753
    %v3755 = vsel %vm2374, %v3437, 0.0
    %3756 = vadd.xlane.f32.xlu0 %v3755
    %v3757 = vpop.xlane.xlu0 %3756
    %v3758 = vsel %vm2374, %v3438, 0.0
    %3759 = vadd.xlane.f32.xlu0 %v3758
    %v3760 = vpop.xlane.xlu0 %3759
    %v3761 = vsel %vm2374, %v3439, 0.0
    %3762 = vadd.xlane.f32.xlu0 %v3761
    %v3763 = vpop.xlane.xlu0 %3762
    %v3764 = vsel %vm2374, %v3440, 0.0
    %3765 = vadd.xlane.f32.xlu0 %v3764
    %v3766 = vpop.xlane.xlu0 %3765
    %v3767 = vsel %vm2374, %v3441, 0.0
    %3768 = vadd.xlane.f32.xlu0 %v3767
    %v3769 = vpop.xlane.xlu0 %3768
    %v3770 = vsel %vm2374, %v3442, 0.0
    %3771 = vadd.xlane.f32.xlu0 %v3770
    %v3772 = vpop.xlane.xlu0 %3771
    %v3773 = vsel %vm2374, %v3443, 0.0
    %3774 = vadd.xlane.f32.xlu0 %v3773
    %v3775 = vpop.xlane.xlu0 %3774
    %v3776 = vsel %vm2374, %v3444, 0.0
    %3777 = vadd.xlane.f32.xlu0 %v3776
    %v3778 = vpop.xlane.xlu0 %3777
    %v3779 = vsel %vm2374, %v3445, 0.0
    %3780 = vadd.xlane.f32.xlu0 %v3779
    %v3781 = vpop.xlane.xlu0 %3780
    %v3782 = vsel %vm2374, %v3446, 0.0
    %3783 = vadd.xlane.f32.xlu0 %v3782
    %v3784 = vpop.xlane.xlu0 %3783
    %v3785 = vsel %vm2374, %v3447, 0.0
    %3786 = vadd.xlane.f32.xlu0 %v3785
    %v3787 = vpop.xlane.xlu0 %3786
    %v3788 = vsel %vm2374, %v3448, 0.0
    %3789 = vadd.xlane.f32.xlu0 %v3788
    %v3790 = vpop.xlane.xlu0 %3789
    %v3791 = vsel %vm2374, %v3449, 0.0
    %3792 = vadd.xlane.f32.xlu0 %v3791
    %v3793 = vpop.xlane.xlu0 %3792
    %v3794 = vsel %vm2374, %v3450, 0.0
    %3795 = vadd.xlane.f32.xlu0 %v3794
    %v3796 = vpop.xlane.xlu0 %3795
    %v3797 = vsel %vm2374, %v3451, 0.0
    %3798 = vadd.xlane.f32.xlu0 %v3797
    %v3799 = vpop.xlane.xlu0 %3798
    %v3800 = vsel %vm2374, %v3452, 0.0
    %3801 = vadd.xlane.f32.xlu0 %v3800
    %v3802 = vpop.xlane.xlu0 %3801
    %v3803 = vsel %vm2374, %v3453, 0.0
    %3804 = vadd.xlane.f32.xlu0 %v3803
    %v3805 = vpop.xlane.xlu0 %3804
    %v3806 = vsel %vm2374, %v3454, 0.0
    %3807 = vadd.xlane.f32.xlu0 %v3806
    %v3808 = vpop.xlane.xlu0 %3807
    %v3809 = vsel %vm2374, %v3455, 0.0
    %3810 = vadd.xlane.f32.xlu0 %v3809
    %v3811 = vpop.xlane.xlu0 %3810
    %v3812 = vsel %vm2374, %v3456, 0.0
    %3813 = vadd.xlane.f32.xlu0 %v3812
    %v3814 = vpop.xlane.xlu0 %3813
    %v3815 = vsel %vm2374, %v3457, 0.0
    %3816 = vadd.xlane.f32.xlu0 %v3815
    %v3817 = vpop.xlane.xlu0 %3816
    %v3818 = vsel %vm2374, %v3458, 0.0
    %3819 = vadd.xlane.f32.xlu0 %v3818
    %v3820 = vpop.xlane.xlu0 %3819
    %v3821 = vsel %vm2374, %v3459, 0.0
    %3822 = vadd.xlane.f32.xlu0 %v3821
    %v3823 = vpop.xlane.xlu0 %3822
    %v3824 = vsel %vm2374, %v3460, 0.0
    %3825 = vadd.xlane.f32.xlu0 %v3824
    %v3826 = vpop.xlane.xlu0 %3825
    %v3827 = vsel %vm2374, %v3461, 0.0
    %3828 = vadd.xlane.f32.xlu0 %v3827
    %v3829 = vpop.xlane.xlu0 %3828
    %v3830 = vsel %vm2374, %v3462, 0.0
    %3831 = vadd.xlane.f32.xlu0 %v3830
    %v3832 = vpop.xlane.xlu0 %3831
    %v3833 = vsel %vm2374, %v3463, 0.0
    %3834 = vadd.xlane.f32.xlu0 %v3833
    %v3835 = vpop.xlane.xlu0 %3834
    %v3836 = vsel %vm2374, %v3464, 0.0
    %3837 = vadd.xlane.f32.xlu0 %v3836
    %v3838 = vpop.xlane.xlu0 %3837
    %v3839 = vsel %vm2374, %v3465, 0.0
    %3840 = vadd.xlane.f32.xlu0 %v3839
    %v3841 = vpop.xlane.xlu0 %3840
    %v3842 = vsel %vm2374, %v3466, 0.0
    %3843 = vadd.xlane.f32.xlu0 %v3842
    %v3844 = vpop.xlane.xlu0 %3843
    %v3845 = vsel %vm2374, %v3467, 0.0
    %3846 = vadd.xlane.f32.xlu0 %v3845
    %v3847 = vpop.xlane.xlu0 %3846
    %v3848 = vsel %vm2374, %v3468, 0.0
    %3849 = vadd.xlane.f32.xlu0 %v3848
    %v3850 = vpop.xlane.xlu0 %3849
    %v3851 = vsel %vm2374, %v3469, 0.0
    %3852 = vadd.xlane.f32.xlu0 %v3851
    %v3853 = vpop.xlane.xlu0 %3852
    %v3854 = vsel %vm2374, %v3470, 0.0
    %3855 = vadd.xlane.f32.xlu0 %v3854
    %v3856 = vpop.xlane.xlu0 %3855
    %v3857 = vsel %vm2374, %v3471, 0.0
    %3858 = vadd.xlane.f32.xlu0 %v3857
    %v3859 = vpop.xlane.xlu0 %3858
    %v3860 = vsel %vm2374, %v3472, 0.0
    %3861 = vadd.xlane.f32.xlu0 %v3860
    %v3862 = vpop.xlane.xlu0 %3861
    %v3863 = vsel %vm2374, %v3473, 0.0
    %3864 = vadd.xlane.f32.xlu0 %v3863
    %v3865 = vpop.xlane.xlu0 %3864
    %v3866 = vsel %vm2374, %v3474, 0.0
    %3867 = vadd.xlane.f32.xlu0 %v3866
    %v3868 = vpop.xlane.xlu0 %3867
    %v3869 = vsel %vm2374, %v3475, 0.0
    %3870 = vadd.xlane.f32.xlu0 %v3869
    %v3871 = vpop.xlane.xlu0 %3870
    %v3872 = vsel %vm2374, %v3476, 0.0
    %3873 = vadd.xlane.f32.xlu0 %v3872
    %v3874 = vpop.xlane.xlu0 %3873
    %v3875 = vsel %vm2374, %v3477, 0.0
    %3876 = vadd.xlane.f32.xlu0 %v3875
    %v3877 = vpop.xlane.xlu0 %3876
    %v3878 = vsel %vm2374, %v3478, 0.0
    %3879 = vadd.xlane.f32.xlu0 %v3878
    %v3880 = vpop.xlane.xlu0 %3879
    %v3881 = vsel %vm2374, %v3479, 0.0
    %3882 = vadd.xlane.f32.xlu0 %v3881
    %v3883 = vpop.xlane.xlu0 %3882
    %v3884 = vsel %vm2374, %v3480, 0.0
    %3885 = vadd.xlane.f32.xlu0 %v3884
    %v3886 = vpop.xlane.xlu0 %3885
    %v3887 = vsel %vm2374, %v3481, 0.0
    %3888 = vadd.xlane.f32.xlu0 %v3887
    %v3889 = vpop.xlane.xlu0 %3888
    %v3890 = vsel %vm2374, %v3482, 0.0
    %3891 = vadd.xlane.f32.xlu0 %v3890
    %v3892 = vpop.xlane.xlu0 %3891
    %v3893 = vsel %vm2374, %v3483, 0.0
    %3894 = vadd.xlane.f32.xlu0 %v3893
    %v3895 = vpop.xlane.xlu0 %3894
    %v3896 = vsel %vm2374, %v3484, 0.0
    %3897 = vadd.xlane.f32.xlu0 %v3896
    %v3898 = vpop.xlane.xlu0 %3897
    %v3899 = vsel %vm2374, %v3485, 0.0
    %3900 = vadd.xlane.f32.xlu0 %v3899
    %v3901 = vpop.xlane.xlu0 %3900
    %v3902 = vsel %vm2374, %v3486, 0.0
    %3903 = vadd.xlane.f32.xlu0 %v3902
    %v3904 = vpop.xlane.xlu0 %3903
    %v3905 = vsel %vm2374, %v3487, 0.0
    %3906 = vadd.xlane.f32.xlu0 %v3905
    %v3907 = vpop.xlane.xlu0 %3906
    %v3908 = vsel %vm2374, %v3488, 0.0
    %3909 = vadd.xlane.f32.xlu0 %v3908
    %v3910 = vpop.xlane.xlu0 %3909
    %v3911 = vsel %vm2374, %v3489, 0.0
    %3912 = vadd.xlane.f32.xlu0 %v3911
    %v3913 = vpop.xlane.xlu0 %3912
    %v3914 = vsel %vm2374, %v3490, 0.0
    %3915 = vadd.xlane.f32.xlu0 %v3914
    %v3916 = vpop.xlane.xlu0 %3915
    %v3917 = vsel %vm2374, %v3491, 0.0
    %3918 = vadd.xlane.f32.xlu0 %v3917
    %v3919 = vpop.xlane.xlu0 %3918
    %v3920 = vsel %vm2374, %v3492, 0.0
    %3921 = vadd.xlane.f32.xlu0 %v3920
    %v3922 = vpop.xlane.xlu0 %3921
    %v3923 = vsel %vm2374, %v3493, 0.0
    %3924 = vadd.xlane.f32.xlu0 %v3923
    %v3925 = vpop.xlane.xlu0 %3924
    %v3926 = vsel %vm2374, %v3494, 0.0
    %3927 = vadd.xlane.f32.xlu0 %v3926
    %v3928 = vpop.xlane.xlu0 %3927
    %v3929 = vsel %vm2374, %v3495, 0.0
    %3930 = vadd.xlane.f32.xlu0 %v3929
    %v3931 = vpop.xlane.xlu0 %3930
    %v3932 = vsel %vm2374, %v3496, 0.0
    %3933 = vadd.xlane.f32.xlu0 %v3932
    %v3934 = vpop.xlane.xlu0 %3933
    %v3935 = vsel %vm2374, %v3497, 0.0
    %3936 = vadd.xlane.f32.xlu0 %v3935
    %v3937 = vpop.xlane.xlu0 %3936
    %v3938 = vsel %vm2374, %v3498, 0.0
    %3939 = vadd.xlane.f32.xlu0 %v3938
    %v3940 = vpop.xlane.xlu0 %3939
    %v3941 = vsel %vm2374, %v3499, 0.0
    %3942 = vadd.xlane.f32.xlu0 %v3941
    %v3943 = vpop.xlane.xlu0 %3942
    %v3944 = vsel %vm2374, %v3500, 0.0
    %3945 = vadd.xlane.f32.xlu0 %v3944
    %v3946 = vpop.xlane.xlu0 %3945
    %v3947 = vsel %vm2374, %v3501, 0.0
    %3948 = vadd.xlane.f32.xlu0 %v3947
    %v3949 = vpop.xlane.xlu0 %3948
    %v3950 = vsel %vm2374, %v3502, 0.0
    %3951 = vadd.xlane.f32.xlu0 %v3950
    %v3952 = vpop.xlane.xlu0 %3951
    %v3953 = vsel %vm2374, %v3503, 0.0
    %3954 = vadd.xlane.f32.xlu0 %v3953
    %v3955 = vpop.xlane.xlu0 %3954
    %v3956 = vsel %vm2374, %v3504, 0.0
    %3957 = vadd.xlane.f32.xlu0 %v3956
    %v3958 = vpop.xlane.xlu0 %3957
    %v3959 = vsel %vm2374, %v3505, 0.0
    %3960 = vadd.xlane.f32.xlu0 %v3959
    %v3961 = vpop.xlane.xlu0 %3960
    %v3962 = vsel %vm2374, %v3506, 0.0
    %3963 = vadd.xlane.f32.xlu0 %v3962
    %v3964 = vpop.xlane.xlu0 %3963
    %v3965 = vsel %vm2374, %v3507, 0.0
    %3966 = vadd.xlane.f32.xlu0 %v3965
    %v3967 = vpop.xlane.xlu0 %3966
    %v3968 = vsel %vm2374, %v3508, 0.0
    %3969 = vadd.xlane.f32.xlu0 %v3968
    %v3970 = vpop.xlane.xlu0 %3969
    %v3971 = vsel %vm2374, %v3509, 0.0
    %3972 = vadd.xlane.f32.xlu0 %v3971
    %v3973 = vpop.xlane.xlu0 %3972
    %v3974 = vsel %vm2374, %v3510, 0.0
    %3975 = vadd.xlane.f32.xlu0 %v3974
    %v3976 = vpop.xlane.xlu0 %3975
    %v3977 = vsel %vm2374, %v3511, 0.0
    %3978 = vadd.xlane.f32.xlu0 %v3977
    %v3979 = vpop.xlane.xlu0 %3978
    %v3980 = vsel %vm2374, %v3512, 0.0
    %3981 = vadd.xlane.f32.xlu0 %v3980
    %v3982 = vpop.xlane.xlu0 %3981
    %v3983 = vsel %vm2374, %v3513, 0.0
    %3984 = vadd.xlane.f32.xlu0 %v3983
    %v3985 = vpop.xlane.xlu0 %3984
    %v3986 = vsel %vm2374, %v3514, 0.0
    %3987 = vadd.xlane.f32.xlu0 %v3986
    %v3988 = vpop.xlane.xlu0 %3987
    %v3989 = vsel %vm2374, %v3515, 0.0
    %3990 = vadd.xlane.f32.xlu0 %v3989
    %v3991 = vpop.xlane.xlu0 %3990
    %v3992 = vsel %vm2374, %v3516, 0.0
    %3993 = vadd.xlane.f32.xlu0 %v3992
    %v3994 = vpop.xlane.xlu0 %3993
    %v3995 = vsel %vm2374, %v3517, 0.0
    %3996 = vadd.xlane.f32.xlu0 %v3995
    %v3997 = vpop.xlane.xlu0 %3996
    %v3998 = vsel %vm2374, %v3518, 0.0
    %3999 = vadd.xlane.f32.xlu0 %v3998
    %v4000 = vpop.xlane.xlu0 %3999
    %v4001 = vsel %vm2374, %v3519, 0.0
    %4002 = vadd.xlane.f32.xlu0 %v4001
    %v4003 = vpop.xlane.xlu0 %4002
    %v4004 = vsel %vm2374, %v3520, 0.0
    %4005 = vadd.xlane.f32.xlu0 %v4004
    %v4006 = vpop.xlane.xlu0 %4005
    %v4007 = vsel %vm2374, %v3521, 0.0
    %4008 = vadd.xlane.f32.xlu0 %v4007
    %v4009 = vpop.xlane.xlu0 %4008
    %v4010 = vsel %vm2374, %v3522, 0.0
    %4011 = vadd.xlane.f32.xlu0 %v4010
    %v4012 = vpop.xlane.xlu0 %4011
    %v4013 = vsel %vm2374, %v3523, 0.0
    %4014 = vadd.xlane.f32.xlu0 %v4013
    %v4015 = vpop.xlane.xlu0 %4014
    %v4016 = vsel %vm2374, %v3524, 0.0
    %4017 = vadd.xlane.f32.xlu0 %v4016
    %v4018 = vpop.xlane.xlu0 %4017
    %v4019 = vsel %vm2374, %v3525, 0.0
    %4020 = vadd.xlane.f32.xlu0 %v4019
    %v4021 = vpop.xlane.xlu0 %4020
    %v4022 = vsel %vm2374, %v3526, 0.0
    %4023 = vadd.xlane.f32.xlu0 %v4022
    %v4024 = vpop.xlane.xlu0 %4023
    %v4025 = vsel %vm2374, %v3527, 0.0
    %4026 = vadd.xlane.f32.xlu0 %v4025
    %v4027 = vpop.xlane.xlu0 %4026
    %v4028 = vsel %vm2374, %v3528, 0.0
    %4029 = vadd.xlane.f32.xlu0 %v4028
    %v4030 = vpop.xlane.xlu0 %4029
    %v4031 = vsel %vm2374, %v3529, 0.0
    %4032 = vadd.xlane.f32.xlu0 %v4031
    %v4033 = vpop.xlane.xlu0 %4032
    %v4034 = vsel %vm2374, %v3530, 0.0
    %4035 = vadd.xlane.f32.xlu0 %v4034
    %v4036 = vpop.xlane.xlu0 %4035
    %v4037 = vsel %vm2374, %v3531, 0.0
    %4038 = vadd.xlane.f32.xlu0 %v4037
    %v4039 = vpop.xlane.xlu0 %4038
    %v4040 = vsel %vm2374, %v3532, 0.0
    %4041 = vadd.xlane.f32.xlu0 %v4040
    %v4042 = vpop.xlane.xlu0 %4041
    %v4043 = vsel %vm2374, %v3533, 0.0
    %4044 = vadd.xlane.f32.xlu0 %v4043
    %v4045 = vpop.xlane.xlu0 %4044
    %v4046 = vsel %vm2374, %v3534, 0.0
    %4047 = vadd.xlane.f32.xlu0 %v4046
    %v4048 = vpop.xlane.xlu0 %4047
    %v4049 = vsel %vm2374, %v3535, 0.0
    %4050 = vadd.xlane.f32.xlu0 %v4049
    %v4051 = vpop.xlane.xlu0 %4050
    %v4052 = vsel %vm2374, %v3536, 0.0
    %4053 = vadd.xlane.f32.xlu0 %v4052
    %v4054 = vpop.xlane.xlu0 %4053
    %v4055 = vsel %vm2374, %v3537, 0.0
    %4056 = vadd.xlane.f32.xlu0 %v4055
    %v4057 = vpop.xlane.xlu0 %4056
    %v4058 = vsel %vm2374, %v3538, 0.0
    %4059 = vadd.xlane.f32.xlu0 %v4058
    %v4060 = vpop.xlane.xlu0 %4059
    %v4061 = vsel %vm2374, %v3539, 0.0
    %4062 = vadd.xlane.f32.xlu0 %v4061
    %v4063 = vpop.xlane.xlu0 %4062
    %v4064 = vsel %vm2374, %v3540, 0.0
    %4065 = vadd.xlane.f32.xlu0 %v4064
    %v4066 = vpop.xlane.xlu0 %4065
    %v4067 = vsel %vm2374, %v3541, 0.0
    %4068 = vadd.xlane.f32.xlu0 %v4067
    %v4069 = vpop.xlane.xlu0 %4068
    %v4070 = vsel %vm2374, %v3542, 0.0
    %4071 = vadd.xlane.f32.xlu0 %v4070
    %v4072 = vpop.xlane.xlu0 %4071
    %v4073 = vsel %vm2374, %v3543, 0.0
    %4074 = vadd.xlane.f32.xlu0 %v4073
    %v4075 = vpop.xlane.xlu0 %4074
    %v4076 = vsel %vm2374, %v3544, 0.0
    %4077 = vadd.xlane.f32.xlu0 %v4076
    %v4078 = vpop.xlane.xlu0 %4077
    %v4079 = vsel %vm2374, %v3545, 0.0
    %4080 = vadd.xlane.f32.xlu0 %v4079
    %v4081 = vpop.xlane.xlu0 %4080
    %v4082 = vsel %vm2374, %v3546, 0.0
    %4083 = vadd.xlane.f32.xlu0 %v4082
    %v4084 = vpop.xlane.xlu0 %4083
    %v4085 = vsel %vm2374, %v3547, 0.0
    %4086 = vadd.xlane.f32.xlu0 %v4085
    %v4087 = vpop.xlane.xlu0 %4086
    %v4088 = vsel %vm2374, %v3548, 0.0
    %4089 = vadd.xlane.f32.xlu0 %v4088
    %v4090 = vpop.xlane.xlu0 %4089
    %v4091 = vsel %vm2374, %v3549, 0.0
    %4092 = vadd.xlane.f32.xlu0 %v4091
    %v4093 = vpop.xlane.xlu0 %4092
    %v4094 = vsel %vm2374, %v3550, 0.0
    %4095 = vadd.xlane.f32.xlu0 %v4094
    %v4096 = vpop.xlane.xlu0 %4095
    %v4097 = vsel %vm2374, %v3551, 0.0
    %4098 = vadd.xlane.f32.xlu0 %v4097
    %v4099 = vpop.xlane.xlu0 %4098
    %v4100 = vsel %vm2374, %v3552, 0.0
    %4101 = vadd.xlane.f32.xlu0 %v4100
    %v4102 = vpop.xlane.xlu0 %4101
    %v4103 = vsel %vm2374, %v3553, 0.0
    %4104 = vadd.xlane.f32.xlu0 %v4103
    %v4105 = vpop.xlane.xlu0 %4104
    %v4106 = vsel %vm2374, %v3554, 0.0
    %4107 = vadd.xlane.f32.xlu0 %v4106
    %v4108 = vpop.xlane.xlu0 %4107
    %v4109 = vsel %vm2374, %v3555, 0.0
    %4110 = vadd.xlane.f32.xlu0 %v4109
    %v4111 = vpop.xlane.xlu0 %4110
    %v4112 = vsel %vm2374, %v3556, 0.0
    %4113 = vadd.xlane.f32.xlu0 %v4112
    %v4114 = vpop.xlane.xlu0 %4113
    %v4115 = vsel %vm2374, %v3557, 0.0
    %4116 = vadd.xlane.f32.xlu0 %v4115
    %v4117 = vpop.xlane.xlu0 %4116
    %v4118 = vsel %vm2374, %v3558, 0.0
    %4119 = vadd.xlane.f32.xlu0 %v4118
    %v4120 = vpop.xlane.xlu0 %4119
    %v4121 = vsel %vm2374, %v3559, 0.0
    %4122 = vadd.xlane.f32.xlu0 %v4121
    %v4123 = vpop.xlane.xlu0 %4122
    %v4124 = vsel %vm2374, %v3560, 0.0
    %4125 = vadd.xlane.f32.xlu0 %v4124
    %v4126 = vpop.xlane.xlu0 %4125
    %v4127 = vsel %vm2374, %v3561, 0.0
    %4128 = vadd.xlane.f32.xlu0 %v4127
    %v4129 = vpop.xlane.xlu0 %4128
    %v4130 = vsel %vm2374, %v3562, 0.0
    %4131 = vadd.xlane.f32.xlu0 %v4130
    %v4132 = vpop.xlane.xlu0 %4131
    %v4133 = vsel %vm2374, %v3563, 0.0
    %4134 = vadd.xlane.f32.xlu0 %v4133
    %v4135 = vpop.xlane.xlu0 %4134
    %v4136 = vsel %vm2374, %v3564, 0.0
    %4137 = vadd.xlane.f32.xlu0 %v4136
    %v4138 = vpop.xlane.xlu0 %4137
    %v4139 = vsel %vm2374, %v3565, 0.0
    %4140 = vadd.xlane.f32.xlu0 %v4139
    %v4141 = vpop.xlane.xlu0 %4140
    %v4142 = vsel %vm2374, %v3566, 0.0
    %4143 = vadd.xlane.f32.xlu0 %v4142
    %v4144 = vpop.xlane.xlu0 %4143
    %v4145 = vsel %vm2374, %v3567, 0.0
    %4146 = vadd.xlane.f32.xlu0 %v4145
    %v4147 = vpop.xlane.xlu0 %4146
    %v4148 = vsel %vm2374, %v3568, 0.0
    %4149 = vadd.xlane.f32.xlu0 %v4148
    %v4150 = vpop.xlane.xlu0 %4149
    %v4151 = vsel %vm2374, %v3569, 0.0
    %4152 = vadd.xlane.f32.xlu0 %v4151
    %v4153 = vpop.xlane.xlu0 %4152
    %v4154 = vsel %vm2374, %v3570, 0.0
    %4155 = vadd.xlane.f32.xlu0 %v4154
    %v4156 = vpop.xlane.xlu0 %4155
    %v4157 = vsel %vm2374, %v3571, 0.0
    %4158 = vadd.xlane.f32.xlu0 %v4157
    %v4159 = vpop.xlane.xlu0 %4158
    %v4160 = vsel %vm2374, %v3572, 0.0
    %4161 = vadd.xlane.f32.xlu0 %v4160
    %v4162 = vpop.xlane.xlu0 %4161
    %v4163 = vsel %vm2374, %v3573, 0.0
    %4164 = vadd.xlane.f32.xlu0 %v4163
    %v4165 = vpop.xlane.xlu0 %4164
    %v4166 = vsel %vm2374, %v3574, 0.0
    %4167 = vadd.xlane.f32.xlu0 %v4166
    %v4168 = vpop.xlane.xlu0 %4167
    %v4169 = vsel %vm2374, %v3575, 0.0
    %4170 = vadd.xlane.f32.xlu0 %v4169
    %v4171 = vpop.xlane.xlu0 %4170
    %v4172 = vsel %vm2374, %v3576, 0.0
    %4173 = vadd.xlane.f32.xlu0 %v4172
    %v4174 = vpop.xlane.xlu0 %4173
    %v4175 = vsel %vm2374, %v3577, 0.0
    %4176 = vadd.xlane.f32.xlu0 %v4175
    %v4177 = vpop.xlane.xlu0 %4176
    %v4178 = vsel %vm2374, %v3578, 0.0
    %4179 = vadd.xlane.f32.xlu0 %v4178
    %v4180 = vpop.xlane.xlu0 %4179
    %v4181 = vsel %vm2374, %v3579, 0.0
    %4182 = vadd.xlane.f32.xlu0 %v4181
    %v4183 = vpop.xlane.xlu0 %4182
    %v4184 = vsel %vm2374, %v3580, 0.0
    %4185 = vadd.xlane.f32.xlu0 %v4184
    %v4186 = vpop.xlane.xlu0 %4185
    %v4187 = vsel %vm2374, %v3581, 0.0
    %4188 = vadd.xlane.f32.xlu0 %v4187
    %v4189 = vpop.xlane.xlu0 %4188
    %v4190 = vsel %vm2374, %v3582, 0.0
    %4191 = vadd.xlane.f32.xlu0 %v4190
    %v4192 = vpop.xlane.xlu0 %4191
    %v4193 = vsel %vm2374, %v3583, 0.0
    %4194 = vadd.xlane.f32.xlu0 %v4193
    %v4195 = vpop.xlane.xlu0 %4194
    %v4196 = vsel %vm2374, %v3584, 0.0
    %4197 = vadd.xlane.f32.xlu0 %v4196
    %v4198 = vpop.xlane.xlu0 %4197
    %v4199 = vsel %vm2374, %v3585, 0.0
    %4200 = vadd.xlane.f32.xlu0 %v4199
    %v4201 = vpop.xlane.xlu0 %4200
    %v4202 = vsel %vm2374, %v3586, 0.0
    %4203 = vadd.xlane.f32.xlu0 %v4202
    %v4204 = vpop.xlane.xlu0 %4203
    %v4205 = vsel %vm2374, %v3587, 0.0
    %4206 = vadd.xlane.f32.xlu0 %v4205
    %v4207 = vpop.xlane.xlu0 %4206
    %v4208 = vsel %vm2374, %v3588, 0.0
    %4209 = vadd.xlane.f32.xlu0 %v4208
    %v4210 = vpop.xlane.xlu0 %4209
    %v4211 = vsel %vm2374, %v3589, 0.0
    %4212 = vadd.xlane.f32.xlu0 %v4211
    %v4213 = vpop.xlane.xlu0 %4212
    %v4214 = vsel %vm2374, %v3590, 0.0
    %4215 = vadd.xlane.f32.xlu0 %v4214
    %v4216 = vpop.xlane.xlu0 %4215
    %v4217 = vsel %vm2374, %v3591, 0.0
    %4218 = vadd.xlane.f32.xlu0 %v4217
    %v4219 = vpop.xlane.xlu0 %4218
    %v4220 = vsel %vm2374, %v3592, 0.0
    %4221 = vadd.xlane.f32.xlu0 %v4220
    %v4222 = vpop.xlane.xlu0 %4221
    %v4223 = vsel %vm2374, %v3593, 0.0
    %4224 = vadd.xlane.f32.xlu0 %v4223
    %v4225 = vpop.xlane.xlu0 %4224
    %v4226 = vsel %vm2374, %v3594, 0.0
    %4227 = vadd.xlane.f32.xlu0 %v4226
    %v4228 = vpop.xlane.xlu0 %4227
    %v4229 = vsel %vm2374, %v3595, 0.0
    %4230 = vadd.xlane.f32.xlu0 %v4229
    %v4231 = vpop.xlane.xlu0 %4230
    %v4232 = vsel %vm2374, %v3596, 0.0
    %4233 = vadd.xlane.f32.xlu0 %v4232
    %v4234 = vpop.xlane.xlu0 %4233
    %v4235 = vsel %vm2374, %v3597, 0.0
    %4236 = vadd.xlane.f32.xlu0 %v4235
    %v4237 = vpop.xlane.xlu0 %4236
    %v4238 = vsel %vm2374, %v3598, 0.0
    %4239 = vadd.xlane.f32.xlu0 %v4238
    %v4240 = vpop.xlane.xlu0 %4239
    %v4241 = vsel %vm2374, %v3599, 0.0
    %4242 = vadd.xlane.f32.xlu0 %v4241
    %v4243 = vpop.xlane.xlu0 %4242
    %v4244 = vsel %vm2374, %v3600, 0.0
    %4245 = vadd.xlane.f32.xlu0 %v4244
    %v4246 = vpop.xlane.xlu0 %4245
    %v4247 = vsel %vm2374, %v3601, 0.0
    %4248 = vadd.xlane.f32.xlu0 %v4247
    %v4249 = vpop.xlane.xlu0 %4248
    %v4250 = vsel %vm2374, %v3602, 0.0
    %4251 = vadd.xlane.f32.xlu0 %v4250
    %v4252 = vpop.xlane.xlu0 %4251
    %v4253 = vsel %vm2374, %v3603, 0.0
    %4254 = vadd.xlane.f32.xlu0 %v4253
    %v4255 = vpop.xlane.xlu0 %4254
    %v4256 = vsel %vm2374, %v3604, 0.0
    %4257 = vadd.xlane.f32.xlu0 %v4256
    %v4258 = vpop.xlane.xlu0 %4257
    %v4259 = vsel %vm2374, %v3605, 0.0
    %4260 = vadd.xlane.f32.xlu0 %v4259
    %v4261 = vpop.xlane.xlu0 %4260
    %v4262 = vsel %vm2374, %v3606, 0.0
    %4263 = vadd.xlane.f32.xlu0 %v4262
    %v4264 = vpop.xlane.xlu0 %4263
    %v4265 = vsel %vm2374, %v3607, 0.0
    %4266 = vadd.xlane.f32.xlu0 %v4265
    %v4267 = vpop.xlane.xlu0 %4266
    %v4268 = vsel %vm2374, %v3608, 0.0
    %4269 = vadd.xlane.f32.xlu0 %v4268
    %v4270 = vpop.xlane.xlu0 %4269
    %v4271 = vsel %vm2374, %v3609, 0.0
    %4272 = vadd.xlane.f32.xlu0 %v4271
    %v4273 = vpop.xlane.xlu0 %4272
    %v4274 = vsel %vm2374, %v3610, 0.0
    %4275 = vadd.xlane.f32.xlu0 %v4274
    %v4276 = vpop.xlane.xlu0 %4275
    %v4277 = vsel %vm2374, %v3611, 0.0
    %4278 = vadd.xlane.f32.xlu0 %v4277
    %v4279 = vpop.xlane.xlu0 %4278
    %v4280 = vsel %vm2374, %v3612, 0.0
    %4281 = vadd.xlane.f32.xlu0 %v4280
    %v4282 = vpop.xlane.xlu0 %4281
    %v4283 = vsel %vm2374, %v3613, 0.0
    %4284 = vadd.xlane.f32.xlu0 %v4283
    %v4285 = vpop.xlane.xlu0 %4284
    %v4286 = vsel %vm2374, %v3614, 0.0
    %4287 = vadd.xlane.f32.xlu0 %v4286
    %v4288 = vpop.xlane.xlu0 %4287
    %v4289 = vsel %vm2374, %v3615, 0.0
    %4290 = vadd.xlane.f32.xlu0 %v4289
    %v4291 = vpop.xlane.xlu0 %4290
    %v4292 = vsel %vm2374, %v3616, 0.0
    %4293 = vadd.xlane.f32.xlu0 %v4292
    %v4294 = vpop.xlane.xlu0 %4293
    %v4295 = vsel %vm2374, %v3617, 0.0
    %4296 = vadd.xlane.f32.xlu0 %v4295
    %v4297 = vpop.xlane.xlu0 %4296
    %v4298 = vsel %vm2374, %v3618, 0.0
    %4299 = vadd.xlane.f32.xlu0 %v4298
    %v4300 = vpop.xlane.xlu0 %4299
    %v4301 = vsel %vm2374, %v3619, 0.0
    %4302 = vadd.xlane.f32.xlu0 %v4301
    %v4303 = vpop.xlane.xlu0 %4302
    %v4304 = vsel %vm2374, %v3620, 0.0
    %4305 = vadd.xlane.f32.xlu0 %v4304
    %v4306 = vpop.xlane.xlu0 %4305
    %v4307 = vsel %vm2374, %v3621, 0.0
    %4308 = vadd.xlane.f32.xlu0 %v4307
    %v4309 = vpop.xlane.xlu0 %4308
    %v4310 = vsel %vm2374, %v3622, 0.0
    %4311 = vadd.xlane.f32.xlu0 %v4310
    %v4312 = vpop.xlane.xlu0 %4311
    %v4313 = vsel %vm2374, %v3623, 0.0
    %4314 = vadd.xlane.f32.xlu0 %v4313
    %v4315 = vpop.xlane.xlu0 %4314
    %v4316 = vsel %vm2374, %v3624, 0.0
    %4317 = vadd.xlane.f32.xlu0 %v4316
    %v4318 = vpop.xlane.xlu0 %4317
    %v4319 = vsel %vm2374, %v3625, 0.0
    %4320 = vadd.xlane.f32.xlu0 %v4319
    %v4321 = vpop.xlane.xlu0 %4320
    %v4322 = vsel %vm2374, %v3626, 0.0
    %4323 = vadd.xlane.f32.xlu0 %v4322
    %v4324 = vpop.xlane.xlu0 %4323
    %v4325 = vsel %vm2374, %v3627, 0.0
    %4326 = vadd.xlane.f32.xlu0 %v4325
    %v4327 = vpop.xlane.xlu0 %4326
    %v4328 = vsel %vm2374, %v3628, 0.0
    %4329 = vadd.xlane.f32.xlu0 %v4328
    %v4330 = vpop.xlane.xlu0 %4329
    %v4331 = vsel %vm2374, %v3629, 0.0
    %4332 = vadd.xlane.f32.xlu0 %v4331
    %v4333 = vpop.xlane.xlu0 %4332
    %v4334 = vsel %vm2374, %v3630, 0.0
    %4335 = vadd.xlane.f32.xlu0 %v4334
    %v4336 = vpop.xlane.xlu0 %4335
    %v4337 = vsel %vm2374, %v3631, 0.0
    %4338 = vadd.xlane.f32.xlu0 %v4337
    %v4339 = vpop.xlane.xlu0 %4338
    %v4340 = vsel %vm2374, %v3632, 0.0
    %4341 = vadd.xlane.f32.xlu0 %v4340
    %v4342 = vpop.xlane.xlu0 %4341
    %v4343 = vsel %vm2374, %v3633, 0.0
    %4344 = vadd.xlane.f32.xlu0 %v4343
    %v4345 = vpop.xlane.xlu0 %4344
    %v4346 = vsel %vm2374, %v3634, 0.0
    %4347 = vadd.xlane.f32.xlu0 %v4346
    %v4348 = vpop.xlane.xlu0 %4347
    %v4349 = vsel %vm2374, %v3635, 0.0
    %4350 = vadd.xlane.f32.xlu0 %v4349
    %v4351 = vpop.xlane.xlu0 %4350
    %v4352 = vsel %vm2374, %v3636, 0.0
    %4353 = vadd.xlane.f32.xlu0 %v4352
    %v4354 = vpop.xlane.xlu0 %4353
    %v4355 = vsel %vm2374, %v3637, 0.0
    %4356 = vadd.xlane.f32.xlu0 %v4355
    %v4357 = vpop.xlane.xlu0 %4356
    %v4358 = vsel %vm2374, %v3638, 0.0
    %4359 = vadd.xlane.f32.xlu0 %v4358
    %v4360 = vpop.xlane.xlu0 %4359
    %v4361 = vsel %vm2374, %v3639, 0.0
    %4362 = vadd.xlane.f32.xlu0 %v4361
    %v4363 = vpop.xlane.xlu0 %4362
    %v4364 = vsel %vm2374, %v3640, 0.0
    %4365 = vadd.xlane.f32.xlu0 %v4364
    %v4366 = vpop.xlane.xlu0 %4365
    %v4367 = vsel %vm2374, %v3641, 0.0
    %4368 = vadd.xlane.f32.xlu0 %v4367
    %v4369 = vpop.xlane.xlu0 %4368
    %v4370 = vsel %vm2374, %v3642, 0.0
    %4371 = vadd.xlane.f32.xlu0 %v4370
    %v4372 = vpop.xlane.xlu0 %4371
    %v4373 = vsel %vm2374, %v3643, 0.0
    %4374 = vadd.xlane.f32.xlu0 %v4373
    %v4375 = vpop.xlane.xlu0 %4374
    %v4376 = vsel %vm2374, %v3644, 0.0
    %4377 = vadd.xlane.f32.xlu0 %v4376
    %v4378 = vpop.xlane.xlu0 %4377
    %v4379 = vsel %vm2374, %v3645, 0.0
    %4380 = vadd.xlane.f32.xlu0 %v4379
    %v4381 = vpop.xlane.xlu0 %4380
    %v4382 = vsel %vm2374, %v3646, 0.0
    %4383 = vadd.xlane.f32.xlu0 %v4382
    %v4384 = vpop.xlane.xlu0 %4383
    %v4385 = vsel %vm2374, %v3647, 0.0
    %4386 = vadd.xlane.f32.xlu0 %v4385
    %v4387 = vpop.xlane.xlu0 %4386
    %v4388 = vsel %vm2374, %v3648, 0.0
    %4389 = vadd.xlane.f32.xlu0 %v4388
    %v4390 = vpop.xlane.xlu0 %4389
    %v4391 = vsel %vm2374, %v3649, 0.0
    %4392 = vadd.xlane.f32.xlu0 %v4391
    %v4393 = vpop.xlane.xlu0 %4392
    %v4394 = vsel %vm2374, %v3650, 0.0
    %4395 = vadd.xlane.f32.xlu0 %v4394
    %v4396 = vpop.xlane.xlu0 %4395
    %v4397 = vsel %vm2374, %v3651, 0.0
    %4398 = vadd.xlane.f32.xlu0 %v4397
    %v4399 = vpop.xlane.xlu0 %4398
    %v4400 = vsel %vm2374, %v3652, 0.0
    %4401 = vadd.xlane.f32.xlu0 %v4400
    %v4402 = vpop.xlane.xlu0 %4401
    %v4403 = vsel %vm2374, %v3653, 0.0
    %4404 = vadd.xlane.f32.xlu0 %v4403
    %v4405 = vpop.xlane.xlu0 %4404
    %v4406 = vsel %vm2374, %v3654, 0.0
    %4407 = vadd.xlane.f32.xlu0 %v4406
    %v4408 = vpop.xlane.xlu0 %4407
    %v4409 = vsel %vm2374, %v3655, 0.0
    %4410 = vadd.xlane.f32.xlu0 %v4409
    %v4411 = vpop.xlane.xlu0 %4410
    %v4412 = vsel %vm2374, %v3656, 0.0
    %4413 = vadd.xlane.f32.xlu0 %v4412
    %v4414 = vpop.xlane.xlu0 %4413
    %v4415 = vsel %vm2374, %v3657, 0.0
    %4416 = vadd.xlane.f32.xlu0 %v4415
    %v4417 = vpop.xlane.xlu0 %4416
    %v4418 = vsel %vm2374, %v3658, 0.0
    %4419 = vadd.xlane.f32.xlu0 %v4418
    %v4420 = vpop.xlane.xlu0 %4419
    %v4421 = vsel %vm2374, %v3659, 0.0
    %4422 = vadd.xlane.f32.xlu0 %v4421
    %v4423 = vpop.xlane.xlu0 %4422
    %v4424 = vsel %vm2374, %v3660, 0.0
    %4425 = vadd.xlane.f32.xlu0 %v4424
    %v4426 = vpop.xlane.xlu0 %4425
    %v4427 = vsel %vm2374, %v3661, 0.0
    %4428 = vadd.xlane.f32.xlu0 %v4427
    %v4429 = vpop.xlane.xlu0 %4428
    %v4430 = vadd.f32 %v3664, %v3667
    %v4431 = vadd.f32 %v4430, %v3670
    %v4432 = vadd.f32 %v4431, %v3673
    %v4433 = vadd.f32 %v4432, %v3676
    %v4434 = vadd.f32 %v4433, %v3679
    %v4435 = vadd.f32 %v4434, %v3682
    %v4436 = vadd.f32 %v4435, %v3685
    %v4437 = vadd.f32 %v4436, %v3688
    %v4438 = vadd.f32 %v4437, %v3691
    %v4439 = vadd.f32 %v4438, %v3694
    %v4440 = vadd.f32 %v4439, %v3697
    %v4441 = vadd.f32 %v4440, %v3700
    %v4442 = vadd.f32 %v4441, %v3703
    %v4443 = vadd.f32 %v4442, %v3706
    %v4444 = vadd.f32 %v4443, %v3709
    %v4445 = vadd.f32 %v4444, %v3712
    %v4446 = vadd.f32 %v4445, %v3715
    %v4447 = vadd.f32 %v4446, %v3718
    %v4448 = vadd.f32 %v4447, %v3721
    %v4449 = vadd.f32 %v4448, %v3724
    %v4450 = vadd.f32 %v4449, %v3727
    %v4451 = vadd.f32 %v4450, %v3730
    %v4452 = vadd.f32 %v4451, %v3733
    %v4453 = vadd.f32 %v4452, %v3736
    %v4454 = vadd.f32 %v4453, %v3739
    %v4455 = vadd.f32 %v4454, %v3742
    %v4456 = vadd.f32 %v4455, %v3745
    %v4457 = vadd.f32 %v4456, %v3748
    %v4458 = vadd.f32 %v4457, %v3751
    %v4459 = vadd.f32 %v4458, %v3754
    %v4460 = vadd.f32 %v4459, %v3757
    %v4461 = vadd.f32 %v4460, %v3760
    %v4462 = vadd.f32 %v4461, %v3763
    %v4463 = vadd.f32 %v4462, %v3766
    %v4464 = vadd.f32 %v4463, %v3769
    %v4465 = vadd.f32 %v4464, %v3772
    %v4466 = vadd.f32 %v4465, %v3775
    %v4467 = vadd.f32 %v4466, %v3778
    %v4468 = vadd.f32 %v4467, %v3781
    %v4469 = vadd.f32 %v4468, %v3784
    %v4470 = vadd.f32 %v4469, %v3787
    %v4471 = vadd.f32 %v4470, %v3790
    %v4472 = vadd.f32 %v4471, %v3793
    %v4473 = vadd.f32 %v4472, %v3796
    %v4474 = vadd.f32 %v4473, %v3799
    %v4475 = vadd.f32 %v4474, %v3802
    %v4476 = vadd.f32 %v4475, %v3805
    %v4477 = vadd.f32 %v4476, %v3808
    %v4478 = vadd.f32 %v4477, %v3811
    %v4479 = vadd.f32 %v4478, %v3814
    %v4480 = vadd.f32 %v4479, %v3817
    %v4481 = vadd.f32 %v4480, %v3820
    %v4482 = vadd.f32 %v4481, %v3823
    %v4483 = vadd.f32 %v4482, %v3826
    %v4484 = vadd.f32 %v4483, %v3829
    %v4485 = vadd.f32 %v4484, %v3832
    %v4486 = vadd.f32 %v4485, %v3835
    %v4487 = vadd.f32 %v4486, %v3838
    %v4488 = vadd.f32 %v4487, %v3841
    %v4489 = vadd.f32 %v4488, %v3844
    %v4490 = vadd.f32 %v4489, %v3847
    %v4491 = vadd.f32 %v4490, %v3850
    %v4492 = vadd.f32 %v4491, %v3853
    %v4493 = vadd.f32 %v4492, %v3856
    %v4494 = vadd.f32 %v4493, %v3859
    %v4495 = vadd.f32 %v4494, %v3862
    %v4496 = vadd.f32 %v4495, %v3865
    %v4497 = vadd.f32 %v4496, %v3868
    %v4498 = vadd.f32 %v4497, %v3871
    %v4499 = vadd.f32 %v4498, %v3874
    %v4500 = vadd.f32 %v4499, %v3877
    %v4501 = vadd.f32 %v4500, %v3880
    %v4502 = vadd.f32 %v4501, %v3883
    %v4503 = vadd.f32 %v4502, %v3886
    %v4504 = vadd.f32 %v4503, %v3889
    %v4505 = vadd.f32 %v4504, %v3892
    %v4506 = vadd.f32 %v4505, %v3895
    %v4507 = vadd.f32 %v4506, %v3898
    %v4508 = vadd.f32 %v4507, %v3901
    %v4509 = vadd.f32 %v4508, %v3904
    %v4510 = vadd.f32 %v4509, %v3907
    %v4511 = vadd.f32 %v4510, %v3910
    %v4512 = vadd.f32 %v4511, %v3913
    %v4513 = vadd.f32 %v4512, %v3916
    %v4514 = vadd.f32 %v4513, %v3919
    %v4515 = vadd.f32 %v4514, %v3922
    %v4516 = vadd.f32 %v4515, %v3925
    %v4517 = vadd.f32 %v4516, %v3928
    %v4518 = vadd.f32 %v4517, %v3931
    %v4519 = vadd.f32 %v4518, %v3934
    %v4520 = vadd.f32 %v4519, %v3937
    %v4521 = vadd.f32 %v4520, %v3940
    %v4522 = vadd.f32 %v4521, %v3943
    %v4523 = vadd.f32 %v4522, %v3946
    %v4524 = vadd.f32 %v4523, %v3949
    %v4525 = vadd.f32 %v4524, %v3952
    %v4526 = vadd.f32 %v4525, %v3955
    %v4527 = vadd.f32 %v4526, %v3958
    %v4528 = vadd.f32 %v4527, %v3961
    %v4529 = vadd.f32 %v4528, %v3964
    %v4530 = vadd.f32 %v4529, %v3967
    %v4531 = vadd.f32 %v4530, %v3970
    %v4532 = vadd.f32 %v4531, %v3973
    %v4533 = vadd.f32 %v4532, %v3976
    %v4534 = vadd.f32 %v4533, %v3979
    %v4535 = vadd.f32 %v4534, %v3982
    %v4536 = vadd.f32 %v4535, %v3985
    %v4537 = vadd.f32 %v4536, %v3988
    %v4538 = vadd.f32 %v4537, %v3991
    %v4539 = vadd.f32 %v4538, %v3994
    %v4540 = vadd.f32 %v4539, %v3997
    %v4541 = vadd.f32 %v4540, %v4000
    %v4542 = vadd.f32 %v4541, %v4003
    %v4543 = vadd.f32 %v4542, %v4006
    %v4544 = vadd.f32 %v4543, %v4009
    %v4545 = vadd.f32 %v4544, %v4012
    %v4546 = vadd.f32 %v4545, %v4015
    %v4547 = vadd.f32 %v4546, %v4018
    %v4548 = vadd.f32 %v4547, %v4021
    %v4549 = vadd.f32 %v4548, %v4024
    %v4550 = vadd.f32 %v4549, %v4027
    %v4551 = vadd.f32 %v4550, %v4030
    %v4552 = vadd.f32 %v4551, %v4033
    %v4553 = vadd.f32 %v4552, %v4036
    %v4554 = vadd.f32 %v4553, %v4039
    %v4555 = vadd.f32 %v4554, %v4042
    %v4556 = vadd.f32 %v4555, %v4045
    %v4557 = vadd.f32 %v4556, %v4048
    %v4558 = vadd.f32 %v4557, %v4051
    %v4559 = vadd.f32 %v4558, %v4054
    %v4560 = vadd.f32 %v4559, %v4057
    %v4561 = vadd.f32 %v4560, %v4060
    %v4562 = vadd.f32 %v4561, %v4063
    %v4563 = vadd.f32 %v4562, %v4066
    %v4564 = vadd.f32 %v4563, %v4069
    %v4565 = vadd.f32 %v4564, %v4072
    %v4566 = vadd.f32 %v4565, %v4075
    %v4567 = vadd.f32 %v4566, %v4078
    %v4568 = vadd.f32 %v4567, %v4081
    %v4569 = vadd.f32 %v4568, %v4084
    %v4570 = vadd.f32 %v4569, %v4087
    %v4571 = vadd.f32 %v4570, %v4090
    %v4572 = vadd.f32 %v4571, %v4093
    %v4573 = vadd.f32 %v4572, %v4096
    %v4574 = vadd.f32 %v4573, %v4099
    %v4575 = vadd.f32 %v4574, %v4102
    %v4576 = vadd.f32 %v4575, %v4105
    %v4577 = vadd.f32 %v4576, %v4108
    %v4578 = vadd.f32 %v4577, %v4111
    %v4579 = vadd.f32 %v4578, %v4114
    %v4580 = vadd.f32 %v4579, %v4117
    %v4581 = vadd.f32 %v4580, %v4120
    %v4582 = vadd.f32 %v4581, %v4123
    %v4583 = vadd.f32 %v4582, %v4126
    %v4584 = vadd.f32 %v4583, %v4129
    %v4585 = vadd.f32 %v4584, %v4132
    %v4586 = vadd.f32 %v4585, %v4135
    %v4587 = vadd.f32 %v4586, %v4138
    %v4588 = vadd.f32 %v4587, %v4141
    %v4589 = vadd.f32 %v4588, %v4144
    %v4590 = vadd.f32 %v4589, %v4147
    %v4591 = vadd.f32 %v4590, %v4150
    %v4592 = vadd.f32 %v4591, %v4153
    %v4593 = vadd.f32 %v4592, %v4156
    %v4594 = vadd.f32 %v4593, %v4159
    %v4595 = vadd.f32 %v4594, %v4162
    %v4596 = vadd.f32 %v4595, %v4165
    %v4597 = vadd.f32 %v4596, %v4168
    %v4598 = vadd.f32 %v4597, %v4171
    %v4599 = vadd.f32 %v4598, %v4174
    %v4600 = vadd.f32 %v4599, %v4177
    %v4601 = vadd.f32 %v4600, %v4180
    %v4602 = vadd.f32 %v4601, %v4183
    %v4603 = vadd.f32 %v4602, %v4186
    %v4604 = vadd.f32 %v4603, %v4189
    %v4605 = vadd.f32 %v4604, %v4192
    %v4606 = vadd.f32 %v4605, %v4195
    %v4607 = vadd.f32 %v4606, %v4198
    %v4608 = vadd.f32 %v4607, %v4201
    %v4609 = vadd.f32 %v4608, %v4204
    %v4610 = vadd.f32 %v4609, %v4207
    %v4611 = vadd.f32 %v4610, %v4210
    %v4612 = vadd.f32 %v4611, %v4213
    %v4613 = vadd.f32 %v4612, %v4216
    %v4614 = vadd.f32 %v4613, %v4219
    %v4615 = vadd.f32 %v4614, %v4222
    %v4616 = vadd.f32 %v4615, %v4225
    %v4617 = vadd.f32 %v4616, %v4228
    %v4618 = vadd.f32 %v4617, %v4231
    %v4619 = vadd.f32 %v4618, %v4234
    %v4620 = vadd.f32 %v4619, %v4237
    %v4621 = vadd.f32 %v4620, %v4240
    %v4622 = vadd.f32 %v4621, %v4243
    %v4623 = vadd.f32 %v4622, %v4246
    %v4624 = vadd.f32 %v4623, %v4249
    %v4625 = vadd.f32 %v4624, %v4252
    %v4626 = vadd.f32 %v4625, %v4255
    %v4627 = vadd.f32 %v4626, %v4258
    %v4628 = vadd.f32 %v4627, %v4261
    %v4629 = vadd.f32 %v4628, %v4264
    %v4630 = vadd.f32 %v4629, %v4267
    %v4631 = vadd.f32 %v4630, %v4270
    %v4632 = vadd.f32 %v4631, %v4273
    %v4633 = vadd.f32 %v4632, %v4276
    %v4634 = vadd.f32 %v4633, %v4279
    %v4635 = vadd.f32 %v4634, %v4282
    %v4636 = vadd.f32 %v4635, %v4285
    %v4637 = vadd.f32 %v4636, %v4288
    %v4638 = vadd.f32 %v4637, %v4291
    %v4639 = vadd.f32 %v4638, %v4294
    %v4640 = vadd.f32 %v4639, %v4297
    %v4641 = vadd.f32 %v4640, %v4300
    %v4642 = vadd.f32 %v4641, %v4303
    %v4643 = vadd.f32 %v4642, %v4306
    %v4644 = vadd.f32 %v4643, %v4309
    %v4645 = vadd.f32 %v4644, %v4312
    %v4646 = vadd.f32 %v4645, %v4315
    %v4647 = vadd.f32 %v4646, %v4318
    %v4648 = vadd.f32 %v4647, %v4321
    %v4649 = vadd.f32 %v4648, %v4324
    %v4650 = vadd.f32 %v4649, %v4327
    %v4651 = vadd.f32 %v4650, %v4330
    %v4652 = vadd.f32 %v4651, %v4333
    %v4653 = vadd.f32 %v4652, %v4336
    %v4654 = vadd.f32 %v4653, %v4339
    %v4655 = vadd.f32 %v4654, %v4342
    %v4656 = vadd.f32 %v4655, %v4345
    %v4657 = vadd.f32 %v4656, %v4348
    %v4658 = vadd.f32 %v4657, %v4351
    %v4659 = vadd.f32 %v4658, %v4354
    %v4660 = vadd.f32 %v4659, %v4357
    %v4661 = vadd.f32 %v4660, %v4360
    %v4662 = vadd.f32 %v4661, %v4363
    %v4663 = vadd.f32 %v4662, %v4366
    %v4664 = vadd.f32 %v4663, %v4369
    %v4665 = vadd.f32 %v4664, %v4372
    %v4666 = vadd.f32 %v4665, %v4375
    %v4667 = vadd.f32 %v4666, %v4378
    %v4668 = vadd.f32 %v4667, %v4381
    %v4669 = vadd.f32 %v4668, %v4384
    %v4670 = vadd.f32 %v4669, %v4387
    %v4671 = vadd.f32 %v4670, %v4390
    %v4672 = vadd.f32 %v4671, %v4393
    %v4673 = vadd.f32 %v4672, %v4396
    %v4674 = vadd.f32 %v4673, %v4399
    %v4675 = vadd.f32 %v4674, %v4402
    %v4676 = vadd.f32 %v4675, %v4405
    %v4677 = vadd.f32 %v4676, %v4408
    %v4678 = vadd.f32 %v4677, %v4411
    %v4679 = vadd.f32 %v4678, %v4414
    %v4680 = vadd.f32 %v4679, %v4417
    %v4681 = vadd.f32 %v4680, %v4420
    %v4682 = vadd.f32 %v4681, %v4423
    %v4683 = vadd.f32 %v4682, %v4426
    %v4684 = vadd.f32 %v4683, %v4429
    %v4685 = vrot.slane %v4684, 4
    %v4686 = vadd.f32 %v4684, %v4685
    %v4687 = vrot.slane %v4686, 2
    %v4688 = vadd.f32 %v4686, %v4687
    %v4689 = vrot.slane %v4688, 1
    %v4690 = vadd.f32 %v4688, %v4689
    %vm4691 = vcmask 0
    %4692 = vst.msk [vmem:[#allocation2] sm:$0x1] %vm4691, %v4690
    // Predicated region
    $region22: #{vae_forward.27} parent=1 // pred_check
      _
    $region23: #{vae_forward.27} parent=1 // pred_check_branch
      %4694 = sbr.rel (0) target = $region25
    $region24: #{vae_forward.27} parent=1 // pred_region
      _
    $region25: #{vae_forward.27} parent=1 // pred_fallthru
      _
    // Predicated region
    $region26: #{vae_forward.27} parent=1 // pred_check
      _
    $region27: #{vae_forward.27} parent=1 // pred_check_branch
      %4696 = sbr.rel (0) target = $region29
    $region28: #{vae_forward.27} parent=1 // pred_region
      %s4698 = ssub.s32 16, 16
      %4699 = vsyncadd [#allocation3], %s4698
      %s4701 = sshll.u32 [#allocation2], 4
      %s4702 = int_to_ptr.vmem [resolvable:$true] %s4701
      %4704 = dma.vmem_to_hbm [thread:$0]  %s4702, 16, %s6, [#allocation3]
    $region29: #{vae_forward.27} parent=1 // pred_fallthru
      _
    // Predicated region
    $region30: #{vae_forward.27} parent=1 // pred_check
      _
    $region31: #{vae_forward.27} parent=1 // pred_check_branch
      %4706 = sbr.rel (0) target = $region33
    $region32: #{vae_forward.27} parent=1 // pred_region
      _
    $region33: #{vae_forward.27} parent=1 // pred_fallthru
      _
    // Predicated region
    $region34: #{vae_forward.27} parent=1 // pred_check
      _
    $region35: #{vae_forward.27} parent=1 // pred_check_branch
      %4708 = sbr.rel (0) target = $region37
    $region36: #{vae_forward.27} parent=1 // pred_region
      %4709 = dma.done [#allocation3], 16
    $region37: #{vae_forward.27} parent=1 // pred_fallthru
      _
    %4710 = vsyncpa [#allocation3], 1

</llo_original>
